<compile_context>
chip_gen: v5e
topology: v5e:2x2
jax: 0.10.0
libtpu: 0.0.40
codegen_flags: <defaults>
</compile_context>

<pallas_src>
import functools

import jax
import jax.numpy as jnp
from jax.experimental import pallas as pl
from jax.experimental.pallas import tpu as pltpu

NEG_SLOPE = 0.01                                    # F.leaky_relu default
BN_EPS = 1e-5                                       # BatchNorm default eps
DROP_P = 0.2
DROP_THRESH = int(DROP_P * (1 << 32)) & 0xFFFFFFFF  # drop iff hash < thresh
KEEP_SCALE = 1.0 / (1.0 - DROP_P)

VMEM_WORKSET_BUDGET = 24 << 20   # target per-pass working set (double-buffered)
VMEM_LIMIT_BYTES = 48 << 20      # raised scoped-VMEM cap; safe on v5e/v6e/v7x

_CONV_CP = pltpu.CompilerParams(
    dimension_semantics=("parallel",),
    vmem_limit_bytes=VMEM_LIMIT_BYTES,
)


def _pick_tm(m, k, cout):
    """Per-layer M tile from a VMEM budget (double-buffered patches + y blocks plus
    the resident weight block), capped at ceil(M/2) so both v7x TensorCores get
    work whenever M allows >=2 grid steps."""
    fixed = 4 * k * cout + (64 << 10)        # bf16 weight x 2 buffers + slack
    per_row = 4 * (k + cout)                 # bf16 patches + bf16 y, x 2 buffers
    tm = max(8, (VMEM_WORKSET_BUDGET - fixed) // per_row)
    tm = min(tm, 2048)
    half = ((m + 1) // 2 + 7) // 8 * 8       # ceil(M/2) rounded up to sublane mult
    tm = min(tm, max(8, half))
    if tm >= m:
        return m, 1                          # single full-extent block
    tm = (tm // 8) * 8
    return tm, -(-m // tm)


def _dropout_keep(shape, row_start, seed_i32):
    """Counter-based keep mask keyed on the GLOBAL (row, channel) coordinate so the
    mask is independent of the M tiling.  One multiply/xor-shift mix round: cheap
    uint32 VPU ops only (lowers on TPU and in interpret mode)."""
    row = (jax.lax.broadcasted_iota(jnp.int32, shape, 0) + row_start).astype(jnp.uint32)
    col = jax.lax.broadcasted_iota(jnp.int32, shape, 1).astype(jnp.uint32)
    x = row * jnp.uint32(0x9E3779B1) + col + seed_i32.astype(jnp.uint32)
    x = x ^ (x >> 16)
    x = x * jnp.uint32(0x7FEB352D)
    x = x ^ (x >> 15)
    return x >= jnp.uint32(DROP_THRESH)


# --------------------------------------------------------------------------
# Kernels
# --------------------------------------------------------------------------
def _stats_kernel(p_ref, w_ref, stats_ref, *, tile_m, m_total):
    """Stats-only pass (conv1): bf16 GEMM (f32 accum), per-tile sum / sum-of-squares."""
    y = jnp.dot(p_ref[...], w_ref[...], preferred_element_type=jnp.float32)
    if m_total % tile_m != 0:        # mask garbage rows of the ragged last tile
        row = (jax.lax.broadcasted_iota(jnp.int32, (y.shape[0], 1), 0)
               + pl.program_id(0) * tile_m)
        y = jnp.where(row < m_total, y, 0.0)
    s1 = jnp.sum(y, axis=0, keepdims=True)
    s2 = jnp.sum(y * y, axis=0, keepdims=True)
    stats_ref[...] = jnp.concatenate([s1, s2], axis=0)[None]


def _gemm_stats_kernel(p_ref, w_ref, y_ref, stats_ref, *, tile_m, m_total):
    """Pass 1 (conv2-4): bf16 GEMM; stats from the f32 accumulator; y stored bf16."""
    y = jnp.dot(p_ref[...], w_ref[...], preferred_element_type=jnp.float32)
    ym = y
    if m_total % tile_m != 0:
        row = (jax.lax.broadcasted_iota(jnp.int32, (y.shape[0], 1), 0)
               + pl.program_id(0) * tile_m)
        ym = jnp.where(row < m_total, y, 0.0)
    s1 = jnp.sum(ym, axis=0, keepdims=True)
    s2 = jnp.sum(ym * ym, axis=0, keepdims=True)
    stats_ref[...] = jnp.concatenate([s1, s2], axis=0)[None]
    y_ref[...] = y.astype(y_ref.dtype)


def _bn_act_drop_kernel(seed_ref, y_ref, ss_ref, o_ref, *, tile_m, training):
    """Pass 2 (conv2-4): BN affine (folded scale/shift) + leaky_relu + dropout(0.2)."""
    y = y_ref[...].astype(jnp.float32) * ss_ref[0:1, :] + ss_ref[1:2, :]
    y = jnp.where(y >= 0.0, y, NEG_SLOPE * y)
    if training:
        keep = _dropout_keep(y.shape, pl.program_id(0) * tile_m, seed_ref[0])
        y = jnp.where(keep, y * KEEP_SCALE, 0.0)
    o_ref[...] = y.astype(o_ref.dtype)


def _gemm_bn_act_drop_kernel(seed_ref, p_ref, w_ref, ss_ref, o_ref, *, tile_m, training):
    """Fused pass 2 (conv1): re-run the tiny GEMM and apply BN + leaky_relu + dropout
    so the pre-activation never round-trips through HBM."""
    y = jnp.dot(p_ref[...], w_ref[...], preferred_element_type=jnp.float32)
    y = y * ss_ref[0:1, :] + ss_ref[1:2, :]
    y = jnp.where(y >= 0.0, y, NEG_SLOPE * y)
    if training:
        keep = _dropout_keep(y.shape, pl.program_id(0) * tile_m, seed_ref[0])
        y = jnp.where(keep, y * KEEP_SCALE, 0.0)
    o_ref[...] = y.astype(o_ref.dtype)


def _linear_heads_kernel(x_ref, w_ref, gb_ref, o_ref, *, nd):
    """Fused mean/log-var heads: one GEMM + shared BatchNorm1d(train) + leaky_relu;
    exp(0.5*x) applied to the log-var half.  Output lane-padded to >=128 columns."""
    y = jnp.dot(x_ref[...], w_ref[...], preferred_element_type=jnp.float32)
    m = jnp.mean(y, axis=0, keepdims=True)
    var = jnp.maximum(jnp.mean(y * y, axis=0, keepdims=True) - m * m, 0.0)
    scale = jax.lax.rsqrt(var + BN_EPS) * gb_ref[0:1, :]
    y = y * scale + (gb_ref[1:2, :] - m * scale)
    y = jnp.where(y >= 0.0, y, NEG_SLOPE * y)
    col = jax.lax.broadcasted_iota(jnp.int32, y.shape, 1)
    is_std = jnp.logical_and(col >= nd, col < 2 * nd)
    o_ref[...] = jnp.where(is_std, jnp.exp(0.5 * y), y)


# --------------------------------------------------------------------------
# Wrappers
# --------------------------------------------------------------------------
def _im2col_3x3_s2_p1(x_nhwc):
    """3x3 / stride-2 / pad-1 patches -> ([N*OH*OW, 9*C], OH, OW)."""
    n, h, w, c = x_nhwc.shape
    oh = (h + 2 - 3) // 2 + 1
    ow = (w + 2 - 3) // 2 + 1
    xp = jnp.pad(x_nhwc, ((0, 0), (1, 1), (1, 1), (0, 0)))
    pieces = [xp[:, kh:kh + 2 * (oh - 1) + 1:2, kw:kw + 2 * (ow - 1) + 1:2, :]
              for kh in range(3) for kw in range(3)]
    patches = jnp.stack(pieces, axis=3)               # (N, OH, OW, 9, C)
    return patches.reshape(n * oh * ow, 9 * c), oh, ow


def conv_block(x_nhwc, w_mat, gamma, beta, *, layer_seed, training, recompute):
    """Conv(3x3,s2,p1) -> BatchNorm2d(train) -> leaky_relu -> dropout(0.2)."""
    n = x_nhwc.shape[0]
    patches, oh, ow = _im2col_3x3_s2_p1(x_nhwc)       # bf16 (m, k)
    m, k = patches.shape
    cout = w_mat.shape[1]
    tm, n_mt = _pick_tm(m, k, cout)

    if recompute:
        # Pass 1: statistics only (no y materialization at all).
        pstats = pl.pallas_call(
            functools.partial(_stats_kernel, tile_m=tm, m_total=m),
            grid=(n_mt,),
            in_specs=[pl.BlockSpec((tm, k), lambda i: (i, 0)),
                      pl.BlockSpec((k, cout), lambda i: (0, 0))],
            out_specs=pl.BlockSpec((1, 2, cout), lambda i: (i, 0, 0)),
            out_shape=jax.ShapeDtypeStruct((n_mt, 2, cout), jnp.float32),
            compiler_params=_CONV_CP,
        )(patches, w_mat)
        y_pre = None
    else:
        # Pass 1: GEMM + statistics; pre-activation stored bf16 (stats taken pre-cast).
        y_pre, pstats = pl.pallas_call(
            functools.partial(_gemm_stats_kernel, tile_m=tm, m_total=m),
            grid=(n_mt,),
            in_specs=[pl.BlockSpec((tm, k), lambda i: (i, 0)),
                      pl.BlockSpec((k, cout), lambda i: (0, 0))],
            out_specs=[pl.BlockSpec((tm, cout), lambda i: (i, 0)),
                       pl.BlockSpec((1, 2, cout), lambda i: (i, 0, 0))],
            out_shape=[jax.ShapeDtypeStruct((m, cout), jnp.bfloat16),
                       jax.ShapeDtypeStruct((n_mt, 2, cout), jnp.float32)],
            compiler_params=_CONV_CP,
        )(patches, w_mat)

    # Tiny O(Cout) glue: finish the full-M BN reduction and fold gamma/beta +
    # mean/rstd into a single per-channel scale/shift.  (Any conv bias would be
    # cancelled exactly here, which is why it was dropped from the parameters.)
    mean = jnp.sum(pstats[:, 0, :], axis=0) / m
    var = jnp.maximum(jnp.sum(pstats[:, 1, :], axis=0) / m - mean * mean, 0.0)
    scale = gamma * jax.lax.rsqrt(var + BN_EPS)
    shift = beta - mean * scale
    ss = jnp.stack([scale, shift], axis=0)            # (2, Cout) f32

    if recompute:
        out = pl.pallas_call(
            functools.partial(_gemm_bn_act_drop_kernel, tile_m=tm, training=training),
            grid_spec=pltpu.PrefetchScalarGridSpec(
                num_scalar_prefetch=1, grid=(n_mt,),
                in_specs=[pl.BlockSpec((tm, k), lambda i, s: (i, 0)),
                          pl.BlockSpec((k, cout), lambda i, s: (0, 0)),
                          pl.BlockSpec((2, cout), lambda i, s: (0, 0))],
                out_specs=pl.BlockSpec((tm, cout), lambda i, s: (i, 0))),
            out_shape=jax.ShapeDtypeStruct((m, cout), jnp.bfloat16),
            compiler_params=_CONV_CP,
        )(layer_seed, patches, w_mat, ss)
    else:
        out = pl.pallas_call(
            functools.partial(_bn_act_drop_kernel, tile_m=tm, training=training),
            grid_spec=pltpu.PrefetchScalarGridSpec(
                num_scalar_prefetch=1, grid=(n_mt,),
                in_specs=[pl.BlockSpec((tm, cout), lambda i, s: (i, 0)),
                          pl.BlockSpec((2, cout), lambda i, s: (0, 0))],
                out_specs=pl.BlockSpec((tm, cout), lambda i, s: (i, 0))),
            out_shape=jax.ShapeDtypeStruct((m, cout), jnp.bfloat16),
            compiler_params=_CONV_CP,
        )(layer_seed, y_pre, ss)

    return out.reshape(n, oh, ow, cout)


def linear_heads(x_flat, w_fused, gb_fused, *, noise_dims):
    """Fused mean/std heads: single pallas_call, output lane-padded to >=128."""
    b, f = x_flat.shape
    ncols = w_fused.shape[1]
    out = pl.pallas_call(
        functools.partial(_linear_heads_kernel, nd=noise_dims),
        grid=(1,),
        in_specs=[pl.BlockSpec((b, f), lambda i: (0, 0)),
                  pl.BlockSpec((f, ncols), lambda i: (0, 0)),
                  pl.BlockSpec((2, ncols), lambda i: (0, 0))],
        out_specs=pl.BlockSpec((b, ncols), lambda i: (0, 0)),
        out_shape=jax.ShapeDtypeStruct((b, ncols), jnp.float32),
    )(x_flat, w_fused, gb_fused)
    return out[:, :noise_dims], out[:, noise_dims:2 * noise_dims]


# --------------------------------------------------------------------------
# Encoder parameters + forward
# --------------------------------------------------------------------------
def init_encoder_params(noise_dims, in_hw=32, key=jax.random.PRNGKey(42)):
    chans = [3, 64, 128, 256, 512]
    params = {}
    for i in range(4):
        cout, cin = chans[i + 1], chans[i]
        kw_ = jax.random.fold_in(key, i)
        w = 0.05 * jax.random.normal(kw_, (cout, cin, 3, 3), jnp.float32)
        # Conv bias omitted: exactly cancelled by train-mode BN mean subtraction.
        # (Cout,Cin,kh,kw) -> (kh,kw,Cin,Cout) -> (9*Cin, Cout); bf16 GEMM operand.
        params[f'conv{i + 1}_w'] = (
            jnp.transpose(w, (2, 3, 1, 0)).reshape(9 * cin, cout).astype(jnp.bfloat16))
        params[f'bn{i + 1}_g'] = jnp.ones((cout,), jnp.float32)
        params[f'bn{i + 1}_b'] = jnp.zeros((cout,), jnp.float32)

    hw = in_hw // 16
    feat = 512 * hw * hw                              # LazyLinear in_features
    ncols = max(128, -(-2 * noise_dims // 128) * 128)  # lane-pad fused head

    def lazy_linear(idx):
        k = jax.random.fold_in(key, idx)
        # Rows generated in torch's NCHW-flatten (C,H,W) order, then permuted ONCE
        # to NHWC order so the conv4 activation is flattened without a transpose.
        w_t = 0.02 * jax.random.normal(k, (feat, noise_dims), jnp.float32)
        return (w_t.reshape(512, hw, hw, noise_dims)
                .transpose(1, 2, 0, 3).reshape(feat, noise_dims))

    w_mean, w_var = lazy_linear(10), lazy_linear(11)
    pad = ncols - 2 * noise_dims
    params['lin_w'] = jnp.concatenate(
        [w_mean, w_var, jnp.zeros((feat, pad), jnp.float32)], axis=1
    ).astype(jnp.bfloat16)
    # Shared BatchNorm1d gamma/beta (same module for both heads), padded to ncols.
    gamma = jnp.ones((noise_dims,), jnp.float32)
    beta = jnp.zeros((noise_dims,), jnp.float32)
    params['lin_gb'] = jnp.stack([
        jnp.concatenate([gamma, gamma, jnp.ones((pad,), jnp.float32)]),
        jnp.concatenate([beta, beta, jnp.zeros((pad,), jnp.float32)])], axis=0)
    # Linear bias omitted: cancelled by the shared train-mode BatchNorm1d.
    return params


@functools.partial(jax.jit, static_argnames=("noise_dims", "training"))
def encoder_forward(params, x_nchw, seed, *, noise_dims, training=True):
    # PyTorch NCHW -> NHWC; bf16 GEMM operands (f32 accumulation inside kernels).
    x = jnp.transpose(x_nchw, (0, 2, 3, 1)).astype(jnp.bfloat16)
    seed = jnp.asarray(seed, jnp.int32)               # runtime data -> no recompiles
    for i in range(1, 5):
        layer_seed = jnp.full((1,), seed * jnp.int32(1009) + jnp.int32(i), jnp.int32)
        x = conv_block(x, params[f'conv{i}_w'],
                       params[f'bn{i}_g'], params[f'bn{i}_b'],
                       layer_seed=layer_seed, training=training,
                       recompute=(i == 1))            # conv1: skip y round-trip
    n = x.shape[0]
    x_flat = x.reshape(n, -1)   # NHWC flatten; linear weight rows pre-permuted to match
    return linear_heads(x_flat, params['lin_w'], params['lin_gb'],
                        noise_dims=noise_dims)


if __name__ == "__main__":
    NOISE_DIMS = 32
    B, C, H, W = 2, 3, 32, 32        # 4 stride-2 convs: 32 -> 16 -> 8 -> 4 -> 2
    x = jax.random.normal(jax.random.PRNGKey(0), (B, C, H, W), jnp.float32)
    params = init_encoder_params(NOISE_DIMS, in_hw=H)

    mean, std = encoder_forward(params, x, 123, noise_dims=NOISE_DIMS, training=True)
    mean = jax.block_until_ready(mean)
    std = jax.block_until_ready(std)

    assert mean.shape == (B, NOISE_DIMS) and std.shape == (B, NOISE_DIMS)
    assert bool(jnp.all(jnp.isfinite(mean))) and bool(jnp.all(jnp.isfinite(std)))
    assert bool(jnp.all(std > 0.0))  # std = exp(0.5 * log_var) must be positive
    print("KERNEL_OK")
</pallas_src>

<mosaic_0001>
module attributes {stable_mosaic.version = 11 : i64} {
  func.func @_stats_kernel(%arg0: i32, %arg1: memref<256x27xbf16, #tpu.memory_space<vmem>>, %arg2: memref<27x64xbf16, #tpu.memory_space<vmem>>, %arg3: memref<1x2x64xf32, #tpu.memory_space<vmem>>) attributes {dimension_semantics = [#tpu.dimension_semantics<parallel>], iteration_bounds = array<i64: 2>, scalar_prefetch = 0 : i64, scratch_operands = 0 : i64, tpu.core_type = #tpu.core_type<tc>, window_params = [{transform_indices = @transform_0, window_bounds = array<i64: 256, 27>}, {pipeline_mode = #tpu.pipeline_mode<synchronous>, transform_indices = @transform_1, window_bounds = array<i64: 27, 64>}, {transform_indices = @transform_2, window_bounds = array<i64: 1, 2, 64>}]} {
    %c0 = arith.constant 0 : index
    %c0_0 = arith.constant 0 : index
    %0 = vector.load %arg1[%c0, %c0_0] : memref<256x27xbf16, #tpu.memory_space<vmem>>, vector<256x27xbf16>
    %c0_1 = arith.constant 0 : index
    %c0_2 = arith.constant 0 : index
    %1 = vector.load %arg2[%c0_1, %c0_2] : memref<27x64xbf16, #tpu.memory_space<vmem>>, vector<27x64xbf16>
    %cst = arith.constant dense<0.000000e+00> : vector<256x64xf32>
    %2 = tpu.matmul %0, %1, %cst {dimension_numbers = #tpu.dot_dimension_numbers<[1], [0], [0], [1], [0, 0, 1, 1], [], []>} : vector<256x27xbf16>, vector<27x64xbf16>, vector<256x64xf32> -> vector<256x64xf32>
    %cst_3 = arith.constant dense<0.000000e+00> : vector<64xf32>
    %3 = vector.multi_reduction <add>, %2, %cst_3 [0] : vector<256x64xf32> to vector<64xf32>
    %4 = vector.shape_cast %3 : vector<64xf32> to vector<1x64xf32>
    %5 = arith.mulf %2, %2 : vector<256x64xf32>
    %cst_4 = arith.constant dense<0.000000e+00> : vector<64xf32>
    %6 = vector.multi_reduction <add>, %5, %cst_4 [0] : vector<256x64xf32> to vector<64xf32>
    %7 = vector.shape_cast %6 : vector<64xf32> to vector<1x64xf32>
    %8 = tpu.concatenate %4, %7 in 0 : vector<1x64xf32>, vector<1x64xf32> -> vector<2x64xf32>
    %9 = vector.shape_cast %8 : vector<2x64xf32> to vector<1x2x64xf32>
    %c0_5 = arith.constant 0 : index
    %c0_6 = arith.constant 0 : index
    %c0_7 = arith.constant 0 : index
    %10 = vector.load %arg3[%c0_5, %c0_6, %c0_7] : memref<1x2x64xf32, #tpu.memory_space<vmem>>, vector<1x2x64xf32>
    tpu.vector_store %arg3[%c0_5, %c0_6, %c0_7], %9 {strides = array<i32>} : memref<1x2x64xf32, #tpu.memory_space<vmem>>, vector<1x2x64xf32>,
    return
  }
  func.func @transform_0(%arg0: i32) -> (i32, i32) {
    %c0_i32 = arith.constant 0 : i32
    %c0_i32_0 = arith.constant 0 : i32
    return %arg0, %c0_i32 : i32, i32
  }
  func.func @transform_1(%arg0: i32) -> (i32, i32) {
    %c0_i32 = arith.constant 0 : i32
    %c0_i32_0 = arith.constant 0 : i32
    %c0_i32_1 = arith.constant 0 : i32
    return %c0_i32, %c0_i32_0 : i32, i32
  }
  func.func @transform_2(%arg0: i32) -> (i32, i32, i32) {
    %c0_i32 = arith.constant 0 : i32
    %c0_i32_0 = arith.constant 0 : i32
    %c0_i32_1 = arith.constant 0 : i32
    return %arg0, %c0_i32, %c0_i32_0 : i32, i32, i32
  }
}

module attributes {stable_mosaic.version = 11 : i64} {
  func.func @_gemm_bn_act_drop_kernel(%arg0: i32, %arg1: memref<1xi32, #tpu.memory_space<smem>>, %arg2: memref<256x27xbf16, #tpu.memory_space<vmem>>, %arg3: memref<27x64xbf16, #tpu.memory_space<vmem>>, %arg4: memref<2x64xf32, #tpu.memory_space<vmem>>, %arg5: memref<256x64xbf16, #tpu.memory_space<vmem>>) attributes {dimension_semantics = [#tpu.dimension_semantics<parallel>], iteration_bounds = array<i64: 2>, scalar_prefetch = 1 : i64, scratch_operands = 0 : i64, tpu.core_type = #tpu.core_type<tc>, window_params = [{transform_indices = @transform_0, window_bounds = array<i64: 256, 27>}, {pipeline_mode = #tpu.pipeline_mode<synchronous>, transform_indices = @transform_1, window_bounds = array<i64: 27, 64>}, {pipeline_mode = #tpu.pipeline_mode<synchronous>, transform_indices = @transform_2, window_bounds = array<i64: 2, 64>}, {transform_indices = @transform_3, window_bounds = array<i64: 256, 64>}]} {
    %c0 = arith.constant 0 : index
    %c0_0 = arith.constant 0 : index
    %0 = vector.load %arg2[%c0, %c0_0] : memref<256x27xbf16, #tpu.memory_space<vmem>>, vector<256x27xbf16>
    %c0_1 = arith.constant 0 : index
    %c0_2 = arith.constant 0 : index
    %1 = vector.load %arg3[%c0_1, %c0_2] : memref<27x64xbf16, #tpu.memory_space<vmem>>, vector<27x64xbf16>
    %cst = arith.constant dense<0.000000e+00> : vector<256x64xf32>
    %2 = tpu.matmul %0, %1, %cst {dimension_numbers = #tpu.dot_dimension_numbers<[1], [0], [0], [1], [0, 0, 1, 1], [], []>} : vector<256x27xbf16>, vector<27x64xbf16>, vector<256x64xf32> -> vector<256x64xf32>
    %c0_3 = arith.constant 0 : index
    %c0_4 = arith.constant 0 : index
    %3 = vector.load %arg4[%c0_3, %c0_4] : memref<2x64xf32, #tpu.memory_space<vmem>>, vector<1x64xf32>
    %4 = vector.broadcast %3 : vector<1x64xf32> to vector<256x64xf32>
    %5 = arith.mulf %2, %4 : vector<256x64xf32>
    %c1 = arith.constant 1 : index
    %c0_5 = arith.constant 0 : index
    %6 = vector.load %arg4[%c1, %c0_5] : memref<2x64xf32, #tpu.memory_space<vmem>>, vector<1x64xf32>
    %7 = vector.broadcast %6 : vector<1x64xf32> to vector<256x64xf32>
    %8 = arith.addf %5, %7 : vector<256x64xf32>
    %cst_6 = arith.constant 0.000000e+00 : f32
    %9 = vector.broadcast %cst_6 : f32 to vector<256x64xf32>
    %10 = arith.cmpf oge, %8, %9 : vector<256x64xf32>
    %cst_7 = arith.constant 0.00999999977 : f32
    %11 = vector.broadcast %cst_7 : f32 to vector<256x64xf32>
    %12 = arith.mulf %11, %8 : vector<256x64xf32>
    %13 = arith.select %10, %8, %12 : vector<256x64xi1>, vector<256x64xf32>
    %c256_i32 = arith.constant 256 : i32
    %14 = arith.muli %arg0, %c256_i32 : i32
    %c0_8 = arith.constant 0 : index
    %15 = memref.load %arg1[%c0_8] : memref<1xi32, #tpu.memory_space<smem>>
    %16 = tpu.iota {dimensions = array<i32: 0>} : vector<256x64xi32>
    %17 = vector.broadcast %14 : i32 to vector<256x64xi32>
    %18 = arith.addi %16, %17 : vector<256x64xi32>
    %19 = tpu.iota {dimensions = array<i32: 1>} : vector<256x64xi32>
    %c-1640531535_i32 = arith.constant -1640531535 : i32
    %20 = vector.broadcast %c-1640531535_i32 : i32 to vector<256x64xi32>
    %21 = arith.muli %18, %20 : vector<256x64xi32>
    %22 = arith.addi %21, %19 : vector<256x64xi32>
    %23 = vector.broadcast %15 : i32 to vector<256x64xi32>
    %24 = arith.addi %22, %23 : vector<256x64xi32>
    %c16_i32 = arith.constant 16 : i32
    %25 = vector.broadcast %c16_i32 : i32 to vector<256x64xi32>
    %26 = arith.shrui %24, %25 : vector<256x64xi32>
    %27 = arith.xori %24, %26 : vector<256x64xi32>
    %c2146121005_i32 = arith.constant 2146121005 : i32
    %28 = vector.broadcast %c2146121005_i32 : i32 to vector<256x64xi32>
    %29 = arith.muli %27, %28 : vector<256x64xi32>
    %c15_i32 = arith.constant 15 : i32
    %30 = vector.broadcast %c15_i32 : i32 to vector<256x64xi32>
    %31 = arith.shrui %29, %30 : vector<256x64xi32>
    %32 = arith.xori %29, %31 : vector<256x64xi32>
    %c858993459_i32 = arith.constant 858993459 : i32
    %33 = vector.broadcast %c858993459_i32 : i32 to vector<256x64xi32>
    %34 = arith.cmpi uge, %32, %33 : vector<256x64xi32>
    %cst_9 = arith.constant 1.250000e+00 : f32
    %35 = vector.broadcast %cst_9 : f32 to vector<256x64xf32>
    %36 = arith.mulf %13, %35 : vector<256x64xf32>
    %cst_10 = arith.constant 0.000000e+00 : f32
    %37 = vector.broadcast %cst_10 : f32 to vector<256x64xf32>
    %38 = arith.select %34, %36, %37 : vector<256x64xi1>, vector<256x64xf32>
    %39 = arith.truncf %38 : vector<256x64xf32> to vector<256x64xbf16>
    %c0_11 = arith.constant 0 : index
    %c0_12 = arith.constant 0 : index
    %40 = vector.load %arg5[%c0_11, %c0_12] : memref<256x64xbf16, #tpu.memory_space<vmem>>, vector<256x64xbf16>
    tpu.vector_store %arg5[%c0_11, %c0_12], %39 {strides = array<i32>} : memref<256x64xbf16, #tpu.memory_space<vmem>>, vector<256x64xbf16>,
    return
  }
  func.func @transform_0(%arg0: i32, %arg1: memref<1xi32, #tpu.memory_space<smem>>) -> (i32, i32) {
    %c0_i32 = arith.constant 0 : i32
    %c0_i32_0 = arith.constant 0 : i32
    return %arg0, %c0_i32 : i32, i32
  }
  func.func @transform_1(%arg0: i32, %arg1: memref<1xi32, #tpu.memory_space<smem>>) -> (i32, i32) {
    %c0_i32 = arith.constant 0 : i32
    %c0_i32_0 = arith.constant 0 : i32
    %c0_i32_1 = arith.constant 0 : i32
    return %c0_i32, %c0_i32_0 : i32, i32
  }
  func.func @transform_2(%arg0: i32, %arg1: memref<1xi32, #tpu.memory_space<smem>>) -> (i32, i32) {
    %c0_i32 = arith.constant 0 : i32
    %c0_i32_0 = arith.constant 0 : i32
    %c0_i32_1 = arith.constant 0 : i32
    return %c0_i32, %c0_i32_0 : i32, i32
  }
  func.func @transform_3(%arg0: i32, %arg1: memref<1xi32, #tpu.memory_space<smem>>) -> (i32, i32) {
    %c0_i32 = arith.constant 0 : i32
    %c0_i32_0 = arith.constant 0 : i32
    return %arg0, %c0_i32 : i32, i32
  }
}

module attributes {stable_mosaic.version = 11 : i64} {
  func.func @_gemm_stats_kernel(%arg0: i32, %arg1: memref<64x576xbf16, #tpu.memory_space<vmem>>, %arg2: memref<576x128xbf16, #tpu.memory_space<vmem>>, %arg3: memref<64x128xbf16, #tpu.memory_space<vmem>>, %arg4: memref<1x2x128xf32, #tpu.memory_space<vmem>>) attributes {dimension_semantics = [#tpu.dimension_semantics<parallel>], iteration_bounds = array<i64: 2>, scalar_prefetch = 0 : i64, scratch_operands = 0 : i64, tpu.core_type = #tpu.core_type<tc>, window_params = [{transform_indices = @transform_0, window_bounds = array<i64: 64, 576>}, {pipeline_mode = #tpu.pipeline_mode<synchronous>, transform_indices = @transform_1, window_bounds = array<i64: 576, 128>}, {transform_indices = @transform_2, window_bounds = array<i64: 64, 128>}, {transform_indices = @transform_3, window_bounds = array<i64: 1, 2, 128>}]} {
    %c0 = arith.constant 0 : index
    %c0_0 = arith.constant 0 : index
    %0 = vector.load %arg1[%c0, %c0_0] : memref<64x576xbf16, #tpu.memory_space<vmem>>, vector<64x576xbf16>
    %c0_1 = arith.constant 0 : index
    %c0_2 = arith.constant 0 : index
    %1 = vector.load %arg2[%c0_1, %c0_2] : memref<576x128xbf16, #tpu.memory_space<vmem>>, vector<576x128xbf16>
    %cst = arith.constant dense<0.000000e+00> : vector<64x128xf32>
    %2 = tpu.matmul %0, %1, %cst {dimension_numbers = #tpu.dot_dimension_numbers<[1], [0], [0], [1], [0, 0, 1, 1], [], []>} : vector<64x576xbf16>, vector<576x128xbf16>, vector<64x128xf32> -> vector<64x128xf32>
    %cst_3 = arith.constant dense<0.000000e+00> : vector<128xf32>
    %3 = vector.multi_reduction <add>, %2, %cst_3 [0] : vector<64x128xf32> to vector<128xf32>
    %4 = vector.shape_cast %3 : vector<128xf32> to vector<1x128xf32>
    %5 = arith.mulf %2, %2 : vector<64x128xf32>
    %cst_4 = arith.constant dense<0.000000e+00> : vector<128xf32>
    %6 = vector.multi_reduction <add>, %5, %cst_4 [0] : vector<64x128xf32> to vector<128xf32>
    %7 = vector.shape_cast %6 : vector<128xf32> to vector<1x128xf32>
    %8 = tpu.concatenate %4, %7 in 0 : vector<1x128xf32>, vector<1x128xf32> -> vector<2x128xf32>
    %9 = vector.shape_cast %8 : vector<2x128xf32> to vector<1x2x128xf32>
    %c0_5 = arith.constant 0 : index
    %c0_6 = arith.constant 0 : index
    %c0_7 = arith.constant 0 : index
    %10 = vector.load %arg4[%c0_5, %c0_6, %c0_7] : memref<1x2x128xf32, #tpu.memory_space<vmem>>, vector<1x2x128xf32>
    tpu.vector_store %arg4[%c0_5, %c0_6, %c0_7], %9 {strides = array<i32>} : memref<1x2x128xf32, #tpu.memory_space<vmem>>, vector<1x2x128xf32>,
    %11 = arith.truncf %2 : vector<64x128xf32> to vector<64x128xbf16>
    %c0_8 = arith.constant 0 : index
    %c0_9 = arith.constant 0 : index
    %12 = vector.load %arg3[%c0_8, %c0_9] : memref<64x128xbf16, #tpu.memory_space<vmem>>, vector<64x128xbf16>
    tpu.vector_store %arg3[%c0_8, %c0_9], %11 {strides = array<i32>} : memref<64x128xbf16, #tpu.memory_space<vmem>>, vector<64x128xbf16>,
    return
  }
  func.func @transform_0(%arg0: i32) -> (i32, i32) {
    %c0_i32 = arith.constant 0 : i32
    %c0_i32_0 = arith.constant 0 : i32
    return %arg0, %c0_i32 : i32, i32
  }
  func.func @transform_1(%arg0: i32) -> (i32, i32) {
    %c0_i32 = arith.constant 0 : i32
    %c0_i32_0 = arith.constant 0 : i32
    %c0_i32_1 = arith.constant 0 : i32
    return %c0_i32, %c0_i32_0 : i32, i32
  }
  func.func @transform_2(%arg0: i32) -> (i32, i32) {
    %c0_i32 = arith.constant 0 : i32
    %c0_i32_0 = arith.constant 0 : i32
    return %arg0, %c0_i32 : i32, i32
  }
  func.func @transform_3(%arg0: i32) -> (i32, i32, i32) {
    %c0_i32 = arith.constant 0 : i32
    %c0_i32_0 = arith.constant 0 : i32
    %c0_i32_1 = arith.constant 0 : i32
    return %arg0, %c0_i32, %c0_i32_0 : i32, i32, i32
  }
}

module attributes {stable_mosaic.version = 11 : i64} {
  func.func @_bn_act_drop_kernel(%arg0: i32, %arg1: memref<1xi32, #tpu.memory_space<smem>>, %arg2: memref<64x128xbf16, #tpu.memory_space<vmem>>, %arg3: memref<2x128xf32, #tpu.memory_space<vmem>>, %arg4: memref<64x128xbf16, #tpu.memory_space<vmem>>) attributes {dimension_semantics = [#tpu.dimension_semantics<parallel>], iteration_bounds = array<i64: 2>, scalar_prefetch = 1 : i64, scratch_operands = 0 : i64, tpu.core_type = #tpu.core_type<tc>, window_params = [{transform_indices = @transform_0, window_bounds = array<i64: 64, 128>}, {pipeline_mode = #tpu.pipeline_mode<synchronous>, transform_indices = @transform_1, window_bounds = array<i64: 2, 128>}, {transform_indices = @transform_2, window_bounds = array<i64: 64, 128>}]} {
    %c0 = arith.constant 0 : index
    %c0_0 = arith.constant 0 : index
    %0 = vector.load %arg2[%c0, %c0_0] : memref<64x128xbf16, #tpu.memory_space<vmem>>, vector<64x128xbf16>
    %1 = arith.extf %0 : vector<64x128xbf16> to vector<64x128xf32>
    %c0_1 = arith.constant 0 : index
    %c0_2 = arith.constant 0 : index
    %2 = vector.load %arg3[%c0_1, %c0_2] : memref<2x128xf32, #tpu.memory_space<vmem>>, vector<1x128xf32>
    %3 = vector.broadcast %2 : vector<1x128xf32> to vector<64x128xf32>
    %4 = arith.mulf %1, %3 : vector<64x128xf32>
    %c1 = arith.constant 1 : index
    %c0_3 = arith.constant 0 : index
    %5 = vector.load %arg3[%c1, %c0_3] : memref<2x128xf32, #tpu.memory_space<vmem>>, vector<1x128xf32>
    %6 = vector.broadcast %5 : vector<1x128xf32> to vector<64x128xf32>
    %7 = arith.addf %4, %6 : vector<64x128xf32>
    %cst = arith.constant 0.000000e+00 : f32
    %8 = vector.broadcast %cst : f32 to vector<64x128xf32>
    %9 = arith.cmpf oge, %7, %8 : vector<64x128xf32>
    %cst_4 = arith.constant 0.00999999977 : f32
    %10 = vector.broadcast %cst_4 : f32 to vector<64x128xf32>
    %11 = arith.mulf %10, %7 : vector<64x128xf32>
    %12 = arith.select %9, %7, %11 : vector<64x128xi1>, vector<64x128xf32>
    %c64_i32 = arith.constant 64 : i32
    %13 = arith.muli %arg0, %c64_i32 : i32
    %c0_5 = arith.constant 0 : index
    %14 = memref.load %arg1[%c0_5] : memref<1xi32, #tpu.memory_space<smem>>
    %15 = tpu.iota {dimensions = array<i32: 0>} : vector<64x128xi32>
    %16 = vector.broadcast %13 : i32 to vector<64x128xi32>
    %17 = arith.addi %15, %16 : vector<64x128xi32>
    %18 = tpu.iota {dimensions = array<i32: 1>} : vector<64x128xi32>
    %c-1640531535_i32 = arith.constant -1640531535 : i32
    %19 = vector.broadcast %c-1640531535_i32 : i32 to vector<64x128xi32>
    %20 = arith.muli %17, %19 : vector<64x128xi32>
    %21 = arith.addi %20, %18 : vector<64x128xi32>
    %22 = vector.broadcast %14 : i32 to vector<64x128xi32>
    %23 = arith.addi %21, %22 : vector<64x128xi32>
    %c16_i32 = arith.constant 16 : i32
    %24 = vector.broadcast %c16_i32 : i32 to vector<64x128xi32>
    %25 = arith.shrui %23, %24 : vector<64x128xi32>
    %26 = arith.xori %23, %25 : vector<64x128xi32>
    %c2146121005_i32 = arith.constant 2146121005 : i32
    %27 = vector.broadcast %c2146121005_i32 : i32 to vector<64x128xi32>
    %28 = arith.muli %26, %27 : vector<64x128xi32>
    %c15_i32 = arith.constant 15 : i32
    %29 = vector.broadcast %c15_i32 : i32 to vector<64x128xi32>
    %30 = arith.shrui %28, %29 : vector<64x128xi32>
    %31 = arith.xori %28, %30 : vector<64x128xi32>
    %c858993459_i32 = arith.constant 858993459 : i32
    %32 = vector.broadcast %c858993459_i32 : i32 to vector<64x128xi32>
    %33 = arith.cmpi uge, %31, %32 : vector<64x128xi32>
    %cst_6 = arith.constant 1.250000e+00 : f32
    %34 = vector.broadcast %cst_6 : f32 to vector<64x128xf32>
    %35 = arith.mulf %12, %34 : vector<64x128xf32>
    %cst_7 = arith.constant 0.000000e+00 : f32
    %36 = vector.broadcast %cst_7 : f32 to vector<64x128xf32>
    %37 = arith.select %33, %35, %36 : vector<64x128xi1>, vector<64x128xf32>
    %38 = arith.truncf %37 : vector<64x128xf32> to vector<64x128xbf16>
    %c0_8 = arith.constant 0 : index
    %c0_9 = arith.constant 0 : index
    %39 = vector.load %arg4[%c0_8, %c0_9] : memref<64x128xbf16, #tpu.memory_space<vmem>>, vector<64x128xbf16>
    tpu.vector_store %arg4[%c0_8, %c0_9], %38 {strides = array<i32>} : memref<64x128xbf16, #tpu.memory_space<vmem>>, vector<64x128xbf16>,
    return
  }
  func.func @transform_0(%arg0: i32, %arg1: memref<1xi32, #tpu.memory_space<smem>>) -> (i32, i32) {
    %c0_i32 = arith.constant 0 : i32
    %c0_i32_0 = arith.constant 0 : i32
    return %arg0, %c0_i32 : i32, i32
  }
  func.func @transform_1(%arg0: i32, %arg1: memref<1xi32, #tpu.memory_space<smem>>) -> (i32, i32) {
    %c0_i32 = arith.constant 0 : i32
    %c0_i32_0 = arith.constant 0 : i32
    %c0_i32_1 = arith.constant 0 : i32
    return %c0_i32, %c0_i32_0 : i32, i32
  }
  func.func @transform_2(%arg0: i32, %arg1: memref<1xi32, #tpu.memory_space<smem>>) -> (i32, i32) {
    %c0_i32 = arith.constant 0 : i32
    %c0_i32_0 = arith.constant 0 : i32
    return %arg0, %c0_i32 : i32, i32
  }
}

module attributes {stable_mosaic.version = 11 : i64} {
  func.func @_gemm_stats_kernel(%arg0: i32, %arg1: memref<16x1152xbf16, #tpu.memory_space<vmem>>, %arg2: memref<1152x256xbf16, #tpu.memory_space<vmem>>, %arg3: memref<16x256xbf16, #tpu.memory_space<vmem>>, %arg4: memref<1x2x256xf32, #tpu.memory_space<vmem>>) attributes {dimension_semantics = [#tpu.dimension_semantics<parallel>], iteration_bounds = array<i64: 2>, scalar_prefetch = 0 : i64, scratch_operands = 0 : i64, tpu.core_type = #tpu.core_type<tc>, window_params = [{transform_indices = @transform_0, window_bounds = array<i64: 16, 1152>}, {pipeline_mode = #tpu.pipeline_mode<synchronous>, transform_indices = @transform_1, window_bounds = array<i64: 1152, 256>}, {transform_indices = @transform_2, window_bounds = array<i64: 16, 256>}, {transform_indices = @transform_3, window_bounds = array<i64: 1, 2, 256>}]} {
    %c0 = arith.constant 0 : index
    %c0_0 = arith.constant 0 : index
    %0 = vector.load %arg1[%c0, %c0_0] : memref<16x1152xbf16, #tpu.memory_space<vmem>>, vector<16x1152xbf16>
    %c0_1 = arith.constant 0 : index
    %c0_2 = arith.constant 0 : index
    %1 = vector.load %arg2[%c0_1, %c0_2] : memref<1152x256xbf16, #tpu.memory_space<vmem>>, vector<1152x256xbf16>
    %cst = arith.constant dense<0.000000e+00> : vector<16x256xf32>
    %2 = tpu.matmul %0, %1, %cst {dimension_numbers = #tpu.dot_dimension_numbers<[1], [0], [0], [1], [0, 0, 1, 1], [], []>} : vector<16x1152xbf16>, vector<1152x256xbf16>, vector<16x256xf32> -> vector<16x256xf32>
    %cst_3 = arith.constant dense<0.000000e+00> : vector<256xf32>
    %3 = vector.multi_reduction <add>, %2, %cst_3 [0] : vector<16x256xf32> to vector<256xf32>
    %4 = vector.shape_cast %3 : vector<256xf32> to vector<1x256xf32>
    %5 = arith.mulf %2, %2 : vector<16x256xf32>
    %cst_4 = arith.constant dense<0.000000e+00> : vector<256xf32>
    %6 = vector.multi_reduction <add>, %5, %cst_4 [0] : vector<16x256xf32> to vector<256xf32>
    %7 = vector.shape_cast %6 : vector<256xf32> to vector<1x256xf32>
    %8 = tpu.concatenate %4, %7 in 0 : vector<1x256xf32>, vector<1x256xf32> -> vector<2x256xf32>
    %9 = vector.shape_cast %8 : vector<2x256xf32> to vector<1x2x256xf32>
    %c0_5 = arith.constant 0 : index
    %c0_6 = arith.constant 0 : index
    %c0_7 = arith.constant 0 : index
    %10 = vector.load %arg4[%c0_5, %c0_6, %c0_7] : memref<1x2x256xf32, #tpu.memory_space<vmem>>, vector<1x2x256xf32>
    tpu.vector_store %arg4[%c0_5, %c0_6, %c0_7], %9 {strides = array<i32>} : memref<1x2x256xf32, #tpu.memory_space<vmem>>, vector<1x2x256xf32>,
    %11 = arith.truncf %2 : vector<16x256xf32> to vector<16x256xbf16>
    %c0_8 = arith.constant 0 : index
    %c0_9 = arith.constant 0 : index
    %12 = vector.load %arg3[%c0_8, %c0_9] : memref<16x256xbf16, #tpu.memory_space<vmem>>, vector<16x256xbf16>
    tpu.vector_store %arg3[%c0_8, %c0_9], %11 {strides = array<i32>} : memref<16x256xbf16, #tpu.memory_space<vmem>>, vector<16x256xbf16>,
    return
  }
  func.func @transform_0(%arg0: i32) -> (i32, i32) {
    %c0_i32 = arith.constant 0 : i32
    %c0_i32_0 = arith.constant 0 : i32
    return %arg0, %c0_i32 : i32, i32
  }
  func.func @transform_1(%arg0: i32) -> (i32, i32) {
    %c0_i32 = arith.constant 0 : i32
    %c0_i32_0 = arith.constant 0 : i32
    %c0_i32_1 = arith.constant 0 : i32
    return %c0_i32, %c0_i32_0 : i32, i32
  }
  func.func @transform_2(%arg0: i32) -> (i32, i32) {
    %c0_i32 = arith.constant 0 : i32
    %c0_i32_0 = arith.constant 0 : i32
    return %arg0, %c0_i32 : i32, i32
  }
  func.func @transform_3(%arg0: i32) -> (i32, i32, i32) {
    %c0_i32 = arith.constant 0 : i32
    %c0_i32_0 = arith.constant 0 : i32
    %c0_i32_1 = arith.constant 0 : i32
    return %arg0, %c0_i32, %c0_i32_0 : i32, i32, i32
  }
}

module attributes {stable_mosaic.version = 11 : i64} {
  func.func @_bn_act_drop_kernel(%arg0: i32, %arg1: memref<1xi32, #tpu.memory_space<smem>>, %arg2: memref<16x256xbf16, #tpu.memory_space<vmem>>, %arg3: memref<2x256xf32, #tpu.memory_space<vmem>>, %arg4: memref<16x256xbf16, #tpu.memory_space<vmem>>) attributes {dimension_semantics = [#tpu.dimension_semantics<parallel>], iteration_bounds = array<i64: 2>, scalar_prefetch = 1 : i64, scratch_operands = 0 : i64, tpu.core_type = #tpu.core_type<tc>, window_params = [{transform_indices = @transform_0, window_bounds = array<i64: 16, 256>}, {pipeline_mode = #tpu.pipeline_mode<synchronous>, transform_indices = @transform_1, window_bounds = array<i64: 2, 256>}, {transform_indices = @transform_2, window_bounds = array<i64: 16, 256>}]} {
    %c0 = arith.constant 0 : index
    %c0_0 = arith.constant 0 : index
    %0 = vector.load %arg2[%c0, %c0_0] : memref<16x256xbf16, #tpu.memory_space<vmem>>, vector<16x256xbf16>
    %1 = arith.extf %0 : vector<16x256xbf16> to vector<16x256xf32>
    %c0_1 = arith.constant 0 : index
    %c0_2 = arith.constant 0 : index
    %2 = vector.load %arg3[%c0_1, %c0_2] : memref<2x256xf32, #tpu.memory_space<vmem>>, vector<1x256xf32>
    %3 = vector.broadcast %2 : vector<1x256xf32> to vector<16x256xf32>
    %4 = arith.mulf %1, %3 : vector<16x256xf32>
    %c1 = arith.constant 1 : index
    %c0_3 = arith.constant 0 : index
    %5 = vector.load %arg3[%c1, %c0_3] : memref<2x256xf32, #tpu.memory_space<vmem>>, vector<1x256xf32>
    %6 = vector.broadcast %5 : vector<1x256xf32> to vector<16x256xf32>
    %7 = arith.addf %4, %6 : vector<16x256xf32>
    %cst = arith.constant 0.000000e+00 : f32
    %8 = vector.broadcast %cst : f32 to vector<16x256xf32>
    %9 = arith.cmpf oge, %7, %8 : vector<16x256xf32>
    %cst_4 = arith.constant 0.00999999977 : f32
    %10 = vector.broadcast %cst_4 : f32 to vector<16x256xf32>
    %11 = arith.mulf %10, %7 : vector<16x256xf32>
    %12 = arith.select %9, %7, %11 : vector<16x256xi1>, vector<16x256xf32>
    %c16_i32 = arith.constant 16 : i32
    %13 = arith.muli %arg0, %c16_i32 : i32
    %c0_5 = arith.constant 0 : index
    %14 = memref.load %arg1[%c0_5] : memref<1xi32, #tpu.memory_space<smem>>
    %15 = tpu.iota {dimensions = array<i32: 0>} : vector<16x256xi32>
    %16 = vector.broadcast %13 : i32 to vector<16x256xi32>
    %17 = arith.addi %15, %16 : vector<16x256xi32>
    %18 = tpu.iota {dimensions = array<i32: 1>} : vector<16x256xi32>
    %c-1640531535_i32 = arith.constant -1640531535 : i32
    %19 = vector.broadcast %c-1640531535_i32 : i32 to vector<16x256xi32>
    %20 = arith.muli %17, %19 : vector<16x256xi32>
    %21 = arith.addi %20, %18 : vector<16x256xi32>
    %22 = vector.broadcast %14 : i32 to vector<16x256xi32>
    %23 = arith.addi %21, %22 : vector<16x256xi32>
    %c16_i32_6 = arith.constant 16 : i32
    %24 = vector.broadcast %c16_i32_6 : i32 to vector<16x256xi32>
    %25 = arith.shrui %23, %24 : vector<16x256xi32>
    %26 = arith.xori %23, %25 : vector<16x256xi32>
    %c2146121005_i32 = arith.constant 2146121005 : i32
    %27 = vector.broadcast %c2146121005_i32 : i32 to vector<16x256xi32>
    %28 = arith.muli %26, %27 : vector<16x256xi32>
    %c15_i32 = arith.constant 15 : i32
    %29 = vector.broadcast %c15_i32 : i32 to vector<16x256xi32>
    %30 = arith.shrui %28, %29 : vector<16x256xi32>
    %31 = arith.xori %28, %30 : vector<16x256xi32>
    %c858993459_i32 = arith.constant 858993459 : i32
    %32 = vector.broadcast %c858993459_i32 : i32 to vector<16x256xi32>
    %33 = arith.cmpi uge, %31, %32 : vector<16x256xi32>
    %cst_7 = arith.constant 1.250000e+00 : f32
    %34 = vector.broadcast %cst_7 : f32 to vector<16x256xf32>
    %35 = arith.mulf %12, %34 : vector<16x256xf32>
    %cst_8 = arith.constant 0.000000e+00 : f32
    %36 = vector.broadcast %cst_8 : f32 to vector<16x256xf32>
    %37 = arith.select %33, %35, %36 : vector<16x256xi1>, vector<16x256xf32>
    %38 = arith.truncf %37 : vector<16x256xf32> to vector<16x256xbf16>
    %c0_9 = arith.constant 0 : index
    %c0_10 = arith.constant 0 : index
    %39 = vector.load %arg4[%c0_9, %c0_10] : memref<16x256xbf16, #tpu.memory_space<vmem>>, vector<16x256xbf16>
    tpu.vector_store %arg4[%c0_9, %c0_10], %38 {strides = array<i32>} : memref<16x256xbf16, #tpu.memory_space<vmem>>, vector<16x256xbf16>,
    return
  }
  func.func @transform_0(%arg0: i32, %arg1: memref<1xi32, #tpu.memory_space<smem>>) -> (i32, i32) {
    %c0_i32 = arith.constant 0 : i32
    %c0_i32_0 = arith.constant 0 : i32
    return %arg0, %c0_i32 : i32, i32
  }
  func.func @transform_1(%arg0: i32, %arg1: memref<1xi32, #tpu.memory_space<smem>>) -> (i32, i32) {
    %c0_i32 = arith.constant 0 : i32
    %c0_i32_0 = arith.constant 0 : i32
    %c0_i32_1 = arith.constant 0 : i32
    return %c0_i32, %c0_i32_0 : i32, i32
  }
  func.func @transform_2(%arg0: i32, %arg1: memref<1xi32, #tpu.memory_space<smem>>) -> (i32, i32) {
    %c0_i32 = arith.constant 0 : i32
    %c0_i32_0 = arith.constant 0 : i32
    return %arg0, %c0_i32 : i32, i32
  }
}

module attributes {stable_mosaic.version = 11 : i64} {
  func.func @_gemm_stats_kernel(%arg0: i32, %arg1: memref<8x2304xbf16, #tpu.memory_space<vmem>>, %arg2: memref<2304x512xbf16, #tpu.memory_space<vmem>>, %arg3: memref<8x512xbf16, #tpu.memory_space<vmem>>, %arg4: memref<1x2x512xf32, #tpu.memory_space<vmem>>) attributes {dimension_semantics = [#tpu.dimension_semantics<parallel>], iteration_bounds = array<i64: 1>, scalar_prefetch = 0 : i64, scratch_operands = 0 : i64, tpu.core_type = #tpu.core_type<tc>, window_params = [{transform_indices = @transform_0, window_bounds = array<i64: 8, 2304>}, {pipeline_mode = #tpu.pipeline_mode<synchronous>, transform_indices = @transform_1, window_bounds = array<i64: 2304, 512>}, {transform_indices = @transform_2, window_bounds = array<i64: 8, 512>}, {transform_indices = @transform_3, window_bounds = array<i64: 1, 2, 512>}]} {
    %c0 = arith.constant 0 : index
    %c0_0 = arith.constant 0 : index
    %0 = vector.load %arg1[%c0, %c0_0] : memref<8x2304xbf16, #tpu.memory_space<vmem>>, vector<8x2304xbf16>
    %c0_1 = arith.constant 0 : index
    %c0_2 = arith.constant 0 : index
    %1 = vector.load %arg2[%c0_1, %c0_2] : memref<2304x512xbf16, #tpu.memory_space<vmem>>, vector<2304x512xbf16>
    %cst = arith.constant dense<0.000000e+00> : vector<8x512xf32>
    %2 = tpu.matmul %0, %1, %cst {dimension_numbers = #tpu.dot_dimension_numbers<[1], [0], [0], [1], [0, 0, 1, 1], [], []>} : vector<8x2304xbf16>, vector<2304x512xbf16>, vector<8x512xf32> -> vector<8x512xf32>
    %cst_3 = arith.constant dense<0.000000e+00> : vector<512xf32>
    %3 = vector.multi_reduction <add>, %2, %cst_3 [0] : vector<8x512xf32> to vector<512xf32>
    %4 = vector.shape_cast %3 : vector<512xf32> to vector<1x512xf32>
    %5 = arith.mulf %2, %2 : vector<8x512xf32>
    %cst_4 = arith.constant dense<0.000000e+00> : vector<512xf32>
    %6 = vector.multi_reduction <add>, %5, %cst_4 [0] : vector<8x512xf32> to vector<512xf32>
    %7 = vector.shape_cast %6 : vector<512xf32> to vector<1x512xf32>
    %8 = tpu.concatenate %4, %7 in 0 : vector<1x512xf32>, vector<1x512xf32> -> vector<2x512xf32>
    %9 = vector.shape_cast %8 : vector<2x512xf32> to vector<1x2x512xf32>
    %c0_5 = arith.constant 0 : index
    %c0_6 = arith.constant 0 : index
    %c0_7 = arith.constant 0 : index
    %10 = vector.load %arg4[%c0_5, %c0_6, %c0_7] : memref<1x2x512xf32, #tpu.memory_space<vmem>>, vector<1x2x512xf32>
    tpu.vector_store %arg4[%c0_5, %c0_6, %c0_7], %9 {strides = array<i32>} : memref<1x2x512xf32, #tpu.memory_space<vmem>>, vector<1x2x512xf32>,
    %11 = arith.truncf %2 : vector<8x512xf32> to vector<8x512xbf16>
    %c0_8 = arith.constant 0 : index
    %c0_9 = arith.constant 0 : index
    %12 = vector.load %arg3[%c0_8, %c0_9] : memref<8x512xbf16, #tpu.memory_space<vmem>>, vector<8x512xbf16>
    tpu.vector_store %arg3[%c0_8, %c0_9], %11 {strides = array<i32>} : memref<8x512xbf16, #tpu.memory_space<vmem>>, vector<8x512xbf16>,
    return
  }
  func.func @transform_0(%arg0: i32) -> (i32, i32) {
    %c0_i32 = arith.constant 0 : i32
    %c0_i32_0 = arith.constant 0 : i32
    return %arg0, %c0_i32 : i32, i32
  }
  func.func @transform_1(%arg0: i32) -> (i32, i32) {
    %c0_i32 = arith.constant 0 : i32
    %c0_i32_0 = arith.constant 0 : i32
    %c0_i32_1 = arith.constant 0 : i32
    return %c0_i32, %c0_i32_0 : i32, i32
  }
  func.func @transform_2(%arg0: i32) -> (i32, i32) {
    %c0_i32 = arith.constant 0 : i32
    %c0_i32_0 = arith.constant 0 : i32
    return %arg0, %c0_i32 : i32, i32
  }
  func.func @transform_3(%arg0: i32) -> (i32, i32, i32) {
    %c0_i32 = arith.constant 0 : i32
    %c0_i32_0 = arith.constant 0 : i32
    %c0_i32_1 = arith.constant 0 : i32
    return %arg0, %c0_i32, %c0_i32_0 : i32, i32, i32
  }
}

module attributes {stable_mosaic.version = 11 : i64} {
  func.func @_bn_act_drop_kernel(%arg0: i32, %arg1: memref<1xi32, #tpu.memory_space<smem>>, %arg2: memref<8x512xbf16, #tpu.memory_space<vmem>>, %arg3: memref<2x512xf32, #tpu.memory_space<vmem>>, %arg4: memref<8x512xbf16, #tpu.memory_space<vmem>>) attributes {dimension_semantics = [#tpu.dimension_semantics<parallel>], iteration_bounds = array<i64: 1>, scalar_prefetch = 1 : i64, scratch_operands = 0 : i64, tpu.core_type = #tpu.core_type<tc>, window_params = [{transform_indices = @transform_0, window_bounds = array<i64: 8, 512>}, {pipeline_mode = #tpu.pipeline_mode<synchronous>, transform_indices = @transform_1, window_bounds = array<i64: 2, 512>}, {transform_indices = @transform_2, window_bounds = array<i64: 8, 512>}]} {
    %c0 = arith.constant 0 : index
    %c0_0 = arith.constant 0 : index
    %0 = vector.load %arg2[%c0, %c0_0] : memref<8x512xbf16, #tpu.memory_space<vmem>>, vector<8x512xbf16>
    %1 = arith.extf %0 : vector<8x512xbf16> to vector<8x512xf32>
    %c0_1 = arith.constant 0 : index
    %c0_2 = arith.constant 0 : index
    %2 = vector.load %arg3[%c0_1, %c0_2] : memref<2x512xf32, #tpu.memory_space<vmem>>, vector<1x512xf32>
    %3 = vector.broadcast %2 : vector<1x512xf32> to vector<8x512xf32>
    %4 = arith.mulf %1, %3 : vector<8x512xf32>
    %c1 = arith.constant 1 : index
    %c0_3 = arith.constant 0 : index
    %5 = vector.load %arg3[%c1, %c0_3] : memref<2x512xf32, #tpu.memory_space<vmem>>, vector<1x512xf32>
    %6 = vector.broadcast %5 : vector<1x512xf32> to vector<8x512xf32>
    %7 = arith.addf %4, %6 : vector<8x512xf32>
    %cst = arith.constant 0.000000e+00 : f32
    %8 = vector.broadcast %cst : f32 to vector<8x512xf32>
    %9 = arith.cmpf oge, %7, %8 : vector<8x512xf32>
    %cst_4 = arith.constant 0.00999999977 : f32
    %10 = vector.broadcast %cst_4 : f32 to vector<8x512xf32>
    %11 = arith.mulf %10, %7 : vector<8x512xf32>
    %12 = arith.select %9, %7, %11 : vector<8x512xi1>, vector<8x512xf32>
    %c8_i32 = arith.constant 8 : i32
    %13 = arith.muli %arg0, %c8_i32 : i32
    %c0_5 = arith.constant 0 : index
    %14 = memref.load %arg1[%c0_5] : memref<1xi32, #tpu.memory_space<smem>>
    %15 = tpu.iota {dimensions = array<i32: 0>} : vector<8x512xi32>
    %16 = vector.broadcast %13 : i32 to vector<8x512xi32>
    %17 = arith.addi %15, %16 : vector<8x512xi32>
    %18 = tpu.iota {dimensions = array<i32: 1>} : vector<8x512xi32>
    %c-1640531535_i32 = arith.constant -1640531535 : i32
    %19 = vector.broadcast %c-1640531535_i32 : i32 to vector<8x512xi32>
    %20 = arith.muli %17, %19 : vector<8x512xi32>
    %21 = arith.addi %20, %18 : vector<8x512xi32>
    %22 = vector.broadcast %14 : i32 to vector<8x512xi32>
    %23 = arith.addi %21, %22 : vector<8x512xi32>
    %c16_i32 = arith.constant 16 : i32
    %24 = vector.broadcast %c16_i32 : i32 to vector<8x512xi32>
    %25 = arith.shrui %23, %24 : vector<8x512xi32>
    %26 = arith.xori %23, %25 : vector<8x512xi32>
    %c2146121005_i32 = arith.constant 2146121005 : i32
    %27 = vector.broadcast %c2146121005_i32 : i32 to vector<8x512xi32>
    %28 = arith.muli %26, %27 : vector<8x512xi32>
    %c15_i32 = arith.constant 15 : i32
    %29 = vector.broadcast %c15_i32 : i32 to vector<8x512xi32>
    %30 = arith.shrui %28, %29 : vector<8x512xi32>
    %31 = arith.xori %28, %30 : vector<8x512xi32>
    %c858993459_i32 = arith.constant 858993459 : i32
    %32 = vector.broadcast %c858993459_i32 : i32 to vector<8x512xi32>
    %33 = arith.cmpi uge, %31, %32 : vector<8x512xi32>
    %cst_6 = arith.constant 1.250000e+00 : f32
    %34 = vector.broadcast %cst_6 : f32 to vector<8x512xf32>
    %35 = arith.mulf %12, %34 : vector<8x512xf32>
    %cst_7 = arith.constant 0.000000e+00 : f32
    %36 = vector.broadcast %cst_7 : f32 to vector<8x512xf32>
    %37 = arith.select %33, %35, %36 : vector<8x512xi1>, vector<8x512xf32>
    %38 = arith.truncf %37 : vector<8x512xf32> to vector<8x512xbf16>
    %c0_8 = arith.constant 0 : index
    %c0_9 = arith.constant 0 : index
    %39 = vector.load %arg4[%c0_8, %c0_9] : memref<8x512xbf16, #tpu.memory_space<vmem>>, vector<8x512xbf16>
    tpu.vector_store %arg4[%c0_8, %c0_9], %38 {strides = array<i32>} : memref<8x512xbf16, #tpu.memory_space<vmem>>, vector<8x512xbf16>,
    return
  }
  func.func @transform_0(%arg0: i32, %arg1: memref<1xi32, #tpu.memory_space<smem>>) -> (i32, i32) {
    %c0_i32 = arith.constant 0 : i32
    %c0_i32_0 = arith.constant 0 : i32
    return %arg0, %c0_i32 : i32, i32
  }
  func.func @transform_1(%arg0: i32, %arg1: memref<1xi32, #tpu.memory_space<smem>>) -> (i32, i32) {
    %c0_i32 = arith.constant 0 : i32
    %c0_i32_0 = arith.constant 0 : i32
    %c0_i32_1 = arith.constant 0 : i32
    return %c0_i32, %c0_i32_0 : i32, i32
  }
  func.func @transform_2(%arg0: i32, %arg1: memref<1xi32, #tpu.memory_space<smem>>) -> (i32, i32) {
    %c0_i32 = arith.constant 0 : i32
    %c0_i32_0 = arith.constant 0 : i32
    return %arg0, %c0_i32 : i32, i32
  }
}

module attributes {stable_mosaic.version = 11 : i64} {
  func.func @_linear_heads_kernel(%arg0: i32, %arg1: memref<2x2048xbf16, #tpu.memory_space<vmem>>, %arg2: memref<2048x128xbf16, #tpu.memory_space<vmem>>, %arg3: memref<2x128xf32, #tpu.memory_space<vmem>>, %arg4: memref<2x128xf32, #tpu.memory_space<vmem>>) attributes {dimension_semantics = [#tpu.dimension_semantics<arbitrary>], iteration_bounds = array<i64: 1>, scalar_prefetch = 0 : i64, scratch_operands = 0 : i64, tpu.core_type = #tpu.core_type<tc>, window_params = [{pipeline_mode = #tpu.pipeline_mode<synchronous>, transform_indices = @transform_0, window_bounds = array<i64: 2, 2048>}, {pipeline_mode = #tpu.pipeline_mode<synchronous>, transform_indices = @transform_1, window_bounds = array<i64: 2048, 128>}, {pipeline_mode = #tpu.pipeline_mode<synchronous>, transform_indices = @transform_2, window_bounds = array<i64: 2, 128>}, {pipeline_mode = #tpu.pipeline_mode<synchronous>, transform_indices = @transform_3, window_bounds = array<i64: 2, 128>}]} {
    %c0 = arith.constant 0 : index
    %c0_0 = arith.constant 0 : index
    %0 = vector.load %arg1[%c0, %c0_0] : memref<2x2048xbf16, #tpu.memory_space<vmem>>, vector<2x2048xbf16>
    %c0_1 = arith.constant 0 : index
    %c0_2 = arith.constant 0 : index
    %1 = vector.load %arg2[%c0_1, %c0_2] : memref<2048x128xbf16, #tpu.memory_space<vmem>>, vector<2048x128xbf16>
    %cst = arith.constant dense<0.000000e+00> : vector<2x128xf32>
    %2 = tpu.matmul %0, %1, %cst {dimension_numbers = #tpu.dot_dimension_numbers<[1], [0], [0], [1], [0, 0, 1, 1], [], []>} : vector<2x2048xbf16>, vector<2048x128xbf16>, vector<2x128xf32> -> vector<2x128xf32>
    %cst_3 = arith.constant dense<0.000000e+00> : vector<128xf32>
    %3 = vector.multi_reduction <add>, %2, %cst_3 [0] : vector<2x128xf32> to vector<128xf32>
    %4 = vector.shape_cast %3 : vector<128xf32> to vector<1x128xf32>
    %cst_4 = arith.constant 2.000000e+00 : f32
    %5 = vector.broadcast %cst_4 : f32 to vector<1x128xf32>
    %6 = arith.divf %4, %5 : vector<1x128xf32>
    %7 = arith.mulf %2, %2 : vector<2x128xf32>
    %cst_5 = arith.constant dense<0.000000e+00> : vector<128xf32>
    %8 = vector.multi_reduction <add>, %7, %cst_5 [0] : vector<2x128xf32> to vector<128xf32>
    %9 = vector.shape_cast %8 : vector<128xf32> to vector<1x128xf32>
    %cst_6 = arith.constant 2.000000e+00 : f32
    %10 = vector.broadcast %cst_6 : f32 to vector<1x128xf32>
    %11 = arith.divf %9, %10 : vector<1x128xf32>
    %12 = arith.mulf %6, %6 : vector<1x128xf32>
    %13 = arith.subf %11, %12 : vector<1x128xf32>
    %cst_7 = arith.constant 0.000000e+00 : f32
    %14 = vector.broadcast %cst_7 : f32 to vector<1x128xf32>
    %15 = arith.maximumf %13, %14 : vector<1x128xf32>
    %cst_8 = arith.constant 9.99999974E-6 : f32
    %16 = vector.broadcast %cst_8 : f32 to vector<1x128xf32>
    %17 = arith.addf %15, %16 : vector<1x128xf32>
    %18 = math.rsqrt %17 : vector<1x128xf32>
    %c0_9 = arith.constant 0 : index
    %c0_10 = arith.constant 0 : index
    %19 = vector.load %arg3[%c0_9, %c0_10] : memref<2x128xf32, #tpu.memory_space<vmem>>, vector<1x128xf32>
    %20 = arith.mulf %18, %19 : vector<1x128xf32>
    %21 = vector.broadcast %20 : vector<1x128xf32> to vector<2x128xf32>
    %22 = arith.mulf %2, %21 : vector<2x128xf32>
    %c1 = arith.constant 1 : index
    %c0_11 = arith.constant 0 : index
    %23 = vector.load %arg3[%c1, %c0_11] : memref<2x128xf32, #tpu.memory_space<vmem>>, vector<1x128xf32>
    %24 = arith.mulf %6, %20 : vector<1x128xf32>
    %25 = arith.subf %23, %24 : vector<1x128xf32>
    %26 = vector.broadcast %25 : vector<1x128xf32> to vector<2x128xf32>
    %27 = arith.addf %22, %26 : vector<2x128xf32>
    %cst_12 = arith.constant 0.000000e+00 : f32
    %28 = vector.broadcast %cst_12 : f32 to vector<2x128xf32>
    %29 = arith.cmpf oge, %27, %28 : vector<2x128xf32>
    %cst_13 = arith.constant 0.00999999977 : f32
    %30 = vector.broadcast %cst_13 : f32 to vector<2x128xf32>
    %31 = arith.mulf %30, %27 : vector<2x128xf32>
    %32 = arith.select %29, %27, %31 : vector<2x128xi1>, vector<2x128xf32>
    %33 = tpu.iota {dimensions = array<i32: 1>} : vector<2x128xi32>
    %c32_i32 = arith.constant 32 : i32
    %34 = vector.broadcast %c32_i32 : i32 to vector<2x128xi32>
    %35 = arith.cmpi sge, %33, %34 : vector<2x128xi32>
    %c64_i32 = arith.constant 64 : i32
    %36 = vector.broadcast %c64_i32 : i32 to vector<2x128xi32>
    %37 = arith.cmpi slt, %33, %36 : vector<2x128xi32>
    %38 = arith.andi %35, %37 : vector<2x128xi1>
    %cst_14 = arith.constant 5.000000e-01 : f32
    %39 = vector.broadcast %cst_14 : f32 to vector<2x128xf32>
    %40 = arith.mulf %39, %32 : vector<2x128xf32>
    %41 = math.exp %40 : vector<2x128xf32>
    %42 = arith.select %38, %41, %32 : vector<2x128xi1>, vector<2x128xf32>
    %c0_15 = arith.constant 0 : index
    %c0_16 = arith.constant 0 : index
    %43 = vector.load %arg4[%c0_15, %c0_16] : memref<2x128xf32, #tpu.memory_space<vmem>>, vector<2x128xf32>
    tpu.vector_store %arg4[%c0_15, %c0_16], %42 {strides = array<i32>} : memref<2x128xf32, #tpu.memory_space<vmem>>, vector<2x128xf32>,
    return
  }
  func.func @transform_0(%arg0: i32) -> (i32, i32) {
    %c0_i32 = arith.constant 0 : i32
    %c0_i32_0 = arith.constant 0 : i32
    %c0_i32_1 = arith.constant 0 : i32
    return %c0_i32, %c0_i32_0 : i32, i32
  }
  func.func @transform_1(%arg0: i32) -> (i32, i32) {
    %c0_i32 = arith.constant 0 : i32
    %c0_i32_0 = arith.constant 0 : i32
    %c0_i32_1 = arith.constant 0 : i32
    return %c0_i32, %c0_i32_0 : i32, i32
  }
  func.func @transform_2(%arg0: i32) -> (i32, i32) {
    %c0_i32 = arith.constant 0 : i32
    %c0_i32_0 = arith.constant 0 : i32
    %c0_i32_1 = arith.constant 0 : i32
    return %c0_i32, %c0_i32_0 : i32, i32
  }
  func.func @transform_3(%arg0: i32) -> (i32, i32) {
    %c0_i32 = arith.constant 0 : i32
    %c0_i32_0 = arith.constant 0 : i32
    %c0_i32_1 = arith.constant 0 : i32
    return %c0_i32, %c0_i32_0 : i32, i32
  }
}

</mosaic_0001>

<llo_original>
// kernel: encoder_forward.9
$region0: #{encoder_forward.9}
  #allocation0 [shape = 'u32[]', space=smem, size = 0x4, offset = 0x4, fixed_abs, tag = 'smem constant byte address 0x4 - core index']
  #allocation1 [shape = 'u32[72,128]{1,0:T(1,128)}', space=vmem, size = 0x9000, scoped, tag = 'internal scratch']
  %s0 = inlined_call_operand.vmem [shape: bf16[512,27], index: 0, kind: input, shape index: {}]
  %s1 = inlined_call_operand.hbm [shape: bf16[27,64], index: 1, kind: input, shape index: {}]
  %s2 = inlined_call_operand.vmem [shape: f32[2,2,64], index: 2, kind: output, shape index: {}]
  %s3 = sld [smem:[#allocation0]]
  $region45: #{encoder_forward.9} parent=0
    _
  %s5 = ssub.s32 1, %s3
  %s6 = scalar_select 0, %s5, %s3
  $region1: #{encoder_forward.9} parent=0
    #allocation2 [shape = 'u8[8192]{0}', space=vmem, size = 0x2000, scoped, tag = 'input window, operand 1, single buffered']
    #allocation3 [shape = 's32[2]{0}', space=sflag, size = 0x8, scoped, tag = 'scoped memory for encoder_forward.9']
    %7 = vsyncpa [#allocation3], 0
    loop: start=0, step=1, limit=4
    $region2: #{encoder_forward.9} parent=1 // loop_pre_header
      _
    $region3: #{encoder_forward.9} parent=1 // loop_header
      %s9 = sphi 0, %s13
      %p10 = scmp.ge.s32.totalorder %s9, 4
      %s19 = sphi 0, %s21
      %s22 = sphi 0, %s19
      %s23 = sphi 0, %s22
      %s39 = sphi 0, %s23
      %s43 = sphi 0, %s43
      %s45 = sphi 0, %s43
      %s46 = sphi 0, %s45
      %s60 = sphi 0, %s46
      %s66 = sphi 0, %s68
      %s69 = sphi 0, %s66
      %s70 = sphi 0, %s69
      %s86 = sphi 0, %s70
    $region4: #{encoder_forward.9} parent=1 // loop_header_branch
      %12 = sbr.rel (%p10) target = $region8
    $region5: #{encoder_forward.9} parent=1 // loop_body
      %s14 = ssub.s32 %s9, 1
      %s15 = ssub.s32 %s9, 2
      %s16 = sadd.s32 %s9, 1
      %s17 = ssub.s32 %s9, %s16
      %p18 = scmp.eq.s32.totalorder %s17, 0
      %s20 = sadd.s32 %s19, 1
      %s21 = scalar_select %p18, %s19, %s20
      %p24 = pneg %p18
      %p25 = scmp.eq.s32.totalorder %s9, 1
      %p26 = por %p24, %p25
      %p27 = scmp.ne.s32.totalorder %s19, %s22
      %p28 = scmp.eq.s32.totalorder %s9, 0
      %p29 = por %p27, %p28
      %p30 = scmp.ne.s32.totalorder %s19, %s22
      %p31 = scmp.eq.s32.totalorder %s14, 1
      %p32 = por %p30, %p31
      %p33 = scmp.ne.s32.totalorder %s22, %s23
      %p34 = scmp.eq.s32.totalorder %s14, 0
      %p35 = por %p33, %p34
      %p36 = scmp.ne.s32.totalorder %s22, %s23
      %p37 = scmp.eq.s32.totalorder %s15, 1
      %p38 = por %p36, %p37
      %p40 = scmp.ne.s32.totalorder %s23, %s39
      %p41 = scmp.eq.s32.totalorder %s15, 0
      %p42 = por %p40, %p41
      %s44 = sadd.s32 %s43, 1
      %p47 = scmp.eq.s32.totalorder %s9, 1
      %p48 = scmp.ne.s32.totalorder %s43, %s45
      %p49 = scmp.eq.s32.totalorder %s9, 0
      %p50 = por %p48, %p49
      %p51 = scmp.ne.s32.totalorder %s43, %s45
      %p52 = scmp.eq.s32.totalorder %s14, 1
      %p53 = por %p51, %p52
      %p54 = scmp.ne.s32.totalorder %s45, %s46
      %p55 = scmp.eq.s32.totalorder %s14, 0
      %p56 = por %p54, %p55
      %p57 = scmp.ne.s32.totalorder %s45, %s46
      %p58 = scmp.eq.s32.totalorder %s15, 1
      %p59 = por %p57, %p58
      %p61 = scmp.ne.s32.totalorder %s46, %s60
      %p62 = scmp.eq.s32.totalorder %s15, 0
      %p63 = por %p61, %p62
      %s64 = ssub.s32 %s9, %s16
      %p65 = scmp.eq.s32.totalorder %s64, 0
      %s67 = sadd.s32 %s66, 1
      %s68 = scalar_select %p65, %s66, %s67
      %p71 = pneg %p65
      %p72 = scmp.eq.s32.totalorder %s9, 1
      %p73 = por %p71, %p72
      %p74 = scmp.ne.s32.totalorder %s66, %s69
      %p75 = scmp.eq.s32.totalorder %s9, 0
      %p76 = por %p74, %p75
      %p77 = scmp.ne.s32.totalorder %s66, %s69
      %p78 = scmp.eq.s32.totalorder %s14, 1
      %p79 = por %p77, %p78
      %p80 = scmp.ne.s32.totalorder %s69, %s70
      %p81 = scmp.eq.s32.totalorder %s14, 0
      %p82 = por %p80, %p81
      %p83 = scmp.ne.s32.totalorder %s69, %s70
      %p84 = scmp.eq.s32.totalorder %s15, 1
      %p85 = por %p83, %p84
      %p87 = scmp.ne.s32.totalorder %s70, %s86
      %p88 = scmp.eq.s32.totalorder %s15, 0
      %p89 = por %p87, %p88
      %p90 = scmp.le.s32.totalorder 1, %s9
      %p91 = scmp.lt.s32.totalorder %s9, 3
      %p92 = pnand %p90, %p91
      %p93 = pneg %p92
      // Predicated region
      $region9: #{encoder_forward.9} parent=5 // pred_check
        _
      $region10: #{encoder_forward.9} parent=5 // pred_check_branch
        %95 = sbr.rel (%p92) target = $region12
      $region11: #{encoder_forward.9} parent=5 // pred_region
        %s96 = ssub.s32 %s9, 1
        // Predicated region
        $region13: #{encoder_forward.9} parent=11 // pred_check
          %p97 = pneg %p56
        $region14: #{encoder_forward.9} parent=11 // pred_check_branch
          %99 = sbr.rel (%p97) target = $region16
        $region15: #{encoder_forward.9} parent=11 // pred_region
          %101 = vsyncadd [#allocation3], 0
          %s102 = sshll.u32 %s1, 4
          %s103 = int_to_ptr.hbm [resolvable:$true] %s102
          %s104 = sshll.u32 [#allocation2], 4
          %s105 = int_to_ptr.vmem [resolvable:$true] %s104
          %110 = dma.hbm_to_vmem [thread:$0]  %s103, 256, %s105, [#allocation3], 64, 64, 4
        $region16: #{encoder_forward.9} parent=11 // pred_fallthru
          _
      $region12: #{encoder_forward.9} parent=5 // pred_fallthru
        _
      %p111 = scmp.lt.s32.totalorder %s9, 2
      // Predicated region
      $region17: #{encoder_forward.9} parent=5 // pred_check
        %p112 = pneg %p111
      $region18: #{encoder_forward.9} parent=5 // pred_check_branch
        %114 = sbr.rel (%p112) target = $region20
      $region19: #{encoder_forward.9} parent=5 // pred_region
        // Predicated region
        $region21: #{encoder_forward.9} parent=19 // pred_check
          %p115 = pneg %p29
        $region22: #{encoder_forward.9} parent=19 // pred_check_branch
          %117 = sbr.rel (%p115) target = $region24
        $region23: #{encoder_forward.9} parent=19 // pred_region
          %s118 = smul.u32 32, %s9
          %p119 = scmp.lt.s32.totalorder %s118, 63
          %s120 = scalar_select %p119, %s118, 63
          %s121 = smul.addr %s120, 4
          %s122 = scalar_lea.vmem %s0, %s121
          %s123 = smul.u32 32, %s9
        $region24: #{encoder_forward.9} parent=19 // pred_fallthru
          _
      $region20: #{encoder_forward.9} parent=5 // pred_fallthru
        _
      %p124 = scmp.le.s32.totalorder 1, %s9
      %p125 = scmp.lt.s32.totalorder %s9, 3
      %p126 = pnand %p124, %p125
      %p127 = pneg %p126
      // Predicated region
      $region25: #{encoder_forward.9} parent=5 // pred_check
        _
      $region26: #{encoder_forward.9} parent=5 // pred_check_branch
        %129 = sbr.rel (%p126) target = $region28
      $region27: #{encoder_forward.9} parent=5 // pred_region
        %s130 = ssub.s32 %s9, 1
        // Predicated region
        $region29: #{encoder_forward.9} parent=27 // pred_check
          %p131 = pneg %p56
        $region30: #{encoder_forward.9} parent=27 // pred_check_branch
          %133 = sbr.rel (%p131) target = $region32
        $region31: #{encoder_forward.9} parent=27 // pred_region
          %135 = dma.done [#allocation3], 256
        $region32: #{encoder_forward.9} parent=27 // pred_fallthru
          _
        %s136 = smul.u32 32, %s14
        %p137 = scmp.lt.s32.totalorder %s136, 63
        %s138 = scalar_select %p137, %s136, 63
        %s139 = smul.addr %s138, 4
        %s140 = scalar_lea.vmem %s0, %s139
        %p141 = pneg %p35
        %p142 = pneg %p32
        %p143 = pneg %p56
        %p144 = pneg %p53
        %p145 = pneg %p82
        %p146 = pneg %p79
        %p147 = scmp.lt.s32.totalorder %s14, 1
        %s148 = scalar_select %p147, %s14, 1
        %s149 = smul.addr %s148, 2
        %s150 = scalar_lea.vmem %s2, %s149
        %s151 = smul.u32 32, %s14
        %p152 = scmp.lt.s32.totalorder %s151, 63
        %s153 = scalar_select %p152, %s151, 63
        %s154 = smul.addr %s153, 4
        %s155 = scalar_lea.vmem %s0, %s154
        %s156 = smul.u32 32, %s14
        %p157 = scmp.lt.s32.totalorder %s14, 1
        %s158 = scalar_select %p157, %s14, 1
        %s159 = smul.addr %s158, 2
        %s160 = scalar_lea.vmem %s2, %s159
        %v162 = vld [vmem:[%s155] sm:$0xf]
        %v163 = vld [vmem:[%s155 + $0x4] sm:$0xf]
        %v164 = vld [vmem:[%s155 + $0x8] sm:$0xf]
        %v165 = vld [vmem:[%s155 + $0xc] sm:$0xf]
        %v166 = vld [vmem:[%s155 + $0x10] sm:$0xf]
        %v167 = vld [vmem:[%s155 + $0x14] sm:$0xf]
        %v168 = vld [vmem:[%s155 + $0x18] sm:$0xf]
        %v169 = vld [vmem:[%s155 + $0x1c] sm:$0xf]
        %v170 = vld [vmem:[%s155 + $0x20] sm:$0xf]
        %v171 = vld [vmem:[%s155 + $0x24] sm:$0xf]
        %v172 = vld [vmem:[%s155 + $0x28] sm:$0xf]
        %v173 = vld [vmem:[%s155 + $0x2c] sm:$0xf]
        %v174 = vld [vmem:[%s155 + $0x30] sm:$0xf]
        %v175 = vld [vmem:[%s155 + $0x34] sm:$0xf]
        %v176 = vld [vmem:[%s155 + $0x38] sm:$0xf]
        %v177 = vld [vmem:[%s155 + $0x3c] sm:$0xf]
        %v178 = vld [vmem:[%s155 + $0x40] sm:$0xf]
        %v179 = vld [vmem:[%s155 + $0x44] sm:$0xf]
        %v180 = vld [vmem:[%s155 + $0x48] sm:$0xf]
        %v181 = vld [vmem:[%s155 + $0x4c] sm:$0xf]
        %v182 = vld [vmem:[%s155 + $0x50] sm:$0xf]
        %v183 = vld [vmem:[%s155 + $0x54] sm:$0xf]
        %v184 = vld [vmem:[%s155 + $0x58] sm:$0xf]
        %v185 = vld [vmem:[%s155 + $0x5c] sm:$0xf]
        %v186 = vld [vmem:[%s155 + $0x60] sm:$0xf]
        %v187 = vld [vmem:[%s155 + $0x64] sm:$0xf]
        %v188 = vld [vmem:[%s155 + $0x68] sm:$0xf]
        %v189 = vld [vmem:[%s155 + $0x6c] sm:$0xf]
        %v190 = vld [vmem:[%s155 + $0x70] sm:$0xf]
        %v191 = vld [vmem:[%s155 + $0x74] sm:$0xf]
        %v192 = vld [vmem:[%s155 + $0x78] sm:$0xf]
        %v193 = vld [vmem:[%s155 + $0x7c] sm:$0xf]
        %v194 = vld [vmem:[#allocation2] sm:$0xf]
        %v195 = vld [vmem:[#allocation2 + $0x4] sm:$0xf]
        %v196 = vld [vmem:[#allocation2 + $0x8] sm:$0xf]
        %v197 = vld [vmem:[#allocation2 + $0xc] sm:$0x3]
        %v230 = vunpack.c.l.b16 %v162
        %v231 = vunpack.c.l.b16 %v163
        %v232 = vunpack.c.l.b16 %v164
        %v233 = vunpack.c.l.b16 %v165
        %v234 = vunpack.c.l.b16 %v166
        %v235 = vunpack.c.l.b16 %v167
        %v236 = vunpack.c.l.b16 %v168
        %v237 = vunpack.c.l.b16 %v169
        %v238 = vunpack.c.l.b16 %v170
        %v239 = vunpack.c.l.b16 %v171
        %v240 = vunpack.c.l.b16 %v172
        %v241 = vunpack.c.l.b16 %v173
        %v242 = vunpack.c.l.b16 %v174
        %v243 = vunpack.c.l.b16 %v175
        %v244 = vunpack.c.l.b16 %v176
        %v245 = vunpack.c.l.b16 %v177
        %v246 = vunpack.c.l.b16 %v178
        %v247 = vunpack.c.l.b16 %v179
        %v248 = vunpack.c.l.b16 %v180
        %v249 = vunpack.c.l.b16 %v181
        %v250 = vunpack.c.l.b16 %v182
        %v251 = vunpack.c.l.b16 %v183
        %v252 = vunpack.c.l.b16 %v184
        %v253 = vunpack.c.l.b16 %v185
        %v254 = vunpack.c.l.b16 %v186
        %v255 = vunpack.c.l.b16 %v187
        %v256 = vunpack.c.l.b16 %v188
        %v257 = vunpack.c.l.b16 %v189
        %v258 = vunpack.c.l.b16 %v190
        %v259 = vunpack.c.l.b16 %v191
        %v260 = vunpack.c.l.b16 %v192
        %v261 = vunpack.c.l.b16 %v193
        %v262 = vpack.c.b16 %v231, %v230
        %v263 = vpack.c.b16 %v233, %v232
        %v264 = vpack.c.b16 %v235, %v234
        %v265 = vpack.c.b16 %v237, %v236
        %v266 = vpack.c.b16 %v239, %v238
        %v267 = vpack.c.b16 %v241, %v240
        %v268 = vpack.c.b16 %v243, %v242
        %v269 = vpack.c.b16 %v245, %v244
        %v270 = vpack.c.b16 %v247, %v246
        %v271 = vpack.c.b16 %v249, %v248
        %v272 = vpack.c.b16 %v251, %v250
        %v273 = vpack.c.b16 %v253, %v252
        %v274 = vpack.c.b16 %v255, %v254
        %v275 = vpack.c.b16 %v257, %v256
        %v276 = vpack.c.b16 %v259, %v258
        %v277 = vpack.c.b16 %v261, %v260
        %v282 = vunpack.c.l.b16 %v194
        %v283 = vunpack.c.l.b16 %v195
        %v284 = vunpack.c.l.b16 %v196
        %v285 = vunpack.c.l.b16 %v197
        %v286 = vpack.c.b16 %v283, %v282
        %v287 = vpack.c.b16 %v285, %v284
        %vm289 = vcmask 220160
        %v291 = vsel %vm289, %v262, 0
        %v294 = vsel %vm289, %v263, 0
        %v297 = vsel %vm289, %v264, 0
        %v300 = vsel %vm289, %v265, 0
        %v303 = vsel %vm289, %v266, 0
        %v306 = vsel %vm289, %v267, 0
        %v309 = vsel %vm289, %v268, 0
        %v312 = vsel %vm289, %v269, 0
        %v315 = vsel %vm289, %v270, 0
        %v318 = vsel %vm289, %v271, 0
        %v321 = vsel %vm289, %v272, 0
        %v324 = vsel %vm289, %v273, 0
        %v327 = vsel %vm289, %v274, 0
        %v330 = vsel %vm289, %v275, 0
        %v333 = vsel %vm289, %v276, 0
        %v336 = vsel %vm289, %v277, 0
        %vm338 = vcmask 1044480
        %vm339 = vcmask 1045504
        %v340 = vsel %vm338, 4294967295, 65535
        %v341 = vsel %vm339, %v340, 0
        %v343 = vand.u32 %v287, %v341
        %345 = vmatpush.bf16.msra.mxu0 0
        %346 = vmatpush.bf16.msra.mxu0 0
        %347 = vmatpush.bf16.msra.mxu0 0
        %348 = vmatpush.bf16.msra.mxu0 0
        %349 = vmatpush.bf16.msra.mxu0 0
        %350 = vmatpush.bf16.msra.mxu0 0
        %351 = vmatpush.bf16.msra.mxu0 %v343
        %352 = vmatpush.bf16.msra.mxu0 %v286
        %353 = vmatmul.bf16.gmra.mxu0 %v291
        %v354 = vpop.f32.mrf.mxu0
        %v355 = vadd.f32 0.0, %v354
        %v356 = vpop.f32.mrf.mxu0
        %v357 = vadd.f32 0.0, %v356
        %358 = vmatmul.bf16.gmra.mxu0 %v294
        %v359 = vpop.f32.mrf.mxu0
        %v360 = vadd.f32 0.0, %v359
        %v361 = vpop.f32.mrf.mxu0
        %v362 = vadd.f32 0.0, %v361
        %363 = vmatmul.bf16.gmra.mxu0 %v297
        %v364 = vpop.f32.mrf.mxu0
        %v365 = vadd.f32 0.0, %v364
        %v366 = vpop.f32.mrf.mxu0
        %v367 = vadd.f32 0.0, %v366
        %368 = vmatmul.bf16.gmra.mxu0 %v300
        %v369 = vpop.f32.mrf.mxu0
        %v370 = vadd.f32 0.0, %v369
        %v371 = vpop.f32.mrf.mxu0
        %v372 = vadd.f32 0.0, %v371
        %373 = vmatmul.bf16.gmra.mxu0 %v303
        %v374 = vpop.f32.mrf.mxu0
        %v375 = vadd.f32 0.0, %v374
        %v376 = vpop.f32.mrf.mxu0
        %v377 = vadd.f32 0.0, %v376
        %378 = vmatmul.bf16.gmra.mxu0 %v306
        %v379 = vpop.f32.mrf.mxu0
        %v380 = vadd.f32 0.0, %v379
        %v381 = vpop.f32.mrf.mxu0
        %v382 = vadd.f32 0.0, %v381
        %383 = vmatmul.bf16.gmra.mxu0 %v309
        %v384 = vpop.f32.mrf.mxu0
        %v385 = vadd.f32 0.0, %v384
        %v386 = vpop.f32.mrf.mxu0
        %v387 = vadd.f32 0.0, %v386
        %388 = vmatmul.bf16.gmra.mxu0 %v312
        %v389 = vpop.f32.mrf.mxu0
        %v390 = vadd.f32 0.0, %v389
        %v391 = vpop.f32.mrf.mxu0
        %v392 = vadd.f32 0.0, %v391
        %393 = vmatmul.bf16.gmra.mxu0 %v315
        %v394 = vpop.f32.mrf.mxu0
        %v395 = vadd.f32 0.0, %v394
        %v396 = vpop.f32.mrf.mxu0
        %v397 = vadd.f32 0.0, %v396
        %398 = vmatmul.bf16.gmra.mxu0 %v318
        %v399 = vpop.f32.mrf.mxu0
        %v400 = vadd.f32 0.0, %v399
        %v401 = vpop.f32.mrf.mxu0
        %v402 = vadd.f32 0.0, %v401
        %403 = vmatmul.bf16.gmra.mxu0 %v321
        %v404 = vpop.f32.mrf.mxu0
        %v405 = vadd.f32 0.0, %v404
        %v406 = vpop.f32.mrf.mxu0
        %v407 = vadd.f32 0.0, %v406
        %408 = vmatmul.bf16.gmra.mxu0 %v324
        %v409 = vpop.f32.mrf.mxu0
        %v410 = vadd.f32 0.0, %v409
        %v411 = vpop.f32.mrf.mxu0
        %v412 = vadd.f32 0.0, %v411
        %413 = vmatmul.bf16.gmra.mxu0 %v327
        %v414 = vpop.f32.mrf.mxu0
        %v415 = vadd.f32 0.0, %v414
        %v416 = vpop.f32.mrf.mxu0
        %v417 = vadd.f32 0.0, %v416
        %418 = vmatmul.bf16.gmra.mxu0 %v330
        %v419 = vpop.f32.mrf.mxu0
        %v420 = vadd.f32 0.0, %v419
        %v421 = vpop.f32.mrf.mxu0
        %v422 = vadd.f32 0.0, %v421
        %423 = vmatmul.bf16.gmra.mxu0 %v333
        %v424 = vpop.f32.mrf.mxu0
        %v425 = vadd.f32 0.0, %v424
        %v426 = vpop.f32.mrf.mxu0
        %v427 = vadd.f32 0.0, %v426
        %428 = vmatmul.bf16.gmra.mxu0 %v336
        %v429 = vpop.f32.mrf.mxu0
        %v430 = vadd.f32 0.0, %v429
        %v431 = vpop.f32.mrf.mxu0
        %v432 = vadd.f32 0.0, %v431
        %433 = vdwg.mxu0
        %vm434 = vcmask 523264
        %v435 = vsel %vm434, %v355, 0.0
        %v436 = vsel %vm434, %v357, 0.0
        %v437 = vadd.f32 %v435, %v436
        %v438 = vsel %vm434, %v360, 0.0
        %v439 = vadd.f32 %v437, %v438
        %v440 = vsel %vm434, %v362, 0.0
        %v441 = vadd.f32 %v439, %v440
        %v442 = vsel %vm434, %v365, 0.0
        %v443 = vadd.f32 %v441, %v442
        %v444 = vsel %vm434, %v367, 0.0
        %v445 = vadd.f32 %v443, %v444
        %v446 = vsel %vm434, %v370, 0.0
        %v447 = vadd.f32 %v445, %v446
        %v448 = vsel %vm434, %v372, 0.0
        %v449 = vadd.f32 %v447, %v448
        %v450 = vsel %vm434, %v375, 0.0
        %v451 = vadd.f32 %v449, %v450
        %v452 = vsel %vm434, %v377, 0.0
        %v453 = vadd.f32 %v451, %v452
        %v454 = vsel %vm434, %v380, 0.0
        %v455 = vadd.f32 %v453, %v454
        %v456 = vsel %vm434, %v382, 0.0
        %v457 = vadd.f32 %v455, %v456
        %v458 = vsel %vm434, %v385, 0.0
        %v459 = vadd.f32 %v457, %v458
        %v460 = vsel %vm434, %v387, 0.0
        %v461 = vadd.f32 %v459, %v460
        %v462 = vsel %vm434, %v390, 0.0
        %v463 = vadd.f32 %v461, %v462
        %v464 = vsel %vm434, %v392, 0.0
        %v465 = vadd.f32 %v463, %v464
        %v466 = vsel %vm434, %v395, 0.0
        %v467 = vadd.f32 %v465, %v466
        %v468 = vsel %vm434, %v397, 0.0
        %v469 = vadd.f32 %v467, %v468
        %v470 = vsel %vm434, %v400, 0.0
        %v471 = vadd.f32 %v469, %v470
        %v472 = vsel %vm434, %v402, 0.0
        %v473 = vadd.f32 %v471, %v472
        %v474 = vsel %vm434, %v405, 0.0
        %v475 = vadd.f32 %v473, %v474
        %v476 = vsel %vm434, %v407, 0.0
        %v477 = vadd.f32 %v475, %v476
        %v478 = vsel %vm434, %v410, 0.0
        %v479 = vadd.f32 %v477, %v478
        %v480 = vsel %vm434, %v412, 0.0
        %v481 = vadd.f32 %v479, %v480
        %v482 = vsel %vm434, %v415, 0.0
        %v483 = vadd.f32 %v481, %v482
        %v484 = vsel %vm434, %v417, 0.0
        %v485 = vadd.f32 %v483, %v484
        %v486 = vsel %vm434, %v420, 0.0
        %v487 = vadd.f32 %v485, %v486
        %v488 = vsel %vm434, %v422, 0.0
        %v489 = vadd.f32 %v487, %v488
        %v490 = vsel %vm434, %v425, 0.0
        %v491 = vadd.f32 %v489, %v490
        %v492 = vsel %vm434, %v427, 0.0
        %v493 = vadd.f32 %v491, %v492
        %v494 = vsel %vm434, %v430, 0.0
        %v495 = vadd.f32 %v493, %v494
        %v496 = vsel %vm434, %v432, 0.0
        %v497 = vadd.f32 %v495, %v496
        %v498 = vrot.slane %v497, 4
        %v499 = vadd.f32 %v497, %v498
        %v500 = vrot.slane %v499, 2
        %v501 = vadd.f32 %v499, %v500
        %v502 = vrot.slane %v501, 1
        %v503 = vadd.f32 %v501, %v502
        %v504 = vmul.f32 %v355, %v355
        %v505 = vmul.f32 %v357, %v357
        %v506 = vmul.f32 %v360, %v360
        %v507 = vmul.f32 %v362, %v362
        %v508 = vmul.f32 %v365, %v365
        %v509 = vmul.f32 %v367, %v367
        %v510 = vmul.f32 %v370, %v370
        %v511 = vmul.f32 %v372, %v372
        %v512 = vmul.f32 %v375, %v375
        %v513 = vmul.f32 %v377, %v377
        %v514 = vmul.f32 %v380, %v380
        %v515 = vmul.f32 %v382, %v382
        %v516 = vmul.f32 %v385, %v385
        %v517 = vmul.f32 %v387, %v387
        %v518 = vmul.f32 %v390, %v390
        %v519 = vmul.f32 %v392, %v392
        %v520 = vmul.f32 %v395, %v395
        %v521 = vmul.f32 %v397, %v397
        %v522 = vmul.f32 %v400, %v400
        %v523 = vmul.f32 %v402, %v402
        %v524 = vmul.f32 %v405, %v405
        %v525 = vmul.f32 %v407, %v407
        %v526 = vmul.f32 %v410, %v410
        %v527 = vmul.f32 %v412, %v412
        %v528 = vmul.f32 %v415, %v415
        %v529 = vmul.f32 %v417, %v417
        %v530 = vmul.f32 %v420, %v420
        %v531 = vmul.f32 %v422, %v422
        %v532 = vmul.f32 %v425, %v425
        %v533 = vmul.f32 %v427, %v427
        %v534 = vmul.f32 %v430, %v430
        %v535 = vmul.f32 %v432, %v432
        %v536 = vsel %vm434, %v504, 0.0
        %v537 = vsel %vm434, %v505, 0.0
        %v538 = vadd.f32 %v536, %v537
        %v539 = vsel %vm434, %v506, 0.0
        %v540 = vadd.f32 %v538, %v539
        %v541 = vsel %vm434, %v507, 0.0
        %v542 = vadd.f32 %v540, %v541
        %v543 = vsel %vm434, %v508, 0.0
        %v544 = vadd.f32 %v542, %v543
        %v545 = vsel %vm434, %v509, 0.0
        %v546 = vadd.f32 %v544, %v545
        %v547 = vsel %vm434, %v510, 0.0
        %v548 = vadd.f32 %v546, %v547
        %v549 = vsel %vm434, %v511, 0.0
        %v550 = vadd.f32 %v548, %v549
        %v551 = vsel %vm434, %v512, 0.0
        %v552 = vadd.f32 %v550, %v551
        %v553 = vsel %vm434, %v513, 0.0
        %v554 = vadd.f32 %v552, %v553
        %v555 = vsel %vm434, %v514, 0.0
        %v556 = vadd.f32 %v554, %v555
        %v557 = vsel %vm434, %v515, 0.0
        %v558 = vadd.f32 %v556, %v557
        %v559 = vsel %vm434, %v516, 0.0
        %v560 = vadd.f32 %v558, %v559
        %v561 = vsel %vm434, %v517, 0.0
        %v562 = vadd.f32 %v560, %v561
        %v563 = vsel %vm434, %v518, 0.0
        %v564 = vadd.f32 %v562, %v563
        %v565 = vsel %vm434, %v519, 0.0
        %v566 = vadd.f32 %v564, %v565
        %v567 = vsel %vm434, %v520, 0.0
        %v568 = vadd.f32 %v566, %v567
        %v569 = vsel %vm434, %v521, 0.0
        %v570 = vadd.f32 %v568, %v569
        %v571 = vsel %vm434, %v522, 0.0
        %v572 = vadd.f32 %v570, %v571
        %v573 = vsel %vm434, %v523, 0.0
        %v574 = vadd.f32 %v572, %v573
        %v575 = vsel %vm434, %v524, 0.0
        %v576 = vadd.f32 %v574, %v575
        %v577 = vsel %vm434, %v525, 0.0
        %v578 = vadd.f32 %v576, %v577
        %v579 = vsel %vm434, %v526, 0.0
        %v580 = vadd.f32 %v578, %v579
        %v581 = vsel %vm434, %v527, 0.0
        %v582 = vadd.f32 %v580, %v581
        %v583 = vsel %vm434, %v528, 0.0
        %v584 = vadd.f32 %v582, %v583
        %v585 = vsel %vm434, %v529, 0.0
        %v586 = vadd.f32 %v584, %v585
        %v587 = vsel %vm434, %v530, 0.0
        %v588 = vadd.f32 %v586, %v587
        %v589 = vsel %vm434, %v531, 0.0
        %v590 = vadd.f32 %v588, %v589
        %v591 = vsel %vm434, %v532, 0.0
        %v592 = vadd.f32 %v590, %v591
        %v593 = vsel %vm434, %v533, 0.0
        %v594 = vadd.f32 %v592, %v593
        %v595 = vsel %vm434, %v534, 0.0
        %v596 = vadd.f32 %v594, %v595
        %v597 = vsel %vm434, %v535, 0.0
        %v598 = vadd.f32 %v596, %v597
        %v599 = vrot.slane %v598, 4
        %v600 = vadd.f32 %v598, %v599
        %v601 = vrot.slane %v600, 2
        %v602 = vadd.f32 %v600, %v601
        %v603 = vrot.slane %v602, 1
        %v604 = vadd.f32 %v602, %v603
        %vm605 = vcmask 1040384
        %v606 = vsel %vm605, %v503, %v604
        %vm607 = vcmask 517120
        %608 = vst.msk [vmem:[%s160] sm:$0x3] %vm607, %v606
        %p609 = scmp.lt.s32.totalorder %s14, 1
        %s610 = scalar_select %p609, %s14, 1
        %s611 = smul.addr %s610, 2
        %s612 = scalar_lea.vmem %s2, %s611
        // Predicated region
        $region33: #{encoder_forward.9} parent=27 // pred_check
          %p613 = pneg %p79
        $region34: #{encoder_forward.9} parent=27 // pred_check_branch
          %615 = sbr.rel (%p613) target = $region36
        $region35: #{encoder_forward.9} parent=27 // pred_region
          _
        $region36: #{encoder_forward.9} parent=27 // pred_fallthru
          _
      $region28: #{encoder_forward.9} parent=5 // pred_fallthru
        _
      %p616 = scmp.le.s32.totalorder 2, %s9
      // Predicated region
      $region37: #{encoder_forward.9} parent=5 // pred_check
        %p617 = pneg %p616
      $region38: #{encoder_forward.9} parent=5 // pred_check_branch
        %619 = sbr.rel (%p617) target = $region40
      $region39: #{encoder_forward.9} parent=5 // pred_region
        %s620 = ssub.s32 %s9, 2
        // Predicated region
        $region41: #{encoder_forward.9} parent=39 // pred_check
          %p621 = pneg %p85
        $region42: #{encoder_forward.9} parent=39 // pred_check_branch
          %623 = sbr.rel (%p621) target = $region44
        $region43: #{encoder_forward.9} parent=39 // pred_region
          %p624 = scmp.lt.s32.totalorder %s15, 1
          %s625 = scalar_select %p624, %s15, 1
          %s626 = smul.addr %s625, 2
          %s627 = scalar_lea.vmem %s2, %s626
        $region44: #{encoder_forward.9} parent=39 // pred_fallthru
          _
      $region40: #{encoder_forward.9} parent=5 // pred_fallthru
        _
    $region6: #{encoder_forward.9} parent=1 // loop_footer
      %s13 = sadd.s32 1, %s9
    $region7: #{encoder_forward.9} parent=1 // loop_footer_branch
      %8 = sbr.rel target = $region3
    $region8: #{encoder_forward.9} parent=1 // loop_exit
      _
    %628 = vsyncpa [#allocation3], 1
    %s629 = scalar_lea.sflag [#allocation3], 1
    %630 = vsyncpa %s629, 1

// kernel: encoder_forward.10
$region0: #{encoder_forward.10}
  #allocation0 [shape = 'u32[]', space=smem, size = 0x4, offset = 0x4, fixed_abs, tag = 'smem constant byte address 0x4 - core index']
  #allocation1 [shape = 'u32[72,128]{1,0:T(1,128)}', space=vmem, size = 0x9000, scoped, tag = 'internal scratch']
  #allocation2 [shape = 's32[1]{0}', space=sflag, size = 0x4, scoped, tag = 'scoped memory for encoder_forward.10']
  #allocation3 [shape = 's32[1]{0:T(128)S(6)}', space=smem, size = 0x200, scoped, tag = 'prefetched SMEM operand 0']
  %s0 = inlined_call_operand.<no memory space> [shape: s32[1], index: 0, kind: input, shape index: {}]
  %s1 = inlined_call_operand.vmem [shape: bf16[512,27], index: 1, kind: input, shape index: {}]
  %s2 = inlined_call_operand.hbm [shape: bf16[27,64], index: 2, kind: input, shape index: {}]
  %s3 = inlined_call_operand.vmem [shape: f32[2,64], index: 3, kind: input, shape index: {}]
  %s4 = inlined_call_operand.vmem [shape: bf16[512,64], index: 4, kind: output, shape index: {}]
  %s5 = sld [smem:[#allocation0]]
  $region49: #{encoder_forward.10} parent=0
    _
  %s7 = ssub.s32 1, %s5
  %s8 = scalar_select 0, %s7, %s5
  %9 = sst [smem:[#allocation3]] %s0
  $region1: #{encoder_forward.10} parent=0
    #allocation4 [shape = 'u8[8192]{0}', space=vmem, size = 0x2000, scoped, tag = 'input window, operand 2, single buffered']
    #allocation5 [shape = 's32[2]{0}', space=sflag, size = 0x8, scoped, tag = 'scoped memory for encoder_forward.10']
    %10 = vsyncpa [#allocation5], 0
    loop: start=0, step=1, limit=4
    $region2: #{encoder_forward.10} parent=1 // loop_pre_header
      _
    $region3: #{encoder_forward.10} parent=1 // loop_header
      %s12 = sphi 0, %s16
      %p13 = scmp.ge.s32.totalorder %s12, 4
      %s22 = sphi 0, %s24
      %s25 = sphi 0, %s22
      %s26 = sphi 0, %s25
      %s42 = sphi 0, %s26
      %s46 = sphi 0, %s46
      %s48 = sphi 0, %s46
      %s49 = sphi 0, %s48
      %s63 = sphi 0, %s49
      %s67 = sphi 0, %s67
      %s69 = sphi 0, %s67
      %s70 = sphi 0, %s69
      %s84 = sphi 0, %s70
      %s90 = sphi 0, %s92
      %s93 = sphi 0, %s90
      %s94 = sphi 0, %s93
      %s110 = sphi 0, %s94
    $region4: #{encoder_forward.10} parent=1 // loop_header_branch
      %15 = sbr.rel (%p13) target = $region8
    $region5: #{encoder_forward.10} parent=1 // loop_body
      %s17 = ssub.s32 %s12, 1
      %s18 = ssub.s32 %s12, 2
      %s19 = sadd.s32 %s12, 1
      %s20 = ssub.s32 %s12, %s19
      %p21 = scmp.eq.s32.totalorder %s20, 0
      %s23 = sadd.s32 %s22, 1
      %s24 = scalar_select %p21, %s22, %s23
      %p27 = pneg %p21
      %p28 = scmp.eq.s32.totalorder %s12, 1
      %p29 = por %p27, %p28
      %p30 = scmp.ne.s32.totalorder %s22, %s25
      %p31 = scmp.eq.s32.totalorder %s12, 0
      %p32 = por %p30, %p31
      %p33 = scmp.ne.s32.totalorder %s22, %s25
      %p34 = scmp.eq.s32.totalorder %s17, 1
      %p35 = por %p33, %p34
      %p36 = scmp.ne.s32.totalorder %s25, %s26
      %p37 = scmp.eq.s32.totalorder %s17, 0
      %p38 = por %p36, %p37
      %p39 = scmp.ne.s32.totalorder %s25, %s26
      %p40 = scmp.eq.s32.totalorder %s18, 1
      %p41 = por %p39, %p40
      %p43 = scmp.ne.s32.totalorder %s26, %s42
      %p44 = scmp.eq.s32.totalorder %s18, 0
      %p45 = por %p43, %p44
      %s47 = sadd.s32 %s46, 1
      %p50 = scmp.eq.s32.totalorder %s12, 1
      %p51 = scmp.ne.s32.totalorder %s46, %s48
      %p52 = scmp.eq.s32.totalorder %s12, 0
      %p53 = por %p51, %p52
      %p54 = scmp.ne.s32.totalorder %s46, %s48
      %p55 = scmp.eq.s32.totalorder %s17, 1
      %p56 = por %p54, %p55
      %p57 = scmp.ne.s32.totalorder %s48, %s49
      %p58 = scmp.eq.s32.totalorder %s17, 0
      %p59 = por %p57, %p58
      %p60 = scmp.ne.s32.totalorder %s48, %s49
      %p61 = scmp.eq.s32.totalorder %s18, 1
      %p62 = por %p60, %p61
      %p64 = scmp.ne.s32.totalorder %s49, %s63
      %p65 = scmp.eq.s32.totalorder %s18, 0
      %p66 = por %p64, %p65
      %s68 = sadd.s32 %s67, 1
      %p71 = scmp.eq.s32.totalorder %s12, 1
      %p72 = scmp.ne.s32.totalorder %s67, %s69
      %p73 = scmp.eq.s32.totalorder %s12, 0
      %p74 = por %p72, %p73
      %p75 = scmp.ne.s32.totalorder %s67, %s69
      %p76 = scmp.eq.s32.totalorder %s17, 1
      %p77 = por %p75, %p76
      %p78 = scmp.ne.s32.totalorder %s69, %s70
      %p79 = scmp.eq.s32.totalorder %s17, 0
      %p80 = por %p78, %p79
      %p81 = scmp.ne.s32.totalorder %s69, %s70
      %p82 = scmp.eq.s32.totalorder %s18, 1
      %p83 = por %p81, %p82
      %p85 = scmp.ne.s32.totalorder %s70, %s84
      %p86 = scmp.eq.s32.totalorder %s18, 0
      %p87 = por %p85, %p86
      %s88 = ssub.s32 %s12, %s19
      %p89 = scmp.eq.s32.totalorder %s88, 0
      %s91 = sadd.s32 %s90, 1
      %s92 = scalar_select %p89, %s90, %s91
      %p95 = pneg %p89
      %p96 = scmp.eq.s32.totalorder %s12, 1
      %p97 = por %p95, %p96
      %p98 = scmp.ne.s32.totalorder %s90, %s93
      %p99 = scmp.eq.s32.totalorder %s12, 0
      %p100 = por %p98, %p99
      %p101 = scmp.ne.s32.totalorder %s90, %s93
      %p102 = scmp.eq.s32.totalorder %s17, 1
      %p103 = por %p101, %p102
      %p104 = scmp.ne.s32.totalorder %s93, %s94
      %p105 = scmp.eq.s32.totalorder %s17, 0
      %p106 = por %p104, %p105
      %p107 = scmp.ne.s32.totalorder %s93, %s94
      %p108 = scmp.eq.s32.totalorder %s18, 1
      %p109 = por %p107, %p108
      %p111 = scmp.ne.s32.totalorder %s94, %s110
      %p112 = scmp.eq.s32.totalorder %s18, 0
      %p113 = por %p111, %p112
      %p114 = scmp.le.s32.totalorder 1, %s12
      %p115 = scmp.lt.s32.totalorder %s12, 3
      %p116 = pnand %p114, %p115
      %p117 = pneg %p116
      // Predicated region
      $region9: #{encoder_forward.10} parent=5 // pred_check
        _
      $region10: #{encoder_forward.10} parent=5 // pred_check_branch
        %119 = sbr.rel (%p116) target = $region12
      $region11: #{encoder_forward.10} parent=5 // pred_region
        %s120 = ssub.s32 %s12, 1
        // Predicated region
        $region13: #{encoder_forward.10} parent=11 // pred_check
          %p121 = pneg %p59
        $region14: #{encoder_forward.10} parent=11 // pred_check_branch
          %123 = sbr.rel (%p121) target = $region16
        $region15: #{encoder_forward.10} parent=11 // pred_region
          %125 = vsyncadd [#allocation5], 0
          %s126 = sshll.u32 %s2, 4
          %s127 = int_to_ptr.hbm [resolvable:$true] %s126
          %s128 = sshll.u32 [#allocation4], 4
          %s129 = int_to_ptr.vmem [resolvable:$true] %s128
          %134 = dma.hbm_to_vmem [thread:$0]  %s127, 256, %s129, [#allocation5], 64, 64, 4
        $region16: #{encoder_forward.10} parent=11 // pred_fallthru
          _
        // Predicated region
        $region17: #{encoder_forward.10} parent=11 // pred_check
          %p135 = pneg %p80
        $region18: #{encoder_forward.10} parent=11 // pred_check_branch
          %137 = sbr.rel (%p135) target = $region20
        $region19: #{encoder_forward.10} parent=11 // pred_region
          _
        $region20: #{encoder_forward.10} parent=11 // pred_fallthru
          _
      $region12: #{encoder_forward.10} parent=5 // pred_fallthru
        _
      %p138 = scmp.lt.s32.totalorder %s12, 2
      // Predicated region
      $region21: #{encoder_forward.10} parent=5 // pred_check
        %p139 = pneg %p138
      $region22: #{encoder_forward.10} parent=5 // pred_check_branch
        %141 = sbr.rel (%p139) target = $region24
      $region23: #{encoder_forward.10} parent=5 // pred_region
        // Predicated region
        $region25: #{encoder_forward.10} parent=23 // pred_check
          %p142 = pneg %p32
        $region26: #{encoder_forward.10} parent=23 // pred_check_branch
          %144 = sbr.rel (%p142) target = $region28
        $region27: #{encoder_forward.10} parent=23 // pred_region
          %s145 = smul.u32 32, %s12
          %p146 = scmp.lt.s32.totalorder %s145, 63
          %s147 = scalar_select %p146, %s145, 63
          %s148 = smul.addr %s147, 4
          %s149 = scalar_lea.vmem %s1, %s148
          %s150 = smul.u32 32, %s12
        $region28: #{encoder_forward.10} parent=23 // pred_fallthru
          _
      $region24: #{encoder_forward.10} parent=5 // pred_fallthru
        _
      %p151 = scmp.le.s32.totalorder 1, %s12
      %p152 = scmp.lt.s32.totalorder %s12, 3
      %p153 = pnand %p151, %p152
      %p154 = pneg %p153
      // Predicated region
      $region29: #{encoder_forward.10} parent=5 // pred_check
        _
      $region30: #{encoder_forward.10} parent=5 // pred_check_branch
        %156 = sbr.rel (%p153) target = $region32
      $region31: #{encoder_forward.10} parent=5 // pred_region
        %s157 = ssub.s32 %s12, 1
        // Predicated region
        $region33: #{encoder_forward.10} parent=31 // pred_check
          %p158 = pneg %p59
        $region34: #{encoder_forward.10} parent=31 // pred_check_branch
          %160 = sbr.rel (%p158) target = $region36
        $region35: #{encoder_forward.10} parent=31 // pred_region
          %162 = dma.done [#allocation5], 256
        $region36: #{encoder_forward.10} parent=31 // pred_fallthru
          _
        %s163 = smul.u32 32, %s17
        %p164 = scmp.lt.s32.totalorder %s163, 63
        %s165 = scalar_select %p164, %s163, 63
        %s166 = smul.addr %s165, 4
        %s167 = scalar_lea.vmem %s1, %s166
        %p168 = pneg %p38
        %p169 = pneg %p35
        %p170 = pneg %p59
        %p171 = pneg %p56
        %p172 = pneg %p80
        %p173 = pneg %p77
        %p174 = pneg %p106
        %p175 = pneg %p103
        %s176 = smul.u32 32, %s17
        %p177 = scmp.lt.s32.totalorder %s176, 63
        %s178 = scalar_select %p177, %s176, 63
        %s179 = smul.addr %s178, 4
        %s180 = scalar_lea.vmem %s4, %s179
        %s181 = smul.u32 32, %s17
        %p182 = scmp.lt.s32.totalorder %s181, 63
        %s183 = scalar_select %p182, %s181, 63
        %s184 = smul.addr %s183, 4
        %s185 = scalar_lea.vmem %s1, %s184
        %s186 = smul.u32 32, %s17
        %s187 = smul.u32 32, %s17
        %p188 = scmp.lt.s32.totalorder %s187, 63
        %s189 = scalar_select %p188, %s187, 63
        %s190 = smul.addr %s189, 4
        %s191 = scalar_lea.vmem %s4, %s190
        %s192 = smul.u32 32, %s17
        %v194 = vld [vmem:[%s185] sm:$0xf]
        %v195 = vld [vmem:[%s185 + $0x4] sm:$0xf]
        %v196 = vld [vmem:[%s185 + $0x8] sm:$0xf]
        %v197 = vld [vmem:[%s185 + $0xc] sm:$0xf]
        %v198 = vld [vmem:[%s185 + $0x10] sm:$0xf]
        %v199 = vld [vmem:[%s185 + $0x14] sm:$0xf]
        %v200 = vld [vmem:[%s185 + $0x18] sm:$0xf]
        %v201 = vld [vmem:[%s185 + $0x1c] sm:$0xf]
        %v202 = vld [vmem:[%s185 + $0x20] sm:$0xf]
        %v203 = vld [vmem:[%s185 + $0x24] sm:$0xf]
        %v204 = vld [vmem:[%s185 + $0x28] sm:$0xf]
        %v205 = vld [vmem:[%s185 + $0x2c] sm:$0xf]
        %v206 = vld [vmem:[%s185 + $0x30] sm:$0xf]
        %v207 = vld [vmem:[%s185 + $0x34] sm:$0xf]
        %v208 = vld [vmem:[%s185 + $0x38] sm:$0xf]
        %v209 = vld [vmem:[%s185 + $0x3c] sm:$0xf]
        %v210 = vld [vmem:[%s185 + $0x40] sm:$0xf]
        %v211 = vld [vmem:[%s185 + $0x44] sm:$0xf]
        %v212 = vld [vmem:[%s185 + $0x48] sm:$0xf]
        %v213 = vld [vmem:[%s185 + $0x4c] sm:$0xf]
        %v214 = vld [vmem:[%s185 + $0x50] sm:$0xf]
        %v215 = vld [vmem:[%s185 + $0x54] sm:$0xf]
        %v216 = vld [vmem:[%s185 + $0x58] sm:$0xf]
        %v217 = vld [vmem:[%s185 + $0x5c] sm:$0xf]
        %v218 = vld [vmem:[%s185 + $0x60] sm:$0xf]
        %v219 = vld [vmem:[%s185 + $0x64] sm:$0xf]
        %v220 = vld [vmem:[%s185 + $0x68] sm:$0xf]
        %v221 = vld [vmem:[%s185 + $0x6c] sm:$0xf]
        %v222 = vld [vmem:[%s185 + $0x70] sm:$0xf]
        %v223 = vld [vmem:[%s185 + $0x74] sm:$0xf]
        %v224 = vld [vmem:[%s185 + $0x78] sm:$0xf]
        %v225 = vld [vmem:[%s185 + $0x7c] sm:$0xf]
        %v226 = vld [vmem:[#allocation4] sm:$0xf]
        %v227 = vld [vmem:[#allocation4 + $0x4] sm:$0xf]
        %v228 = vld [vmem:[#allocation4 + $0x8] sm:$0xf]
        %v229 = vld [vmem:[#allocation4 + $0xc] sm:$0x3]
        %v262 = vunpack.c.l.b16 %v194
        %v263 = vunpack.c.l.b16 %v195
        %v264 = vunpack.c.l.b16 %v196
        %v265 = vunpack.c.l.b16 %v197
        %v266 = vunpack.c.l.b16 %v198
        %v267 = vunpack.c.l.b16 %v199
        %v268 = vunpack.c.l.b16 %v200
        %v269 = vunpack.c.l.b16 %v201
        %v270 = vunpack.c.l.b16 %v202
        %v271 = vunpack.c.l.b16 %v203
        %v272 = vunpack.c.l.b16 %v204
        %v273 = vunpack.c.l.b16 %v205
        %v274 = vunpack.c.l.b16 %v206
        %v275 = vunpack.c.l.b16 %v207
        %v276 = vunpack.c.l.b16 %v208
        %v277 = vunpack.c.l.b16 %v209
        %v278 = vunpack.c.l.b16 %v210
        %v279 = vunpack.c.l.b16 %v211
        %v280 = vunpack.c.l.b16 %v212
        %v281 = vunpack.c.l.b16 %v213
        %v282 = vunpack.c.l.b16 %v214
        %v283 = vunpack.c.l.b16 %v215
        %v284 = vunpack.c.l.b16 %v216
        %v285 = vunpack.c.l.b16 %v217
        %v286 = vunpack.c.l.b16 %v218
        %v287 = vunpack.c.l.b16 %v219
        %v288 = vunpack.c.l.b16 %v220
        %v289 = vunpack.c.l.b16 %v221
        %v290 = vunpack.c.l.b16 %v222
        %v291 = vunpack.c.l.b16 %v223
        %v292 = vunpack.c.l.b16 %v224
        %v293 = vunpack.c.l.b16 %v225
        %v294 = vpack.c.b16 %v263, %v262
        %v295 = vpack.c.b16 %v265, %v264
        %v296 = vpack.c.b16 %v267, %v266
        %v297 = vpack.c.b16 %v269, %v268
        %v298 = vpack.c.b16 %v271, %v270
        %v299 = vpack.c.b16 %v273, %v272
        %v300 = vpack.c.b16 %v275, %v274
        %v301 = vpack.c.b16 %v277, %v276
        %v302 = vpack.c.b16 %v279, %v278
        %v303 = vpack.c.b16 %v281, %v280
        %v304 = vpack.c.b16 %v283, %v282
        %v305 = vpack.c.b16 %v285, %v284
        %v306 = vpack.c.b16 %v287, %v286
        %v307 = vpack.c.b16 %v289, %v288
        %v308 = vpack.c.b16 %v291, %v290
        %v309 = vpack.c.b16 %v293, %v292
        %v314 = vunpack.c.l.b16 %v226
        %v315 = vunpack.c.l.b16 %v227
        %v316 = vunpack.c.l.b16 %v228
        %v317 = vunpack.c.l.b16 %v229
        %v318 = vpack.c.b16 %v315, %v314
        %v319 = vpack.c.b16 %v317, %v316
        %vm321 = vcmask 220160
        %v323 = vsel %vm321, %v294, 0
        %v326 = vsel %vm321, %v295, 0
        %v329 = vsel %vm321, %v296, 0
        %v332 = vsel %vm321, %v297, 0
        %v335 = vsel %vm321, %v298, 0
        %v338 = vsel %vm321, %v299, 0
        %v341 = vsel %vm321, %v300, 0
        %v344 = vsel %vm321, %v301, 0
        %v347 = vsel %vm321, %v302, 0
        %v350 = vsel %vm321, %v303, 0
        %v353 = vsel %vm321, %v304, 0
        %v356 = vsel %vm321, %v305, 0
        %v359 = vsel %vm321, %v306, 0
        %v362 = vsel %vm321, %v307, 0
        %v365 = vsel %vm321, %v308, 0
        %v368 = vsel %vm321, %v309, 0
        %vm370 = vcmask 1044480
        %vm371 = vcmask 1045504
        %v372 = vsel %vm370, 4294967295, 65535
        %v373 = vsel %vm371, %v372, 0
        %v375 = vand.u32 %v319, %v373
        %377 = vmatpush.bf16.msra.mxu0 0
        %378 = vmatpush.bf16.msra.mxu0 0
        %379 = vmatpush.bf16.msra.mxu0 0
        %380 = vmatpush.bf16.msra.mxu0 0
        %381 = vmatpush.bf16.msra.mxu0 0
        %382 = vmatpush.bf16.msra.mxu0 0
        %383 = vmatpush.bf16.msra.mxu0 %v375
        %384 = vmatpush.bf16.msra.mxu0 %v318
        %385 = vmatmul.bf16.gmra.mxu0 %v323
        %v386 = vpop.f32.mrf.mxu0
        %v387 = vadd.f32 0.0, %v386
        %v388 = vpop.f32.mrf.mxu0
        %v389 = vadd.f32 0.0, %v388
        %390 = vmatmul.bf16.gmra.mxu0 %v326
        %v391 = vpop.f32.mrf.mxu0
        %v392 = vadd.f32 0.0, %v391
        %v393 = vpop.f32.mrf.mxu0
        %v394 = vadd.f32 0.0, %v393
        %395 = vmatmul.bf16.gmra.mxu0 %v329
        %v396 = vpop.f32.mrf.mxu0
        %v397 = vadd.f32 0.0, %v396
        %v398 = vpop.f32.mrf.mxu0
        %v399 = vadd.f32 0.0, %v398
        %400 = vmatmul.bf16.gmra.mxu0 %v332
        %v401 = vpop.f32.mrf.mxu0
        %v402 = vadd.f32 0.0, %v401
        %v403 = vpop.f32.mrf.mxu0
        %v404 = vadd.f32 0.0, %v403
        %405 = vmatmul.bf16.gmra.mxu0 %v335
        %v406 = vpop.f32.mrf.mxu0
        %v407 = vadd.f32 0.0, %v406
        %v408 = vpop.f32.mrf.mxu0
        %v409 = vadd.f32 0.0, %v408
        %410 = vmatmul.bf16.gmra.mxu0 %v338
        %v411 = vpop.f32.mrf.mxu0
        %v412 = vadd.f32 0.0, %v411
        %v413 = vpop.f32.mrf.mxu0
        %v414 = vadd.f32 0.0, %v413
        %415 = vmatmul.bf16.gmra.mxu0 %v341
        %v416 = vpop.f32.mrf.mxu0
        %v417 = vadd.f32 0.0, %v416
        %v418 = vpop.f32.mrf.mxu0
        %v419 = vadd.f32 0.0, %v418
        %420 = vmatmul.bf16.gmra.mxu0 %v344
        %v421 = vpop.f32.mrf.mxu0
        %v422 = vadd.f32 0.0, %v421
        %v423 = vpop.f32.mrf.mxu0
        %v424 = vadd.f32 0.0, %v423
        %425 = vmatmul.bf16.gmra.mxu0 %v347
        %v426 = vpop.f32.mrf.mxu0
        %v427 = vadd.f32 0.0, %v426
        %v428 = vpop.f32.mrf.mxu0
        %v429 = vadd.f32 0.0, %v428
        %430 = vmatmul.bf16.gmra.mxu0 %v350
        %v431 = vpop.f32.mrf.mxu0
        %v432 = vadd.f32 0.0, %v431
        %v433 = vpop.f32.mrf.mxu0
        %v434 = vadd.f32 0.0, %v433
        %435 = vmatmul.bf16.gmra.mxu0 %v353
        %v436 = vpop.f32.mrf.mxu0
        %v437 = vadd.f32 0.0, %v436
        %v438 = vpop.f32.mrf.mxu0
        %v439 = vadd.f32 0.0, %v438
        %440 = vmatmul.bf16.gmra.mxu0 %v356
        %v441 = vpop.f32.mrf.mxu0
        %v442 = vadd.f32 0.0, %v441
        %v443 = vpop.f32.mrf.mxu0
        %v444 = vadd.f32 0.0, %v443
        %445 = vmatmul.bf16.gmra.mxu0 %v359
        %v446 = vpop.f32.mrf.mxu0
        %v447 = vadd.f32 0.0, %v446
        %v448 = vpop.f32.mrf.mxu0
        %v449 = vadd.f32 0.0, %v448
        %450 = vmatmul.bf16.gmra.mxu0 %v362
        %v451 = vpop.f32.mrf.mxu0
        %v452 = vadd.f32 0.0, %v451
        %v453 = vpop.f32.mrf.mxu0
        %v454 = vadd.f32 0.0, %v453
        %455 = vmatmul.bf16.gmra.mxu0 %v365
        %v456 = vpop.f32.mrf.mxu0
        %v457 = vadd.f32 0.0, %v456
        %v458 = vpop.f32.mrf.mxu0
        %v459 = vadd.f32 0.0, %v458
        %460 = vmatmul.bf16.gmra.mxu0 %v368
        %v461 = vpop.f32.mrf.mxu0
        %v462 = vadd.f32 0.0, %v461
        %v463 = vpop.f32.mrf.mxu0
        %v464 = vadd.f32 0.0, %v463
        %465 = vdwg.mxu0
        %v466 = vld [vmem:[%s3] sm:$0x1]
        %v467 = vperm.slane %v466, 0
        %v468 = vmul.f32 %v387, %v467
        %v469 = vmul.f32 %v389, %v467
        %v470 = vmul.f32 %v392, %v467
        %v471 = vmul.f32 %v394, %v467
        %v472 = vmul.f32 %v397, %v467
        %v473 = vmul.f32 %v399, %v467
        %v474 = vmul.f32 %v402, %v467
        %v475 = vmul.f32 %v404, %v467
        %v476 = vmul.f32 %v407, %v467
        %v477 = vmul.f32 %v409, %v467
        %v478 = vmul.f32 %v412, %v467
        %v479 = vmul.f32 %v414, %v467
        %v480 = vmul.f32 %v417, %v467
        %v481 = vmul.f32 %v419, %v467
        %v482 = vmul.f32 %v422, %v467
        %v483 = vmul.f32 %v424, %v467
        %v484 = vmul.f32 %v427, %v467
        %v485 = vmul.f32 %v429, %v467
        %v486 = vmul.f32 %v432, %v467
        %v487 = vmul.f32 %v434, %v467
        %v488 = vmul.f32 %v437, %v467
        %v489 = vmul.f32 %v439, %v467
        %v490 = vmul.f32 %v442, %v467
        %v491 = vmul.f32 %v444, %v467
        %v492 = vmul.f32 %v447, %v467
        %v493 = vmul.f32 %v449, %v467
        %v494 = vmul.f32 %v452, %v467
        %v495 = vmul.f32 %v454, %v467
        %v496 = vmul.f32 %v457, %v467
        %v497 = vmul.f32 %v459, %v467
        %v498 = vmul.f32 %v462, %v467
        %v499 = vmul.f32 %v464, %v467
        %v500 = vld [vmem:[%s3 + $0x1] sm:$0x1]
        %v501 = vperm.slane %v500, 0
        %v502 = vadd.f32 %v468, %v501
        %v503 = vadd.f32 %v469, %v501
        %v504 = vadd.f32 %v470, %v501
        %v505 = vadd.f32 %v471, %v501
        %v506 = vadd.f32 %v472, %v501
        %v507 = vadd.f32 %v473, %v501
        %v508 = vadd.f32 %v474, %v501
        %v509 = vadd.f32 %v475, %v501
        %v510 = vadd.f32 %v476, %v501
        %v511 = vadd.f32 %v477, %v501
        %v512 = vadd.f32 %v478, %v501
        %v513 = vadd.f32 %v479, %v501
        %v514 = vadd.f32 %v480, %v501
        %v515 = vadd.f32 %v481, %v501
        %v516 = vadd.f32 %v482, %v501
        %v517 = vadd.f32 %v483, %v501
        %v518 = vadd.f32 %v484, %v501
        %v519 = vadd.f32 %v485, %v501
        %v520 = vadd.f32 %v486, %v501
        %v521 = vadd.f32 %v487, %v501
        %v522 = vadd.f32 %v488, %v501
        %v523 = vadd.f32 %v489, %v501
        %v524 = vadd.f32 %v490, %v501
        %v525 = vadd.f32 %v491, %v501
        %v526 = vadd.f32 %v492, %v501
        %v527 = vadd.f32 %v493, %v501
        %v528 = vadd.f32 %v494, %v501
        %v529 = vadd.f32 %v495, %v501
        %v530 = vadd.f32 %v496, %v501
        %v531 = vadd.f32 %v497, %v501
        %v532 = vadd.f32 %v498, %v501
        %v533 = vadd.f32 %v499, %v501
        %vm534 = vcmp.ge.f32.partialorder %v502, 0.0
        %vm535 = vcmp.ge.f32.partialorder %v503, 0.0
        %vm536 = vcmp.ge.f32.partialorder %v504, 0.0
        %vm537 = vcmp.ge.f32.partialorder %v505, 0.0
        %vm538 = vcmp.ge.f32.partialorder %v506, 0.0
        %vm539 = vcmp.ge.f32.partialorder %v507, 0.0
        %vm540 = vcmp.ge.f32.partialorder %v508, 0.0
        %vm541 = vcmp.ge.f32.partialorder %v509, 0.0
        %vm542 = vcmp.ge.f32.partialorder %v510, 0.0
        %vm543 = vcmp.ge.f32.partialorder %v511, 0.0
        %vm544 = vcmp.ge.f32.partialorder %v512, 0.0
        %vm545 = vcmp.ge.f32.partialorder %v513, 0.0
        %vm546 = vcmp.ge.f32.partialorder %v514, 0.0
        %vm547 = vcmp.ge.f32.partialorder %v515, 0.0
        %vm548 = vcmp.ge.f32.partialorder %v516, 0.0
        %vm549 = vcmp.ge.f32.partialorder %v517, 0.0
        %vm550 = vcmp.ge.f32.partialorder %v518, 0.0
        %vm551 = vcmp.ge.f32.partialorder %v519, 0.0
        %vm552 = vcmp.ge.f32.partialorder %v520, 0.0
        %vm553 = vcmp.ge.f32.partialorder %v521, 0.0
        %vm554 = vcmp.ge.f32.partialorder %v522, 0.0
        %vm555 = vcmp.ge.f32.partialorder %v523, 0.0
        %vm556 = vcmp.ge.f32.partialorder %v524, 0.0
        %vm557 = vcmp.ge.f32.partialorder %v525, 0.0
        %vm558 = vcmp.ge.f32.partialorder %v526, 0.0
        %vm559 = vcmp.ge.f32.partialorder %v527, 0.0
        %vm560 = vcmp.ge.f32.partialorder %v528, 0.0
        %vm561 = vcmp.ge.f32.partialorder %v529, 0.0
        %vm562 = vcmp.ge.f32.partialorder %v530, 0.0
        %vm563 = vcmp.ge.f32.partialorder %v531, 0.0
        %vm564 = vcmp.ge.f32.partialorder %v532, 0.0
        %vm565 = vcmp.ge.f32.partialorder %v533, 0.0
        %v566 = vmul.f32 %v502, 0.01
        %v567 = vmul.f32 %v503, 0.01
        %v568 = vmul.f32 %v504, 0.01
        %v569 = vmul.f32 %v505, 0.01
        %v570 = vmul.f32 %v506, 0.01
        %v571 = vmul.f32 %v507, 0.01
        %v572 = vmul.f32 %v508, 0.01
        %v573 = vmul.f32 %v509, 0.01
        %v574 = vmul.f32 %v510, 0.01
        %v575 = vmul.f32 %v511, 0.01
        %v576 = vmul.f32 %v512, 0.01
        %v577 = vmul.f32 %v513, 0.01
        %v578 = vmul.f32 %v514, 0.01
        %v579 = vmul.f32 %v515, 0.01
        %v580 = vmul.f32 %v516, 0.01
        %v581 = vmul.f32 %v517, 0.01
        %v582 = vmul.f32 %v518, 0.01
        %v583 = vmul.f32 %v519, 0.01
        %v584 = vmul.f32 %v520, 0.01
        %v585 = vmul.f32 %v521, 0.01
        %v586 = vmul.f32 %v522, 0.01
        %v587 = vmul.f32 %v523, 0.01
        %v588 = vmul.f32 %v524, 0.01
        %v589 = vmul.f32 %v525, 0.01
        %v590 = vmul.f32 %v526, 0.01
        %v591 = vmul.f32 %v527, 0.01
        %v592 = vmul.f32 %v528, 0.01
        %v593 = vmul.f32 %v529, 0.01
        %v594 = vmul.f32 %v530, 0.01
        %v595 = vmul.f32 %v531, 0.01
        %v596 = vmul.f32 %v532, 0.01
        %v597 = vmul.f32 %v533, 0.01
        %v598 = vsel %vm534, %v502, %v566
        %v599 = vsel %vm535, %v503, %v567
        %v600 = vsel %vm536, %v504, %v568
        %v601 = vsel %vm537, %v505, %v569
        %v602 = vsel %vm538, %v506, %v570
        %v603 = vsel %vm539, %v507, %v571
        %v604 = vsel %vm540, %v508, %v572
        %v605 = vsel %vm541, %v509, %v573
        %v606 = vsel %vm542, %v510, %v574
        %v607 = vsel %vm543, %v511, %v575
        %v608 = vsel %vm544, %v512, %v576
        %v609 = vsel %vm545, %v513, %v577
        %v610 = vsel %vm546, %v514, %v578
        %v611 = vsel %vm547, %v515, %v579
        %v612 = vsel %vm548, %v516, %v580
        %v613 = vsel %vm549, %v517, %v581
        %v614 = vsel %vm550, %v518, %v582
        %v615 = vsel %vm551, %v519, %v583
        %v616 = vsel %vm552, %v520, %v584
        %v617 = vsel %vm553, %v521, %v585
        %v618 = vsel %vm554, %v522, %v586
        %v619 = vsel %vm555, %v523, %v587
        %v620 = vsel %vm556, %v524, %v588
        %v621 = vsel %vm557, %v525, %v589
        %v622 = vsel %vm558, %v526, %v590
        %v623 = vsel %vm559, %v527, %v591
        %v624 = vsel %vm560, %v528, %v592
        %v625 = vsel %vm561, %v529, %v593
        %v626 = vsel %vm562, %v530, %v594
        %v627 = vsel %vm563, %v531, %v595
        %v628 = vsel %vm564, %v532, %v596
        %v629 = vsel %vm565, %v533, %v597
        %s630 = smul.u32 %s17, 256
        %s631 = sld [smem:[#allocation3]]
        %v632 = vlaneseq
        %v633 = vshrl.u32 %v632, 7
        %v634 = vadd.s32 %v633, 8
        %v635 = vadd.s32 %v633, 16
        %v636 = vadd.s32 %v633, 24
        %v637 = vadd.s32 %v633, 32
        %v638 = vadd.s32 %v633, 40
        %v639 = vadd.s32 %v633, 48
        %v640 = vadd.s32 %v633, 56
        %v641 = vadd.s32 %v633, 64
        %v642 = vadd.s32 %v633, 72
        %v643 = vadd.s32 %v633, 80
        %v644 = vadd.s32 %v633, 88
        %v645 = vadd.s32 %v633, 96
        %v646 = vadd.s32 %v633, 104
        %v647 = vadd.s32 %v633, 112
        %v648 = vadd.s32 %v633, 120
        %v649 = vadd.s32 %v633, 128
        %v650 = vadd.s32 %v633, 136
        %v651 = vadd.s32 %v633, 144
        %v652 = vadd.s32 %v633, 152
        %v653 = vadd.s32 %v633, 160
        %v654 = vadd.s32 %v633, 168
        %v655 = vadd.s32 %v633, 176
        %v656 = vadd.s32 %v633, 184
        %v657 = vadd.s32 %v633, 192
        %v658 = vadd.s32 %v633, 200
        %v659 = vadd.s32 %v633, 208
        %v660 = vadd.s32 %v633, 216
        %v661 = vadd.s32 %v633, 224
        %v662 = vadd.s32 %v633, 232
        %v663 = vadd.s32 %v633, 240
        %v664 = vadd.s32 %v633, 248
        %v665 = vstv %s630
        %v666 = vadd.s32 %v633, %v665
        %v667 = vadd.s32 %v634, %v665
        %v668 = vadd.s32 %v635, %v665
        %v669 = vadd.s32 %v636, %v665
        %v670 = vadd.s32 %v637, %v665
        %v671 = vadd.s32 %v638, %v665
        %v672 = vadd.s32 %v639, %v665
        %v673 = vadd.s32 %v640, %v665
        %v674 = vadd.s32 %v641, %v665
        %v675 = vadd.s32 %v642, %v665
        %v676 = vadd.s32 %v643, %v665
        %v677 = vadd.s32 %v644, %v665
        %v678 = vadd.s32 %v645, %v665
        %v679 = vadd.s32 %v646, %v665
        %v680 = vadd.s32 %v647, %v665
        %v681 = vadd.s32 %v648, %v665
        %v682 = vadd.s32 %v649, %v665
        %v683 = vadd.s32 %v650, %v665
        %v684 = vadd.s32 %v651, %v665
        %v685 = vadd.s32 %v652, %v665
        %v686 = vadd.s32 %v653, %v665
        %v687 = vadd.s32 %v654, %v665
        %v688 = vadd.s32 %v655, %v665
        %v689 = vadd.s32 %v656, %v665
        %v690 = vadd.s32 %v657, %v665
        %v691 = vadd.s32 %v658, %v665
        %v692 = vadd.s32 %v659, %v665
        %v693 = vadd.s32 %v660, %v665
        %v694 = vadd.s32 %v661, %v665
        %v695 = vadd.s32 %v662, %v665
        %v696 = vadd.s32 %v663, %v665
        %v697 = vadd.s32 %v664, %v665
        %v698 = vlaneseq
        %v699 = vand.u32 %v698, 127
        %v700 = vmul.u32 %v666, 2654435761
        %v701 = vmul.u32 %v667, 2654435761
        %v702 = vmul.u32 %v668, 2654435761
        %v703 = vmul.u32 %v669, 2654435761
        %v704 = vmul.u32 %v670, 2654435761
        %v705 = vmul.u32 %v671, 2654435761
        %v706 = vmul.u32 %v672, 2654435761
        %v707 = vmul.u32 %v673, 2654435761
        %v708 = vmul.u32 %v674, 2654435761
        %v709 = vmul.u32 %v675, 2654435761
        %v710 = vmul.u32 %v676, 2654435761
        %v711 = vmul.u32 %v677, 2654435761
        %v712 = vmul.u32 %v678, 2654435761
        %v713 = vmul.u32 %v679, 2654435761
        %v714 = vmul.u32 %v680, 2654435761
        %v715 = vmul.u32 %v681, 2654435761
        %v716 = vmul.u32 %v682, 2654435761
        %v717 = vmul.u32 %v683, 2654435761
        %v718 = vmul.u32 %v684, 2654435761
        %v719 = vmul.u32 %v685, 2654435761
        %v720 = vmul.u32 %v686, 2654435761
        %v721 = vmul.u32 %v687, 2654435761
        %v722 = vmul.u32 %v688, 2654435761
        %v723 = vmul.u32 %v689, 2654435761
        %v724 = vmul.u32 %v690, 2654435761
        %v725 = vmul.u32 %v691, 2654435761
        %v726 = vmul.u32 %v692, 2654435761
        %v727 = vmul.u32 %v693, 2654435761
        %v728 = vmul.u32 %v694, 2654435761
        %v729 = vmul.u32 %v695, 2654435761
        %v730 = vmul.u32 %v696, 2654435761
        %v731 = vmul.u32 %v697, 2654435761
        %v732 = vadd.s32 %v700, %v699
        %v733 = vadd.s32 %v701, %v699
        %v734 = vadd.s32 %v702, %v699
        %v735 = vadd.s32 %v703, %v699
        %v736 = vadd.s32 %v704, %v699
        %v737 = vadd.s32 %v705, %v699
        %v738 = vadd.s32 %v706, %v699
        %v739 = vadd.s32 %v707, %v699
        %v740 = vadd.s32 %v708, %v699
        %v741 = vadd.s32 %v709, %v699
        %v742 = vadd.s32 %v710, %v699
        %v743 = vadd.s32 %v711, %v699
        %v744 = vadd.s32 %v712, %v699
        %v745 = vadd.s32 %v713, %v699
        %v746 = vadd.s32 %v714, %v699
        %v747 = vadd.s32 %v715, %v699
        %v748 = vadd.s32 %v716, %v699
        %v749 = vadd.s32 %v717, %v699
        %v750 = vadd.s32 %v718, %v699
        %v751 = vadd.s32 %v719, %v699
        %v752 = vadd.s32 %v720, %v699
        %v753 = vadd.s32 %v721, %v699
        %v754 = vadd.s32 %v722, %v699
        %v755 = vadd.s32 %v723, %v699
        %v756 = vadd.s32 %v724, %v699
        %v757 = vadd.s32 %v725, %v699
        %v758 = vadd.s32 %v726, %v699
        %v759 = vadd.s32 %v727, %v699
        %v760 = vadd.s32 %v728, %v699
        %v761 = vadd.s32 %v729, %v699
        %v762 = vadd.s32 %v730, %v699
        %v763 = vadd.s32 %v731, %v699
        %v764 = vstv %s631
        %v765 = vadd.s32 %v732, %v764
        %v766 = vadd.s32 %v733, %v764
        %v767 = vadd.s32 %v734, %v764
        %v768 = vadd.s32 %v735, %v764
        %v769 = vadd.s32 %v736, %v764
        %v770 = vadd.s32 %v737, %v764
        %v771 = vadd.s32 %v738, %v764
        %v772 = vadd.s32 %v739, %v764
        %v773 = vadd.s32 %v740, %v764
        %v774 = vadd.s32 %v741, %v764
        %v775 = vadd.s32 %v742, %v764
        %v776 = vadd.s32 %v743, %v764
        %v777 = vadd.s32 %v744, %v764
        %v778 = vadd.s32 %v745, %v764
        %v779 = vadd.s32 %v746, %v764
        %v780 = vadd.s32 %v747, %v764
        %v781 = vadd.s32 %v748, %v764
        %v782 = vadd.s32 %v749, %v764
        %v783 = vadd.s32 %v750, %v764
        %v784 = vadd.s32 %v751, %v764
        %v785 = vadd.s32 %v752, %v764
        %v786 = vadd.s32 %v753, %v764
        %v787 = vadd.s32 %v754, %v764
        %v788 = vadd.s32 %v755, %v764
        %v789 = vadd.s32 %v756, %v764
        %v790 = vadd.s32 %v757, %v764
        %v791 = vadd.s32 %v758, %v764
        %v792 = vadd.s32 %v759, %v764
        %v793 = vadd.s32 %v760, %v764
        %v794 = vadd.s32 %v761, %v764
        %v795 = vadd.s32 %v762, %v764
        %v796 = vadd.s32 %v763, %v764
        %v797 = vshrl.u32 %v765, 16
        %v798 = vshrl.u32 %v766, 16
        %v799 = vshrl.u32 %v767, 16
        %v800 = vshrl.u32 %v768, 16
        %v801 = vshrl.u32 %v769, 16
        %v802 = vshrl.u32 %v770, 16
        %v803 = vshrl.u32 %v771, 16
        %v804 = vshrl.u32 %v772, 16
        %v805 = vshrl.u32 %v773, 16
        %v806 = vshrl.u32 %v774, 16
        %v807 = vshrl.u32 %v775, 16
        %v808 = vshrl.u32 %v776, 16
        %v809 = vshrl.u32 %v777, 16
        %v810 = vshrl.u32 %v778, 16
        %v811 = vshrl.u32 %v779, 16
        %v812 = vshrl.u32 %v780, 16
        %v813 = vshrl.u32 %v781, 16
        %v814 = vshrl.u32 %v782, 16
        %v815 = vshrl.u32 %v783, 16
        %v816 = vshrl.u32 %v784, 16
        %v817 = vshrl.u32 %v785, 16
        %v818 = vshrl.u32 %v786, 16
        %v819 = vshrl.u32 %v787, 16
        %v820 = vshrl.u32 %v788, 16
        %v821 = vshrl.u32 %v789, 16
        %v822 = vshrl.u32 %v790, 16
        %v823 = vshrl.u32 %v791, 16
        %v824 = vshrl.u32 %v792, 16
        %v825 = vshrl.u32 %v793, 16
        %v826 = vshrl.u32 %v794, 16
        %v827 = vshrl.u32 %v795, 16
        %v828 = vshrl.u32 %v796, 16
        %v829 = vxor.u32 %v765, %v797
        %v830 = vxor.u32 %v766, %v798
        %v831 = vxor.u32 %v767, %v799
        %v832 = vxor.u32 %v768, %v800
        %v833 = vxor.u32 %v769, %v801
        %v834 = vxor.u32 %v770, %v802
        %v835 = vxor.u32 %v771, %v803
        %v836 = vxor.u32 %v772, %v804
        %v837 = vxor.u32 %v773, %v805
        %v838 = vxor.u32 %v774, %v806
        %v839 = vxor.u32 %v775, %v807
        %v840 = vxor.u32 %v776, %v808
        %v841 = vxor.u32 %v777, %v809
        %v842 = vxor.u32 %v778, %v810
        %v843 = vxor.u32 %v779, %v811
        %v844 = vxor.u32 %v780, %v812
        %v845 = vxor.u32 %v781, %v813
        %v846 = vxor.u32 %v782, %v814
        %v847 = vxor.u32 %v783, %v815
        %v848 = vxor.u32 %v784, %v816
        %v849 = vxor.u32 %v785, %v817
        %v850 = vxor.u32 %v786, %v818
        %v851 = vxor.u32 %v787, %v819
        %v852 = vxor.u32 %v788, %v820
        %v853 = vxor.u32 %v789, %v821
        %v854 = vxor.u32 %v790, %v822
        %v855 = vxor.u32 %v791, %v823
        %v856 = vxor.u32 %v792, %v824
        %v857 = vxor.u32 %v793, %v825
        %v858 = vxor.u32 %v794, %v826
        %v859 = vxor.u32 %v795, %v827
        %v860 = vxor.u32 %v796, %v828
        %v861 = vmul.u32 %v829, 2146121005
        %v862 = vmul.u32 %v830, 2146121005
        %v863 = vmul.u32 %v831, 2146121005
        %v864 = vmul.u32 %v832, 2146121005
        %v865 = vmul.u32 %v833, 2146121005
        %v866 = vmul.u32 %v834, 2146121005
        %v867 = vmul.u32 %v835, 2146121005
        %v868 = vmul.u32 %v836, 2146121005
        %v869 = vmul.u32 %v837, 2146121005
        %v870 = vmul.u32 %v838, 2146121005
        %v871 = vmul.u32 %v839, 2146121005
        %v872 = vmul.u32 %v840, 2146121005
        %v873 = vmul.u32 %v841, 2146121005
        %v874 = vmul.u32 %v842, 2146121005
        %v875 = vmul.u32 %v843, 2146121005
        %v876 = vmul.u32 %v844, 2146121005
        %v877 = vmul.u32 %v845, 2146121005
        %v878 = vmul.u32 %v846, 2146121005
        %v879 = vmul.u32 %v847, 2146121005
        %v880 = vmul.u32 %v848, 2146121005
        %v881 = vmul.u32 %v849, 2146121005
        %v882 = vmul.u32 %v850, 2146121005
        %v883 = vmul.u32 %v851, 2146121005
        %v884 = vmul.u32 %v852, 2146121005
        %v885 = vmul.u32 %v853, 2146121005
        %v886 = vmul.u32 %v854, 2146121005
        %v887 = vmul.u32 %v855, 2146121005
        %v888 = vmul.u32 %v856, 2146121005
        %v889 = vmul.u32 %v857, 2146121005
        %v890 = vmul.u32 %v858, 2146121005
        %v891 = vmul.u32 %v859, 2146121005
        %v892 = vmul.u32 %v860, 2146121005
        %v893 = vshrl.u32 %v861, 15
        %v894 = vshrl.u32 %v862, 15
        %v895 = vshrl.u32 %v863, 15
        %v896 = vshrl.u32 %v864, 15
        %v897 = vshrl.u32 %v865, 15
        %v898 = vshrl.u32 %v866, 15
        %v899 = vshrl.u32 %v867, 15
        %v900 = vshrl.u32 %v868, 15
        %v901 = vshrl.u32 %v869, 15
        %v902 = vshrl.u32 %v870, 15
        %v903 = vshrl.u32 %v871, 15
        %v904 = vshrl.u32 %v872, 15
        %v905 = vshrl.u32 %v873, 15
        %v906 = vshrl.u32 %v874, 15
        %v907 = vshrl.u32 %v875, 15
        %v908 = vshrl.u32 %v876, 15
        %v909 = vshrl.u32 %v877, 15
        %v910 = vshrl.u32 %v878, 15
        %v911 = vshrl.u32 %v879, 15
        %v912 = vshrl.u32 %v880, 15
        %v913 = vshrl.u32 %v881, 15
        %v914 = vshrl.u32 %v882, 15
        %v915 = vshrl.u32 %v883, 15
        %v916 = vshrl.u32 %v884, 15
        %v917 = vshrl.u32 %v885, 15
        %v918 = vshrl.u32 %v886, 15
        %v919 = vshrl.u32 %v887, 15
        %v920 = vshrl.u32 %v888, 15
        %v921 = vshrl.u32 %v889, 15
        %v922 = vshrl.u32 %v890, 15
        %v923 = vshrl.u32 %v891, 15
        %v924 = vshrl.u32 %v892, 15
        %v925 = vxor.u32 %v861, %v893
        %v926 = vxor.u32 %v862, %v894
        %v927 = vxor.u32 %v863, %v895
        %v928 = vxor.u32 %v864, %v896
        %v929 = vxor.u32 %v865, %v897
        %v930 = vxor.u32 %v866, %v898
        %v931 = vxor.u32 %v867, %v899
        %v932 = vxor.u32 %v868, %v900
        %v933 = vxor.u32 %v869, %v901
        %v934 = vxor.u32 %v870, %v902
        %v935 = vxor.u32 %v871, %v903
        %v936 = vxor.u32 %v872, %v904
        %v937 = vxor.u32 %v873, %v905
        %v938 = vxor.u32 %v874, %v906
        %v939 = vxor.u32 %v875, %v907
        %v940 = vxor.u32 %v876, %v908
        %v941 = vxor.u32 %v877, %v909
        %v942 = vxor.u32 %v878, %v910
        %v943 = vxor.u32 %v879, %v911
        %v944 = vxor.u32 %v880, %v912
        %v945 = vxor.u32 %v881, %v913
        %v946 = vxor.u32 %v882, %v914
        %v947 = vxor.u32 %v883, %v915
        %v948 = vxor.u32 %v884, %v916
        %v949 = vxor.u32 %v885, %v917
        %v950 = vxor.u32 %v886, %v918
        %v951 = vxor.u32 %v887, %v919
        %v952 = vxor.u32 %v888, %v920
        %v953 = vxor.u32 %v889, %v921
        %v954 = vxor.u32 %v890, %v922
        %v955 = vxor.u32 %v891, %v923
        %v956 = vxor.u32 %v892, %v924
        %v957 = vadd.s32 %v925, 2147483648
        %vm959 = vcmp.ge.s32.totalorder %v957, 3006477107
        %v960 = vadd.s32 %v926, 2147483648
        %vm962 = vcmp.ge.s32.totalorder %v960, 3006477107
        %v963 = vadd.s32 %v927, 2147483648
        %vm965 = vcmp.ge.s32.totalorder %v963, 3006477107
        %v966 = vadd.s32 %v928, 2147483648
        %vm968 = vcmp.ge.s32.totalorder %v966, 3006477107
        %v969 = vadd.s32 %v929, 2147483648
        %vm971 = vcmp.ge.s32.totalorder %v969, 3006477107
        %v972 = vadd.s32 %v930, 2147483648
        %vm974 = vcmp.ge.s32.totalorder %v972, 3006477107
        %v975 = vadd.s32 %v931, 2147483648
        %vm977 = vcmp.ge.s32.totalorder %v975, 3006477107
        %v978 = vadd.s32 %v932, 2147483648
        %vm980 = vcmp.ge.s32.totalorder %v978, 3006477107
        %v981 = vadd.s32 %v933, 2147483648
        %vm983 = vcmp.ge.s32.totalorder %v981, 3006477107
        %v984 = vadd.s32 %v934, 2147483648
        %vm986 = vcmp.ge.s32.totalorder %v984, 3006477107
        %v987 = vadd.s32 %v935, 2147483648
        %vm989 = vcmp.ge.s32.totalorder %v987, 3006477107
        %v990 = vadd.s32 %v936, 2147483648
        %vm992 = vcmp.ge.s32.totalorder %v990, 3006477107
        %v993 = vadd.s32 %v937, 2147483648
        %vm995 = vcmp.ge.s32.totalorder %v993, 3006477107
        %v996 = vadd.s32 %v938, 2147483648
        %vm998 = vcmp.ge.s32.totalorder %v996, 3006477107
        %v999 = vadd.s32 %v939, 2147483648
        %vm1001 = vcmp.ge.s32.totalorder %v999, 3006477107
        %v1002 = vadd.s32 %v940, 2147483648
        %vm1004 = vcmp.ge.s32.totalorder %v1002, 3006477107
        %v1005 = vadd.s32 %v941, 2147483648
        %vm1007 = vcmp.ge.s32.totalorder %v1005, 3006477107
        %v1008 = vadd.s32 %v942, 2147483648
        %vm1010 = vcmp.ge.s32.totalorder %v1008, 3006477107
        %v1011 = vadd.s32 %v943, 2147483648
        %vm1013 = vcmp.ge.s32.totalorder %v1011, 3006477107
        %v1014 = vadd.s32 %v944, 2147483648
        %vm1016 = vcmp.ge.s32.totalorder %v1014, 3006477107
        %v1017 = vadd.s32 %v945, 2147483648
        %vm1019 = vcmp.ge.s32.totalorder %v1017, 3006477107
        %v1020 = vadd.s32 %v946, 2147483648
        %vm1022 = vcmp.ge.s32.totalorder %v1020, 3006477107
        %v1023 = vadd.s32 %v947, 2147483648
        %vm1025 = vcmp.ge.s32.totalorder %v1023, 3006477107
        %v1026 = vadd.s32 %v948, 2147483648
        %vm1028 = vcmp.ge.s32.totalorder %v1026, 3006477107
        %v1029 = vadd.s32 %v949, 2147483648
        %vm1031 = vcmp.ge.s32.totalorder %v1029, 3006477107
        %v1032 = vadd.s32 %v950, 2147483648
        %vm1034 = vcmp.ge.s32.totalorder %v1032, 3006477107
        %v1035 = vadd.s32 %v951, 2147483648
        %vm1037 = vcmp.ge.s32.totalorder %v1035, 3006477107
        %v1038 = vadd.s32 %v952, 2147483648
        %vm1040 = vcmp.ge.s32.totalorder %v1038, 3006477107
        %v1041 = vadd.s32 %v953, 2147483648
        %vm1043 = vcmp.ge.s32.totalorder %v1041, 3006477107
        %v1044 = vadd.s32 %v954, 2147483648
        %vm1046 = vcmp.ge.s32.totalorder %v1044, 3006477107
        %v1047 = vadd.s32 %v955, 2147483648
        %vm1049 = vcmp.ge.s32.totalorder %v1047, 3006477107
        %v1050 = vadd.s32 %v956, 2147483648
        %vm1052 = vcmp.ge.s32.totalorder %v1050, 3006477107
        %v1053 = vmul.f32 %v598, 1.25
        %v1054 = vmul.f32 %v599, 1.25
        %v1055 = vmul.f32 %v600, 1.25
        %v1056 = vmul.f32 %v601, 1.25
        %v1057 = vmul.f32 %v602, 1.25
        %v1058 = vmul.f32 %v603, 1.25
        %v1059 = vmul.f32 %v604, 1.25
        %v1060 = vmul.f32 %v605, 1.25
        %v1061 = vmul.f32 %v606, 1.25
        %v1062 = vmul.f32 %v607, 1.25
        %v1063 = vmul.f32 %v608, 1.25
        %v1064 = vmul.f32 %v609, 1.25
        %v1065 = vmul.f32 %v610, 1.25
        %v1066 = vmul.f32 %v611, 1.25
        %v1067 = vmul.f32 %v612, 1.25
        %v1068 = vmul.f32 %v613, 1.25
        %v1069 = vmul.f32 %v614, 1.25
        %v1070 = vmul.f32 %v615, 1.25
        %v1071 = vmul.f32 %v616, 1.25
        %v1072 = vmul.f32 %v617, 1.25
        %v1073 = vmul.f32 %v618, 1.25
        %v1074 = vmul.f32 %v619, 1.25
        %v1075 = vmul.f32 %v620, 1.25
        %v1076 = vmul.f32 %v621, 1.25
        %v1077 = vmul.f32 %v622, 1.25
        %v1078 = vmul.f32 %v623, 1.25
        %v1079 = vmul.f32 %v624, 1.25
        %v1080 = vmul.f32 %v625, 1.25
        %v1081 = vmul.f32 %v626, 1.25
        %v1082 = vmul.f32 %v627, 1.25
        %v1083 = vmul.f32 %v628, 1.25
        %v1084 = vmul.f32 %v629, 1.25
        %v1085 = vsel %vm959, %v1053, 0.0
        %v1086 = vsel %vm962, %v1054, 0.0
        %v1087 = vsel %vm965, %v1055, 0.0
        %v1088 = vsel %vm968, %v1056, 0.0
        %v1089 = vsel %vm971, %v1057, 0.0
        %v1090 = vsel %vm974, %v1058, 0.0
        %v1091 = vsel %vm977, %v1059, 0.0
        %v1092 = vsel %vm980, %v1060, 0.0
        %v1093 = vsel %vm983, %v1061, 0.0
        %v1094 = vsel %vm986, %v1062, 0.0
        %v1095 = vsel %vm989, %v1063, 0.0
        %v1096 = vsel %vm992, %v1064, 0.0
        %v1097 = vsel %vm995, %v1065, 0.0
        %v1098 = vsel %vm998, %v1066, 0.0
        %v1099 = vsel %vm1001, %v1067, 0.0
        %v1100 = vsel %vm1004, %v1068, 0.0
        %v1101 = vsel %vm1007, %v1069, 0.0
        %v1102 = vsel %vm1010, %v1070, 0.0
        %v1103 = vsel %vm1013, %v1071, 0.0
        %v1104 = vsel %vm1016, %v1072, 0.0
        %v1105 = vsel %vm1019, %v1073, 0.0
        %v1106 = vsel %vm1022, %v1074, 0.0
        %v1107 = vsel %vm1025, %v1075, 0.0
        %v1108 = vsel %vm1028, %v1076, 0.0
        %v1109 = vsel %vm1031, %v1077, 0.0
        %v1110 = vsel %vm1034, %v1078, 0.0
        %v1111 = vsel %vm1037, %v1079, 0.0
        %v1112 = vsel %vm1040, %v1080, 0.0
        %v1113 = vsel %vm1043, %v1081, 0.0
        %v1114 = vsel %vm1046, %v1082, 0.0
        %v1115 = vsel %vm1049, %v1083, 0.0
        %v1116 = vsel %vm1052, %v1084, 0.0
        %v1117 = vpack.c.bf16 %v1085, %v1085
        %v1118 = vpack.c.bf16 %v1086, %v1086
        %v1119 = vpack.c.bf16 %v1087, %v1087
        %v1120 = vpack.c.bf16 %v1088, %v1088
        %v1121 = vpack.c.bf16 %v1089, %v1089
        %v1122 = vpack.c.bf16 %v1090, %v1090
        %v1123 = vpack.c.bf16 %v1091, %v1091
        %v1124 = vpack.c.bf16 %v1092, %v1092
        %v1125 = vpack.c.bf16 %v1093, %v1093
        %v1126 = vpack.c.bf16 %v1094, %v1094
        %v1127 = vpack.c.bf16 %v1095, %v1095
        %v1128 = vpack.c.bf16 %v1096, %v1096
        %v1129 = vpack.c.bf16 %v1097, %v1097
        %v1130 = vpack.c.bf16 %v1098, %v1098
        %v1131 = vpack.c.bf16 %v1099, %v1099
        %v1132 = vpack.c.bf16 %v1100, %v1100
        %v1133 = vpack.c.bf16 %v1101, %v1101
        %v1134 = vpack.c.bf16 %v1102, %v1102
        %v1135 = vpack.c.bf16 %v1103, %v1103
        %v1136 = vpack.c.bf16 %v1104, %v1104
        %v1137 = vpack.c.bf16 %v1105, %v1105
        %v1138 = vpack.c.bf16 %v1106, %v1106
        %v1139 = vpack.c.bf16 %v1107, %v1107
        %v1140 = vpack.c.bf16 %v1108, %v1108
        %v1141 = vpack.c.bf16 %v1109, %v1109
        %v1142 = vpack.c.bf16 %v1110, %v1110
        %v1143 = vpack.c.bf16 %v1111, %v1111
        %v1144 = vpack.c.bf16 %v1112, %v1112
        %v1145 = vpack.c.bf16 %v1113, %v1113
        %v1146 = vpack.c.bf16 %v1114, %v1114
        %v1147 = vpack.c.bf16 %v1115, %v1115
        %v1148 = vpack.c.bf16 %v1116, %v1116
        %vm1149 = vcmask 519168
        %1150 = vst.msk [vmem:[%s191] sm:$0xf] %vm1149, %v1117
        %1151 = vst.msk [vmem:[%s191 + $0x4] sm:$0xf] %vm1149, %v1118
        %1152 = vst.msk [vmem:[%s191 + $0x8] sm:$0xf] %vm1149, %v1119
        %1153 = vst.msk [vmem:[%s191 + $0xc] sm:$0xf] %vm1149, %v1120
        %1154 = vst.msk [vmem:[%s191 + $0x10] sm:$0xf] %vm1149, %v1121
        %1155 = vst.msk [vmem:[%s191 + $0x14] sm:$0xf] %vm1149, %v1122
        %1156 = vst.msk [vmem:[%s191 + $0x18] sm:$0xf] %vm1149, %v1123
        %1157 = vst.msk [vmem:[%s191 + $0x1c] sm:$0xf] %vm1149, %v1124
        %1158 = vst.msk [vmem:[%s191 + $0x20] sm:$0xf] %vm1149, %v1125
        %1159 = vst.msk [vmem:[%s191 + $0x24] sm:$0xf] %vm1149, %v1126
        %1160 = vst.msk [vmem:[%s191 + $0x28] sm:$0xf] %vm1149, %v1127
        %1161 = vst.msk [vmem:[%s191 + $0x2c] sm:$0xf] %vm1149, %v1128
        %1162 = vst.msk [vmem:[%s191 + $0x30] sm:$0xf] %vm1149, %v1129
        %1163 = vst.msk [vmem:[%s191 + $0x34] sm:$0xf] %vm1149, %v1130
        %1164 = vst.msk [vmem:[%s191 + $0x38] sm:$0xf] %vm1149, %v1131
        %1165 = vst.msk [vmem:[%s191 + $0x3c] sm:$0xf] %vm1149, %v1132
        %1166 = vst.msk [vmem:[%s191 + $0x40] sm:$0xf] %vm1149, %v1133
        %1167 = vst.msk [vmem:[%s191 + $0x44] sm:$0xf] %vm1149, %v1134
        %1168 = vst.msk [vmem:[%s191 + $0x48] sm:$0xf] %vm1149, %v1135
        %1169 = vst.msk [vmem:[%s191 + $0x4c] sm:$0xf] %vm1149, %v1136
        %1170 = vst.msk [vmem:[%s191 + $0x50] sm:$0xf] %vm1149, %v1137
        %1171 = vst.msk [vmem:[%s191 + $0x54] sm:$0xf] %vm1149, %v1138
        %1172 = vst.msk [vmem:[%s191 + $0x58] sm:$0xf] %vm1149, %v1139
        %1173 = vst.msk [vmem:[%s191 + $0x5c] sm:$0xf] %vm1149, %v1140
        %1174 = vst.msk [vmem:[%s191 + $0x60] sm:$0xf] %vm1149, %v1141
        %1175 = vst.msk [vmem:[%s191 + $0x64] sm:$0xf] %vm1149, %v1142
        %1176 = vst.msk [vmem:[%s191 + $0x68] sm:$0xf] %vm1149, %v1143
        %1177 = vst.msk [vmem:[%s191 + $0x6c] sm:$0xf] %vm1149, %v1144
        %1178 = vst.msk [vmem:[%s191 + $0x70] sm:$0xf] %vm1149, %v1145
        %1179 = vst.msk [vmem:[%s191 + $0x74] sm:$0xf] %vm1149, %v1146
        %1180 = vst.msk [vmem:[%s191 + $0x78] sm:$0xf] %vm1149, %v1147
        %1181 = vst.msk [vmem:[%s191 + $0x7c] sm:$0xf] %vm1149, %v1148
        %s1182 = smul.u32 32, %s17
        %p1183 = scmp.lt.s32.totalorder %s1182, 63
        %s1184 = scalar_select %p1183, %s1182, 63
        %s1185 = smul.addr %s1184, 4
        %s1186 = scalar_lea.vmem %s4, %s1185
        // Predicated region
        $region37: #{encoder_forward.10} parent=31 // pred_check
          %p1187 = pneg %p103
        $region38: #{encoder_forward.10} parent=31 // pred_check_branch
          %1189 = sbr.rel (%p1187) target = $region40
        $region39: #{encoder_forward.10} parent=31 // pred_region
          %s1190 = smul.u32 32, %s17
        $region40: #{encoder_forward.10} parent=31 // pred_fallthru
          _
      $region32: #{encoder_forward.10} parent=5 // pred_fallthru
        _
      %p1191 = scmp.le.s32.totalorder 2, %s12
      // Predicated region
      $region41: #{encoder_forward.10} parent=5 // pred_check
        %p1192 = pneg %p1191
      $region42: #{encoder_forward.10} parent=5 // pred_check_branch
        %1194 = sbr.rel (%p1192) target = $region44
      $region43: #{encoder_forward.10} parent=5 // pred_region
        %s1195 = ssub.s32 %s12, 2
        // Predicated region
        $region45: #{encoder_forward.10} parent=43 // pred_check
          %p1196 = pneg %p109
        $region46: #{encoder_forward.10} parent=43 // pred_check_branch
          %1198 = sbr.rel (%p1196) target = $region48
        $region47: #{encoder_forward.10} parent=43 // pred_region
          %s1199 = smul.u32 32, %s18
          %p1200 = scmp.lt.s32.totalorder %s1199, 63
          %s1201 = scalar_select %p1200, %s1199, 63
          %s1202 = smul.addr %s1201, 4
          %s1203 = scalar_lea.vmem %s4, %s1202
        $region48: #{encoder_forward.10} parent=43 // pred_fallthru
          _
      $region44: #{encoder_forward.10} parent=5 // pred_fallthru
        _
    $region6: #{encoder_forward.10} parent=1 // loop_footer
      %s16 = sadd.s32 1, %s12
    $region7: #{encoder_forward.10} parent=1 // loop_footer_branch
      %11 = sbr.rel target = $region3
    $region8: #{encoder_forward.10} parent=1 // loop_exit
      _
    %1204 = vsyncpa [#allocation5], 1
    %s1205 = scalar_lea.sflag [#allocation5], 1
    %1206 = vsyncpa %s1205, 1

// kernel: encoder_forward.12
$region0: #{encoder_forward.12}
  #allocation0 [shape = 'u32[]', space=smem, size = 0x4, offset = 0x4, fixed_abs, tag = 'smem constant byte address 0x4 - core index']
  #allocation1 [shape = 'u32[72,128]{1,0:T(1,128)}', space=vmem, size = 0x9000, scoped, tag = 'internal scratch']
  #allocation2 [shape = 's32[1]{0}', space=sflag, size = 0x4, scoped, tag = 'scoped memory for encoder_forward.12']
  #allocation3 [shape = 's32[1]{0:T(128)S(6)}', space=smem, size = 0x200, scoped, tag = 'prefetched SMEM operand 0']
  %s0 = inlined_call_operand.<no memory space> [shape: s32[1], index: 0, kind: input, shape index: {}]
  %s1 = inlined_call_operand.vmem [shape: bf16[128,128], index: 1, kind: input, shape index: {}]
  %s2 = inlined_call_operand.vmem [shape: f32[2,128], index: 2, kind: input, shape index: {}]
  %s3 = inlined_call_operand.vmem [shape: bf16[128,128], index: 3, kind: output, shape index: {}]
  %s4 = sld [smem:[#allocation0]]
  $region41: #{encoder_forward.12} parent=0
    _
  %s6 = ssub.s32 1, %s4
  %s7 = scalar_select 0, %s6, %s4
  %8 = sst [smem:[#allocation3]] %s0
  loop: start=0, step=1, limit=4
  $region2: #{encoder_forward.12} parent=0 // loop_pre_header
    _
  $region3: #{encoder_forward.12} parent=0 // loop_header
    %s10 = sphi 0, %s14
    %p11 = scmp.ge.s32.totalorder %s10, 4
    %s20 = sphi 0, %s22
    %s23 = sphi 0, %s20
    %s24 = sphi 0, %s23
    %s40 = sphi 0, %s24
    %s44 = sphi 0, %s44
    %s46 = sphi 0, %s44
    %s47 = sphi 0, %s46
    %s61 = sphi 0, %s47
    %s67 = sphi 0, %s69
    %s70 = sphi 0, %s67
    %s71 = sphi 0, %s70
    %s87 = sphi 0, %s71
  $region4: #{encoder_forward.12} parent=0 // loop_header_branch
    %13 = sbr.rel (%p11) target = $region8
  $region5: #{encoder_forward.12} parent=0 // loop_body
    %s15 = ssub.s32 %s10, 1
    %s16 = ssub.s32 %s10, 2
    %s17 = sadd.s32 %s10, 1
    %s18 = ssub.s32 %s10, %s17
    %p19 = scmp.eq.s32.totalorder %s18, 0
    %s21 = sadd.s32 %s20, 1
    %s22 = scalar_select %p19, %s20, %s21
    %p25 = pneg %p19
    %p26 = scmp.eq.s32.totalorder %s10, 1
    %p27 = por %p25, %p26
    %p28 = scmp.ne.s32.totalorder %s20, %s23
    %p29 = scmp.eq.s32.totalorder %s10, 0
    %p30 = por %p28, %p29
    %p31 = scmp.ne.s32.totalorder %s20, %s23
    %p32 = scmp.eq.s32.totalorder %s15, 1
    %p33 = por %p31, %p32
    %p34 = scmp.ne.s32.totalorder %s23, %s24
    %p35 = scmp.eq.s32.totalorder %s15, 0
    %p36 = por %p34, %p35
    %p37 = scmp.ne.s32.totalorder %s23, %s24
    %p38 = scmp.eq.s32.totalorder %s16, 1
    %p39 = por %p37, %p38
    %p41 = scmp.ne.s32.totalorder %s24, %s40
    %p42 = scmp.eq.s32.totalorder %s16, 0
    %p43 = por %p41, %p42
    %s45 = sadd.s32 %s44, 1
    %p48 = scmp.eq.s32.totalorder %s10, 1
    %p49 = scmp.ne.s32.totalorder %s44, %s46
    %p50 = scmp.eq.s32.totalorder %s10, 0
    %p51 = por %p49, %p50
    %p52 = scmp.ne.s32.totalorder %s44, %s46
    %p53 = scmp.eq.s32.totalorder %s15, 1
    %p54 = por %p52, %p53
    %p55 = scmp.ne.s32.totalorder %s46, %s47
    %p56 = scmp.eq.s32.totalorder %s15, 0
    %p57 = por %p55, %p56
    %p58 = scmp.ne.s32.totalorder %s46, %s47
    %p59 = scmp.eq.s32.totalorder %s16, 1
    %p60 = por %p58, %p59
    %p62 = scmp.ne.s32.totalorder %s47, %s61
    %p63 = scmp.eq.s32.totalorder %s16, 0
    %p64 = por %p62, %p63
    %s65 = ssub.s32 %s10, %s17
    %p66 = scmp.eq.s32.totalorder %s65, 0
    %s68 = sadd.s32 %s67, 1
    %s69 = scalar_select %p66, %s67, %s68
    %p72 = pneg %p66
    %p73 = scmp.eq.s32.totalorder %s10, 1
    %p74 = por %p72, %p73
    %p75 = scmp.ne.s32.totalorder %s67, %s70
    %p76 = scmp.eq.s32.totalorder %s10, 0
    %p77 = por %p75, %p76
    %p78 = scmp.ne.s32.totalorder %s67, %s70
    %p79 = scmp.eq.s32.totalorder %s15, 1
    %p80 = por %p78, %p79
    %p81 = scmp.ne.s32.totalorder %s70, %s71
    %p82 = scmp.eq.s32.totalorder %s15, 0
    %p83 = por %p81, %p82
    %p84 = scmp.ne.s32.totalorder %s70, %s71
    %p85 = scmp.eq.s32.totalorder %s16, 1
    %p86 = por %p84, %p85
    %p88 = scmp.ne.s32.totalorder %s71, %s87
    %p89 = scmp.eq.s32.totalorder %s16, 0
    %p90 = por %p88, %p89
    %p91 = scmp.le.s32.totalorder 1, %s10
    %p92 = scmp.lt.s32.totalorder %s10, 3
    %p93 = pnand %p91, %p92
    %p94 = pneg %p93
    // Predicated region
    $region9: #{encoder_forward.12} parent=5 // pred_check
      _
    $region10: #{encoder_forward.12} parent=5 // pred_check_branch
      %96 = sbr.rel (%p93) target = $region12
    $region11: #{encoder_forward.12} parent=5 // pred_region
      %s97 = ssub.s32 %s10, 1
      // Predicated region
      $region13: #{encoder_forward.12} parent=11 // pred_check
        %p98 = pneg %p57
      $region14: #{encoder_forward.12} parent=11 // pred_check_branch
        %100 = sbr.rel (%p98) target = $region16
      $region15: #{encoder_forward.12} parent=11 // pred_region
        _
      $region16: #{encoder_forward.12} parent=11 // pred_fallthru
        _
    $region12: #{encoder_forward.12} parent=5 // pred_fallthru
      _
    %p101 = scmp.lt.s32.totalorder %s10, 2
    // Predicated region
    $region17: #{encoder_forward.12} parent=5 // pred_check
      %p102 = pneg %p101
    $region18: #{encoder_forward.12} parent=5 // pred_check_branch
      %104 = sbr.rel (%p102) target = $region20
    $region19: #{encoder_forward.12} parent=5 // pred_region
      // Predicated region
      $region21: #{encoder_forward.12} parent=19 // pred_check
        %p105 = pneg %p30
      $region22: #{encoder_forward.12} parent=19 // pred_check_branch
        %107 = sbr.rel (%p105) target = $region24
      $region23: #{encoder_forward.12} parent=19 // pred_region
        %s108 = smul.u32 8, %s10
        %p109 = scmp.lt.s32.totalorder %s108, 15
        %s110 = scalar_select %p109, %s108, 15
        %s111 = smul.addr %s110, 4
        %s112 = scalar_lea.vmem %s1, %s111
        %s113 = smul.u32 8, %s10
      $region24: #{encoder_forward.12} parent=19 // pred_fallthru
        _
    $region20: #{encoder_forward.12} parent=5 // pred_fallthru
      _
    %p114 = scmp.le.s32.totalorder 1, %s10
    %p115 = scmp.lt.s32.totalorder %s10, 3
    %p116 = pnand %p114, %p115
    %p117 = pneg %p116
    // Predicated region
    $region25: #{encoder_forward.12} parent=5 // pred_check
      _
    $region26: #{encoder_forward.12} parent=5 // pred_check_branch
      %119 = sbr.rel (%p116) target = $region28
    $region27: #{encoder_forward.12} parent=5 // pred_region
      %s120 = ssub.s32 %s10, 1
      %s121 = smul.u32 8, %s15
      %p122 = scmp.lt.s32.totalorder %s121, 15
      %s123 = scalar_select %p122, %s121, 15
      %s124 = smul.addr %s123, 4
      %s125 = scalar_lea.vmem %s1, %s124
      %p126 = pneg %p36
      %p127 = pneg %p33
      %p128 = pneg %p57
      %p129 = pneg %p54
      %p130 = pneg %p83
      %p131 = pneg %p80
      %s132 = smul.u32 8, %s15
      %p133 = scmp.lt.s32.totalorder %s132, 15
      %s134 = scalar_select %p133, %s132, 15
      %s135 = smul.addr %s134, 4
      %s136 = scalar_lea.vmem %s3, %s135
      %s137 = smul.u32 8, %s15
      %p138 = scmp.lt.s32.totalorder %s137, 15
      %s139 = scalar_select %p138, %s137, 15
      %s140 = smul.addr %s139, 4
      %s141 = scalar_lea.vmem %s1, %s140
      %s142 = smul.u32 8, %s15
      %s143 = smul.u32 8, %s15
      %p144 = scmp.lt.s32.totalorder %s143, 15
      %s145 = scalar_select %p144, %s143, 15
      %s146 = smul.addr %s145, 4
      %s147 = scalar_lea.vmem %s3, %s146
      %s148 = smul.u32 8, %s15
      %v149 = vld [vmem:[%s141] sm:$0xf]
      %v150 = vld [vmem:[%s141 + $0x4] sm:$0xf]
      %v151 = vld [vmem:[%s141 + $0x8] sm:$0xf]
      %v152 = vld [vmem:[%s141 + $0xc] sm:$0xf]
      %v153 = vld [vmem:[%s141 + $0x10] sm:$0xf]
      %v154 = vld [vmem:[%s141 + $0x14] sm:$0xf]
      %v155 = vld [vmem:[%s141 + $0x18] sm:$0xf]
      %v156 = vld [vmem:[%s141 + $0x1c] sm:$0xf]
      %v157 = vunpack.c.l.bf16 %v149
      %v158 = vunpack.c.l.bf16 %v150
      %v159 = vunpack.c.l.bf16 %v151
      %v160 = vunpack.c.l.bf16 %v152
      %v161 = vunpack.c.l.bf16 %v153
      %v162 = vunpack.c.l.bf16 %v154
      %v163 = vunpack.c.l.bf16 %v155
      %v164 = vunpack.c.l.bf16 %v156
      %v165 = vld [vmem:[%s2] sm:$0x1]
      %v166 = vperm.slane %v165, 0
      %v167 = vmul.f32 %v157, %v166
      %v168 = vmul.f32 %v158, %v166
      %v169 = vmul.f32 %v159, %v166
      %v170 = vmul.f32 %v160, %v166
      %v171 = vmul.f32 %v161, %v166
      %v172 = vmul.f32 %v162, %v166
      %v173 = vmul.f32 %v163, %v166
      %v174 = vmul.f32 %v164, %v166
      %v175 = vld [vmem:[%s2 + $0x1] sm:$0x1]
      %v176 = vperm.slane %v175, 0
      %v177 = vadd.f32 %v167, %v176
      %v178 = vadd.f32 %v168, %v176
      %v179 = vadd.f32 %v169, %v176
      %v180 = vadd.f32 %v170, %v176
      %v181 = vadd.f32 %v171, %v176
      %v182 = vadd.f32 %v172, %v176
      %v183 = vadd.f32 %v173, %v176
      %v184 = vadd.f32 %v174, %v176
      %vm185 = vcmp.ge.f32.partialorder %v177, 0.0
      %vm186 = vcmp.ge.f32.partialorder %v178, 0.0
      %vm187 = vcmp.ge.f32.partialorder %v179, 0.0
      %vm188 = vcmp.ge.f32.partialorder %v180, 0.0
      %vm189 = vcmp.ge.f32.partialorder %v181, 0.0
      %vm190 = vcmp.ge.f32.partialorder %v182, 0.0
      %vm191 = vcmp.ge.f32.partialorder %v183, 0.0
      %vm192 = vcmp.ge.f32.partialorder %v184, 0.0
      %v193 = vmul.f32 %v177, 0.01
      %v194 = vmul.f32 %v178, 0.01
      %v195 = vmul.f32 %v179, 0.01
      %v196 = vmul.f32 %v180, 0.01
      %v197 = vmul.f32 %v181, 0.01
      %v198 = vmul.f32 %v182, 0.01
      %v199 = vmul.f32 %v183, 0.01
      %v200 = vmul.f32 %v184, 0.01
      %v201 = vsel %vm185, %v177, %v193
      %v202 = vsel %vm186, %v178, %v194
      %v203 = vsel %vm187, %v179, %v195
      %v204 = vsel %vm188, %v180, %v196
      %v205 = vsel %vm189, %v181, %v197
      %v206 = vsel %vm190, %v182, %v198
      %v207 = vsel %vm191, %v183, %v199
      %v208 = vsel %vm192, %v184, %v200
      %s209 = smul.u32 %s15, 64
      %s210 = sld [smem:[#allocation3]]
      %v211 = vlaneseq
      %v212 = vshrl.u32 %v211, 7
      %v213 = vadd.s32 %v212, 8
      %v214 = vadd.s32 %v212, 16
      %v215 = vadd.s32 %v212, 24
      %v216 = vadd.s32 %v212, 32
      %v217 = vadd.s32 %v212, 40
      %v218 = vadd.s32 %v212, 48
      %v219 = vadd.s32 %v212, 56
      %v220 = vstv %s209
      %v221 = vadd.s32 %v212, %v220
      %v222 = vadd.s32 %v213, %v220
      %v223 = vadd.s32 %v214, %v220
      %v224 = vadd.s32 %v215, %v220
      %v225 = vadd.s32 %v216, %v220
      %v226 = vadd.s32 %v217, %v220
      %v227 = vadd.s32 %v218, %v220
      %v228 = vadd.s32 %v219, %v220
      %v229 = vlaneseq
      %v230 = vand.u32 %v229, 127
      %v231 = vmul.u32 %v221, 2654435761
      %v232 = vmul.u32 %v222, 2654435761
      %v233 = vmul.u32 %v223, 2654435761
      %v234 = vmul.u32 %v224, 2654435761
      %v235 = vmul.u32 %v225, 2654435761
      %v236 = vmul.u32 %v226, 2654435761
      %v237 = vmul.u32 %v227, 2654435761
      %v238 = vmul.u32 %v228, 2654435761
      %v239 = vadd.s32 %v231, %v230
      %v240 = vadd.s32 %v232, %v230
      %v241 = vadd.s32 %v233, %v230
      %v242 = vadd.s32 %v234, %v230
      %v243 = vadd.s32 %v235, %v230
      %v244 = vadd.s32 %v236, %v230
      %v245 = vadd.s32 %v237, %v230
      %v246 = vadd.s32 %v238, %v230
      %v247 = vstv %s210
      %v248 = vadd.s32 %v239, %v247
      %v249 = vadd.s32 %v240, %v247
      %v250 = vadd.s32 %v241, %v247
      %v251 = vadd.s32 %v242, %v247
      %v252 = vadd.s32 %v243, %v247
      %v253 = vadd.s32 %v244, %v247
      %v254 = vadd.s32 %v245, %v247
      %v255 = vadd.s32 %v246, %v247
      %v256 = vshrl.u32 %v248, 16
      %v257 = vshrl.u32 %v249, 16
      %v258 = vshrl.u32 %v250, 16
      %v259 = vshrl.u32 %v251, 16
      %v260 = vshrl.u32 %v252, 16
      %v261 = vshrl.u32 %v253, 16
      %v262 = vshrl.u32 %v254, 16
      %v263 = vshrl.u32 %v255, 16
      %v264 = vxor.u32 %v248, %v256
      %v265 = vxor.u32 %v249, %v257
      %v266 = vxor.u32 %v250, %v258
      %v267 = vxor.u32 %v251, %v259
      %v268 = vxor.u32 %v252, %v260
      %v269 = vxor.u32 %v253, %v261
      %v270 = vxor.u32 %v254, %v262
      %v271 = vxor.u32 %v255, %v263
      %v272 = vmul.u32 %v264, 2146121005
      %v273 = vmul.u32 %v265, 2146121005
      %v274 = vmul.u32 %v266, 2146121005
      %v275 = vmul.u32 %v267, 2146121005
      %v276 = vmul.u32 %v268, 2146121005
      %v277 = vmul.u32 %v269, 2146121005
      %v278 = vmul.u32 %v270, 2146121005
      %v279 = vmul.u32 %v271, 2146121005
      %v280 = vshrl.u32 %v272, 15
      %v281 = vshrl.u32 %v273, 15
      %v282 = vshrl.u32 %v274, 15
      %v283 = vshrl.u32 %v275, 15
      %v284 = vshrl.u32 %v276, 15
      %v285 = vshrl.u32 %v277, 15
      %v286 = vshrl.u32 %v278, 15
      %v287 = vshrl.u32 %v279, 15
      %v288 = vxor.u32 %v272, %v280
      %v289 = vxor.u32 %v273, %v281
      %v290 = vxor.u32 %v274, %v282
      %v291 = vxor.u32 %v275, %v283
      %v292 = vxor.u32 %v276, %v284
      %v293 = vxor.u32 %v277, %v285
      %v294 = vxor.u32 %v278, %v286
      %v295 = vxor.u32 %v279, %v287
      %v296 = vadd.s32 %v288, 2147483648
      %vm298 = vcmp.ge.s32.totalorder %v296, 3006477107
      %v299 = vadd.s32 %v289, 2147483648
      %vm301 = vcmp.ge.s32.totalorder %v299, 3006477107
      %v302 = vadd.s32 %v290, 2147483648
      %vm304 = vcmp.ge.s32.totalorder %v302, 3006477107
      %v305 = vadd.s32 %v291, 2147483648
      %vm307 = vcmp.ge.s32.totalorder %v305, 3006477107
      %v308 = vadd.s32 %v292, 2147483648
      %vm310 = vcmp.ge.s32.totalorder %v308, 3006477107
      %v311 = vadd.s32 %v293, 2147483648
      %vm313 = vcmp.ge.s32.totalorder %v311, 3006477107
      %v314 = vadd.s32 %v294, 2147483648
      %vm316 = vcmp.ge.s32.totalorder %v314, 3006477107
      %v317 = vadd.s32 %v295, 2147483648
      %vm319 = vcmp.ge.s32.totalorder %v317, 3006477107
      %v320 = vmul.f32 %v201, 1.25
      %v321 = vmul.f32 %v202, 1.25
      %v322 = vmul.f32 %v203, 1.25
      %v323 = vmul.f32 %v204, 1.25
      %v324 = vmul.f32 %v205, 1.25
      %v325 = vmul.f32 %v206, 1.25
      %v326 = vmul.f32 %v207, 1.25
      %v327 = vmul.f32 %v208, 1.25
      %v328 = vsel %vm298, %v320, 0.0
      %v329 = vsel %vm301, %v321, 0.0
      %v330 = vsel %vm304, %v322, 0.0
      %v331 = vsel %vm307, %v323, 0.0
      %v332 = vsel %vm310, %v324, 0.0
      %v333 = vsel %vm313, %v325, 0.0
      %v334 = vsel %vm316, %v326, 0.0
      %v335 = vsel %vm319, %v327, 0.0
      %v336 = vpack.c.bf16 %v328, %v328
      %v337 = vpack.c.bf16 %v329, %v329
      %v338 = vpack.c.bf16 %v330, %v330
      %v339 = vpack.c.bf16 %v331, %v331
      %v340 = vpack.c.bf16 %v332, %v332
      %v341 = vpack.c.bf16 %v333, %v333
      %v342 = vpack.c.bf16 %v334, %v334
      %v343 = vpack.c.bf16 %v335, %v335
      %344 = vst [vmem:[%s147] sm:$0xf] %v336
      %345 = vst [vmem:[%s147 + $0x4] sm:$0xf] %v337
      %346 = vst [vmem:[%s147 + $0x8] sm:$0xf] %v338
      %347 = vst [vmem:[%s147 + $0xc] sm:$0xf] %v339
      %348 = vst [vmem:[%s147 + $0x10] sm:$0xf] %v340
      %349 = vst [vmem:[%s147 + $0x14] sm:$0xf] %v341
      %350 = vst [vmem:[%s147 + $0x18] sm:$0xf] %v342
      %351 = vst [vmem:[%s147 + $0x1c] sm:$0xf] %v343
      %s352 = smul.u32 8, %s15
      %p353 = scmp.lt.s32.totalorder %s352, 15
      %s354 = scalar_select %p353, %s352, 15
      %s355 = smul.addr %s354, 4
      %s356 = scalar_lea.vmem %s3, %s355
      // Predicated region
      $region29: #{encoder_forward.12} parent=27 // pred_check
        %p357 = pneg %p80
      $region30: #{encoder_forward.12} parent=27 // pred_check_branch
        %359 = sbr.rel (%p357) target = $region32
      $region31: #{encoder_forward.12} parent=27 // pred_region
        %s360 = smul.u32 8, %s15
      $region32: #{encoder_forward.12} parent=27 // pred_fallthru
        _
    $region28: #{encoder_forward.12} parent=5 // pred_fallthru
      _
    %p361 = scmp.le.s32.totalorder 2, %s10
    // Predicated region
    $region33: #{encoder_forward.12} parent=5 // pred_check
      %p362 = pneg %p361
    $region34: #{encoder_forward.12} parent=5 // pred_check_branch
      %364 = sbr.rel (%p362) target = $region36
    $region35: #{encoder_forward.12} parent=5 // pred_region
      %s365 = ssub.s32 %s10, 2
      // Predicated region
      $region37: #{encoder_forward.12} parent=35 // pred_check
        %p366 = pneg %p86
      $region38: #{encoder_forward.12} parent=35 // pred_check_branch
        %368 = sbr.rel (%p366) target = $region40
      $region39: #{encoder_forward.12} parent=35 // pred_region
        %s369 = smul.u32 8, %s16
        %p370 = scmp.lt.s32.totalorder %s369, 15
        %s371 = scalar_select %p370, %s369, 15
        %s372 = smul.addr %s371, 4
        %s373 = scalar_lea.vmem %s3, %s372
      $region40: #{encoder_forward.12} parent=35 // pred_fallthru
        _
    $region36: #{encoder_forward.12} parent=5 // pred_fallthru
      _
  $region6: #{encoder_forward.12} parent=0 // loop_footer
    %s14 = sadd.s32 1, %s10
  $region7: #{encoder_forward.12} parent=0 // loop_footer_branch
    %9 = sbr.rel target = $region3
  $region8: #{encoder_forward.12} parent=0 // loop_exit
    _

// kernel: encoder_forward.11
$region0: #{encoder_forward.11}
  #allocation0 [shape = 'u32[]', space=smem, size = 0x4, offset = 0x4, fixed_abs, tag = 'smem constant byte address 0x4 - core index']
  #allocation1 [shape = 'u32[72,128]{1,0:T(1,128)}', space=vmem, size = 0x9000, scoped, tag = 'internal scratch']
  %s0 = inlined_call_operand.vmem [shape: bf16[128,576], index: 0, kind: input, shape index: {}]
  %s1 = inlined_call_operand.vmem [shape: bf16[576,128], index: 1, kind: input, shape index: {}]
  %s2 = inlined_call_operand.vmem [shape: bf16[128,128], index: 2, kind: output, shape index: {0}]
  %s3 = inlined_call_operand.vmem [shape: f32[2,2,128], index: 3, kind: output, shape index: {1}]
  %4 = xla_tuple %s2, %s3
  %s5 = sld [smem:[#allocation0]]
  $region49: #{encoder_forward.11} parent=0
    _
  %s7 = ssub.s32 1, %s5
  %s8 = scalar_select 0, %s7, %s5
  loop: start=0, step=1, limit=4
  $region2: #{encoder_forward.11} parent=0 // loop_pre_header
    _
  $region3: #{encoder_forward.11} parent=0 // loop_header
    %s10 = sphi 0, %s14
    %p11 = scmp.ge.s32.totalorder %s10, 4
    %s20 = sphi 0, %s22
    %s23 = sphi 0, %s20
    %s24 = sphi 0, %s23
    %s40 = sphi 0, %s24
    %s44 = sphi 0, %s44
    %s46 = sphi 0, %s44
    %s47 = sphi 0, %s46
    %s61 = sphi 0, %s47
    %s67 = sphi 0, %s69
    %s70 = sphi 0, %s67
    %s71 = sphi 0, %s70
    %s87 = sphi 0, %s71
    %s93 = sphi 0, %s95
    %s96 = sphi 0, %s93
    %s97 = sphi 0, %s96
    %s113 = sphi 0, %s97
  $region4: #{encoder_forward.11} parent=0 // loop_header_branch
    %13 = sbr.rel (%p11) target = $region8
  $region5: #{encoder_forward.11} parent=0 // loop_body
    %s15 = ssub.s32 %s10, 1
    %s16 = ssub.s32 %s10, 2
    %s17 = sadd.s32 %s10, 1
    %s18 = ssub.s32 %s10, %s17
    %p19 = scmp.eq.s32.totalorder %s18, 0
    %s21 = sadd.s32 %s20, 1
    %s22 = scalar_select %p19, %s20, %s21
    %p25 = pneg %p19
    %p26 = scmp.eq.s32.totalorder %s10, 1
    %p27 = por %p25, %p26
    %p28 = scmp.ne.s32.totalorder %s20, %s23
    %p29 = scmp.eq.s32.totalorder %s10, 0
    %p30 = por %p28, %p29
    %p31 = scmp.ne.s32.totalorder %s20, %s23
    %p32 = scmp.eq.s32.totalorder %s15, 1
    %p33 = por %p31, %p32
    %p34 = scmp.ne.s32.totalorder %s23, %s24
    %p35 = scmp.eq.s32.totalorder %s15, 0
    %p36 = por %p34, %p35
    %p37 = scmp.ne.s32.totalorder %s23, %s24
    %p38 = scmp.eq.s32.totalorder %s16, 1
    %p39 = por %p37, %p38
    %p41 = scmp.ne.s32.totalorder %s24, %s40
    %p42 = scmp.eq.s32.totalorder %s16, 0
    %p43 = por %p41, %p42
    %s45 = sadd.s32 %s44, 1
    %p48 = scmp.eq.s32.totalorder %s10, 1
    %p49 = scmp.ne.s32.totalorder %s44, %s46
    %p50 = scmp.eq.s32.totalorder %s10, 0
    %p51 = por %p49, %p50
    %p52 = scmp.ne.s32.totalorder %s44, %s46
    %p53 = scmp.eq.s32.totalorder %s15, 1
    %p54 = por %p52, %p53
    %p55 = scmp.ne.s32.totalorder %s46, %s47
    %p56 = scmp.eq.s32.totalorder %s15, 0
    %p57 = por %p55, %p56
    %p58 = scmp.ne.s32.totalorder %s46, %s47
    %p59 = scmp.eq.s32.totalorder %s16, 1
    %p60 = por %p58, %p59
    %p62 = scmp.ne.s32.totalorder %s47, %s61
    %p63 = scmp.eq.s32.totalorder %s16, 0
    %p64 = por %p62, %p63
    %s65 = ssub.s32 %s10, %s17
    %p66 = scmp.eq.s32.totalorder %s65, 0
    %s68 = sadd.s32 %s67, 1
    %s69 = scalar_select %p66, %s67, %s68
    %p72 = pneg %p66
    %p73 = scmp.eq.s32.totalorder %s10, 1
    %p74 = por %p72, %p73
    %p75 = scmp.ne.s32.totalorder %s67, %s70
    %p76 = scmp.eq.s32.totalorder %s10, 0
    %p77 = por %p75, %p76
    %p78 = scmp.ne.s32.totalorder %s67, %s70
    %p79 = scmp.eq.s32.totalorder %s15, 1
    %p80 = por %p78, %p79
    %p81 = scmp.ne.s32.totalorder %s70, %s71
    %p82 = scmp.eq.s32.totalorder %s15, 0
    %p83 = por %p81, %p82
    %p84 = scmp.ne.s32.totalorder %s70, %s71
    %p85 = scmp.eq.s32.totalorder %s16, 1
    %p86 = por %p84, %p85
    %p88 = scmp.ne.s32.totalorder %s71, %s87
    %p89 = scmp.eq.s32.totalorder %s16, 0
    %p90 = por %p88, %p89
    %s91 = ssub.s32 %s10, %s17
    %p92 = scmp.eq.s32.totalorder %s91, 0
    %s94 = sadd.s32 %s93, 1
    %s95 = scalar_select %p92, %s93, %s94
    %p98 = pneg %p92
    %p99 = scmp.eq.s32.totalorder %s10, 1
    %p100 = por %p98, %p99
    %p101 = scmp.ne.s32.totalorder %s93, %s96
    %p102 = scmp.eq.s32.totalorder %s10, 0
    %p103 = por %p101, %p102
    %p104 = scmp.ne.s32.totalorder %s93, %s96
    %p105 = scmp.eq.s32.totalorder %s15, 1
    %p106 = por %p104, %p105
    %p107 = scmp.ne.s32.totalorder %s96, %s97
    %p108 = scmp.eq.s32.totalorder %s15, 0
    %p109 = por %p107, %p108
    %p110 = scmp.ne.s32.totalorder %s96, %s97
    %p111 = scmp.eq.s32.totalorder %s16, 1
    %p112 = por %p110, %p111
    %p114 = scmp.ne.s32.totalorder %s97, %s113
    %p115 = scmp.eq.s32.totalorder %s16, 0
    %p116 = por %p114, %p115
    %p117 = scmp.le.s32.totalorder 1, %s10
    %p118 = scmp.lt.s32.totalorder %s10, 3
    %p119 = pnand %p117, %p118
    %p120 = pneg %p119
    // Predicated region
    $region9: #{encoder_forward.11} parent=5 // pred_check
      _
    $region10: #{encoder_forward.11} parent=5 // pred_check_branch
      %122 = sbr.rel (%p119) target = $region12
    $region11: #{encoder_forward.11} parent=5 // pred_region
      %s123 = ssub.s32 %s10, 1
      // Predicated region
      $region13: #{encoder_forward.11} parent=11 // pred_check
        %p124 = pneg %p57
      $region14: #{encoder_forward.11} parent=11 // pred_check_branch
        %126 = sbr.rel (%p124) target = $region16
      $region15: #{encoder_forward.11} parent=11 // pred_region
        _
      $region16: #{encoder_forward.11} parent=11 // pred_fallthru
        _
    $region12: #{encoder_forward.11} parent=5 // pred_fallthru
      _
    %p127 = scmp.lt.s32.totalorder %s10, 2
    // Predicated region
    $region17: #{encoder_forward.11} parent=5 // pred_check
      %p128 = pneg %p127
    $region18: #{encoder_forward.11} parent=5 // pred_check_branch
      %130 = sbr.rel (%p128) target = $region20
    $region19: #{encoder_forward.11} parent=5 // pred_region
      // Predicated region
      $region21: #{encoder_forward.11} parent=19 // pred_check
        %p131 = pneg %p30
      $region22: #{encoder_forward.11} parent=19 // pred_check_branch
        %133 = sbr.rel (%p131) target = $region24
      $region23: #{encoder_forward.11} parent=19 // pred_region
        %s134 = smul.u32 8, %s10
        %p135 = scmp.lt.s32.totalorder %s134, 15
        %s136 = scalar_select %p135, %s134, 15
        %s137 = smul.addr %s136, 5
        %s138 = smul.addr %s137, 4
        %s139 = scalar_lea.vmem %s0, %s138
        %s140 = smul.u32 8, %s10
      $region24: #{encoder_forward.11} parent=19 // pred_fallthru
        _
    $region20: #{encoder_forward.11} parent=5 // pred_fallthru
      _
    %p141 = scmp.le.s32.totalorder 1, %s10
    %p142 = scmp.lt.s32.totalorder %s10, 3
    %p143 = pnand %p141, %p142
    %p144 = pneg %p143
    // Predicated region
    $region25: #{encoder_forward.11} parent=5 // pred_check
      _
    $region26: #{encoder_forward.11} parent=5 // pred_check_branch
      %146 = sbr.rel (%p143) target = $region28
    $region27: #{encoder_forward.11} parent=5 // pred_region
      %s147 = ssub.s32 %s10, 1
      %s148 = smul.u32 8, %s15
      %p149 = scmp.lt.s32.totalorder %s148, 15
      %s150 = scalar_select %p149, %s148, 15
      %s151 = smul.addr %s150, 5
      %s152 = smul.addr %s151, 4
      %s153 = scalar_lea.vmem %s0, %s152
      %p154 = pneg %p36
      %p155 = pneg %p33
      %p156 = pneg %p57
      %p157 = pneg %p54
      %p158 = pneg %p83
      %p159 = pneg %p80
      %s160 = smul.u32 8, %s15
      %p161 = scmp.lt.s32.totalorder %s160, 15
      %s162 = scalar_select %p161, %s160, 15
      %s163 = smul.addr %s162, 4
      %s164 = scalar_lea.vmem %s2, %s163
      %p165 = pneg %p109
      %p166 = pneg %p106
      %p167 = scmp.lt.s32.totalorder %s15, 1
      %s168 = scalar_select %p167, %s15, 1
      %s169 = smul.addr %s168, 2
      %s170 = scalar_lea.vmem %s3, %s169
      %s171 = smul.u32 8, %s15
      %p172 = scmp.lt.s32.totalorder %s171, 15
      %s173 = scalar_select %p172, %s171, 15
      %s174 = smul.addr %s173, 5
      %s175 = smul.addr %s174, 4
      %s176 = scalar_lea.vmem %s0, %s175
      %s177 = smul.u32 8, %s15
      %s178 = smul.u32 8, %s15
      %p179 = scmp.lt.s32.totalorder %s178, 15
      %s180 = scalar_select %p179, %s178, 15
      %s181 = smul.addr %s180, 4
      %s182 = scalar_lea.vmem %s2, %s181
      %s183 = smul.u32 8, %s15
      %p184 = scmp.lt.s32.totalorder %s15, 1
      %s185 = scalar_select %p184, %s15, 1
      %s186 = smul.addr %s185, 2
      %s187 = scalar_lea.vmem %s3, %s186
      %v189 = vld [vmem:[%s176] sm:$0xff]
      %v190 = vld [vmem:[%s176 + $0x8] sm:$0xff]
      %v191 = vld [vmem:[%s176 + $0x10] sm:$0xf]
      %v192 = vld [vmem:[%s176 + $0x14] sm:$0xff]
      %v193 = vld [vmem:[%s176 + $0x1c] sm:$0xff]
      %v194 = vld [vmem:[%s176 + $0x24] sm:$0xf]
      %v195 = vld [vmem:[%s176 + $0x28] sm:$0xff]
      %v196 = vld [vmem:[%s176 + $0x30] sm:$0xff]
      %v197 = vld [vmem:[%s176 + $0x38] sm:$0xf]
      %v198 = vld [vmem:[%s176 + $0x3c] sm:$0xff]
      %v199 = vld [vmem:[%s176 + $0x44] sm:$0xff]
      %v200 = vld [vmem:[%s176 + $0x4c] sm:$0xf]
      %v201 = vld [vmem:[%s176 + $0x50] sm:$0xff]
      %v202 = vld [vmem:[%s176 + $0x58] sm:$0xff]
      %v203 = vld [vmem:[%s176 + $0x60] sm:$0xf]
      %v204 = vld [vmem:[%s176 + $0x64] sm:$0xff]
      %v205 = vld [vmem:[%s176 + $0x6c] sm:$0xff]
      %v206 = vld [vmem:[%s176 + $0x74] sm:$0xf]
      %v207 = vld [vmem:[%s176 + $0x78] sm:$0xff]
      %v208 = vld [vmem:[%s176 + $0x80] sm:$0xff]
      %v209 = vld [vmem:[%s176 + $0x88] sm:$0xf]
      %v210 = vld [vmem:[%s176 + $0x8c] sm:$0xff]
      %v211 = vld [vmem:[%s176 + $0x94] sm:$0xff]
      %v212 = vld [vmem:[%s176 + $0x9c] sm:$0xf]
      %v213 = vld [vmem:[%s1] sm:$0xf]
      %v214 = vld [vmem:[%s1 + $0x4] sm:$0xf]
      %v215 = vld [vmem:[%s1 + $0x8] sm:$0xf]
      %v216 = vld [vmem:[%s1 + $0xc] sm:$0xf]
      %v217 = vld [vmem:[%s1 + $0x10] sm:$0xf]
      %v218 = vld [vmem:[%s1 + $0x14] sm:$0xf]
      %v219 = vld [vmem:[%s1 + $0x18] sm:$0xf]
      %v220 = vld [vmem:[%s1 + $0x1c] sm:$0xf]
      %v221 = vld [vmem:[%s1 + $0x20] sm:$0xf]
      %v222 = vld [vmem:[%s1 + $0x24] sm:$0xf]
      %v223 = vld [vmem:[%s1 + $0x28] sm:$0xf]
      %v224 = vld [vmem:[%s1 + $0x2c] sm:$0xf]
      %v225 = vld [vmem:[%s1 + $0x30] sm:$0xf]
      %v226 = vld [vmem:[%s1 + $0x34] sm:$0xf]
      %v227 = vld [vmem:[%s1 + $0x38] sm:$0xf]
      %v228 = vld [vmem:[%s1 + $0x3c] sm:$0xf]
      %v229 = vld [vmem:[%s1 + $0x40] sm:$0xf]
      %v230 = vld [vmem:[%s1 + $0x44] sm:$0xf]
      %v231 = vld [vmem:[%s1 + $0x48] sm:$0xf]
      %v232 = vld [vmem:[%s1 + $0x4c] sm:$0xf]
      %v233 = vld [vmem:[%s1 + $0x50] sm:$0xf]
      %v234 = vld [vmem:[%s1 + $0x54] sm:$0xf]
      %v235 = vld [vmem:[%s1 + $0x58] sm:$0xf]
      %v236 = vld [vmem:[%s1 + $0x5c] sm:$0xf]
      %v237 = vld [vmem:[%s1 + $0x60] sm:$0xf]
      %v238 = vld [vmem:[%s1 + $0x64] sm:$0xf]
      %v239 = vld [vmem:[%s1 + $0x68] sm:$0xf]
      %v240 = vld [vmem:[%s1 + $0x6c] sm:$0xf]
      %v241 = vld [vmem:[%s1 + $0x70] sm:$0xf]
      %v242 = vld [vmem:[%s1 + $0x74] sm:$0xf]
      %v243 = vld [vmem:[%s1 + $0x78] sm:$0xf]
      %v244 = vld [vmem:[%s1 + $0x7c] sm:$0xf]
      %v245 = vld [vmem:[%s1 + $0x80] sm:$0xf]
      %v246 = vld [vmem:[%s1 + $0x84] sm:$0xf]
      %v247 = vld [vmem:[%s1 + $0x88] sm:$0xf]
      %v248 = vld [vmem:[%s1 + $0x8c] sm:$0xf]
      %v249 = vld [vmem:[%s1 + $0x90] sm:$0xf]
      %v250 = vld [vmem:[%s1 + $0x94] sm:$0xf]
      %v251 = vld [vmem:[%s1 + $0x98] sm:$0xf]
      %v252 = vld [vmem:[%s1 + $0x9c] sm:$0xf]
      %v253 = vld [vmem:[%s1 + $0xa0] sm:$0xf]
      %v254 = vld [vmem:[%s1 + $0xa4] sm:$0xf]
      %v255 = vld [vmem:[%s1 + $0xa8] sm:$0xf]
      %v256 = vld [vmem:[%s1 + $0xac] sm:$0xf]
      %v257 = vld [vmem:[%s1 + $0xb0] sm:$0xf]
      %v258 = vld [vmem:[%s1 + $0xb4] sm:$0xf]
      %v259 = vld [vmem:[%s1 + $0xb8] sm:$0xf]
      %v260 = vld [vmem:[%s1 + $0xbc] sm:$0xf]
      %v261 = vld [vmem:[%s1 + $0xc0] sm:$0xf]
      %v262 = vld [vmem:[%s1 + $0xc4] sm:$0xf]
      %v263 = vld [vmem:[%s1 + $0xc8] sm:$0xf]
      %v264 = vld [vmem:[%s1 + $0xcc] sm:$0xf]
      %v265 = vld [vmem:[%s1 + $0xd0] sm:$0xf]
      %v266 = vld [vmem:[%s1 + $0xd4] sm:$0xf]
      %v267 = vld [vmem:[%s1 + $0xd8] sm:$0xf]
      %v268 = vld [vmem:[%s1 + $0xdc] sm:$0xf]
      %v269 = vld [vmem:[%s1 + $0xe0] sm:$0xf]
      %v270 = vld [vmem:[%s1 + $0xe4] sm:$0xf]
      %v271 = vld [vmem:[%s1 + $0xe8] sm:$0xf]
      %v272 = vld [vmem:[%s1 + $0xec] sm:$0xf]
      %v273 = vld [vmem:[%s1 + $0xf0] sm:$0xf]
      %v274 = vld [vmem:[%s1 + $0xf4] sm:$0xf]
      %v275 = vld [vmem:[%s1 + $0xf8] sm:$0xf]
      %v276 = vld [vmem:[%s1 + $0xfc] sm:$0xf]
      %v277 = vld [vmem:[%s1 + $0x100] sm:$0xf]
      %v278 = vld [vmem:[%s1 + $0x104] sm:$0xf]
      %v279 = vld [vmem:[%s1 + $0x108] sm:$0xf]
      %v280 = vld [vmem:[%s1 + $0x10c] sm:$0xf]
      %v281 = vld [vmem:[%s1 + $0x110] sm:$0xf]
      %v282 = vld [vmem:[%s1 + $0x114] sm:$0xf]
      %v283 = vld [vmem:[%s1 + $0x118] sm:$0xf]
      %v284 = vld [vmem:[%s1 + $0x11c] sm:$0xf]
      %v309 = vunpack.c.l.b16 %v189
      %v310 = vunpack.c.h.b16 %v189
      %v311 = vunpack.c.l.b16 %v190
      %v312 = vunpack.c.h.b16 %v190
      %v313 = vunpack.c.l.b16 %v191
      %v314 = vunpack.c.l.b16 %v192
      %v315 = vunpack.c.h.b16 %v192
      %v316 = vunpack.c.l.b16 %v193
      %v317 = vunpack.c.h.b16 %v193
      %v318 = vunpack.c.l.b16 %v194
      %v319 = vunpack.c.l.b16 %v195
      %v320 = vunpack.c.h.b16 %v195
      %v321 = vunpack.c.l.b16 %v196
      %v322 = vunpack.c.h.b16 %v196
      %v323 = vunpack.c.l.b16 %v197
      %v324 = vunpack.c.l.b16 %v198
      %v325 = vunpack.c.h.b16 %v198
      %v326 = vunpack.c.l.b16 %v199
      %v327 = vunpack.c.h.b16 %v199
      %v328 = vunpack.c.l.b16 %v200
      %v329 = vunpack.c.l.b16 %v201
      %v330 = vunpack.c.h.b16 %v201
      %v331 = vunpack.c.l.b16 %v202
      %v332 = vunpack.c.h.b16 %v202
      %v333 = vunpack.c.l.b16 %v203
      %v334 = vunpack.c.l.b16 %v204
      %v335 = vunpack.c.h.b16 %v204
      %v336 = vunpack.c.l.b16 %v205
      %v337 = vunpack.c.h.b16 %v205
      %v338 = vunpack.c.l.b16 %v206
      %v339 = vunpack.c.l.b16 %v207
      %v340 = vunpack.c.h.b16 %v207
      %v341 = vunpack.c.l.b16 %v208
      %v342 = vunpack.c.h.b16 %v208
      %v343 = vunpack.c.l.b16 %v209
      %v344 = vunpack.c.l.b16 %v210
      %v345 = vunpack.c.h.b16 %v210
      %v346 = vunpack.c.l.b16 %v211
      %v347 = vunpack.c.h.b16 %v211
      %v348 = vunpack.c.l.b16 %v212
      %v349 = vpack.c.b16 %v314, %v309
      %v350 = vpack.c.b16 %v315, %v310
      %v351 = vpack.c.b16 %v316, %v311
      %v352 = vpack.c.b16 %v317, %v312
      %v353 = vpack.c.b16 %v318, %v313
      %v354 = vpack.c.b16 %v324, %v319
      %v355 = vpack.c.b16 %v325, %v320
      %v356 = vpack.c.b16 %v326, %v321
      %v357 = vpack.c.b16 %v327, %v322
      %v358 = vpack.c.b16 %v328, %v323
      %v359 = vpack.c.b16 %v334, %v329
      %v360 = vpack.c.b16 %v335, %v330
      %v361 = vpack.c.b16 %v336, %v331
      %v362 = vpack.c.b16 %v337, %v332
      %v363 = vpack.c.b16 %v338, %v333
      %v364 = vpack.c.b16 %v344, %v339
      %v365 = vpack.c.b16 %v345, %v340
      %v366 = vpack.c.b16 %v346, %v341
      %v367 = vpack.c.b16 %v347, %v342
      %v368 = vpack.c.b16 %v348, %v343
      %v457 = vunpack.c.l.b16 %v213
      %v458 = vunpack.c.l.b16 %v214
      %v459 = vunpack.c.l.b16 %v215
      %v460 = vunpack.c.l.b16 %v216
      %v461 = vunpack.c.l.b16 %v217
      %v462 = vunpack.c.l.b16 %v218
      %v463 = vunpack.c.l.b16 %v219
      %v464 = vunpack.c.l.b16 %v220
      %v465 = vunpack.c.l.b16 %v221
      %v466 = vunpack.c.l.b16 %v222
      %v467 = vunpack.c.l.b16 %v223
      %v468 = vunpack.c.l.b16 %v224
      %v469 = vunpack.c.l.b16 %v225
      %v470 = vunpack.c.l.b16 %v226
      %v471 = vunpack.c.l.b16 %v227
      %v472 = vunpack.c.l.b16 %v228
      %v473 = vunpack.c.l.b16 %v229
      %v474 = vunpack.c.l.b16 %v230
      %v475 = vunpack.c.l.b16 %v231
      %v476 = vunpack.c.l.b16 %v232
      %v477 = vunpack.c.l.b16 %v233
      %v478 = vunpack.c.l.b16 %v234
      %v479 = vunpack.c.l.b16 %v235
      %v480 = vunpack.c.l.b16 %v236
      %v481 = vunpack.c.l.b16 %v237
      %v482 = vunpack.c.l.b16 %v238
      %v483 = vunpack.c.l.b16 %v239
      %v484 = vunpack.c.l.b16 %v240
      %v485 = vunpack.c.l.b16 %v241
      %v486 = vunpack.c.l.b16 %v242
      %v487 = vunpack.c.l.b16 %v243
      %v488 = vunpack.c.l.b16 %v244
      %v489 = vunpack.c.l.b16 %v245
      %v490 = vunpack.c.l.b16 %v246
      %v491 = vunpack.c.l.b16 %v247
      %v492 = vunpack.c.l.b16 %v248
      %v493 = vunpack.c.l.b16 %v249
      %v494 = vunpack.c.l.b16 %v250
      %v495 = vunpack.c.l.b16 %v251
      %v496 = vunpack.c.l.b16 %v252
      %v497 = vunpack.c.l.b16 %v253
      %v498 = vunpack.c.l.b16 %v254
      %v499 = vunpack.c.l.b16 %v255
      %v500 = vunpack.c.l.b16 %v256
      %v501 = vunpack.c.l.b16 %v257
      %v502 = vunpack.c.l.b16 %v258
      %v503 = vunpack.c.l.b16 %v259
      %v504 = vunpack.c.l.b16 %v260
      %v505 = vunpack.c.l.b16 %v261
      %v506 = vunpack.c.l.b16 %v262
      %v507 = vunpack.c.l.b16 %v263
      %v508 = vunpack.c.l.b16 %v264
      %v509 = vunpack.c.l.b16 %v265
      %v510 = vunpack.c.l.b16 %v266
      %v511 = vunpack.c.l.b16 %v267
      %v512 = vunpack.c.l.b16 %v268
      %v513 = vunpack.c.l.b16 %v269
      %v514 = vunpack.c.l.b16 %v270
      %v515 = vunpack.c.l.b16 %v271
      %v516 = vunpack.c.l.b16 %v272
      %v517 = vunpack.c.l.b16 %v273
      %v518 = vunpack.c.l.b16 %v274
      %v519 = vunpack.c.l.b16 %v275
      %v520 = vunpack.c.l.b16 %v276
      %v521 = vunpack.c.l.b16 %v277
      %v522 = vunpack.c.l.b16 %v278
      %v523 = vunpack.c.l.b16 %v279
      %v524 = vunpack.c.l.b16 %v280
      %v525 = vunpack.c.l.b16 %v281
      %v526 = vunpack.c.l.b16 %v282
      %v527 = vunpack.c.l.b16 %v283
      %v528 = vunpack.c.l.b16 %v284
      %v529 = vpack.c.b16 %v458, %v457
      %v530 = vpack.c.b16 %v460, %v459
      %v531 = vpack.c.b16 %v462, %v461
      %v532 = vpack.c.b16 %v464, %v463
      %v533 = vpack.c.b16 %v466, %v465
      %v534 = vpack.c.b16 %v468, %v467
      %v535 = vpack.c.b16 %v470, %v469
      %v536 = vpack.c.b16 %v472, %v471
      %v537 = vpack.c.b16 %v474, %v473
      %v538 = vpack.c.b16 %v476, %v475
      %v539 = vpack.c.b16 %v478, %v477
      %v540 = vpack.c.b16 %v480, %v479
      %v541 = vpack.c.b16 %v482, %v481
      %v542 = vpack.c.b16 %v484, %v483
      %v543 = vpack.c.b16 %v486, %v485
      %v544 = vpack.c.b16 %v488, %v487
      %v545 = vpack.c.b16 %v490, %v489
      %v546 = vpack.c.b16 %v492, %v491
      %v547 = vpack.c.b16 %v494, %v493
      %v548 = vpack.c.b16 %v496, %v495
      %v549 = vpack.c.b16 %v498, %v497
      %v550 = vpack.c.b16 %v500, %v499
      %v551 = vpack.c.b16 %v502, %v501
      %v552 = vpack.c.b16 %v504, %v503
      %v553 = vpack.c.b16 %v506, %v505
      %v554 = vpack.c.b16 %v508, %v507
      %v555 = vpack.c.b16 %v510, %v509
      %v556 = vpack.c.b16 %v512, %v511
      %v557 = vpack.c.b16 %v514, %v513
      %v558 = vpack.c.b16 %v516, %v515
      %v559 = vpack.c.b16 %v518, %v517
      %v560 = vpack.c.b16 %v520, %v519
      %v561 = vpack.c.b16 %v522, %v521
      %v562 = vpack.c.b16 %v524, %v523
      %v563 = vpack.c.b16 %v526, %v525
      %v564 = vpack.c.b16 %v528, %v527
      %vm601 = vcmask 523264
      %v603 = vsel %vm601, %v353, 0
      %v606 = vsel %vm601, %v358, 0
      %v609 = vsel %vm601, %v363, 0
      %v612 = vsel %vm601, %v368, 0
      %614 = vmatpush.bf16.msra.mxu0 %v536
      %615 = vmatpush.bf16.msra.mxu0 %v535
      %616 = vmatpush.bf16.msra.mxu0 %v534
      %617 = vmatpush.bf16.msra.mxu0 %v533
      %618 = vmatpush.bf16.msra.mxu0 %v532
      %619 = vmatpush.bf16.msra.mxu0 %v531
      %620 = vmatpush.bf16.msra.mxu0 %v530
      %621 = vmatpush.bf16.msra.mxu0 %v529
      %622 = vmatmul.bf16.gmra.mxu0 %v349
      %v623 = vpop.f32.mrf.mxu0
      %v624 = vadd.f32 0.0, %v623
      %v625 = vpop.f32.mrf.mxu0
      %v626 = vadd.f32 0.0, %v625
      %627 = vmatmul.bf16.gmra.mxu0 %v354
      %v628 = vpop.f32.mrf.mxu0
      %v629 = vadd.f32 0.0, %v628
      %v630 = vpop.f32.mrf.mxu0
      %v631 = vadd.f32 0.0, %v630
      %632 = vmatmul.bf16.gmra.mxu0 %v359
      %v633 = vpop.f32.mrf.mxu0
      %v634 = vadd.f32 0.0, %v633
      %v635 = vpop.f32.mrf.mxu0
      %v636 = vadd.f32 0.0, %v635
      %637 = vmatmul.bf16.gmra.mxu0 %v364
      %v638 = vpop.f32.mrf.mxu0
      %v639 = vadd.f32 0.0, %v638
      %v640 = vpop.f32.mrf.mxu0
      %v641 = vadd.f32 0.0, %v640
      %642 = vdwg.mxu0
      %643 = vmatpush.bf16.msra.mxu0 %v544
      %644 = vmatpush.bf16.msra.mxu0 %v543
      %645 = vmatpush.bf16.msra.mxu0 %v542
      %646 = vmatpush.bf16.msra.mxu0 %v541
      %647 = vmatpush.bf16.msra.mxu0 %v540
      %648 = vmatpush.bf16.msra.mxu0 %v539
      %649 = vmatpush.bf16.msra.mxu0 %v538
      %650 = vmatpush.bf16.msra.mxu0 %v537
      %651 = vmatmul.bf16.gmra.mxu0 %v350
      %v652 = vpop.f32.mrf.mxu0
      %v653 = vadd.f32 %v624, %v652
      %v654 = vpop.f32.mrf.mxu0
      %v655 = vadd.f32 %v626, %v654
      %656 = vmatmul.bf16.gmra.mxu0 %v355
      %v657 = vpop.f32.mrf.mxu0
      %v658 = vadd.f32 %v629, %v657
      %v659 = vpop.f32.mrf.mxu0
      %v660 = vadd.f32 %v631, %v659
      %661 = vmatmul.bf16.gmra.mxu0 %v360
      %v662 = vpop.f32.mrf.mxu0
      %v663 = vadd.f32 %v634, %v662
      %v664 = vpop.f32.mrf.mxu0
      %v665 = vadd.f32 %v636, %v664
      %666 = vmatmul.bf16.gmra.mxu0 %v365
      %v667 = vpop.f32.mrf.mxu0
      %v668 = vadd.f32 %v639, %v667
      %v669 = vpop.f32.mrf.mxu0
      %v670 = vadd.f32 %v641, %v669
      %671 = vdwg.mxu0
      %672 = vmatpush.bf16.msra.mxu0 %v552
      %673 = vmatpush.bf16.msra.mxu0 %v551
      %674 = vmatpush.bf16.msra.mxu0 %v550
      %675 = vmatpush.bf16.msra.mxu0 %v549
      %676 = vmatpush.bf16.msra.mxu0 %v548
      %677 = vmatpush.bf16.msra.mxu0 %v547
      %678 = vmatpush.bf16.msra.mxu0 %v546
      %679 = vmatpush.bf16.msra.mxu0 %v545
      %680 = vmatmul.bf16.gmra.mxu0 %v351
      %v681 = vpop.f32.mrf.mxu0
      %v682 = vadd.f32 %v653, %v681
      %v683 = vpop.f32.mrf.mxu0
      %v684 = vadd.f32 %v655, %v683
      %685 = vmatmul.bf16.gmra.mxu0 %v356
      %v686 = vpop.f32.mrf.mxu0
      %v687 = vadd.f32 %v658, %v686
      %v688 = vpop.f32.mrf.mxu0
      %v689 = vadd.f32 %v660, %v688
      %690 = vmatmul.bf16.gmra.mxu0 %v361
      %v691 = vpop.f32.mrf.mxu0
      %v692 = vadd.f32 %v663, %v691
      %v693 = vpop.f32.mrf.mxu0
      %v694 = vadd.f32 %v665, %v693
      %695 = vmatmul.bf16.gmra.mxu0 %v366
      %v696 = vpop.f32.mrf.mxu0
      %v697 = vadd.f32 %v668, %v696
      %v698 = vpop.f32.mrf.mxu0
      %v699 = vadd.f32 %v670, %v698
      %700 = vdwg.mxu0
      %701 = vmatpush.bf16.msra.mxu0 %v560
      %702 = vmatpush.bf16.msra.mxu0 %v559
      %703 = vmatpush.bf16.msra.mxu0 %v558
      %704 = vmatpush.bf16.msra.mxu0 %v557
      %705 = vmatpush.bf16.msra.mxu0 %v556
      %706 = vmatpush.bf16.msra.mxu0 %v555
      %707 = vmatpush.bf16.msra.mxu0 %v554
      %708 = vmatpush.bf16.msra.mxu0 %v553
      %709 = vmatmul.bf16.gmra.mxu0 %v352
      %v710 = vpop.f32.mrf.mxu0
      %v711 = vadd.f32 %v682, %v710
      %v712 = vpop.f32.mrf.mxu0
      %v713 = vadd.f32 %v684, %v712
      %714 = vmatmul.bf16.gmra.mxu0 %v357
      %v715 = vpop.f32.mrf.mxu0
      %v716 = vadd.f32 %v687, %v715
      %v717 = vpop.f32.mrf.mxu0
      %v718 = vadd.f32 %v689, %v717
      %719 = vmatmul.bf16.gmra.mxu0 %v362
      %v720 = vpop.f32.mrf.mxu0
      %v721 = vadd.f32 %v692, %v720
      %v722 = vpop.f32.mrf.mxu0
      %v723 = vadd.f32 %v694, %v722
      %724 = vmatmul.bf16.gmra.mxu0 %v367
      %v725 = vpop.f32.mrf.mxu0
      %v726 = vadd.f32 %v697, %v725
      %v727 = vpop.f32.mrf.mxu0
      %v728 = vadd.f32 %v699, %v727
      %729 = vdwg.mxu0
      %730 = vmatpush.bf16.msra.mxu0 0
      %731 = vmatpush.bf16.msra.mxu0 0
      %732 = vmatpush.bf16.msra.mxu0 0
      %733 = vmatpush.bf16.msra.mxu0 0
      %734 = vmatpush.bf16.msra.mxu0 %v564
      %735 = vmatpush.bf16.msra.mxu0 %v563
      %736 = vmatpush.bf16.msra.mxu0 %v562
      %737 = vmatpush.bf16.msra.mxu0 %v561
      %738 = vmatmul.bf16.gmra.mxu0 %v603
      %v739 = vpop.f32.mrf.mxu0
      %v740 = vadd.f32 %v711, %v739
      %v741 = vpop.f32.mrf.mxu0
      %v742 = vadd.f32 %v713, %v741
      %743 = vmatmul.bf16.gmra.mxu0 %v606
      %v744 = vpop.f32.mrf.mxu0
      %v745 = vadd.f32 %v716, %v744
      %v746 = vpop.f32.mrf.mxu0
      %v747 = vadd.f32 %v718, %v746
      %748 = vmatmul.bf16.gmra.mxu0 %v609
      %v749 = vpop.f32.mrf.mxu0
      %v750 = vadd.f32 %v721, %v749
      %v751 = vpop.f32.mrf.mxu0
      %v752 = vadd.f32 %v723, %v751
      %753 = vmatmul.bf16.gmra.mxu0 %v612
      %v754 = vpop.f32.mrf.mxu0
      %v755 = vadd.f32 %v726, %v754
      %v756 = vpop.f32.mrf.mxu0
      %v757 = vadd.f32 %v728, %v756
      %758 = vdwg.mxu0
      %v759 = vadd.f32 %v740, %v742
      %v760 = vadd.f32 %v759, %v745
      %v761 = vadd.f32 %v760, %v747
      %v762 = vadd.f32 %v761, %v750
      %v763 = vadd.f32 %v762, %v752
      %v764 = vadd.f32 %v763, %v755
      %v765 = vadd.f32 %v764, %v757
      %v766 = vrot.slane %v765, 4
      %v767 = vadd.f32 %v765, %v766
      %v768 = vrot.slane %v767, 2
      %v769 = vadd.f32 %v767, %v768
      %v770 = vrot.slane %v769, 1
      %v771 = vadd.f32 %v769, %v770
      %v772 = vmul.f32 %v740, %v740
      %v773 = vmul.f32 %v742, %v742
      %v774 = vmul.f32 %v745, %v745
      %v775 = vmul.f32 %v747, %v747
      %v776 = vmul.f32 %v750, %v750
      %v777 = vmul.f32 %v752, %v752
      %v778 = vmul.f32 %v755, %v755
      %v779 = vmul.f32 %v757, %v757
      %v780 = vadd.f32 %v772, %v773
      %v781 = vadd.f32 %v780, %v774
      %v782 = vadd.f32 %v781, %v775
      %v783 = vadd.f32 %v782, %v776
      %v784 = vadd.f32 %v783, %v777
      %v785 = vadd.f32 %v784, %v778
      %v786 = vadd.f32 %v785, %v779
      %v787 = vrot.slane %v786, 4
      %v788 = vadd.f32 %v786, %v787
      %v789 = vrot.slane %v788, 2
      %v790 = vadd.f32 %v788, %v789
      %v791 = vrot.slane %v790, 1
      %v792 = vadd.f32 %v790, %v791
      %vm793 = vcmask 1040384
      %v794 = vsel %vm793, %v771, %v792
      %795 = vst [vmem:[%s187] sm:$0x3] %v794
      %v796 = vpack.c.bf16 %v740, %v740
      %v797 = vpack.c.bf16 %v742, %v742
      %v798 = vpack.c.bf16 %v745, %v745
      %v799 = vpack.c.bf16 %v747, %v747
      %v800 = vpack.c.bf16 %v750, %v750
      %v801 = vpack.c.bf16 %v752, %v752
      %v802 = vpack.c.bf16 %v755, %v755
      %v803 = vpack.c.bf16 %v757, %v757
      %804 = vst [vmem:[%s182] sm:$0xf] %v796
      %805 = vst [vmem:[%s182 + $0x4] sm:$0xf] %v797
      %806 = vst [vmem:[%s182 + $0x8] sm:$0xf] %v798
      %807 = vst [vmem:[%s182 + $0xc] sm:$0xf] %v799
      %808 = vst [vmem:[%s182 + $0x10] sm:$0xf] %v800
      %809 = vst [vmem:[%s182 + $0x14] sm:$0xf] %v801
      %810 = vst [vmem:[%s182 + $0x18] sm:$0xf] %v802
      %811 = vst [vmem:[%s182 + $0x1c] sm:$0xf] %v803
      %s812 = smul.u32 8, %s15
      %p813 = scmp.lt.s32.totalorder %s812, 15
      %s814 = scalar_select %p813, %s812, 15
      %s815 = smul.addr %s814, 4
      %s816 = scalar_lea.vmem %s2, %s815
      %p817 = scmp.lt.s32.totalorder %s15, 1
      %s818 = scalar_select %p817, %s15, 1
      %s819 = smul.addr %s818, 2
      %s820 = scalar_lea.vmem %s3, %s819
      // Predicated region
      $region29: #{encoder_forward.11} parent=27 // pred_check
        %p821 = pneg %p80
      $region30: #{encoder_forward.11} parent=27 // pred_check_branch
        %823 = sbr.rel (%p821) target = $region32
      $region31: #{encoder_forward.11} parent=27 // pred_region
        %s824 = smul.u32 8, %s15
      $region32: #{encoder_forward.11} parent=27 // pred_fallthru
        _
      // Predicated region
      $region33: #{encoder_forward.11} parent=27 // pred_check
        %p825 = pneg %p106
      $region34: #{encoder_forward.11} parent=27 // pred_check_branch
        %827 = sbr.rel (%p825) target = $region36
      $region35: #{encoder_forward.11} parent=27 // pred_region
        _
      $region36: #{encoder_forward.11} parent=27 // pred_fallthru
        _
    $region28: #{encoder_forward.11} parent=5 // pred_fallthru
      _
    %p828 = scmp.le.s32.totalorder 2, %s10
    // Predicated region
    $region37: #{encoder_forward.11} parent=5 // pred_check
      %p829 = pneg %p828
    $region38: #{encoder_forward.11} parent=5 // pred_check_branch
      %831 = sbr.rel (%p829) target = $region40
    $region39: #{encoder_forward.11} parent=5 // pred_region
      %s832 = ssub.s32 %s10, 2
      // Predicated region
      $region41: #{encoder_forward.11} parent=39 // pred_check
        %p833 = pneg %p86
      $region42: #{encoder_forward.11} parent=39 // pred_check_branch
        %835 = sbr.rel (%p833) target = $region44
      $region43: #{encoder_forward.11} parent=39 // pred_region
        %s836 = smul.u32 8, %s16
        %p837 = scmp.lt.s32.totalorder %s836, 15
        %s838 = scalar_select %p837, %s836, 15
        %s839 = smul.addr %s838, 4
        %s840 = scalar_lea.vmem %s2, %s839
      $region44: #{encoder_forward.11} parent=39 // pred_fallthru
        _
      // Predicated region
      $region45: #{encoder_forward.11} parent=39 // pred_check
        %p841 = pneg %p112
      $region46: #{encoder_forward.11} parent=39 // pred_check_branch
        %843 = sbr.rel (%p841) target = $region48
      $region47: #{encoder_forward.11} parent=39 // pred_region
        %p844 = scmp.lt.s32.totalorder %s16, 1
        %s845 = scalar_select %p844, %s16, 1
        %s846 = smul.addr %s845, 2
        %s847 = scalar_lea.vmem %s3, %s846
      $region48: #{encoder_forward.11} parent=39 // pred_fallthru
        _
    $region40: #{encoder_forward.11} parent=5 // pred_fallthru
      _
  $region6: #{encoder_forward.11} parent=0 // loop_footer
    %s14 = sadd.s32 1, %s10
  $region7: #{encoder_forward.11} parent=0 // loop_footer_branch
    %9 = sbr.rel target = $region3
  $region8: #{encoder_forward.11} parent=0 // loop_exit
    _

// kernel: encoder_forward.14
$region0: #{encoder_forward.14}
  #allocation0 [shape = 'u32[]', space=smem, size = 0x4, offset = 0x4, fixed_abs, tag = 'smem constant byte address 0x4 - core index']
  #allocation1 [shape = 'u32[72,128]{1,0:T(1,128)}', space=vmem, size = 0x9000, scoped, tag = 'internal scratch']
  #allocation2 [shape = 's32[1]{0}', space=sflag, size = 0x4, scoped, tag = 'scoped memory for encoder_forward.14']
  #allocation3 [shape = 's32[1]{0:T(128)S(6)}', space=smem, size = 0x200, scoped, tag = 'prefetched SMEM operand 0']
  %s0 = inlined_call_operand.<no memory space> [shape: s32[1], index: 0, kind: input, shape index: {}]
  %s1 = inlined_call_operand.vmem [shape: bf16[32,256], index: 1, kind: input, shape index: {}]
  %s2 = inlined_call_operand.vmem [shape: f32[2,256], index: 2, kind: input, shape index: {}]
  %s3 = inlined_call_operand.vmem [shape: bf16[32,256], index: 3, kind: output, shape index: {}]
  %s4 = sld [smem:[#allocation0]]
  $region41: #{encoder_forward.14} parent=0
    _
  %s6 = ssub.s32 1, %s4
  %s7 = scalar_select 0, %s6, %s4
  %8 = sst [smem:[#allocation3]] %s0
  loop: start=0, step=1, limit=4
  $region2: #{encoder_forward.14} parent=0 // loop_pre_header
    _
  $region3: #{encoder_forward.14} parent=0 // loop_header
    %s10 = sphi 0, %s14
    %p11 = scmp.ge.s32.totalorder %s10, 4
    %s20 = sphi 0, %s22
    %s23 = sphi 0, %s20
    %s24 = sphi 0, %s23
    %s40 = sphi 0, %s24
    %s44 = sphi 0, %s44
    %s46 = sphi 0, %s44
    %s47 = sphi 0, %s46
    %s61 = sphi 0, %s47
    %s67 = sphi 0, %s69
    %s70 = sphi 0, %s67
    %s71 = sphi 0, %s70
    %s87 = sphi 0, %s71
  $region4: #{encoder_forward.14} parent=0 // loop_header_branch
    %13 = sbr.rel (%p11) target = $region8
  $region5: #{encoder_forward.14} parent=0 // loop_body
    %s15 = ssub.s32 %s10, 1
    %s16 = ssub.s32 %s10, 2
    %s17 = sadd.s32 %s10, 1
    %s18 = ssub.s32 %s10, %s17
    %p19 = scmp.eq.s32.totalorder %s18, 0
    %s21 = sadd.s32 %s20, 1
    %s22 = scalar_select %p19, %s20, %s21
    %p25 = pneg %p19
    %p26 = scmp.eq.s32.totalorder %s10, 1
    %p27 = por %p25, %p26
    %p28 = scmp.ne.s32.totalorder %s20, %s23
    %p29 = scmp.eq.s32.totalorder %s10, 0
    %p30 = por %p28, %p29
    %p31 = scmp.ne.s32.totalorder %s20, %s23
    %p32 = scmp.eq.s32.totalorder %s15, 1
    %p33 = por %p31, %p32
    %p34 = scmp.ne.s32.totalorder %s23, %s24
    %p35 = scmp.eq.s32.totalorder %s15, 0
    %p36 = por %p34, %p35
    %p37 = scmp.ne.s32.totalorder %s23, %s24
    %p38 = scmp.eq.s32.totalorder %s16, 1
    %p39 = por %p37, %p38
    %p41 = scmp.ne.s32.totalorder %s24, %s40
    %p42 = scmp.eq.s32.totalorder %s16, 0
    %p43 = por %p41, %p42
    %s45 = sadd.s32 %s44, 1
    %p48 = scmp.eq.s32.totalorder %s10, 1
    %p49 = scmp.ne.s32.totalorder %s44, %s46
    %p50 = scmp.eq.s32.totalorder %s10, 0
    %p51 = por %p49, %p50
    %p52 = scmp.ne.s32.totalorder %s44, %s46
    %p53 = scmp.eq.s32.totalorder %s15, 1
    %p54 = por %p52, %p53
    %p55 = scmp.ne.s32.totalorder %s46, %s47
    %p56 = scmp.eq.s32.totalorder %s15, 0
    %p57 = por %p55, %p56
    %p58 = scmp.ne.s32.totalorder %s46, %s47
    %p59 = scmp.eq.s32.totalorder %s16, 1
    %p60 = por %p58, %p59
    %p62 = scmp.ne.s32.totalorder %s47, %s61
    %p63 = scmp.eq.s32.totalorder %s16, 0
    %p64 = por %p62, %p63
    %s65 = ssub.s32 %s10, %s17
    %p66 = scmp.eq.s32.totalorder %s65, 0
    %s68 = sadd.s32 %s67, 1
    %s69 = scalar_select %p66, %s67, %s68
    %p72 = pneg %p66
    %p73 = scmp.eq.s32.totalorder %s10, 1
    %p74 = por %p72, %p73
    %p75 = scmp.ne.s32.totalorder %s67, %s70
    %p76 = scmp.eq.s32.totalorder %s10, 0
    %p77 = por %p75, %p76
    %p78 = scmp.ne.s32.totalorder %s67, %s70
    %p79 = scmp.eq.s32.totalorder %s15, 1
    %p80 = por %p78, %p79
    %p81 = scmp.ne.s32.totalorder %s70, %s71
    %p82 = scmp.eq.s32.totalorder %s15, 0
    %p83 = por %p81, %p82
    %p84 = scmp.ne.s32.totalorder %s70, %s71
    %p85 = scmp.eq.s32.totalorder %s16, 1
    %p86 = por %p84, %p85
    %p88 = scmp.ne.s32.totalorder %s71, %s87
    %p89 = scmp.eq.s32.totalorder %s16, 0
    %p90 = por %p88, %p89
    %p91 = scmp.le.s32.totalorder 1, %s10
    %p92 = scmp.lt.s32.totalorder %s10, 3
    %p93 = pnand %p91, %p92
    %p94 = pneg %p93
    // Predicated region
    $region9: #{encoder_forward.14} parent=5 // pred_check
      _
    $region10: #{encoder_forward.14} parent=5 // pred_check_branch
      %96 = sbr.rel (%p93) target = $region12
    $region11: #{encoder_forward.14} parent=5 // pred_region
      %s97 = ssub.s32 %s10, 1
      // Predicated region
      $region13: #{encoder_forward.14} parent=11 // pred_check
        %p98 = pneg %p57
      $region14: #{encoder_forward.14} parent=11 // pred_check_branch
        %100 = sbr.rel (%p98) target = $region16
      $region15: #{encoder_forward.14} parent=11 // pred_region
        _
      $region16: #{encoder_forward.14} parent=11 // pred_fallthru
        _
    $region12: #{encoder_forward.14} parent=5 // pred_fallthru
      _
    %p101 = scmp.lt.s32.totalorder %s10, 2
    // Predicated region
    $region17: #{encoder_forward.14} parent=5 // pred_check
      %p102 = pneg %p101
    $region18: #{encoder_forward.14} parent=5 // pred_check_branch
      %104 = sbr.rel (%p102) target = $region20
    $region19: #{encoder_forward.14} parent=5 // pred_region
      // Predicated region
      $region21: #{encoder_forward.14} parent=19 // pred_check
        %p105 = pneg %p30
      $region22: #{encoder_forward.14} parent=19 // pred_check_branch
        %107 = sbr.rel (%p105) target = $region24
      $region23: #{encoder_forward.14} parent=19 // pred_region
        %s108 = smul.u32 2, %s10
        %p109 = scmp.lt.s32.totalorder %s108, 3
        %s110 = scalar_select %p109, %s108, 3
        %s111 = smul.addr %s110, 2
        %s112 = smul.addr %s111, 4
        %s113 = scalar_lea.vmem %s1, %s112
        %s114 = smul.u32 2, %s10
      $region24: #{encoder_forward.14} parent=19 // pred_fallthru
        _
    $region20: #{encoder_forward.14} parent=5 // pred_fallthru
      _
    %p115 = scmp.le.s32.totalorder 1, %s10
    %p116 = scmp.lt.s32.totalorder %s10, 3
    %p117 = pnand %p115, %p116
    %p118 = pneg %p117
    // Predicated region
    $region25: #{encoder_forward.14} parent=5 // pred_check
      _
    $region26: #{encoder_forward.14} parent=5 // pred_check_branch
      %120 = sbr.rel (%p117) target = $region28
    $region27: #{encoder_forward.14} parent=5 // pred_region
      %s121 = ssub.s32 %s10, 1
      %s122 = smul.u32 2, %s15
      %p123 = scmp.lt.s32.totalorder %s122, 3
      %s124 = scalar_select %p123, %s122, 3
      %s125 = smul.addr %s124, 2
      %s126 = smul.addr %s125, 4
      %s127 = scalar_lea.vmem %s1, %s126
      %p128 = pneg %p36
      %p129 = pneg %p33
      %p130 = pneg %p57
      %p131 = pneg %p54
      %p132 = pneg %p83
      %p133 = pneg %p80
      %s134 = smul.u32 2, %s15
      %p135 = scmp.lt.s32.totalorder %s134, 3
      %s136 = scalar_select %p135, %s134, 3
      %s137 = smul.addr %s136, 2
      %s138 = smul.addr %s137, 4
      %s139 = scalar_lea.vmem %s3, %s138
      %s140 = smul.u32 2, %s15
      %p141 = scmp.lt.s32.totalorder %s140, 3
      %s142 = scalar_select %p141, %s140, 3
      %s143 = smul.addr %s142, 2
      %s144 = smul.addr %s143, 4
      %s145 = scalar_lea.vmem %s1, %s144
      %s146 = smul.u32 2, %s15
      %s147 = smul.u32 2, %s15
      %p148 = scmp.lt.s32.totalorder %s147, 3
      %s149 = scalar_select %p148, %s147, 3
      %s150 = smul.addr %s149, 2
      %s151 = smul.addr %s150, 4
      %s152 = scalar_lea.vmem %s3, %s151
      %s153 = smul.u32 2, %s15
      %v154 = vld [vmem:[%s145] sm:$0xff]
      %v155 = vld [vmem:[%s145 + $0x8] sm:$0xff]
      %v156 = vunpack.c.l.bf16 %v154
      %v157 = vunpack.c.h.bf16 %v154
      %v158 = vunpack.c.l.bf16 %v155
      %v159 = vunpack.c.h.bf16 %v155
      %v160 = vld [vmem:[%s2] ss:$2 sm:$0x3]
      %v162 = vperm.slane %v160, 0
      %v163 = vperm.slane %v160, 1
      %v166 = vmul.f32 %v156, %v162
      %v167 = vmul.f32 %v157, %v163
      %v168 = vmul.f32 %v158, %v162
      %v169 = vmul.f32 %v159, %v163
      %s170 = scalar_lea.vmem %s2, 1
      %v171 = vld [vmem:[%s170] ss:$2 sm:$0x3]
      %v173 = vperm.slane %v171, 0
      %v174 = vperm.slane %v171, 1
      %v177 = vadd.f32 %v166, %v173
      %v178 = vadd.f32 %v167, %v174
      %v179 = vadd.f32 %v168, %v173
      %v180 = vadd.f32 %v169, %v174
      %vm181 = vcmp.ge.f32.partialorder %v177, 0.0
      %vm182 = vcmp.ge.f32.partialorder %v178, 0.0
      %vm183 = vcmp.ge.f32.partialorder %v179, 0.0
      %vm184 = vcmp.ge.f32.partialorder %v180, 0.0
      %v185 = vmul.f32 %v177, 0.01
      %v186 = vmul.f32 %v178, 0.01
      %v187 = vmul.f32 %v179, 0.01
      %v188 = vmul.f32 %v180, 0.01
      %v189 = vsel %vm181, %v177, %v185
      %v190 = vsel %vm182, %v178, %v186
      %v191 = vsel %vm183, %v179, %v187
      %v192 = vsel %vm184, %v180, %v188
      %s193 = smul.u32 %s15, 16
      %s194 = sld [smem:[#allocation3]]
      %v195 = vlaneseq
      %v196 = vshrl.u32 %v195, 7
      %v197 = vadd.s32 %v196, 8
      %v198 = vstv %s193
      %v199 = vadd.s32 %v196, %v198
      %v200 = vadd.s32 %v197, %v198
      %v201 = vlaneseq
      %v202 = vand.u32 %v201, 127
      %v203 = vadd.s32 %v202, 128
      %v204 = vmul.u32 %v199, 2654435761
      %v205 = vmul.u32 %v200, 2654435761
      %v206 = vadd.s32 %v204, %v202
      %v207 = vadd.s32 %v204, %v203
      %v208 = vadd.s32 %v205, %v202
      %v209 = vadd.s32 %v205, %v203
      %v210 = vstv %s194
      %v211 = vadd.s32 %v206, %v210
      %v212 = vadd.s32 %v207, %v210
      %v213 = vadd.s32 %v208, %v210
      %v214 = vadd.s32 %v209, %v210
      %v215 = vshrl.u32 %v211, 16
      %v216 = vshrl.u32 %v212, 16
      %v217 = vshrl.u32 %v213, 16
      %v218 = vshrl.u32 %v214, 16
      %v219 = vxor.u32 %v211, %v215
      %v220 = vxor.u32 %v212, %v216
      %v221 = vxor.u32 %v213, %v217
      %v222 = vxor.u32 %v214, %v218
      %v223 = vmul.u32 %v219, 2146121005
      %v224 = vmul.u32 %v220, 2146121005
      %v225 = vmul.u32 %v221, 2146121005
      %v226 = vmul.u32 %v222, 2146121005
      %v227 = vshrl.u32 %v223, 15
      %v228 = vshrl.u32 %v224, 15
      %v229 = vshrl.u32 %v225, 15
      %v230 = vshrl.u32 %v226, 15
      %v231 = vxor.u32 %v223, %v227
      %v232 = vxor.u32 %v224, %v228
      %v233 = vxor.u32 %v225, %v229
      %v234 = vxor.u32 %v226, %v230
      %v235 = vadd.s32 %v231, 2147483648
      %vm237 = vcmp.ge.s32.totalorder %v235, 3006477107
      %v238 = vadd.s32 %v232, 2147483648
      %vm240 = vcmp.ge.s32.totalorder %v238, 3006477107
      %v241 = vadd.s32 %v233, 2147483648
      %vm243 = vcmp.ge.s32.totalorder %v241, 3006477107
      %v244 = vadd.s32 %v234, 2147483648
      %vm246 = vcmp.ge.s32.totalorder %v244, 3006477107
      %v247 = vmul.f32 %v189, 1.25
      %v248 = vmul.f32 %v190, 1.25
      %v249 = vmul.f32 %v191, 1.25
      %v250 = vmul.f32 %v192, 1.25
      %v251 = vsel %vm237, %v247, 0.0
      %v252 = vsel %vm240, %v248, 0.0
      %v253 = vsel %vm243, %v249, 0.0
      %v254 = vsel %vm246, %v250, 0.0
      %v255 = vpack.c.bf16 %v252, %v251
      %v256 = vpack.c.bf16 %v254, %v253
      %257 = vst [vmem:[%s152] sm:$0xff] %v255
      %258 = vst [vmem:[%s152 + $0x8] sm:$0xff] %v256
      %s259 = smul.u32 2, %s15
      %p260 = scmp.lt.s32.totalorder %s259, 3
      %s261 = scalar_select %p260, %s259, 3
      %s262 = smul.addr %s261, 2
      %s263 = smul.addr %s262, 4
      %s264 = scalar_lea.vmem %s3, %s263
      // Predicated region
      $region29: #{encoder_forward.14} parent=27 // pred_check
        %p265 = pneg %p80
      $region30: #{encoder_forward.14} parent=27 // pred_check_branch
        %267 = sbr.rel (%p265) target = $region32
      $region31: #{encoder_forward.14} parent=27 // pred_region
        %s268 = smul.u32 2, %s15
      $region32: #{encoder_forward.14} parent=27 // pred_fallthru
        _
    $region28: #{encoder_forward.14} parent=5 // pred_fallthru
      _
    %p269 = scmp.le.s32.totalorder 2, %s10
    // Predicated region
    $region33: #{encoder_forward.14} parent=5 // pred_check
      %p270 = pneg %p269
    $region34: #{encoder_forward.14} parent=5 // pred_check_branch
      %272 = sbr.rel (%p270) target = $region36
    $region35: #{encoder_forward.14} parent=5 // pred_region
      %s273 = ssub.s32 %s10, 2
      // Predicated region
      $region37: #{encoder_forward.14} parent=35 // pred_check
        %p274 = pneg %p86
      $region38: #{encoder_forward.14} parent=35 // pred_check_branch
        %276 = sbr.rel (%p274) target = $region40
      $region39: #{encoder_forward.14} parent=35 // pred_region
        %s277 = smul.u32 2, %s16
        %p278 = scmp.lt.s32.totalorder %s277, 3
        %s279 = scalar_select %p278, %s277, 3
        %s280 = smul.addr %s279, 2
        %s281 = smul.addr %s280, 4
        %s282 = scalar_lea.vmem %s3, %s281
      $region40: #{encoder_forward.14} parent=35 // pred_fallthru
        _
    $region36: #{encoder_forward.14} parent=5 // pred_fallthru
      _
  $region6: #{encoder_forward.14} parent=0 // loop_footer
    %s14 = sadd.s32 1, %s10
  $region7: #{encoder_forward.14} parent=0 // loop_footer_branch
    %9 = sbr.rel target = $region3
  $region8: #{encoder_forward.14} parent=0 // loop_exit
    _

// kernel: encoder_forward.13
$region0: #{encoder_forward.13}
  #allocation0 [shape = 'u32[]', space=smem, size = 0x4, offset = 0x4, fixed_abs, tag = 'smem constant byte address 0x4 - core index']
  #allocation1 [shape = 'u32[72,128]{1,0:T(1,128)}', space=vmem, size = 0x9000, scoped, tag = 'internal scratch']
  %s0 = inlined_call_operand.vmem [shape: bf16[32,1152], index: 0, kind: input, shape index: {}]
  %s1 = inlined_call_operand.vmem [shape: bf16[1152,256], index: 1, kind: input, shape index: {}]
  %s2 = inlined_call_operand.vmem [shape: bf16[32,256], index: 2, kind: output, shape index: {0}]
  %s3 = inlined_call_operand.vmem [shape: f32[2,2,256], index: 3, kind: output, shape index: {1}]
  %4 = xla_tuple %s2, %s3
  %s5 = sld [smem:[#allocation0]]
  $region49: #{encoder_forward.13} parent=0
    _
  %s7 = ssub.s32 1, %s5
  %s8 = scalar_select 0, %s7, %s5
  loop: start=0, step=1, limit=4
  $region2: #{encoder_forward.13} parent=0 // loop_pre_header
    _
  $region3: #{encoder_forward.13} parent=0 // loop_header
    %s10 = sphi 0, %s14
    %p11 = scmp.ge.s32.totalorder %s10, 4
    %s20 = sphi 0, %s22
    %s23 = sphi 0, %s20
    %s24 = sphi 0, %s23
    %s40 = sphi 0, %s24
    %s44 = sphi 0, %s44
    %s46 = sphi 0, %s44
    %s47 = sphi 0, %s46
    %s61 = sphi 0, %s47
    %s67 = sphi 0, %s69
    %s70 = sphi 0, %s67
    %s71 = sphi 0, %s70
    %s87 = sphi 0, %s71
    %s93 = sphi 0, %s95
    %s96 = sphi 0, %s93
    %s97 = sphi 0, %s96
    %s113 = sphi 0, %s97
  $region4: #{encoder_forward.13} parent=0 // loop_header_branch
    %13 = sbr.rel (%p11) target = $region8
  $region5: #{encoder_forward.13} parent=0 // loop_body
    %s15 = ssub.s32 %s10, 1
    %s16 = ssub.s32 %s10, 2
    %s17 = sadd.s32 %s10, 1
    %s18 = ssub.s32 %s10, %s17
    %p19 = scmp.eq.s32.totalorder %s18, 0
    %s21 = sadd.s32 %s20, 1
    %s22 = scalar_select %p19, %s20, %s21
    %p25 = pneg %p19
    %p26 = scmp.eq.s32.totalorder %s10, 1
    %p27 = por %p25, %p26
    %p28 = scmp.ne.s32.totalorder %s20, %s23
    %p29 = scmp.eq.s32.totalorder %s10, 0
    %p30 = por %p28, %p29
    %p31 = scmp.ne.s32.totalorder %s20, %s23
    %p32 = scmp.eq.s32.totalorder %s15, 1
    %p33 = por %p31, %p32
    %p34 = scmp.ne.s32.totalorder %s23, %s24
    %p35 = scmp.eq.s32.totalorder %s15, 0
    %p36 = por %p34, %p35
    %p37 = scmp.ne.s32.totalorder %s23, %s24
    %p38 = scmp.eq.s32.totalorder %s16, 1
    %p39 = por %p37, %p38
    %p41 = scmp.ne.s32.totalorder %s24, %s40
    %p42 = scmp.eq.s32.totalorder %s16, 0
    %p43 = por %p41, %p42
    %s45 = sadd.s32 %s44, 1
    %p48 = scmp.eq.s32.totalorder %s10, 1
    %p49 = scmp.ne.s32.totalorder %s44, %s46
    %p50 = scmp.eq.s32.totalorder %s10, 0
    %p51 = por %p49, %p50
    %p52 = scmp.ne.s32.totalorder %s44, %s46
    %p53 = scmp.eq.s32.totalorder %s15, 1
    %p54 = por %p52, %p53
    %p55 = scmp.ne.s32.totalorder %s46, %s47
    %p56 = scmp.eq.s32.totalorder %s15, 0
    %p57 = por %p55, %p56
    %p58 = scmp.ne.s32.totalorder %s46, %s47
    %p59 = scmp.eq.s32.totalorder %s16, 1
    %p60 = por %p58, %p59
    %p62 = scmp.ne.s32.totalorder %s47, %s61
    %p63 = scmp.eq.s32.totalorder %s16, 0
    %p64 = por %p62, %p63
    %s65 = ssub.s32 %s10, %s17
    %p66 = scmp.eq.s32.totalorder %s65, 0
    %s68 = sadd.s32 %s67, 1
    %s69 = scalar_select %p66, %s67, %s68
    %p72 = pneg %p66
    %p73 = scmp.eq.s32.totalorder %s10, 1
    %p74 = por %p72, %p73
    %p75 = scmp.ne.s32.totalorder %s67, %s70
    %p76 = scmp.eq.s32.totalorder %s10, 0
    %p77 = por %p75, %p76
    %p78 = scmp.ne.s32.totalorder %s67, %s70
    %p79 = scmp.eq.s32.totalorder %s15, 1
    %p80 = por %p78, %p79
    %p81 = scmp.ne.s32.totalorder %s70, %s71
    %p82 = scmp.eq.s32.totalorder %s15, 0
    %p83 = por %p81, %p82
    %p84 = scmp.ne.s32.totalorder %s70, %s71
    %p85 = scmp.eq.s32.totalorder %s16, 1
    %p86 = por %p84, %p85
    %p88 = scmp.ne.s32.totalorder %s71, %s87
    %p89 = scmp.eq.s32.totalorder %s16, 0
    %p90 = por %p88, %p89
    %s91 = ssub.s32 %s10, %s17
    %p92 = scmp.eq.s32.totalorder %s91, 0
    %s94 = sadd.s32 %s93, 1
    %s95 = scalar_select %p92, %s93, %s94
    %p98 = pneg %p92
    %p99 = scmp.eq.s32.totalorder %s10, 1
    %p100 = por %p98, %p99
    %p101 = scmp.ne.s32.totalorder %s93, %s96
    %p102 = scmp.eq.s32.totalorder %s10, 0
    %p103 = por %p101, %p102
    %p104 = scmp.ne.s32.totalorder %s93, %s96
    %p105 = scmp.eq.s32.totalorder %s15, 1
    %p106 = por %p104, %p105
    %p107 = scmp.ne.s32.totalorder %s96, %s97
    %p108 = scmp.eq.s32.totalorder %s15, 0
    %p109 = por %p107, %p108
    %p110 = scmp.ne.s32.totalorder %s96, %s97
    %p111 = scmp.eq.s32.totalorder %s16, 1
    %p112 = por %p110, %p111
    %p114 = scmp.ne.s32.totalorder %s97, %s113
    %p115 = scmp.eq.s32.totalorder %s16, 0
    %p116 = por %p114, %p115
    %p117 = scmp.le.s32.totalorder 1, %s10
    %p118 = scmp.lt.s32.totalorder %s10, 3
    %p119 = pnand %p117, %p118
    %p120 = pneg %p119
    // Predicated region
    $region9: #{encoder_forward.13} parent=5 // pred_check
      _
    $region10: #{encoder_forward.13} parent=5 // pred_check_branch
      %122 = sbr.rel (%p119) target = $region12
    $region11: #{encoder_forward.13} parent=5 // pred_region
      %s123 = ssub.s32 %s10, 1
      // Predicated region
      $region13: #{encoder_forward.13} parent=11 // pred_check
        %p124 = pneg %p57
      $region14: #{encoder_forward.13} parent=11 // pred_check_branch
        %126 = sbr.rel (%p124) target = $region16
      $region15: #{encoder_forward.13} parent=11 // pred_region
        _
      $region16: #{encoder_forward.13} parent=11 // pred_fallthru
        _
    $region12: #{encoder_forward.13} parent=5 // pred_fallthru
      _
    %p127 = scmp.lt.s32.totalorder %s10, 2
    // Predicated region
    $region17: #{encoder_forward.13} parent=5 // pred_check
      %p128 = pneg %p127
    $region18: #{encoder_forward.13} parent=5 // pred_check_branch
      %130 = sbr.rel (%p128) target = $region20
    $region19: #{encoder_forward.13} parent=5 // pred_region
      // Predicated region
      $region21: #{encoder_forward.13} parent=19 // pred_check
        %p131 = pneg %p30
      $region22: #{encoder_forward.13} parent=19 // pred_check_branch
        %133 = sbr.rel (%p131) target = $region24
      $region23: #{encoder_forward.13} parent=19 // pred_region
        %s134 = smul.u32 2, %s10
        %p135 = scmp.lt.s32.totalorder %s134, 3
        %s136 = scalar_select %p135, %s134, 3
        %s137 = smul.addr %s136, 9
        %s138 = smul.addr %s137, 4
        %s139 = scalar_lea.vmem %s0, %s138
        %s140 = smul.u32 2, %s10
      $region24: #{encoder_forward.13} parent=19 // pred_fallthru
        _
    $region20: #{encoder_forward.13} parent=5 // pred_fallthru
      _
    %p141 = scmp.le.s32.totalorder 1, %s10
    %p142 = scmp.lt.s32.totalorder %s10, 3
    %p143 = pnand %p141, %p142
    %p144 = pneg %p143
    // Predicated region
    $region25: #{encoder_forward.13} parent=5 // pred_check
      _
    $region26: #{encoder_forward.13} parent=5 // pred_check_branch
      %146 = sbr.rel (%p143) target = $region28
    $region27: #{encoder_forward.13} parent=5 // pred_region
      %s147 = ssub.s32 %s10, 1
      %s148 = smul.u32 2, %s15
      %p149 = scmp.lt.s32.totalorder %s148, 3
      %s150 = scalar_select %p149, %s148, 3
      %s151 = smul.addr %s150, 9
      %s152 = smul.addr %s151, 4
      %s153 = scalar_lea.vmem %s0, %s152
      %p154 = pneg %p36
      %p155 = pneg %p33
      %p156 = pneg %p57
      %p157 = pneg %p54
      %p158 = pneg %p83
      %p159 = pneg %p80
      %s160 = smul.u32 2, %s15
      %p161 = scmp.lt.s32.totalorder %s160, 3
      %s162 = scalar_select %p161, %s160, 3
      %s163 = smul.addr %s162, 2
      %s164 = smul.addr %s163, 4
      %s165 = scalar_lea.vmem %s2, %s164
      %p166 = pneg %p109
      %p167 = pneg %p106
      %p168 = scmp.lt.s32.totalorder %s15, 1
      %s169 = scalar_select %p168, %s15, 1
      %s170 = smul.addr %s169, 2
      %s171 = smul.addr %s170, 2
      %s172 = scalar_lea.vmem %s3, %s171
      %s173 = smul.u32 2, %s15
      %p174 = scmp.lt.s32.totalorder %s173, 3
      %s175 = scalar_select %p174, %s173, 3
      %s176 = smul.addr %s175, 9
      %s177 = smul.addr %s176, 4
      %s178 = scalar_lea.vmem %s0, %s177
      %s179 = smul.u32 2, %s15
      %s180 = smul.u32 2, %s15
      %p181 = scmp.lt.s32.totalorder %s180, 3
      %s182 = scalar_select %p181, %s180, 3
      %s183 = smul.addr %s182, 2
      %s184 = smul.addr %s183, 4
      %s185 = scalar_lea.vmem %s2, %s184
      %s186 = smul.u32 2, %s15
      %p187 = scmp.lt.s32.totalorder %s15, 1
      %s188 = scalar_select %p187, %s15, 1
      %s189 = smul.addr %s188, 2
      %s190 = smul.addr %s189, 2
      %s191 = scalar_lea.vmem %s3, %s190
      %v192 = vld [vmem:[%s178] sm:$0xff]
      %v193 = vld [vmem:[%s178 + $0x8] sm:$0xff]
      %v194 = vld [vmem:[%s178 + $0x10] sm:$0xff]
      %v195 = vld [vmem:[%s178 + $0x18] sm:$0xff]
      %v196 = vld [vmem:[%s178 + $0x20] sm:$0xf]
      %v197 = vld [vmem:[%s178 + $0x24] sm:$0xff]
      %v198 = vld [vmem:[%s178 + $0x2c] sm:$0xff]
      %v199 = vld [vmem:[%s178 + $0x34] sm:$0xff]
      %v200 = vld [vmem:[%s178 + $0x3c] sm:$0xff]
      %v201 = vld [vmem:[%s178 + $0x44] sm:$0xf]
      %v202 = vld [vmem:[%s1] sm:$0xff]
      %v203 = vld [vmem:[%s1 + $0x8] sm:$0xff]
      %v204 = vld [vmem:[%s1 + $0x10] sm:$0xff]
      %v205 = vld [vmem:[%s1 + $0x18] sm:$0xff]
      %v206 = vld [vmem:[%s1 + $0x20] sm:$0xff]
      %v207 = vld [vmem:[%s1 + $0x28] sm:$0xff]
      %v208 = vld [vmem:[%s1 + $0x30] sm:$0xff]
      %v209 = vld [vmem:[%s1 + $0x38] sm:$0xff]
      %v210 = vld [vmem:[%s1 + $0x40] sm:$0xff]
      %v211 = vld [vmem:[%s1 + $0x48] sm:$0xff]
      %v212 = vld [vmem:[%s1 + $0x50] sm:$0xff]
      %v213 = vld [vmem:[%s1 + $0x58] sm:$0xff]
      %v214 = vld [vmem:[%s1 + $0x60] sm:$0xff]
      %v215 = vld [vmem:[%s1 + $0x68] sm:$0xff]
      %v216 = vld [vmem:[%s1 + $0x70] sm:$0xff]
      %v217 = vld [vmem:[%s1 + $0x78] sm:$0xff]
      %v218 = vld [vmem:[%s1 + $0x80] sm:$0xff]
      %v219 = vld [vmem:[%s1 + $0x88] sm:$0xff]
      %v220 = vld [vmem:[%s1 + $0x90] sm:$0xff]
      %v221 = vld [vmem:[%s1 + $0x98] sm:$0xff]
      %v222 = vld [vmem:[%s1 + $0xa0] sm:$0xff]
      %v223 = vld [vmem:[%s1 + $0xa8] sm:$0xff]
      %v224 = vld [vmem:[%s1 + $0xb0] sm:$0xff]
      %v225 = vld [vmem:[%s1 + $0xb8] sm:$0xff]
      %v226 = vld [vmem:[%s1 + $0xc0] sm:$0xff]
      %v227 = vld [vmem:[%s1 + $0xc8] sm:$0xff]
      %v228 = vld [vmem:[%s1 + $0xd0] sm:$0xff]
      %v229 = vld [vmem:[%s1 + $0xd8] sm:$0xff]
      %v230 = vld [vmem:[%s1 + $0xe0] sm:$0xff]
      %v231 = vld [vmem:[%s1 + $0xe8] sm:$0xff]
      %v232 = vld [vmem:[%s1 + $0xf0] sm:$0xff]
      %v233 = vld [vmem:[%s1 + $0xf8] sm:$0xff]
      %v234 = vld [vmem:[%s1 + $0x100] sm:$0xff]
      %v235 = vld [vmem:[%s1 + $0x108] sm:$0xff]
      %v236 = vld [vmem:[%s1 + $0x110] sm:$0xff]
      %v237 = vld [vmem:[%s1 + $0x118] sm:$0xff]
      %v238 = vld [vmem:[%s1 + $0x120] sm:$0xff]
      %v239 = vld [vmem:[%s1 + $0x128] sm:$0xff]
      %v240 = vld [vmem:[%s1 + $0x130] sm:$0xff]
      %v241 = vld [vmem:[%s1 + $0x138] sm:$0xff]
      %v242 = vld [vmem:[%s1 + $0x140] sm:$0xff]
      %v243 = vld [vmem:[%s1 + $0x148] sm:$0xff]
      %v244 = vld [vmem:[%s1 + $0x150] sm:$0xff]
      %v245 = vld [vmem:[%s1 + $0x158] sm:$0xff]
      %v246 = vld [vmem:[%s1 + $0x160] sm:$0xff]
      %v247 = vld [vmem:[%s1 + $0x168] sm:$0xff]
      %v248 = vld [vmem:[%s1 + $0x170] sm:$0xff]
      %v249 = vld [vmem:[%s1 + $0x178] sm:$0xff]
      %v250 = vld [vmem:[%s1 + $0x180] sm:$0xff]
      %v251 = vld [vmem:[%s1 + $0x188] sm:$0xff]
      %v252 = vld [vmem:[%s1 + $0x190] sm:$0xff]
      %v253 = vld [vmem:[%s1 + $0x198] sm:$0xff]
      %v254 = vld [vmem:[%s1 + $0x1a0] sm:$0xff]
      %v255 = vld [vmem:[%s1 + $0x1a8] sm:$0xff]
      %v256 = vld [vmem:[%s1 + $0x1b0] sm:$0xff]
      %v257 = vld [vmem:[%s1 + $0x1b8] sm:$0xff]
      %v258 = vld [vmem:[%s1 + $0x1c0] sm:$0xff]
      %v259 = vld [vmem:[%s1 + $0x1c8] sm:$0xff]
      %v260 = vld [vmem:[%s1 + $0x1d0] sm:$0xff]
      %v261 = vld [vmem:[%s1 + $0x1d8] sm:$0xff]
      %v262 = vld [vmem:[%s1 + $0x1e0] sm:$0xff]
      %v263 = vld [vmem:[%s1 + $0x1e8] sm:$0xff]
      %v264 = vld [vmem:[%s1 + $0x1f0] sm:$0xff]
      %v265 = vld [vmem:[%s1 + $0x1f8] sm:$0xff]
      %v266 = vld [vmem:[%s1 + $0x200] sm:$0xff]
      %v267 = vld [vmem:[%s1 + $0x208] sm:$0xff]
      %v268 = vld [vmem:[%s1 + $0x210] sm:$0xff]
      %v269 = vld [vmem:[%s1 + $0x218] sm:$0xff]
      %v270 = vld [vmem:[%s1 + $0x220] sm:$0xff]
      %v271 = vld [vmem:[%s1 + $0x228] sm:$0xff]
      %v272 = vld [vmem:[%s1 + $0x230] sm:$0xff]
      %v273 = vld [vmem:[%s1 + $0x238] sm:$0xff]
      %v274 = vld [vmem:[%s1 + $0x240] sm:$0xff]
      %v275 = vld [vmem:[%s1 + $0x248] sm:$0xff]
      %v276 = vld [vmem:[%s1 + $0x250] sm:$0xff]
      %v277 = vld [vmem:[%s1 + $0x258] sm:$0xff]
      %v278 = vld [vmem:[%s1 + $0x260] sm:$0xff]
      %v279 = vld [vmem:[%s1 + $0x268] sm:$0xff]
      %v280 = vld [vmem:[%s1 + $0x270] sm:$0xff]
      %v281 = vld [vmem:[%s1 + $0x278] sm:$0xff]
      %v282 = vld [vmem:[%s1 + $0x280] sm:$0xff]
      %v283 = vld [vmem:[%s1 + $0x288] sm:$0xff]
      %v284 = vld [vmem:[%s1 + $0x290] sm:$0xff]
      %v285 = vld [vmem:[%s1 + $0x298] sm:$0xff]
      %v286 = vld [vmem:[%s1 + $0x2a0] sm:$0xff]
      %v287 = vld [vmem:[%s1 + $0x2a8] sm:$0xff]
      %v288 = vld [vmem:[%s1 + $0x2b0] sm:$0xff]
      %v289 = vld [vmem:[%s1 + $0x2b8] sm:$0xff]
      %v290 = vld [vmem:[%s1 + $0x2c0] sm:$0xff]
      %v291 = vld [vmem:[%s1 + $0x2c8] sm:$0xff]
      %v292 = vld [vmem:[%s1 + $0x2d0] sm:$0xff]
      %v293 = vld [vmem:[%s1 + $0x2d8] sm:$0xff]
      %v294 = vld [vmem:[%s1 + $0x2e0] sm:$0xff]
      %v295 = vld [vmem:[%s1 + $0x2e8] sm:$0xff]
      %v296 = vld [vmem:[%s1 + $0x2f0] sm:$0xff]
      %v297 = vld [vmem:[%s1 + $0x2f8] sm:$0xff]
      %v298 = vld [vmem:[%s1 + $0x300] sm:$0xff]
      %v299 = vld [vmem:[%s1 + $0x308] sm:$0xff]
      %v300 = vld [vmem:[%s1 + $0x310] sm:$0xff]
      %v301 = vld [vmem:[%s1 + $0x318] sm:$0xff]
      %v302 = vld [vmem:[%s1 + $0x320] sm:$0xff]
      %v303 = vld [vmem:[%s1 + $0x328] sm:$0xff]
      %v304 = vld [vmem:[%s1 + $0x330] sm:$0xff]
      %v305 = vld [vmem:[%s1 + $0x338] sm:$0xff]
      %v306 = vld [vmem:[%s1 + $0x340] sm:$0xff]
      %v307 = vld [vmem:[%s1 + $0x348] sm:$0xff]
      %v308 = vld [vmem:[%s1 + $0x350] sm:$0xff]
      %v309 = vld [vmem:[%s1 + $0x358] sm:$0xff]
      %v310 = vld [vmem:[%s1 + $0x360] sm:$0xff]
      %v311 = vld [vmem:[%s1 + $0x368] sm:$0xff]
      %v312 = vld [vmem:[%s1 + $0x370] sm:$0xff]
      %v313 = vld [vmem:[%s1 + $0x378] sm:$0xff]
      %v314 = vld [vmem:[%s1 + $0x380] sm:$0xff]
      %v315 = vld [vmem:[%s1 + $0x388] sm:$0xff]
      %v316 = vld [vmem:[%s1 + $0x390] sm:$0xff]
      %v317 = vld [vmem:[%s1 + $0x398] sm:$0xff]
      %v318 = vld [vmem:[%s1 + $0x3a0] sm:$0xff]
      %v319 = vld [vmem:[%s1 + $0x3a8] sm:$0xff]
      %v320 = vld [vmem:[%s1 + $0x3b0] sm:$0xff]
      %v321 = vld [vmem:[%s1 + $0x3b8] sm:$0xff]
      %v322 = vld [vmem:[%s1 + $0x3c0] sm:$0xff]
      %v323 = vld [vmem:[%s1 + $0x3c8] sm:$0xff]
      %v324 = vld [vmem:[%s1 + $0x3d0] sm:$0xff]
      %v325 = vld [vmem:[%s1 + $0x3d8] sm:$0xff]
      %v326 = vld [vmem:[%s1 + $0x3e0] sm:$0xff]
      %v327 = vld [vmem:[%s1 + $0x3e8] sm:$0xff]
      %v328 = vld [vmem:[%s1 + $0x3f0] sm:$0xff]
      %v329 = vld [vmem:[%s1 + $0x3f8] sm:$0xff]
      %v330 = vld [vmem:[%s1 + $0x400] sm:$0xff]
      %v331 = vld [vmem:[%s1 + $0x408] sm:$0xff]
      %v332 = vld [vmem:[%s1 + $0x410] sm:$0xff]
      %v333 = vld [vmem:[%s1 + $0x418] sm:$0xff]
      %v334 = vld [vmem:[%s1 + $0x420] sm:$0xff]
      %v335 = vld [vmem:[%s1 + $0x428] sm:$0xff]
      %v336 = vld [vmem:[%s1 + $0x430] sm:$0xff]
      %v337 = vld [vmem:[%s1 + $0x438] sm:$0xff]
      %v338 = vld [vmem:[%s1 + $0x440] sm:$0xff]
      %v339 = vld [vmem:[%s1 + $0x448] sm:$0xff]
      %v340 = vld [vmem:[%s1 + $0x450] sm:$0xff]
      %v341 = vld [vmem:[%s1 + $0x458] sm:$0xff]
      %v342 = vld [vmem:[%s1 + $0x460] sm:$0xff]
      %v343 = vld [vmem:[%s1 + $0x468] sm:$0xff]
      %v344 = vld [vmem:[%s1 + $0x470] sm:$0xff]
      %v345 = vld [vmem:[%s1 + $0x478] sm:$0xff]
      %v356 = vunpack.c.l.b16 %v192
      %v357 = vunpack.c.h.b16 %v192
      %v358 = vunpack.c.l.b16 %v193
      %v359 = vunpack.c.h.b16 %v193
      %v360 = vunpack.c.l.b16 %v194
      %v361 = vunpack.c.h.b16 %v194
      %v362 = vunpack.c.l.b16 %v195
      %v363 = vunpack.c.h.b16 %v195
      %v364 = vunpack.c.l.b16 %v196
      %v365 = vunpack.c.l.b16 %v197
      %v366 = vunpack.c.h.b16 %v197
      %v367 = vunpack.c.l.b16 %v198
      %v368 = vunpack.c.h.b16 %v198
      %v369 = vunpack.c.l.b16 %v199
      %v370 = vunpack.c.h.b16 %v199
      %v371 = vunpack.c.l.b16 %v200
      %v372 = vunpack.c.h.b16 %v200
      %v373 = vunpack.c.l.b16 %v201
      %v374 = vpack.c.b16 %v365, %v356
      %v375 = vpack.c.b16 %v366, %v357
      %v376 = vpack.c.b16 %v367, %v358
      %v377 = vpack.c.b16 %v368, %v359
      %v378 = vpack.c.b16 %v369, %v360
      %v379 = vpack.c.b16 %v370, %v361
      %v380 = vpack.c.b16 %v371, %v362
      %v381 = vpack.c.b16 %v372, %v363
      %v382 = vpack.c.b16 %v373, %v364
      %v536 = vunpack.c.l.b16 %v202
      %v537 = vunpack.c.h.b16 %v202
      %v538 = vunpack.c.l.b16 %v203
      %v539 = vunpack.c.h.b16 %v203
      %v540 = vunpack.c.l.b16 %v204
      %v541 = vunpack.c.h.b16 %v204
      %v542 = vunpack.c.l.b16 %v205
      %v543 = vunpack.c.h.b16 %v205
      %v544 = vunpack.c.l.b16 %v206
      %v545 = vunpack.c.h.b16 %v206
      %v546 = vunpack.c.l.b16 %v207
      %v547 = vunpack.c.h.b16 %v207
      %v548 = vunpack.c.l.b16 %v208
      %v549 = vunpack.c.h.b16 %v208
      %v550 = vunpack.c.l.b16 %v209
      %v551 = vunpack.c.h.b16 %v209
      %v552 = vunpack.c.l.b16 %v210
      %v553 = vunpack.c.h.b16 %v210
      %v554 = vunpack.c.l.b16 %v211
      %v555 = vunpack.c.h.b16 %v211
      %v556 = vunpack.c.l.b16 %v212
      %v557 = vunpack.c.h.b16 %v212
      %v558 = vunpack.c.l.b16 %v213
      %v559 = vunpack.c.h.b16 %v213
      %v560 = vunpack.c.l.b16 %v214
      %v561 = vunpack.c.h.b16 %v214
      %v562 = vunpack.c.l.b16 %v215
      %v563 = vunpack.c.h.b16 %v215
      %v564 = vunpack.c.l.b16 %v216
      %v565 = vunpack.c.h.b16 %v216
      %v566 = vunpack.c.l.b16 %v217
      %v567 = vunpack.c.h.b16 %v217
      %v568 = vunpack.c.l.b16 %v218
      %v569 = vunpack.c.h.b16 %v218
      %v570 = vunpack.c.l.b16 %v219
      %v571 = vunpack.c.h.b16 %v219
      %v572 = vunpack.c.l.b16 %v220
      %v573 = vunpack.c.h.b16 %v220
      %v574 = vunpack.c.l.b16 %v221
      %v575 = vunpack.c.h.b16 %v221
      %v576 = vunpack.c.l.b16 %v222
      %v577 = vunpack.c.h.b16 %v222
      %v578 = vunpack.c.l.b16 %v223
      %v579 = vunpack.c.h.b16 %v223
      %v580 = vunpack.c.l.b16 %v224
      %v581 = vunpack.c.h.b16 %v224
      %v582 = vunpack.c.l.b16 %v225
      %v583 = vunpack.c.h.b16 %v225
      %v584 = vunpack.c.l.b16 %v226
      %v585 = vunpack.c.h.b16 %v226
      %v586 = vunpack.c.l.b16 %v227
      %v587 = vunpack.c.h.b16 %v227
      %v588 = vunpack.c.l.b16 %v228
      %v589 = vunpack.c.h.b16 %v228
      %v590 = vunpack.c.l.b16 %v229
      %v591 = vunpack.c.h.b16 %v229
      %v592 = vunpack.c.l.b16 %v230
      %v593 = vunpack.c.h.b16 %v230
      %v594 = vunpack.c.l.b16 %v231
      %v595 = vunpack.c.h.b16 %v231
      %v596 = vunpack.c.l.b16 %v232
      %v597 = vunpack.c.h.b16 %v232
      %v598 = vunpack.c.l.b16 %v233
      %v599 = vunpack.c.h.b16 %v233
      %v600 = vunpack.c.l.b16 %v234
      %v601 = vunpack.c.h.b16 %v234
      %v602 = vunpack.c.l.b16 %v235
      %v603 = vunpack.c.h.b16 %v235
      %v604 = vunpack.c.l.b16 %v236
      %v605 = vunpack.c.h.b16 %v236
      %v606 = vunpack.c.l.b16 %v237
      %v607 = vunpack.c.h.b16 %v237
      %v608 = vunpack.c.l.b16 %v238
      %v609 = vunpack.c.h.b16 %v238
      %v610 = vunpack.c.l.b16 %v239
      %v611 = vunpack.c.h.b16 %v239
      %v612 = vunpack.c.l.b16 %v240
      %v613 = vunpack.c.h.b16 %v240
      %v614 = vunpack.c.l.b16 %v241
      %v615 = vunpack.c.h.b16 %v241
      %v616 = vunpack.c.l.b16 %v242
      %v617 = vunpack.c.h.b16 %v242
      %v618 = vunpack.c.l.b16 %v243
      %v619 = vunpack.c.h.b16 %v243
      %v620 = vunpack.c.l.b16 %v244
      %v621 = vunpack.c.h.b16 %v244
      %v622 = vunpack.c.l.b16 %v245
      %v623 = vunpack.c.h.b16 %v245
      %v624 = vunpack.c.l.b16 %v246
      %v625 = vunpack.c.h.b16 %v246
      %v626 = vunpack.c.l.b16 %v247
      %v627 = vunpack.c.h.b16 %v247
      %v628 = vunpack.c.l.b16 %v248
      %v629 = vunpack.c.h.b16 %v248
      %v630 = vunpack.c.l.b16 %v249
      %v631 = vunpack.c.h.b16 %v249
      %v632 = vunpack.c.l.b16 %v250
      %v633 = vunpack.c.h.b16 %v250
      %v634 = vunpack.c.l.b16 %v251
      %v635 = vunpack.c.h.b16 %v251
      %v636 = vunpack.c.l.b16 %v252
      %v637 = vunpack.c.h.b16 %v252
      %v638 = vunpack.c.l.b16 %v253
      %v639 = vunpack.c.h.b16 %v253
      %v640 = vunpack.c.l.b16 %v254
      %v641 = vunpack.c.h.b16 %v254
      %v642 = vunpack.c.l.b16 %v255
      %v643 = vunpack.c.h.b16 %v255
      %v644 = vunpack.c.l.b16 %v256
      %v645 = vunpack.c.h.b16 %v256
      %v646 = vunpack.c.l.b16 %v257
      %v647 = vunpack.c.h.b16 %v257
      %v648 = vunpack.c.l.b16 %v258
      %v649 = vunpack.c.h.b16 %v258
      %v650 = vunpack.c.l.b16 %v259
      %v651 = vunpack.c.h.b16 %v259
      %v652 = vunpack.c.l.b16 %v260
      %v653 = vunpack.c.h.b16 %v260
      %v654 = vunpack.c.l.b16 %v261
      %v655 = vunpack.c.h.b16 %v261
      %v656 = vunpack.c.l.b16 %v262
      %v657 = vunpack.c.h.b16 %v262
      %v658 = vunpack.c.l.b16 %v263
      %v659 = vunpack.c.h.b16 %v263
      %v660 = vunpack.c.l.b16 %v264
      %v661 = vunpack.c.h.b16 %v264
      %v662 = vunpack.c.l.b16 %v265
      %v663 = vunpack.c.h.b16 %v265
      %v664 = vunpack.c.l.b16 %v266
      %v665 = vunpack.c.h.b16 %v266
      %v666 = vunpack.c.l.b16 %v267
      %v667 = vunpack.c.h.b16 %v267
      %v668 = vunpack.c.l.b16 %v268
      %v669 = vunpack.c.h.b16 %v268
      %v670 = vunpack.c.l.b16 %v269
      %v671 = vunpack.c.h.b16 %v269
      %v672 = vunpack.c.l.b16 %v270
      %v673 = vunpack.c.h.b16 %v270
      %v674 = vunpack.c.l.b16 %v271
      %v675 = vunpack.c.h.b16 %v271
      %v676 = vunpack.c.l.b16 %v272
      %v677 = vunpack.c.h.b16 %v272
      %v678 = vunpack.c.l.b16 %v273
      %v679 = vunpack.c.h.b16 %v273
      %v680 = vunpack.c.l.b16 %v274
      %v681 = vunpack.c.h.b16 %v274
      %v682 = vunpack.c.l.b16 %v275
      %v683 = vunpack.c.h.b16 %v275
      %v684 = vunpack.c.l.b16 %v276
      %v685 = vunpack.c.h.b16 %v276
      %v686 = vunpack.c.l.b16 %v277
      %v687 = vunpack.c.h.b16 %v277
      %v688 = vunpack.c.l.b16 %v278
      %v689 = vunpack.c.h.b16 %v278
      %v690 = vunpack.c.l.b16 %v279
      %v691 = vunpack.c.h.b16 %v279
      %v692 = vunpack.c.l.b16 %v280
      %v693 = vunpack.c.h.b16 %v280
      %v694 = vunpack.c.l.b16 %v281
      %v695 = vunpack.c.h.b16 %v281
      %v696 = vunpack.c.l.b16 %v282
      %v697 = vunpack.c.h.b16 %v282
      %v698 = vunpack.c.l.b16 %v283
      %v699 = vunpack.c.h.b16 %v283
      %v700 = vunpack.c.l.b16 %v284
      %v701 = vunpack.c.h.b16 %v284
      %v702 = vunpack.c.l.b16 %v285
      %v703 = vunpack.c.h.b16 %v285
      %v704 = vunpack.c.l.b16 %v286
      %v705 = vunpack.c.h.b16 %v286
      %v706 = vunpack.c.l.b16 %v287
      %v707 = vunpack.c.h.b16 %v287
      %v708 = vunpack.c.l.b16 %v288
      %v709 = vunpack.c.h.b16 %v288
      %v710 = vunpack.c.l.b16 %v289
      %v711 = vunpack.c.h.b16 %v289
      %v712 = vunpack.c.l.b16 %v290
      %v713 = vunpack.c.h.b16 %v290
      %v714 = vunpack.c.l.b16 %v291
      %v715 = vunpack.c.h.b16 %v291
      %v716 = vunpack.c.l.b16 %v292
      %v717 = vunpack.c.h.b16 %v292
      %v718 = vunpack.c.l.b16 %v293
      %v719 = vunpack.c.h.b16 %v293
      %v720 = vunpack.c.l.b16 %v294
      %v721 = vunpack.c.h.b16 %v294
      %v722 = vunpack.c.l.b16 %v295
      %v723 = vunpack.c.h.b16 %v295
      %v724 = vunpack.c.l.b16 %v296
      %v725 = vunpack.c.h.b16 %v296
      %v726 = vunpack.c.l.b16 %v297
      %v727 = vunpack.c.h.b16 %v297
      %v728 = vunpack.c.l.b16 %v298
      %v729 = vunpack.c.h.b16 %v298
      %v730 = vunpack.c.l.b16 %v299
      %v731 = vunpack.c.h.b16 %v299
      %v732 = vunpack.c.l.b16 %v300
      %v733 = vunpack.c.h.b16 %v300
      %v734 = vunpack.c.l.b16 %v301
      %v735 = vunpack.c.h.b16 %v301
      %v736 = vunpack.c.l.b16 %v302
      %v737 = vunpack.c.h.b16 %v302
      %v738 = vunpack.c.l.b16 %v303
      %v739 = vunpack.c.h.b16 %v303
      %v740 = vunpack.c.l.b16 %v304
      %v741 = vunpack.c.h.b16 %v304
      %v742 = vunpack.c.l.b16 %v305
      %v743 = vunpack.c.h.b16 %v305
      %v744 = vunpack.c.l.b16 %v306
      %v745 = vunpack.c.h.b16 %v306
      %v746 = vunpack.c.l.b16 %v307
      %v747 = vunpack.c.h.b16 %v307
      %v748 = vunpack.c.l.b16 %v308
      %v749 = vunpack.c.h.b16 %v308
      %v750 = vunpack.c.l.b16 %v309
      %v751 = vunpack.c.h.b16 %v309
      %v752 = vunpack.c.l.b16 %v310
      %v753 = vunpack.c.h.b16 %v310
      %v754 = vunpack.c.l.b16 %v311
      %v755 = vunpack.c.h.b16 %v311
      %v756 = vunpack.c.l.b16 %v312
      %v757 = vunpack.c.h.b16 %v312
      %v758 = vunpack.c.l.b16 %v313
      %v759 = vunpack.c.h.b16 %v313
      %v760 = vunpack.c.l.b16 %v314
      %v761 = vunpack.c.h.b16 %v314
      %v762 = vunpack.c.l.b16 %v315
      %v763 = vunpack.c.h.b16 %v315
      %v764 = vunpack.c.l.b16 %v316
      %v765 = vunpack.c.h.b16 %v316
      %v766 = vunpack.c.l.b16 %v317
      %v767 = vunpack.c.h.b16 %v317
      %v768 = vunpack.c.l.b16 %v318
      %v769 = vunpack.c.h.b16 %v318
      %v770 = vunpack.c.l.b16 %v319
      %v771 = vunpack.c.h.b16 %v319
      %v772 = vunpack.c.l.b16 %v320
      %v773 = vunpack.c.h.b16 %v320
      %v774 = vunpack.c.l.b16 %v321
      %v775 = vunpack.c.h.b16 %v321
      %v776 = vunpack.c.l.b16 %v322
      %v777 = vunpack.c.h.b16 %v322
      %v778 = vunpack.c.l.b16 %v323
      %v779 = vunpack.c.h.b16 %v323
      %v780 = vunpack.c.l.b16 %v324
      %v781 = vunpack.c.h.b16 %v324
      %v782 = vunpack.c.l.b16 %v325
      %v783 = vunpack.c.h.b16 %v325
      %v784 = vunpack.c.l.b16 %v326
      %v785 = vunpack.c.h.b16 %v326
      %v786 = vunpack.c.l.b16 %v327
      %v787 = vunpack.c.h.b16 %v327
      %v788 = vunpack.c.l.b16 %v328
      %v789 = vunpack.c.h.b16 %v328
      %v790 = vunpack.c.l.b16 %v329
      %v791 = vunpack.c.h.b16 %v329
      %v792 = vunpack.c.l.b16 %v330
      %v793 = vunpack.c.h.b16 %v330
      %v794 = vunpack.c.l.b16 %v331
      %v795 = vunpack.c.h.b16 %v331
      %v796 = vunpack.c.l.b16 %v332
      %v797 = vunpack.c.h.b16 %v332
      %v798 = vunpack.c.l.b16 %v333
      %v799 = vunpack.c.h.b16 %v333
      %v800 = vunpack.c.l.b16 %v334
      %v801 = vunpack.c.h.b16 %v334
      %v802 = vunpack.c.l.b16 %v335
      %v803 = vunpack.c.h.b16 %v335
      %v804 = vunpack.c.l.b16 %v336
      %v805 = vunpack.c.h.b16 %v336
      %v806 = vunpack.c.l.b16 %v337
      %v807 = vunpack.c.h.b16 %v337
      %v808 = vunpack.c.l.b16 %v338
      %v809 = vunpack.c.h.b16 %v338
      %v810 = vunpack.c.l.b16 %v339
      %v811 = vunpack.c.h.b16 %v339
      %v812 = vunpack.c.l.b16 %v340
      %v813 = vunpack.c.h.b16 %v340
      %v814 = vunpack.c.l.b16 %v341
      %v815 = vunpack.c.h.b16 %v341
      %v816 = vunpack.c.l.b16 %v342
      %v817 = vunpack.c.h.b16 %v342
      %v818 = vunpack.c.l.b16 %v343
      %v819 = vunpack.c.h.b16 %v343
      %v820 = vunpack.c.l.b16 %v344
      %v821 = vunpack.c.h.b16 %v344
      %v822 = vunpack.c.l.b16 %v345
      %v823 = vunpack.c.h.b16 %v345
      %v824 = vpack.c.b16 %v538, %v536
      %v825 = vpack.c.b16 %v539, %v537
      %v826 = vpack.c.b16 %v542, %v540
      %v827 = vpack.c.b16 %v543, %v541
      %v828 = vpack.c.b16 %v546, %v544
      %v829 = vpack.c.b16 %v547, %v545
      %v830 = vpack.c.b16 %v550, %v548
      %v831 = vpack.c.b16 %v551, %v549
      %v832 = vpack.c.b16 %v554, %v552
      %v833 = vpack.c.b16 %v555, %v553
      %v834 = vpack.c.b16 %v558, %v556
      %v835 = vpack.c.b16 %v559, %v557
      %v836 = vpack.c.b16 %v562, %v560
      %v837 = vpack.c.b16 %v563, %v561
      %v838 = vpack.c.b16 %v566, %v564
      %v839 = vpack.c.b16 %v567, %v565
      %v840 = vpack.c.b16 %v570, %v568
      %v841 = vpack.c.b16 %v571, %v569
      %v842 = vpack.c.b16 %v574, %v572
      %v843 = vpack.c.b16 %v575, %v573
      %v844 = vpack.c.b16 %v578, %v576
      %v845 = vpack.c.b16 %v579, %v577
      %v846 = vpack.c.b16 %v582, %v580
      %v847 = vpack.c.b16 %v583, %v581
      %v848 = vpack.c.b16 %v586, %v584
      %v849 = vpack.c.b16 %v587, %v585
      %v850 = vpack.c.b16 %v590, %v588
      %v851 = vpack.c.b16 %v591, %v589
      %v852 = vpack.c.b16 %v594, %v592
      %v853 = vpack.c.b16 %v595, %v593
      %v854 = vpack.c.b16 %v598, %v596
      %v855 = vpack.c.b16 %v599, %v597
      %v856 = vpack.c.b16 %v602, %v600
      %v857 = vpack.c.b16 %v603, %v601
      %v858 = vpack.c.b16 %v606, %v604
      %v859 = vpack.c.b16 %v607, %v605
      %v860 = vpack.c.b16 %v610, %v608
      %v861 = vpack.c.b16 %v611, %v609
      %v862 = vpack.c.b16 %v614, %v612
      %v863 = vpack.c.b16 %v615, %v613
      %v864 = vpack.c.b16 %v618, %v616
      %v865 = vpack.c.b16 %v619, %v617
      %v866 = vpack.c.b16 %v622, %v620
      %v867 = vpack.c.b16 %v623, %v621
      %v868 = vpack.c.b16 %v626, %v624
      %v869 = vpack.c.b16 %v627, %v625
      %v870 = vpack.c.b16 %v630, %v628
      %v871 = vpack.c.b16 %v631, %v629
      %v872 = vpack.c.b16 %v634, %v632
      %v873 = vpack.c.b16 %v635, %v633
      %v874 = vpack.c.b16 %v638, %v636
      %v875 = vpack.c.b16 %v639, %v637
      %v876 = vpack.c.b16 %v642, %v640
      %v877 = vpack.c.b16 %v643, %v641
      %v878 = vpack.c.b16 %v646, %v644
      %v879 = vpack.c.b16 %v647, %v645
      %v880 = vpack.c.b16 %v650, %v648
      %v881 = vpack.c.b16 %v651, %v649
      %v882 = vpack.c.b16 %v654, %v652
      %v883 = vpack.c.b16 %v655, %v653
      %v884 = vpack.c.b16 %v658, %v656
      %v885 = vpack.c.b16 %v659, %v657
      %v886 = vpack.c.b16 %v662, %v660
      %v887 = vpack.c.b16 %v663, %v661
      %v888 = vpack.c.b16 %v666, %v664
      %v889 = vpack.c.b16 %v667, %v665
      %v890 = vpack.c.b16 %v670, %v668
      %v891 = vpack.c.b16 %v671, %v669
      %v892 = vpack.c.b16 %v674, %v672
      %v893 = vpack.c.b16 %v675, %v673
      %v894 = vpack.c.b16 %v678, %v676
      %v895 = vpack.c.b16 %v679, %v677
      %v896 = vpack.c.b16 %v682, %v680
      %v897 = vpack.c.b16 %v683, %v681
      %v898 = vpack.c.b16 %v686, %v684
      %v899 = vpack.c.b16 %v687, %v685
      %v900 = vpack.c.b16 %v690, %v688
      %v901 = vpack.c.b16 %v691, %v689
      %v902 = vpack.c.b16 %v694, %v692
      %v903 = vpack.c.b16 %v695, %v693
      %v904 = vpack.c.b16 %v698, %v696
      %v905 = vpack.c.b16 %v699, %v697
      %v906 = vpack.c.b16 %v702, %v700
      %v907 = vpack.c.b16 %v703, %v701
      %v908 = vpack.c.b16 %v706, %v704
      %v909 = vpack.c.b16 %v707, %v705
      %v910 = vpack.c.b16 %v710, %v708
      %v911 = vpack.c.b16 %v711, %v709
      %v912 = vpack.c.b16 %v714, %v712
      %v913 = vpack.c.b16 %v715, %v713
      %v914 = vpack.c.b16 %v718, %v716
      %v915 = vpack.c.b16 %v719, %v717
      %v916 = vpack.c.b16 %v722, %v720
      %v917 = vpack.c.b16 %v723, %v721
      %v918 = vpack.c.b16 %v726, %v724
      %v919 = vpack.c.b16 %v727, %v725
      %v920 = vpack.c.b16 %v730, %v728
      %v921 = vpack.c.b16 %v731, %v729
      %v922 = vpack.c.b16 %v734, %v732
      %v923 = vpack.c.b16 %v735, %v733
      %v924 = vpack.c.b16 %v738, %v736
      %v925 = vpack.c.b16 %v739, %v737
      %v926 = vpack.c.b16 %v742, %v740
      %v927 = vpack.c.b16 %v743, %v741
      %v928 = vpack.c.b16 %v746, %v744
      %v929 = vpack.c.b16 %v747, %v745
      %v930 = vpack.c.b16 %v750, %v748
      %v931 = vpack.c.b16 %v751, %v749
      %v932 = vpack.c.b16 %v754, %v752
      %v933 = vpack.c.b16 %v755, %v753
      %v934 = vpack.c.b16 %v758, %v756
      %v935 = vpack.c.b16 %v759, %v757
      %v936 = vpack.c.b16 %v762, %v760
      %v937 = vpack.c.b16 %v763, %v761
      %v938 = vpack.c.b16 %v766, %v764
      %v939 = vpack.c.b16 %v767, %v765
      %v940 = vpack.c.b16 %v770, %v768
      %v941 = vpack.c.b16 %v771, %v769
      %v942 = vpack.c.b16 %v774, %v772
      %v943 = vpack.c.b16 %v775, %v773
      %v944 = vpack.c.b16 %v778, %v776
      %v945 = vpack.c.b16 %v779, %v777
      %v946 = vpack.c.b16 %v782, %v780
      %v947 = vpack.c.b16 %v783, %v781
      %v948 = vpack.c.b16 %v786, %v784
      %v949 = vpack.c.b16 %v787, %v785
      %v950 = vpack.c.b16 %v790, %v788
      %v951 = vpack.c.b16 %v791, %v789
      %v952 = vpack.c.b16 %v794, %v792
      %v953 = vpack.c.b16 %v795, %v793
      %v954 = vpack.c.b16 %v798, %v796
      %v955 = vpack.c.b16 %v799, %v797
      %v956 = vpack.c.b16 %v802, %v800
      %v957 = vpack.c.b16 %v803, %v801
      %v958 = vpack.c.b16 %v806, %v804
      %v959 = vpack.c.b16 %v807, %v805
      %v960 = vpack.c.b16 %v810, %v808
      %v961 = vpack.c.b16 %v811, %v809
      %v962 = vpack.c.b16 %v814, %v812
      %v963 = vpack.c.b16 %v815, %v813
      %v964 = vpack.c.b16 %v818, %v816
      %v965 = vpack.c.b16 %v819, %v817
      %v966 = vpack.c.b16 %v822, %v820
      %v967 = vpack.c.b16 %v823, %v821
      %1112 = vmatpush.bf16.msra.mxu0 %v838
      %1113 = vmatpush.bf16.msra.mxu0 %v836
      %1114 = vmatpush.bf16.msra.mxu0 %v834
      %1115 = vmatpush.bf16.msra.mxu0 %v832
      %1116 = vmatpush.bf16.msra.mxu0 %v830
      %1117 = vmatpush.bf16.msra.mxu0 %v828
      %1118 = vmatpush.bf16.msra.mxu0 %v826
      %1119 = vmatpush.bf16.msra.mxu0 %v824
      %1120 = vmatmul.bf16.gmra.mxu0 %v374
      %v1121 = vpop.f32.mrf.mxu0
      %v1122 = vadd.f32 0.0, %v1121
      %v1123 = vpop.f32.mrf.mxu0
      %v1124 = vadd.f32 0.0, %v1123
      %1125 = vdwg.mxu0
      %1126 = vmatpush.bf16.msra.mxu0 %v854
      %1127 = vmatpush.bf16.msra.mxu0 %v852
      %1128 = vmatpush.bf16.msra.mxu0 %v850
      %1129 = vmatpush.bf16.msra.mxu0 %v848
      %1130 = vmatpush.bf16.msra.mxu0 %v846
      %1131 = vmatpush.bf16.msra.mxu0 %v844
      %1132 = vmatpush.bf16.msra.mxu0 %v842
      %1133 = vmatpush.bf16.msra.mxu0 %v840
      %1134 = vmatmul.bf16.gmra.mxu0 %v375
      %v1135 = vpop.f32.mrf.mxu0
      %v1136 = vadd.f32 %v1122, %v1135
      %v1137 = vpop.f32.mrf.mxu0
      %v1138 = vadd.f32 %v1124, %v1137
      %1139 = vdwg.mxu0
      %1140 = vmatpush.bf16.msra.mxu0 %v870
      %1141 = vmatpush.bf16.msra.mxu0 %v868
      %1142 = vmatpush.bf16.msra.mxu0 %v866
      %1143 = vmatpush.bf16.msra.mxu0 %v864
      %1144 = vmatpush.bf16.msra.mxu0 %v862
      %1145 = vmatpush.bf16.msra.mxu0 %v860
      %1146 = vmatpush.bf16.msra.mxu0 %v858
      %1147 = vmatpush.bf16.msra.mxu0 %v856
      %1148 = vmatmul.bf16.gmra.mxu0 %v376
      %v1149 = vpop.f32.mrf.mxu0
      %v1150 = vadd.f32 %v1136, %v1149
      %v1151 = vpop.f32.mrf.mxu0
      %v1152 = vadd.f32 %v1138, %v1151
      %1153 = vdwg.mxu0
      %1154 = vmatpush.bf16.msra.mxu0 %v886
      %1155 = vmatpush.bf16.msra.mxu0 %v884
      %1156 = vmatpush.bf16.msra.mxu0 %v882
      %1157 = vmatpush.bf16.msra.mxu0 %v880
      %1158 = vmatpush.bf16.msra.mxu0 %v878
      %1159 = vmatpush.bf16.msra.mxu0 %v876
      %1160 = vmatpush.bf16.msra.mxu0 %v874
      %1161 = vmatpush.bf16.msra.mxu0 %v872
      %1162 = vmatmul.bf16.gmra.mxu0 %v377
      %v1163 = vpop.f32.mrf.mxu0
      %v1164 = vadd.f32 %v1150, %v1163
      %v1165 = vpop.f32.mrf.mxu0
      %v1166 = vadd.f32 %v1152, %v1165
      %1167 = vdwg.mxu0
      %1168 = vmatpush.bf16.msra.mxu0 %v902
      %1169 = vmatpush.bf16.msra.mxu0 %v900
      %1170 = vmatpush.bf16.msra.mxu0 %v898
      %1171 = vmatpush.bf16.msra.mxu0 %v896
      %1172 = vmatpush.bf16.msra.mxu0 %v894
      %1173 = vmatpush.bf16.msra.mxu0 %v892
      %1174 = vmatpush.bf16.msra.mxu0 %v890
      %1175 = vmatpush.bf16.msra.mxu0 %v888
      %1176 = vmatmul.bf16.gmra.mxu0 %v378
      %v1177 = vpop.f32.mrf.mxu0
      %v1178 = vadd.f32 %v1164, %v1177
      %v1179 = vpop.f32.mrf.mxu0
      %v1180 = vadd.f32 %v1166, %v1179
      %1181 = vdwg.mxu0
      %1182 = vmatpush.bf16.msra.mxu0 %v918
      %1183 = vmatpush.bf16.msra.mxu0 %v916
      %1184 = vmatpush.bf16.msra.mxu0 %v914
      %1185 = vmatpush.bf16.msra.mxu0 %v912
      %1186 = vmatpush.bf16.msra.mxu0 %v910
      %1187 = vmatpush.bf16.msra.mxu0 %v908
      %1188 = vmatpush.bf16.msra.mxu0 %v906
      %1189 = vmatpush.bf16.msra.mxu0 %v904
      %1190 = vmatmul.bf16.gmra.mxu0 %v379
      %v1191 = vpop.f32.mrf.mxu0
      %v1192 = vadd.f32 %v1178, %v1191
      %v1193 = vpop.f32.mrf.mxu0
      %v1194 = vadd.f32 %v1180, %v1193
      %1195 = vdwg.mxu0
      %1196 = vmatpush.bf16.msra.mxu0 %v934
      %1197 = vmatpush.bf16.msra.mxu0 %v932
      %1198 = vmatpush.bf16.msra.mxu0 %v930
      %1199 = vmatpush.bf16.msra.mxu0 %v928
      %1200 = vmatpush.bf16.msra.mxu0 %v926
      %1201 = vmatpush.bf16.msra.mxu0 %v924
      %1202 = vmatpush.bf16.msra.mxu0 %v922
      %1203 = vmatpush.bf16.msra.mxu0 %v920
      %1204 = vmatmul.bf16.gmra.mxu0 %v380
      %v1205 = vpop.f32.mrf.mxu0
      %v1206 = vadd.f32 %v1192, %v1205
      %v1207 = vpop.f32.mrf.mxu0
      %v1208 = vadd.f32 %v1194, %v1207
      %1209 = vdwg.mxu0
      %1210 = vmatpush.bf16.msra.mxu0 %v950
      %1211 = vmatpush.bf16.msra.mxu0 %v948
      %1212 = vmatpush.bf16.msra.mxu0 %v946
      %1213 = vmatpush.bf16.msra.mxu0 %v944
      %1214 = vmatpush.bf16.msra.mxu0 %v942
      %1215 = vmatpush.bf16.msra.mxu0 %v940
      %1216 = vmatpush.bf16.msra.mxu0 %v938
      %1217 = vmatpush.bf16.msra.mxu0 %v936
      %1218 = vmatmul.bf16.gmra.mxu0 %v381
      %v1219 = vpop.f32.mrf.mxu0
      %v1220 = vadd.f32 %v1206, %v1219
      %v1221 = vpop.f32.mrf.mxu0
      %v1222 = vadd.f32 %v1208, %v1221
      %1223 = vdwg.mxu0
      %1224 = vmatpush.bf16.msra.mxu0 %v966
      %1225 = vmatpush.bf16.msra.mxu0 %v964
      %1226 = vmatpush.bf16.msra.mxu0 %v962
      %1227 = vmatpush.bf16.msra.mxu0 %v960
      %1228 = vmatpush.bf16.msra.mxu0 %v958
      %1229 = vmatpush.bf16.msra.mxu0 %v956
      %1230 = vmatpush.bf16.msra.mxu0 %v954
      %1231 = vmatpush.bf16.msra.mxu0 %v952
      %1232 = vmatmul.bf16.gmra.mxu0 %v382
      %v1233 = vpop.f32.mrf.mxu0
      %v1234 = vadd.f32 %v1220, %v1233
      %v1235 = vpop.f32.mrf.mxu0
      %v1236 = vadd.f32 %v1222, %v1235
      %1237 = vdwg.mxu0
      %1238 = vmatpush.bf16.msra.mxu0 %v839
      %1239 = vmatpush.bf16.msra.mxu0 %v837
      %1240 = vmatpush.bf16.msra.mxu0 %v835
      %1241 = vmatpush.bf16.msra.mxu0 %v833
      %1242 = vmatpush.bf16.msra.mxu0 %v831
      %1243 = vmatpush.bf16.msra.mxu0 %v829
      %1244 = vmatpush.bf16.msra.mxu0 %v827
      %1245 = vmatpush.bf16.msra.mxu0 %v825
      %1246 = vmatmul.bf16.gmra.mxu0 %v374
      %v1247 = vpop.f32.mrf.mxu0
      %v1248 = vadd.f32 0.0, %v1247
      %v1249 = vpop.f32.mrf.mxu0
      %v1250 = vadd.f32 0.0, %v1249
      %1251 = vdwg.mxu0
      %1252 = vmatpush.bf16.msra.mxu0 %v855
      %1253 = vmatpush.bf16.msra.mxu0 %v853
      %1254 = vmatpush.bf16.msra.mxu0 %v851
      %1255 = vmatpush.bf16.msra.mxu0 %v849
      %1256 = vmatpush.bf16.msra.mxu0 %v847
      %1257 = vmatpush.bf16.msra.mxu0 %v845
      %1258 = vmatpush.bf16.msra.mxu0 %v843
      %1259 = vmatpush.bf16.msra.mxu0 %v841
      %1260 = vmatmul.bf16.gmra.mxu0 %v375
      %v1261 = vpop.f32.mrf.mxu0
      %v1262 = vadd.f32 %v1248, %v1261
      %v1263 = vpop.f32.mrf.mxu0
      %v1264 = vadd.f32 %v1250, %v1263
      %1265 = vdwg.mxu0
      %1266 = vmatpush.bf16.msra.mxu0 %v871
      %1267 = vmatpush.bf16.msra.mxu0 %v869
      %1268 = vmatpush.bf16.msra.mxu0 %v867
      %1269 = vmatpush.bf16.msra.mxu0 %v865
      %1270 = vmatpush.bf16.msra.mxu0 %v863
      %1271 = vmatpush.bf16.msra.mxu0 %v861
      %1272 = vmatpush.bf16.msra.mxu0 %v859
      %1273 = vmatpush.bf16.msra.mxu0 %v857
      %1274 = vmatmul.bf16.gmra.mxu0 %v376
      %v1275 = vpop.f32.mrf.mxu0
      %v1276 = vadd.f32 %v1262, %v1275
      %v1277 = vpop.f32.mrf.mxu0
      %v1278 = vadd.f32 %v1264, %v1277
      %1279 = vdwg.mxu0
      %1280 = vmatpush.bf16.msra.mxu0 %v887
      %1281 = vmatpush.bf16.msra.mxu0 %v885
      %1282 = vmatpush.bf16.msra.mxu0 %v883
      %1283 = vmatpush.bf16.msra.mxu0 %v881
      %1284 = vmatpush.bf16.msra.mxu0 %v879
      %1285 = vmatpush.bf16.msra.mxu0 %v877
      %1286 = vmatpush.bf16.msra.mxu0 %v875
      %1287 = vmatpush.bf16.msra.mxu0 %v873
      %1288 = vmatmul.bf16.gmra.mxu0 %v377
      %v1289 = vpop.f32.mrf.mxu0
      %v1290 = vadd.f32 %v1276, %v1289
      %v1291 = vpop.f32.mrf.mxu0
      %v1292 = vadd.f32 %v1278, %v1291
      %1293 = vdwg.mxu0
      %1294 = vmatpush.bf16.msra.mxu0 %v903
      %1295 = vmatpush.bf16.msra.mxu0 %v901
      %1296 = vmatpush.bf16.msra.mxu0 %v899
      %1297 = vmatpush.bf16.msra.mxu0 %v897
      %1298 = vmatpush.bf16.msra.mxu0 %v895
      %1299 = vmatpush.bf16.msra.mxu0 %v893
      %1300 = vmatpush.bf16.msra.mxu0 %v891
      %1301 = vmatpush.bf16.msra.mxu0 %v889
      %1302 = vmatmul.bf16.gmra.mxu0 %v378
      %v1303 = vpop.f32.mrf.mxu0
      %v1304 = vadd.f32 %v1290, %v1303
      %v1305 = vpop.f32.mrf.mxu0
      %v1306 = vadd.f32 %v1292, %v1305
      %1307 = vdwg.mxu0
      %1308 = vmatpush.bf16.msra.mxu0 %v919
      %1309 = vmatpush.bf16.msra.mxu0 %v917
      %1310 = vmatpush.bf16.msra.mxu0 %v915
      %1311 = vmatpush.bf16.msra.mxu0 %v913
      %1312 = vmatpush.bf16.msra.mxu0 %v911
      %1313 = vmatpush.bf16.msra.mxu0 %v909
      %1314 = vmatpush.bf16.msra.mxu0 %v907
      %1315 = vmatpush.bf16.msra.mxu0 %v905
      %1316 = vmatmul.bf16.gmra.mxu0 %v379
      %v1317 = vpop.f32.mrf.mxu0
      %v1318 = vadd.f32 %v1304, %v1317
      %v1319 = vpop.f32.mrf.mxu0
      %v1320 = vadd.f32 %v1306, %v1319
      %1321 = vdwg.mxu0
      %1322 = vmatpush.bf16.msra.mxu0 %v935
      %1323 = vmatpush.bf16.msra.mxu0 %v933
      %1324 = vmatpush.bf16.msra.mxu0 %v931
      %1325 = vmatpush.bf16.msra.mxu0 %v929
      %1326 = vmatpush.bf16.msra.mxu0 %v927
      %1327 = vmatpush.bf16.msra.mxu0 %v925
      %1328 = vmatpush.bf16.msra.mxu0 %v923
      %1329 = vmatpush.bf16.msra.mxu0 %v921
      %1330 = vmatmul.bf16.gmra.mxu0 %v380
      %v1331 = vpop.f32.mrf.mxu0
      %v1332 = vadd.f32 %v1318, %v1331
      %v1333 = vpop.f32.mrf.mxu0
      %v1334 = vadd.f32 %v1320, %v1333
      %1335 = vdwg.mxu0
      %1336 = vmatpush.bf16.msra.mxu0 %v951
      %1337 = vmatpush.bf16.msra.mxu0 %v949
      %1338 = vmatpush.bf16.msra.mxu0 %v947
      %1339 = vmatpush.bf16.msra.mxu0 %v945
      %1340 = vmatpush.bf16.msra.mxu0 %v943
      %1341 = vmatpush.bf16.msra.mxu0 %v941
      %1342 = vmatpush.bf16.msra.mxu0 %v939
      %1343 = vmatpush.bf16.msra.mxu0 %v937
      %1344 = vmatmul.bf16.gmra.mxu0 %v381
      %v1345 = vpop.f32.mrf.mxu0
      %v1346 = vadd.f32 %v1332, %v1345
      %v1347 = vpop.f32.mrf.mxu0
      %v1348 = vadd.f32 %v1334, %v1347
      %1349 = vdwg.mxu0
      %1350 = vmatpush.bf16.msra.mxu0 %v967
      %1351 = vmatpush.bf16.msra.mxu0 %v965
      %1352 = vmatpush.bf16.msra.mxu0 %v963
      %1353 = vmatpush.bf16.msra.mxu0 %v961
      %1354 = vmatpush.bf16.msra.mxu0 %v959
      %1355 = vmatpush.bf16.msra.mxu0 %v957
      %1356 = vmatpush.bf16.msra.mxu0 %v955
      %1357 = vmatpush.bf16.msra.mxu0 %v953
      %1358 = vmatmul.bf16.gmra.mxu0 %v382
      %v1359 = vpop.f32.mrf.mxu0
      %v1360 = vadd.f32 %v1346, %v1359
      %v1361 = vpop.f32.mrf.mxu0
      %v1362 = vadd.f32 %v1348, %v1361
      %1363 = vdwg.mxu0
      %v1364 = vadd.f32 %v1234, %v1236
      %v1365 = vrot.slane %v1364, 4
      %v1366 = vadd.f32 %v1364, %v1365
      %v1367 = vrot.slane %v1366, 2
      %v1368 = vadd.f32 %v1366, %v1367
      %v1369 = vrot.slane %v1368, 1
      %v1370 = vadd.f32 %v1368, %v1369
      %v1371 = vadd.f32 %v1360, %v1362
      %v1372 = vrot.slane %v1371, 4
      %v1373 = vadd.f32 %v1371, %v1372
      %v1374 = vrot.slane %v1373, 2
      %v1375 = vadd.f32 %v1373, %v1374
      %v1376 = vrot.slane %v1375, 1
      %v1377 = vadd.f32 %v1375, %v1376
      %v1378 = vmul.f32 %v1234, %v1234
      %v1379 = vmul.f32 %v1360, %v1360
      %v1380 = vmul.f32 %v1236, %v1236
      %v1381 = vmul.f32 %v1362, %v1362
      %v1382 = vadd.f32 %v1378, %v1380
      %v1383 = vrot.slane %v1382, 4
      %v1384 = vadd.f32 %v1382, %v1383
      %v1385 = vrot.slane %v1384, 2
      %v1386 = vadd.f32 %v1384, %v1385
      %v1387 = vrot.slane %v1386, 1
      %v1388 = vadd.f32 %v1386, %v1387
      %v1389 = vadd.f32 %v1379, %v1381
      %v1390 = vrot.slane %v1389, 4
      %v1391 = vadd.f32 %v1389, %v1390
      %v1392 = vrot.slane %v1391, 2
      %v1393 = vadd.f32 %v1391, %v1392
      %v1394 = vrot.slane %v1393, 1
      %v1395 = vadd.f32 %v1393, %v1394
      %vm1396 = vcmask 1040384
      %v1397 = vsel %vm1396, %v1370, %v1388
      %v1398 = vsel %vm1396, %v1377, %v1395
      %v1401 = vrot.slane %v1398, 6
      %vm1402 = vcmask 1041408
      %v1403 = vsel %vm1402, %v1397, %v1401
      %1405 = vst [vmem:[%s191] sm:$0xf] %v1403
      %v1406 = vpack.c.bf16 %v1360, %v1234
      %v1407 = vpack.c.bf16 %v1362, %v1236
      %1408 = vst [vmem:[%s185] sm:$0xff] %v1406
      %1409 = vst [vmem:[%s185 + $0x8] sm:$0xff] %v1407
      %s1410 = smul.u32 2, %s15
      %p1411 = scmp.lt.s32.totalorder %s1410, 3
      %s1412 = scalar_select %p1411, %s1410, 3
      %s1413 = smul.addr %s1412, 2
      %s1414 = smul.addr %s1413, 4
      %s1415 = scalar_lea.vmem %s2, %s1414
      %p1416 = scmp.lt.s32.totalorder %s15, 1
      %s1417 = scalar_select %p1416, %s15, 1
      %s1418 = smul.addr %s1417, 2
      %s1419 = smul.addr %s1418, 2
      %s1420 = scalar_lea.vmem %s3, %s1419
      // Predicated region
      $region29: #{encoder_forward.13} parent=27 // pred_check
        %p1421 = pneg %p80
      $region30: #{encoder_forward.13} parent=27 // pred_check_branch
        %1423 = sbr.rel (%p1421) target = $region32
      $region31: #{encoder_forward.13} parent=27 // pred_region
        %s1424 = smul.u32 2, %s15
      $region32: #{encoder_forward.13} parent=27 // pred_fallthru
        _
      // Predicated region
      $region33: #{encoder_forward.13} parent=27 // pred_check
        %p1425 = pneg %p106
      $region34: #{encoder_forward.13} parent=27 // pred_check_branch
        %1427 = sbr.rel (%p1425) target = $region36
      $region35: #{encoder_forward.13} parent=27 // pred_region
        _
      $region36: #{encoder_forward.13} parent=27 // pred_fallthru
        _
    $region28: #{encoder_forward.13} parent=5 // pred_fallthru
      _
    %p1428 = scmp.le.s32.totalorder 2, %s10
    // Predicated region
    $region37: #{encoder_forward.13} parent=5 // pred_check
      %p1429 = pneg %p1428
    $region38: #{encoder_forward.13} parent=5 // pred_check_branch
      %1431 = sbr.rel (%p1429) target = $region40
    $region39: #{encoder_forward.13} parent=5 // pred_region
      %s1432 = ssub.s32 %s10, 2
      // Predicated region
      $region41: #{encoder_forward.13} parent=39 // pred_check
        %p1433 = pneg %p86
      $region42: #{encoder_forward.13} parent=39 // pred_check_branch
        %1435 = sbr.rel (%p1433) target = $region44
      $region43: #{encoder_forward.13} parent=39 // pred_region
        %s1436 = smul.u32 2, %s16
        %p1437 = scmp.lt.s32.totalorder %s1436, 3
        %s1438 = scalar_select %p1437, %s1436, 3
        %s1439 = smul.addr %s1438, 2
        %s1440 = smul.addr %s1439, 4
        %s1441 = scalar_lea.vmem %s2, %s1440
      $region44: #{encoder_forward.13} parent=39 // pred_fallthru
        _
      // Predicated region
      $region45: #{encoder_forward.13} parent=39 // pred_check
        %p1442 = pneg %p112
      $region46: #{encoder_forward.13} parent=39 // pred_check_branch
        %1444 = sbr.rel (%p1442) target = $region48
      $region47: #{encoder_forward.13} parent=39 // pred_region
        %p1445 = scmp.lt.s32.totalorder %s16, 1
        %s1446 = scalar_select %p1445, %s16, 1
        %s1447 = smul.addr %s1446, 2
        %s1448 = smul.addr %s1447, 2
        %s1449 = scalar_lea.vmem %s3, %s1448
      $region48: #{encoder_forward.13} parent=39 // pred_fallthru
        _
    $region40: #{encoder_forward.13} parent=5 // pred_fallthru
      _
  $region6: #{encoder_forward.13} parent=0 // loop_footer
    %s14 = sadd.s32 1, %s10
  $region7: #{encoder_forward.13} parent=0 // loop_footer_branch
    %9 = sbr.rel target = $region3
  $region8: #{encoder_forward.13} parent=0 // loop_exit
    _

// kernel: encoder_forward.16
$region0: #{encoder_forward.16}
  #allocation0 [shape = 'u32[]', space=smem, size = 0x4, offset = 0x4, fixed_abs, tag = 'smem constant byte address 0x4 - core index']
  #allocation1 [shape = 'u32[72,128]{1,0:T(1,128)}', space=vmem, size = 0x9000, scoped, tag = 'internal scratch']
  #allocation2 [shape = 's32[1]{0}', space=sflag, size = 0x4, scoped, tag = 'scoped memory for encoder_forward.16']
  #allocation3 [shape = 's32[1]{0:T(128)S(6)}', space=smem, size = 0x200, scoped, tag = 'prefetched SMEM operand 0']
  %s0 = inlined_call_operand.<no memory space> [shape: s32[1], index: 0, kind: input, shape index: {}]
  %s1 = inlined_call_operand.vmem [shape: bf16[8,512], index: 1, kind: input, shape index: {}]
  %s2 = inlined_call_operand.vmem [shape: f32[2,512], index: 2, kind: input, shape index: {}]
  %s3 = inlined_call_operand.vmem [shape: bf16[8,512], index: 3, kind: output, shape index: {}]
  %s4 = sld [smem:[#allocation0]]
  $region18: #{encoder_forward.16} parent=0
    _
  %s6 = ssub.s32 1, %s4
  %s7 = scalar_select 0, %s6, %s4
  %8 = sst [smem:[#allocation3]] %s0
  // Predicated region
  $region2: #{encoder_forward.16} parent=0 // pred_check
    _
  $region3: #{encoder_forward.16} parent=0 // pred_check_branch
    %10 = sbr.rel (0) target = $region5
  $region4: #{encoder_forward.16} parent=0 // pred_region
    _
  $region5: #{encoder_forward.16} parent=0 // pred_fallthru
    _
  // Predicated region
  $region6: #{encoder_forward.16} parent=0 // pred_check
    _
  $region7: #{encoder_forward.16} parent=0 // pred_check_branch
    %12 = sbr.rel (0) target = $region9
  $region8: #{encoder_forward.16} parent=0 // pred_region
    _
  $region9: #{encoder_forward.16} parent=0 // pred_fallthru
    _
  %v13 = vld [vmem:[%s1] sm:$0xff]
  %v14 = vld [vmem:[%s1 + $0x8] sm:$0xff]
  %v15 = vunpack.c.l.bf16 %v13
  %v16 = vunpack.c.h.bf16 %v13
  %v17 = vunpack.c.l.bf16 %v14
  %v18 = vunpack.c.h.bf16 %v14
  %v19 = vld [vmem:[%s2] ss:$2 sm:$0xf]
  %v21 = vperm.slane %v19, 0
  %v22 = vperm.slane %v19, 1
  %v23 = vperm.slane %v19, 2
  %v24 = vperm.slane %v19, 3
  %v29 = vmul.f32 %v15, %v21
  %v30 = vmul.f32 %v16, %v22
  %v31 = vmul.f32 %v17, %v23
  %v32 = vmul.f32 %v18, %v24
  %s33 = scalar_lea.vmem %s2, 1
  %v34 = vld [vmem:[%s33] ss:$2 sm:$0xf]
  %v36 = vperm.slane %v34, 0
  %v37 = vperm.slane %v34, 1
  %v38 = vperm.slane %v34, 2
  %v39 = vperm.slane %v34, 3
  %v44 = vadd.f32 %v29, %v36
  %v45 = vadd.f32 %v30, %v37
  %v46 = vadd.f32 %v31, %v38
  %v47 = vadd.f32 %v32, %v39
  %vm48 = vcmp.ge.f32.partialorder %v44, 0.0
  %vm49 = vcmp.ge.f32.partialorder %v45, 0.0
  %vm50 = vcmp.ge.f32.partialorder %v46, 0.0
  %vm51 = vcmp.ge.f32.partialorder %v47, 0.0
  %v52 = vmul.f32 %v44, 0.01
  %v53 = vmul.f32 %v45, 0.01
  %v54 = vmul.f32 %v46, 0.01
  %v55 = vmul.f32 %v47, 0.01
  %v56 = vsel %vm48, %v44, %v52
  %v57 = vsel %vm49, %v45, %v53
  %v58 = vsel %vm50, %v46, %v54
  %v59 = vsel %vm51, %v47, %v55
  %s60 = smul.u32 0, 8
  %s61 = sld [smem:[#allocation3]]
  %v62 = vlaneseq
  %v63 = vshrl.u32 %v62, 7
  %v64 = vstv %s60
  %v65 = vadd.s32 %v63, %v64
  %v66 = vlaneseq
  %v67 = vand.u32 %v66, 127
  %v68 = vadd.s32 %v67, 128
  %v69 = vadd.s32 %v67, 256
  %v70 = vadd.s32 %v67, 384
  %v71 = vmul.u32 %v65, 2654435761
  %v72 = vadd.s32 %v71, %v67
  %v73 = vadd.s32 %v71, %v68
  %v74 = vadd.s32 %v71, %v69
  %v75 = vadd.s32 %v71, %v70
  %v76 = vstv %s61
  %v77 = vadd.s32 %v72, %v76
  %v78 = vadd.s32 %v73, %v76
  %v79 = vadd.s32 %v74, %v76
  %v80 = vadd.s32 %v75, %v76
  %v81 = vshrl.u32 %v77, 16
  %v82 = vshrl.u32 %v78, 16
  %v83 = vshrl.u32 %v79, 16
  %v84 = vshrl.u32 %v80, 16
  %v85 = vxor.u32 %v77, %v81
  %v86 = vxor.u32 %v78, %v82
  %v87 = vxor.u32 %v79, %v83
  %v88 = vxor.u32 %v80, %v84
  %v89 = vmul.u32 %v85, 2146121005
  %v90 = vmul.u32 %v86, 2146121005
  %v91 = vmul.u32 %v87, 2146121005
  %v92 = vmul.u32 %v88, 2146121005
  %v93 = vshrl.u32 %v89, 15
  %v94 = vshrl.u32 %v90, 15
  %v95 = vshrl.u32 %v91, 15
  %v96 = vshrl.u32 %v92, 15
  %v97 = vxor.u32 %v89, %v93
  %v98 = vxor.u32 %v90, %v94
  %v99 = vxor.u32 %v91, %v95
  %v100 = vxor.u32 %v92, %v96
  %v101 = vadd.s32 %v97, 2147483648
  %vm103 = vcmp.ge.s32.totalorder %v101, 3006477107
  %v104 = vadd.s32 %v98, 2147483648
  %vm106 = vcmp.ge.s32.totalorder %v104, 3006477107
  %v107 = vadd.s32 %v99, 2147483648
  %vm109 = vcmp.ge.s32.totalorder %v107, 3006477107
  %v110 = vadd.s32 %v100, 2147483648
  %vm112 = vcmp.ge.s32.totalorder %v110, 3006477107
  %v113 = vmul.f32 %v56, 1.25
  %v114 = vmul.f32 %v57, 1.25
  %v115 = vmul.f32 %v58, 1.25
  %v116 = vmul.f32 %v59, 1.25
  %v117 = vsel %vm103, %v113, 0.0
  %v118 = vsel %vm106, %v114, 0.0
  %v119 = vsel %vm109, %v115, 0.0
  %v120 = vsel %vm112, %v116, 0.0
  %v121 = vpack.c.bf16 %v118, %v117
  %v122 = vpack.c.bf16 %v120, %v119
  %123 = vst [vmem:[%s3] sm:$0xff] %v121
  %124 = vst [vmem:[%s3 + $0x8] sm:$0xff] %v122
  // Predicated region
  $region10: #{encoder_forward.16} parent=0 // pred_check
    _
  $region11: #{encoder_forward.16} parent=0 // pred_check_branch
    %126 = sbr.rel (0) target = $region13
  $region12: #{encoder_forward.16} parent=0 // pred_region
    _
  $region13: #{encoder_forward.16} parent=0 // pred_fallthru
    _
  // Predicated region
  $region14: #{encoder_forward.16} parent=0 // pred_check
    _
  $region15: #{encoder_forward.16} parent=0 // pred_check_branch
    %128 = sbr.rel (0) target = $region17
  $region16: #{encoder_forward.16} parent=0 // pred_region
    _
  $region17: #{encoder_forward.16} parent=0 // pred_fallthru
    _

// kernel: encoder_forward.17
$region0: #{encoder_forward.17}
  #allocation0 [shape = 'u32[]', space=smem, size = 0x4, offset = 0x4, fixed_abs, tag = 'smem constant byte address 0x4 - core index']
  #allocation1 [shape = 'u32[72,128]{1,0:T(1,128)}', space=vmem, size = 0x9000, scoped, tag = 'internal scratch']
  %s0 = inlined_call_operand.vmem [shape: bf16[2,2048], index: 0, kind: input, shape index: {}]
  %s1 = inlined_call_operand.vmem [shape: bf16[2048,128], index: 1, kind: input, shape index: {}]
  %s2 = inlined_call_operand.vmem [shape: f32[2,128], index: 2, kind: input, shape index: {}]
  %s3 = inlined_call_operand.vmem [shape: f32[2,128], index: 3, kind: output, shape index: {}]
  %s4 = sld [smem:[#allocation0]]
  $region22: #{encoder_forward.17} parent=0
    _
  %s6 = ssub.s32 1, %s4
  %s7 = scalar_select 0, %s6, %s4
  // Predicated region
  $region2: #{encoder_forward.17} parent=0 // pred_check
    _
  $region3: #{encoder_forward.17} parent=0 // pred_check_branch
    %9 = sbr.rel (0) target = $region5
  $region4: #{encoder_forward.17} parent=0 // pred_region
    _
  $region5: #{encoder_forward.17} parent=0 // pred_fallthru
    _
  // Predicated region
  $region6: #{encoder_forward.17} parent=0 // pred_check
    _
  $region7: #{encoder_forward.17} parent=0 // pred_check_branch
    %11 = sbr.rel (0) target = $region9
  $region8: #{encoder_forward.17} parent=0 // pred_region
    _
  $region9: #{encoder_forward.17} parent=0 // pred_fallthru
    _
  // Predicated region
  $region10: #{encoder_forward.17} parent=0 // pred_check
    _
  $region11: #{encoder_forward.17} parent=0 // pred_check_branch
    %13 = sbr.rel (0) target = $region13
  $region12: #{encoder_forward.17} parent=0 // pred_region
    _
  $region13: #{encoder_forward.17} parent=0 // pred_fallthru
    _
  %v14 = vld [vmem:[%s0] sm:$0xff]
  %v15 = vld [vmem:[%s0 + $0x8] sm:$0xff]
  %v16 = vld [vmem:[%s1] sm:$0xf]
  %v17 = vld [vmem:[%s1 + $0x4] sm:$0xf]
  %v18 = vld [vmem:[%s1 + $0x8] sm:$0xf]
  %v19 = vld [vmem:[%s1 + $0xc] sm:$0xf]
  %v20 = vld [vmem:[%s1 + $0x10] sm:$0xf]
  %v21 = vld [vmem:[%s1 + $0x14] sm:$0xf]
  %v22 = vld [vmem:[%s1 + $0x18] sm:$0xf]
  %v23 = vld [vmem:[%s1 + $0x1c] sm:$0xf]
  %v24 = vld [vmem:[%s1 + $0x20] sm:$0xf]
  %v25 = vld [vmem:[%s1 + $0x24] sm:$0xf]
  %v26 = vld [vmem:[%s1 + $0x28] sm:$0xf]
  %v27 = vld [vmem:[%s1 + $0x2c] sm:$0xf]
  %v28 = vld [vmem:[%s1 + $0x30] sm:$0xf]
  %v29 = vld [vmem:[%s1 + $0x34] sm:$0xf]
  %v30 = vld [vmem:[%s1 + $0x38] sm:$0xf]
  %v31 = vld [vmem:[%s1 + $0x3c] sm:$0xf]
  %v32 = vld [vmem:[%s1 + $0x40] sm:$0xf]
  %v33 = vld [vmem:[%s1 + $0x44] sm:$0xf]
  %v34 = vld [vmem:[%s1 + $0x48] sm:$0xf]
  %v35 = vld [vmem:[%s1 + $0x4c] sm:$0xf]
  %v36 = vld [vmem:[%s1 + $0x50] sm:$0xf]
  %v37 = vld [vmem:[%s1 + $0x54] sm:$0xf]
  %v38 = vld [vmem:[%s1 + $0x58] sm:$0xf]
  %v39 = vld [vmem:[%s1 + $0x5c] sm:$0xf]
  %v40 = vld [vmem:[%s1 + $0x60] sm:$0xf]
  %v41 = vld [vmem:[%s1 + $0x64] sm:$0xf]
  %v42 = vld [vmem:[%s1 + $0x68] sm:$0xf]
  %v43 = vld [vmem:[%s1 + $0x6c] sm:$0xf]
  %v44 = vld [vmem:[%s1 + $0x70] sm:$0xf]
  %v45 = vld [vmem:[%s1 + $0x74] sm:$0xf]
  %v46 = vld [vmem:[%s1 + $0x78] sm:$0xf]
  %v47 = vld [vmem:[%s1 + $0x7c] sm:$0xf]
  %v48 = vld [vmem:[%s1 + $0x80] sm:$0xf]
  %v49 = vld [vmem:[%s1 + $0x84] sm:$0xf]
  %v50 = vld [vmem:[%s1 + $0x88] sm:$0xf]
  %v51 = vld [vmem:[%s1 + $0x8c] sm:$0xf]
  %v52 = vld [vmem:[%s1 + $0x90] sm:$0xf]
  %v53 = vld [vmem:[%s1 + $0x94] sm:$0xf]
  %v54 = vld [vmem:[%s1 + $0x98] sm:$0xf]
  %v55 = vld [vmem:[%s1 + $0x9c] sm:$0xf]
  %v56 = vld [vmem:[%s1 + $0xa0] sm:$0xf]
  %v57 = vld [vmem:[%s1 + $0xa4] sm:$0xf]
  %v58 = vld [vmem:[%s1 + $0xa8] sm:$0xf]
  %v59 = vld [vmem:[%s1 + $0xac] sm:$0xf]
  %v60 = vld [vmem:[%s1 + $0xb0] sm:$0xf]
  %v61 = vld [vmem:[%s1 + $0xb4] sm:$0xf]
  %v62 = vld [vmem:[%s1 + $0xb8] sm:$0xf]
  %v63 = vld [vmem:[%s1 + $0xbc] sm:$0xf]
  %v64 = vld [vmem:[%s1 + $0xc0] sm:$0xf]
  %v65 = vld [vmem:[%s1 + $0xc4] sm:$0xf]
  %v66 = vld [vmem:[%s1 + $0xc8] sm:$0xf]
  %v67 = vld [vmem:[%s1 + $0xcc] sm:$0xf]
  %v68 = vld [vmem:[%s1 + $0xd0] sm:$0xf]
  %v69 = vld [vmem:[%s1 + $0xd4] sm:$0xf]
  %v70 = vld [vmem:[%s1 + $0xd8] sm:$0xf]
  %v71 = vld [vmem:[%s1 + $0xdc] sm:$0xf]
  %v72 = vld [vmem:[%s1 + $0xe0] sm:$0xf]
  %v73 = vld [vmem:[%s1 + $0xe4] sm:$0xf]
  %v74 = vld [vmem:[%s1 + $0xe8] sm:$0xf]
  %v75 = vld [vmem:[%s1 + $0xec] sm:$0xf]
  %v76 = vld [vmem:[%s1 + $0xf0] sm:$0xf]
  %v77 = vld [vmem:[%s1 + $0xf4] sm:$0xf]
  %v78 = vld [vmem:[%s1 + $0xf8] sm:$0xf]
  %v79 = vld [vmem:[%s1 + $0xfc] sm:$0xf]
  %v80 = vld [vmem:[%s1 + $0x100] sm:$0xf]
  %v81 = vld [vmem:[%s1 + $0x104] sm:$0xf]
  %v82 = vld [vmem:[%s1 + $0x108] sm:$0xf]
  %v83 = vld [vmem:[%s1 + $0x10c] sm:$0xf]
  %v84 = vld [vmem:[%s1 + $0x110] sm:$0xf]
  %v85 = vld [vmem:[%s1 + $0x114] sm:$0xf]
  %v86 = vld [vmem:[%s1 + $0x118] sm:$0xf]
  %v87 = vld [vmem:[%s1 + $0x11c] sm:$0xf]
  %v88 = vld [vmem:[%s1 + $0x120] sm:$0xf]
  %v89 = vld [vmem:[%s1 + $0x124] sm:$0xf]
  %v90 = vld [vmem:[%s1 + $0x128] sm:$0xf]
  %v91 = vld [vmem:[%s1 + $0x12c] sm:$0xf]
  %v92 = vld [vmem:[%s1 + $0x130] sm:$0xf]
  %v93 = vld [vmem:[%s1 + $0x134] sm:$0xf]
  %v94 = vld [vmem:[%s1 + $0x138] sm:$0xf]
  %v95 = vld [vmem:[%s1 + $0x13c] sm:$0xf]
  %v96 = vld [vmem:[%s1 + $0x140] sm:$0xf]
  %v97 = vld [vmem:[%s1 + $0x144] sm:$0xf]
  %v98 = vld [vmem:[%s1 + $0x148] sm:$0xf]
  %v99 = vld [vmem:[%s1 + $0x14c] sm:$0xf]
  %v100 = vld [vmem:[%s1 + $0x150] sm:$0xf]
  %v101 = vld [vmem:[%s1 + $0x154] sm:$0xf]
  %v102 = vld [vmem:[%s1 + $0x158] sm:$0xf]
  %v103 = vld [vmem:[%s1 + $0x15c] sm:$0xf]
  %v104 = vld [vmem:[%s1 + $0x160] sm:$0xf]
  %v105 = vld [vmem:[%s1 + $0x164] sm:$0xf]
  %v106 = vld [vmem:[%s1 + $0x168] sm:$0xf]
  %v107 = vld [vmem:[%s1 + $0x16c] sm:$0xf]
  %v108 = vld [vmem:[%s1 + $0x170] sm:$0xf]
  %v109 = vld [vmem:[%s1 + $0x174] sm:$0xf]
  %v110 = vld [vmem:[%s1 + $0x178] sm:$0xf]
  %v111 = vld [vmem:[%s1 + $0x17c] sm:$0xf]
  %v112 = vld [vmem:[%s1 + $0x180] sm:$0xf]
  %v113 = vld [vmem:[%s1 + $0x184] sm:$0xf]
  %v114 = vld [vmem:[%s1 + $0x188] sm:$0xf]
  %v115 = vld [vmem:[%s1 + $0x18c] sm:$0xf]
  %v116 = vld [vmem:[%s1 + $0x190] sm:$0xf]
  %v117 = vld [vmem:[%s1 + $0x194] sm:$0xf]
  %v118 = vld [vmem:[%s1 + $0x198] sm:$0xf]
  %v119 = vld [vmem:[%s1 + $0x19c] sm:$0xf]
  %v120 = vld [vmem:[%s1 + $0x1a0] sm:$0xf]
  %v121 = vld [vmem:[%s1 + $0x1a4] sm:$0xf]
  %v122 = vld [vmem:[%s1 + $0x1a8] sm:$0xf]
  %v123 = vld [vmem:[%s1 + $0x1ac] sm:$0xf]
  %v124 = vld [vmem:[%s1 + $0x1b0] sm:$0xf]
  %v125 = vld [vmem:[%s1 + $0x1b4] sm:$0xf]
  %v126 = vld [vmem:[%s1 + $0x1b8] sm:$0xf]
  %v127 = vld [vmem:[%s1 + $0x1bc] sm:$0xf]
  %v128 = vld [vmem:[%s1 + $0x1c0] sm:$0xf]
  %v129 = vld [vmem:[%s1 + $0x1c4] sm:$0xf]
  %v130 = vld [vmem:[%s1 + $0x1c8] sm:$0xf]
  %v131 = vld [vmem:[%s1 + $0x1cc] sm:$0xf]
  %v132 = vld [vmem:[%s1 + $0x1d0] sm:$0xf]
  %v133 = vld [vmem:[%s1 + $0x1d4] sm:$0xf]
  %v134 = vld [vmem:[%s1 + $0x1d8] sm:$0xf]
  %v135 = vld [vmem:[%s1 + $0x1dc] sm:$0xf]
  %v136 = vld [vmem:[%s1 + $0x1e0] sm:$0xf]
  %v137 = vld [vmem:[%s1 + $0x1e4] sm:$0xf]
  %v138 = vld [vmem:[%s1 + $0x1e8] sm:$0xf]
  %v139 = vld [vmem:[%s1 + $0x1ec] sm:$0xf]
  %v140 = vld [vmem:[%s1 + $0x1f0] sm:$0xf]
  %v141 = vld [vmem:[%s1 + $0x1f4] sm:$0xf]
  %v142 = vld [vmem:[%s1 + $0x1f8] sm:$0xf]
  %v143 = vld [vmem:[%s1 + $0x1fc] sm:$0xf]
  %v144 = vld [vmem:[%s1 + $0x200] sm:$0xf]
  %v145 = vld [vmem:[%s1 + $0x204] sm:$0xf]
  %v146 = vld [vmem:[%s1 + $0x208] sm:$0xf]
  %v147 = vld [vmem:[%s1 + $0x20c] sm:$0xf]
  %v148 = vld [vmem:[%s1 + $0x210] sm:$0xf]
  %v149 = vld [vmem:[%s1 + $0x214] sm:$0xf]
  %v150 = vld [vmem:[%s1 + $0x218] sm:$0xf]
  %v151 = vld [vmem:[%s1 + $0x21c] sm:$0xf]
  %v152 = vld [vmem:[%s1 + $0x220] sm:$0xf]
  %v153 = vld [vmem:[%s1 + $0x224] sm:$0xf]
  %v154 = vld [vmem:[%s1 + $0x228] sm:$0xf]
  %v155 = vld [vmem:[%s1 + $0x22c] sm:$0xf]
  %v156 = vld [vmem:[%s1 + $0x230] sm:$0xf]
  %v157 = vld [vmem:[%s1 + $0x234] sm:$0xf]
  %v158 = vld [vmem:[%s1 + $0x238] sm:$0xf]
  %v159 = vld [vmem:[%s1 + $0x23c] sm:$0xf]
  %v160 = vld [vmem:[%s1 + $0x240] sm:$0xf]
  %v161 = vld [vmem:[%s1 + $0x244] sm:$0xf]
  %v162 = vld [vmem:[%s1 + $0x248] sm:$0xf]
  %v163 = vld [vmem:[%s1 + $0x24c] sm:$0xf]
  %v164 = vld [vmem:[%s1 + $0x250] sm:$0xf]
  %v165 = vld [vmem:[%s1 + $0x254] sm:$0xf]
  %v166 = vld [vmem:[%s1 + $0x258] sm:$0xf]
  %v167 = vld [vmem:[%s1 + $0x25c] sm:$0xf]
  %v168 = vld [vmem:[%s1 + $0x260] sm:$0xf]
  %v169 = vld [vmem:[%s1 + $0x264] sm:$0xf]
  %v170 = vld [vmem:[%s1 + $0x268] sm:$0xf]
  %v171 = vld [vmem:[%s1 + $0x26c] sm:$0xf]
  %v172 = vld [vmem:[%s1 + $0x270] sm:$0xf]
  %v173 = vld [vmem:[%s1 + $0x274] sm:$0xf]
  %v174 = vld [vmem:[%s1 + $0x278] sm:$0xf]
  %v175 = vld [vmem:[%s1 + $0x27c] sm:$0xf]
  %v176 = vld [vmem:[%s1 + $0x280] sm:$0xf]
  %v177 = vld [vmem:[%s1 + $0x284] sm:$0xf]
  %v178 = vld [vmem:[%s1 + $0x288] sm:$0xf]
  %v179 = vld [vmem:[%s1 + $0x28c] sm:$0xf]
  %v180 = vld [vmem:[%s1 + $0x290] sm:$0xf]
  %v181 = vld [vmem:[%s1 + $0x294] sm:$0xf]
  %v182 = vld [vmem:[%s1 + $0x298] sm:$0xf]
  %v183 = vld [vmem:[%s1 + $0x29c] sm:$0xf]
  %v184 = vld [vmem:[%s1 + $0x2a0] sm:$0xf]
  %v185 = vld [vmem:[%s1 + $0x2a4] sm:$0xf]
  %v186 = vld [vmem:[%s1 + $0x2a8] sm:$0xf]
  %v187 = vld [vmem:[%s1 + $0x2ac] sm:$0xf]
  %v188 = vld [vmem:[%s1 + $0x2b0] sm:$0xf]
  %v189 = vld [vmem:[%s1 + $0x2b4] sm:$0xf]
  %v190 = vld [vmem:[%s1 + $0x2b8] sm:$0xf]
  %v191 = vld [vmem:[%s1 + $0x2bc] sm:$0xf]
  %v192 = vld [vmem:[%s1 + $0x2c0] sm:$0xf]
  %v193 = vld [vmem:[%s1 + $0x2c4] sm:$0xf]
  %v194 = vld [vmem:[%s1 + $0x2c8] sm:$0xf]
  %v195 = vld [vmem:[%s1 + $0x2cc] sm:$0xf]
  %v196 = vld [vmem:[%s1 + $0x2d0] sm:$0xf]
  %v197 = vld [vmem:[%s1 + $0x2d4] sm:$0xf]
  %v198 = vld [vmem:[%s1 + $0x2d8] sm:$0xf]
  %v199 = vld [vmem:[%s1 + $0x2dc] sm:$0xf]
  %v200 = vld [vmem:[%s1 + $0x2e0] sm:$0xf]
  %v201 = vld [vmem:[%s1 + $0x2e4] sm:$0xf]
  %v202 = vld [vmem:[%s1 + $0x2e8] sm:$0xf]
  %v203 = vld [vmem:[%s1 + $0x2ec] sm:$0xf]
  %v204 = vld [vmem:[%s1 + $0x2f0] sm:$0xf]
  %v205 = vld [vmem:[%s1 + $0x2f4] sm:$0xf]
  %v206 = vld [vmem:[%s1 + $0x2f8] sm:$0xf]
  %v207 = vld [vmem:[%s1 + $0x2fc] sm:$0xf]
  %v208 = vld [vmem:[%s1 + $0x300] sm:$0xf]
  %v209 = vld [vmem:[%s1 + $0x304] sm:$0xf]
  %v210 = vld [vmem:[%s1 + $0x308] sm:$0xf]
  %v211 = vld [vmem:[%s1 + $0x30c] sm:$0xf]
  %v212 = vld [vmem:[%s1 + $0x310] sm:$0xf]
  %v213 = vld [vmem:[%s1 + $0x314] sm:$0xf]
  %v214 = vld [vmem:[%s1 + $0x318] sm:$0xf]
  %v215 = vld [vmem:[%s1 + $0x31c] sm:$0xf]
  %v216 = vld [vmem:[%s1 + $0x320] sm:$0xf]
  %v217 = vld [vmem:[%s1 + $0x324] sm:$0xf]
  %v218 = vld [vmem:[%s1 + $0x328] sm:$0xf]
  %v219 = vld [vmem:[%s1 + $0x32c] sm:$0xf]
  %v220 = vld [vmem:[%s1 + $0x330] sm:$0xf]
  %v221 = vld [vmem:[%s1 + $0x334] sm:$0xf]
  %v222 = vld [vmem:[%s1 + $0x338] sm:$0xf]
  %v223 = vld [vmem:[%s1 + $0x33c] sm:$0xf]
  %v224 = vld [vmem:[%s1 + $0x340] sm:$0xf]
  %v225 = vld [vmem:[%s1 + $0x344] sm:$0xf]
  %v226 = vld [vmem:[%s1 + $0x348] sm:$0xf]
  %v227 = vld [vmem:[%s1 + $0x34c] sm:$0xf]
  %v228 = vld [vmem:[%s1 + $0x350] sm:$0xf]
  %v229 = vld [vmem:[%s1 + $0x354] sm:$0xf]
  %v230 = vld [vmem:[%s1 + $0x358] sm:$0xf]
  %v231 = vld [vmem:[%s1 + $0x35c] sm:$0xf]
  %v232 = vld [vmem:[%s1 + $0x360] sm:$0xf]
  %v233 = vld [vmem:[%s1 + $0x364] sm:$0xf]
  %v234 = vld [vmem:[%s1 + $0x368] sm:$0xf]
  %v235 = vld [vmem:[%s1 + $0x36c] sm:$0xf]
  %v236 = vld [vmem:[%s1 + $0x370] sm:$0xf]
  %v237 = vld [vmem:[%s1 + $0x374] sm:$0xf]
  %v238 = vld [vmem:[%s1 + $0x378] sm:$0xf]
  %v239 = vld [vmem:[%s1 + $0x37c] sm:$0xf]
  %v240 = vld [vmem:[%s1 + $0x380] sm:$0xf]
  %v241 = vld [vmem:[%s1 + $0x384] sm:$0xf]
  %v242 = vld [vmem:[%s1 + $0x388] sm:$0xf]
  %v243 = vld [vmem:[%s1 + $0x38c] sm:$0xf]
  %v244 = vld [vmem:[%s1 + $0x390] sm:$0xf]
  %v245 = vld [vmem:[%s1 + $0x394] sm:$0xf]
  %v246 = vld [vmem:[%s1 + $0x398] sm:$0xf]
  %v247 = vld [vmem:[%s1 + $0x39c] sm:$0xf]
  %v248 = vld [vmem:[%s1 + $0x3a0] sm:$0xf]
  %v249 = vld [vmem:[%s1 + $0x3a4] sm:$0xf]
  %v250 = vld [vmem:[%s1 + $0x3a8] sm:$0xf]
  %v251 = vld [vmem:[%s1 + $0x3ac] sm:$0xf]
  %v252 = vld [vmem:[%s1 + $0x3b0] sm:$0xf]
  %v253 = vld [vmem:[%s1 + $0x3b4] sm:$0xf]
  %v254 = vld [vmem:[%s1 + $0x3b8] sm:$0xf]
  %v255 = vld [vmem:[%s1 + $0x3bc] sm:$0xf]
  %v256 = vld [vmem:[%s1 + $0x3c0] sm:$0xf]
  %v257 = vld [vmem:[%s1 + $0x3c4] sm:$0xf]
  %v258 = vld [vmem:[%s1 + $0x3c8] sm:$0xf]
  %v259 = vld [vmem:[%s1 + $0x3cc] sm:$0xf]
  %v260 = vld [vmem:[%s1 + $0x3d0] sm:$0xf]
  %v261 = vld [vmem:[%s1 + $0x3d4] sm:$0xf]
  %v262 = vld [vmem:[%s1 + $0x3d8] sm:$0xf]
  %v263 = vld [vmem:[%s1 + $0x3dc] sm:$0xf]
  %v264 = vld [vmem:[%s1 + $0x3e0] sm:$0xf]
  %v265 = vld [vmem:[%s1 + $0x3e4] sm:$0xf]
  %v266 = vld [vmem:[%s1 + $0x3e8] sm:$0xf]
  %v267 = vld [vmem:[%s1 + $0x3ec] sm:$0xf]
  %v268 = vld [vmem:[%s1 + $0x3f0] sm:$0xf]
  %v269 = vld [vmem:[%s1 + $0x3f4] sm:$0xf]
  %v270 = vld [vmem:[%s1 + $0x3f8] sm:$0xf]
  %v271 = vld [vmem:[%s1 + $0x3fc] sm:$0xf]
  %273 = vst [vmem:[#allocation1] ss:$9 sm:$0xff] %v14
  %v274 = vld [vmem:[#allocation1] sm:$0xff]
  %v275 = vld [vmem:[#allocation1 + $0x9] sm:$0xff]
  %v276 = vld [vmem:[#allocation1 + $0x12] sm:$0xff]
  %v277 = vld [vmem:[#allocation1 + $0x1b] sm:$0xff]
  %v278 = vld [vmem:[#allocation1 + $0x24] sm:$0xff]
  %v279 = vld [vmem:[#allocation1 + $0x2d] sm:$0xff]
  %v280 = vld [vmem:[#allocation1 + $0x36] sm:$0xff]
  %v281 = vld [vmem:[#allocation1 + $0x3f] sm:$0xff]
  %283 = vst [vmem:[#allocation1] ss:$9 sm:$0xff] %v15
  %v284 = vld [vmem:[#allocation1] sm:$0xff]
  %v285 = vld [vmem:[#allocation1 + $0x9] sm:$0xff]
  %v286 = vld [vmem:[#allocation1 + $0x12] sm:$0xff]
  %v287 = vld [vmem:[#allocation1 + $0x1b] sm:$0xff]
  %v288 = vld [vmem:[#allocation1 + $0x24] sm:$0xff]
  %v289 = vld [vmem:[#allocation1 + $0x2d] sm:$0xff]
  %v290 = vld [vmem:[#allocation1 + $0x36] sm:$0xff]
  %v291 = vld [vmem:[#allocation1 + $0x3f] sm:$0xff]
  %v564 = vunpack.c.l.b16 %v16
  %v565 = vunpack.c.l.b16 %v17
  %v566 = vunpack.c.l.b16 %v18
  %v567 = vunpack.c.l.b16 %v19
  %v568 = vunpack.c.l.b16 %v20
  %v569 = vunpack.c.l.b16 %v21
  %v570 = vunpack.c.l.b16 %v22
  %v571 = vunpack.c.l.b16 %v23
  %v572 = vunpack.c.l.b16 %v24
  %v573 = vunpack.c.l.b16 %v25
  %v574 = vunpack.c.l.b16 %v26
  %v575 = vunpack.c.l.b16 %v27
  %v576 = vunpack.c.l.b16 %v28
  %v577 = vunpack.c.l.b16 %v29
  %v578 = vunpack.c.l.b16 %v30
  %v579 = vunpack.c.l.b16 %v31
  %v580 = vunpack.c.l.b16 %v32
  %v581 = vunpack.c.l.b16 %v33
  %v582 = vunpack.c.l.b16 %v34
  %v583 = vunpack.c.l.b16 %v35
  %v584 = vunpack.c.l.b16 %v36
  %v585 = vunpack.c.l.b16 %v37
  %v586 = vunpack.c.l.b16 %v38
  %v587 = vunpack.c.l.b16 %v39
  %v588 = vunpack.c.l.b16 %v40
  %v589 = vunpack.c.l.b16 %v41
  %v590 = vunpack.c.l.b16 %v42
  %v591 = vunpack.c.l.b16 %v43
  %v592 = vunpack.c.l.b16 %v44
  %v593 = vunpack.c.l.b16 %v45
  %v594 = vunpack.c.l.b16 %v46
  %v595 = vunpack.c.l.b16 %v47
  %v596 = vunpack.c.l.b16 %v48
  %v597 = vunpack.c.l.b16 %v49
  %v598 = vunpack.c.l.b16 %v50
  %v599 = vunpack.c.l.b16 %v51
  %v600 = vunpack.c.l.b16 %v52
  %v601 = vunpack.c.l.b16 %v53
  %v602 = vunpack.c.l.b16 %v54
  %v603 = vunpack.c.l.b16 %v55
  %v604 = vunpack.c.l.b16 %v56
  %v605 = vunpack.c.l.b16 %v57
  %v606 = vunpack.c.l.b16 %v58
  %v607 = vunpack.c.l.b16 %v59
  %v608 = vunpack.c.l.b16 %v60
  %v609 = vunpack.c.l.b16 %v61
  %v610 = vunpack.c.l.b16 %v62
  %v611 = vunpack.c.l.b16 %v63
  %v612 = vunpack.c.l.b16 %v64
  %v613 = vunpack.c.l.b16 %v65
  %v614 = vunpack.c.l.b16 %v66
  %v615 = vunpack.c.l.b16 %v67
  %v616 = vunpack.c.l.b16 %v68
  %v617 = vunpack.c.l.b16 %v69
  %v618 = vunpack.c.l.b16 %v70
  %v619 = vunpack.c.l.b16 %v71
  %v620 = vunpack.c.l.b16 %v72
  %v621 = vunpack.c.l.b16 %v73
  %v622 = vunpack.c.l.b16 %v74
  %v623 = vunpack.c.l.b16 %v75
  %v624 = vunpack.c.l.b16 %v76
  %v625 = vunpack.c.l.b16 %v77
  %v626 = vunpack.c.l.b16 %v78
  %v627 = vunpack.c.l.b16 %v79
  %v628 = vunpack.c.l.b16 %v80
  %v629 = vunpack.c.l.b16 %v81
  %v630 = vunpack.c.l.b16 %v82
  %v631 = vunpack.c.l.b16 %v83
  %v632 = vunpack.c.l.b16 %v84
  %v633 = vunpack.c.l.b16 %v85
  %v634 = vunpack.c.l.b16 %v86
  %v635 = vunpack.c.l.b16 %v87
  %v636 = vunpack.c.l.b16 %v88
  %v637 = vunpack.c.l.b16 %v89
  %v638 = vunpack.c.l.b16 %v90
  %v639 = vunpack.c.l.b16 %v91
  %v640 = vunpack.c.l.b16 %v92
  %v641 = vunpack.c.l.b16 %v93
  %v642 = vunpack.c.l.b16 %v94
  %v643 = vunpack.c.l.b16 %v95
  %v644 = vunpack.c.l.b16 %v96
  %v645 = vunpack.c.l.b16 %v97
  %v646 = vunpack.c.l.b16 %v98
  %v647 = vunpack.c.l.b16 %v99
  %v648 = vunpack.c.l.b16 %v100
  %v649 = vunpack.c.l.b16 %v101
  %v650 = vunpack.c.l.b16 %v102
  %v651 = vunpack.c.l.b16 %v103
  %v652 = vunpack.c.l.b16 %v104
  %v653 = vunpack.c.l.b16 %v105
  %v654 = vunpack.c.l.b16 %v106
  %v655 = vunpack.c.l.b16 %v107
  %v656 = vunpack.c.l.b16 %v108
  %v657 = vunpack.c.l.b16 %v109
  %v658 = vunpack.c.l.b16 %v110
  %v659 = vunpack.c.l.b16 %v111
  %v660 = vunpack.c.l.b16 %v112
  %v661 = vunpack.c.l.b16 %v113
  %v662 = vunpack.c.l.b16 %v114
  %v663 = vunpack.c.l.b16 %v115
  %v664 = vunpack.c.l.b16 %v116
  %v665 = vunpack.c.l.b16 %v117
  %v666 = vunpack.c.l.b16 %v118
  %v667 = vunpack.c.l.b16 %v119
  %v668 = vunpack.c.l.b16 %v120
  %v669 = vunpack.c.l.b16 %v121
  %v670 = vunpack.c.l.b16 %v122
  %v671 = vunpack.c.l.b16 %v123
  %v672 = vunpack.c.l.b16 %v124
  %v673 = vunpack.c.l.b16 %v125
  %v674 = vunpack.c.l.b16 %v126
  %v675 = vunpack.c.l.b16 %v127
  %v676 = vunpack.c.l.b16 %v128
  %v677 = vunpack.c.l.b16 %v129
  %v678 = vunpack.c.l.b16 %v130
  %v679 = vunpack.c.l.b16 %v131
  %v680 = vunpack.c.l.b16 %v132
  %v681 = vunpack.c.l.b16 %v133
  %v682 = vunpack.c.l.b16 %v134
  %v683 = vunpack.c.l.b16 %v135
  %v684 = vunpack.c.l.b16 %v136
  %v685 = vunpack.c.l.b16 %v137
  %v686 = vunpack.c.l.b16 %v138
  %v687 = vunpack.c.l.b16 %v139
  %v688 = vunpack.c.l.b16 %v140
  %v689 = vunpack.c.l.b16 %v141
  %v690 = vunpack.c.l.b16 %v142
  %v691 = vunpack.c.l.b16 %v143
  %v692 = vunpack.c.l.b16 %v144
  %v693 = vunpack.c.l.b16 %v145
  %v694 = vunpack.c.l.b16 %v146
  %v695 = vunpack.c.l.b16 %v147
  %v696 = vunpack.c.l.b16 %v148
  %v697 = vunpack.c.l.b16 %v149
  %v698 = vunpack.c.l.b16 %v150
  %v699 = vunpack.c.l.b16 %v151
  %v700 = vunpack.c.l.b16 %v152
  %v701 = vunpack.c.l.b16 %v153
  %v702 = vunpack.c.l.b16 %v154
  %v703 = vunpack.c.l.b16 %v155
  %v704 = vunpack.c.l.b16 %v156
  %v705 = vunpack.c.l.b16 %v157
  %v706 = vunpack.c.l.b16 %v158
  %v707 = vunpack.c.l.b16 %v159
  %v708 = vunpack.c.l.b16 %v160
  %v709 = vunpack.c.l.b16 %v161
  %v710 = vunpack.c.l.b16 %v162
  %v711 = vunpack.c.l.b16 %v163
  %v712 = vunpack.c.l.b16 %v164
  %v713 = vunpack.c.l.b16 %v165
  %v714 = vunpack.c.l.b16 %v166
  %v715 = vunpack.c.l.b16 %v167
  %v716 = vunpack.c.l.b16 %v168
  %v717 = vunpack.c.l.b16 %v169
  %v718 = vunpack.c.l.b16 %v170
  %v719 = vunpack.c.l.b16 %v171
  %v720 = vunpack.c.l.b16 %v172
  %v721 = vunpack.c.l.b16 %v173
  %v722 = vunpack.c.l.b16 %v174
  %v723 = vunpack.c.l.b16 %v175
  %v724 = vunpack.c.l.b16 %v176
  %v725 = vunpack.c.l.b16 %v177
  %v726 = vunpack.c.l.b16 %v178
  %v727 = vunpack.c.l.b16 %v179
  %v728 = vunpack.c.l.b16 %v180
  %v729 = vunpack.c.l.b16 %v181
  %v730 = vunpack.c.l.b16 %v182
  %v731 = vunpack.c.l.b16 %v183
  %v732 = vunpack.c.l.b16 %v184
  %v733 = vunpack.c.l.b16 %v185
  %v734 = vunpack.c.l.b16 %v186
  %v735 = vunpack.c.l.b16 %v187
  %v736 = vunpack.c.l.b16 %v188
  %v737 = vunpack.c.l.b16 %v189
  %v738 = vunpack.c.l.b16 %v190
  %v739 = vunpack.c.l.b16 %v191
  %v740 = vunpack.c.l.b16 %v192
  %v741 = vunpack.c.l.b16 %v193
  %v742 = vunpack.c.l.b16 %v194
  %v743 = vunpack.c.l.b16 %v195
  %v744 = vunpack.c.l.b16 %v196
  %v745 = vunpack.c.l.b16 %v197
  %v746 = vunpack.c.l.b16 %v198
  %v747 = vunpack.c.l.b16 %v199
  %v748 = vunpack.c.l.b16 %v200
  %v749 = vunpack.c.l.b16 %v201
  %v750 = vunpack.c.l.b16 %v202
  %v751 = vunpack.c.l.b16 %v203
  %v752 = vunpack.c.l.b16 %v204
  %v753 = vunpack.c.l.b16 %v205
  %v754 = vunpack.c.l.b16 %v206
  %v755 = vunpack.c.l.b16 %v207
  %v756 = vunpack.c.l.b16 %v208
  %v757 = vunpack.c.l.b16 %v209
  %v758 = vunpack.c.l.b16 %v210
  %v759 = vunpack.c.l.b16 %v211
  %v760 = vunpack.c.l.b16 %v212
  %v761 = vunpack.c.l.b16 %v213
  %v762 = vunpack.c.l.b16 %v214
  %v763 = vunpack.c.l.b16 %v215
  %v764 = vunpack.c.l.b16 %v216
  %v765 = vunpack.c.l.b16 %v217
  %v766 = vunpack.c.l.b16 %v218
  %v767 = vunpack.c.l.b16 %v219
  %v768 = vunpack.c.l.b16 %v220
  %v769 = vunpack.c.l.b16 %v221
  %v770 = vunpack.c.l.b16 %v222
  %v771 = vunpack.c.l.b16 %v223
  %v772 = vunpack.c.l.b16 %v224
  %v773 = vunpack.c.l.b16 %v225
  %v774 = vunpack.c.l.b16 %v226
  %v775 = vunpack.c.l.b16 %v227
  %v776 = vunpack.c.l.b16 %v228
  %v777 = vunpack.c.l.b16 %v229
  %v778 = vunpack.c.l.b16 %v230
  %v779 = vunpack.c.l.b16 %v231
  %v780 = vunpack.c.l.b16 %v232
  %v781 = vunpack.c.l.b16 %v233
  %v782 = vunpack.c.l.b16 %v234
  %v783 = vunpack.c.l.b16 %v235
  %v784 = vunpack.c.l.b16 %v236
  %v785 = vunpack.c.l.b16 %v237
  %v786 = vunpack.c.l.b16 %v238
  %v787 = vunpack.c.l.b16 %v239
  %v788 = vunpack.c.l.b16 %v240
  %v789 = vunpack.c.l.b16 %v241
  %v790 = vunpack.c.l.b16 %v242
  %v791 = vunpack.c.l.b16 %v243
  %v792 = vunpack.c.l.b16 %v244
  %v793 = vunpack.c.l.b16 %v245
  %v794 = vunpack.c.l.b16 %v246
  %v795 = vunpack.c.l.b16 %v247
  %v796 = vunpack.c.l.b16 %v248
  %v797 = vunpack.c.l.b16 %v249
  %v798 = vunpack.c.l.b16 %v250
  %v799 = vunpack.c.l.b16 %v251
  %v800 = vunpack.c.l.b16 %v252
  %v801 = vunpack.c.l.b16 %v253
  %v802 = vunpack.c.l.b16 %v254
  %v803 = vunpack.c.l.b16 %v255
  %v804 = vunpack.c.l.b16 %v256
  %v805 = vunpack.c.l.b16 %v257
  %v806 = vunpack.c.l.b16 %v258
  %v807 = vunpack.c.l.b16 %v259
  %v808 = vunpack.c.l.b16 %v260
  %v809 = vunpack.c.l.b16 %v261
  %v810 = vunpack.c.l.b16 %v262
  %v811 = vunpack.c.l.b16 %v263
  %v812 = vunpack.c.l.b16 %v264
  %v813 = vunpack.c.l.b16 %v265
  %v814 = vunpack.c.l.b16 %v266
  %v815 = vunpack.c.l.b16 %v267
  %v816 = vunpack.c.l.b16 %v268
  %v817 = vunpack.c.l.b16 %v269
  %v818 = vunpack.c.l.b16 %v270
  %v819 = vunpack.c.l.b16 %v271
  %v820 = vpack.c.b16 %v565, %v564
  %v821 = vpack.c.b16 %v567, %v566
  %v822 = vpack.c.b16 %v569, %v568
  %v823 = vpack.c.b16 %v571, %v570
  %v824 = vpack.c.b16 %v573, %v572
  %v825 = vpack.c.b16 %v575, %v574
  %v826 = vpack.c.b16 %v577, %v576
  %v827 = vpack.c.b16 %v579, %v578
  %v828 = vpack.c.b16 %v581, %v580
  %v829 = vpack.c.b16 %v583, %v582
  %v830 = vpack.c.b16 %v585, %v584
  %v831 = vpack.c.b16 %v587, %v586
  %v832 = vpack.c.b16 %v589, %v588
  %v833 = vpack.c.b16 %v591, %v590
  %v834 = vpack.c.b16 %v593, %v592
  %v835 = vpack.c.b16 %v595, %v594
  %v836 = vpack.c.b16 %v597, %v596
  %v837 = vpack.c.b16 %v599, %v598
  %v838 = vpack.c.b16 %v601, %v600
  %v839 = vpack.c.b16 %v603, %v602
  %v840 = vpack.c.b16 %v605, %v604
  %v841 = vpack.c.b16 %v607, %v606
  %v842 = vpack.c.b16 %v609, %v608
  %v843 = vpack.c.b16 %v611, %v610
  %v844 = vpack.c.b16 %v613, %v612
  %v845 = vpack.c.b16 %v615, %v614
  %v846 = vpack.c.b16 %v617, %v616
  %v847 = vpack.c.b16 %v619, %v618
  %v848 = vpack.c.b16 %v621, %v620
  %v849 = vpack.c.b16 %v623, %v622
  %v850 = vpack.c.b16 %v625, %v624
  %v851 = vpack.c.b16 %v627, %v626
  %v852 = vpack.c.b16 %v629, %v628
  %v853 = vpack.c.b16 %v631, %v630
  %v854 = vpack.c.b16 %v633, %v632
  %v855 = vpack.c.b16 %v635, %v634
  %v856 = vpack.c.b16 %v637, %v636
  %v857 = vpack.c.b16 %v639, %v638
  %v858 = vpack.c.b16 %v641, %v640
  %v859 = vpack.c.b16 %v643, %v642
  %v860 = vpack.c.b16 %v645, %v644
  %v861 = vpack.c.b16 %v647, %v646
  %v862 = vpack.c.b16 %v649, %v648
  %v863 = vpack.c.b16 %v651, %v650
  %v864 = vpack.c.b16 %v653, %v652
  %v865 = vpack.c.b16 %v655, %v654
  %v866 = vpack.c.b16 %v657, %v656
  %v867 = vpack.c.b16 %v659, %v658
  %v868 = vpack.c.b16 %v661, %v660
  %v869 = vpack.c.b16 %v663, %v662
  %v870 = vpack.c.b16 %v665, %v664
  %v871 = vpack.c.b16 %v667, %v666
  %v872 = vpack.c.b16 %v669, %v668
  %v873 = vpack.c.b16 %v671, %v670
  %v874 = vpack.c.b16 %v673, %v672
  %v875 = vpack.c.b16 %v675, %v674
  %v876 = vpack.c.b16 %v677, %v676
  %v877 = vpack.c.b16 %v679, %v678
  %v878 = vpack.c.b16 %v681, %v680
  %v879 = vpack.c.b16 %v683, %v682
  %v880 = vpack.c.b16 %v685, %v684
  %v881 = vpack.c.b16 %v687, %v686
  %v882 = vpack.c.b16 %v689, %v688
  %v883 = vpack.c.b16 %v691, %v690
  %v884 = vpack.c.b16 %v693, %v692
  %v885 = vpack.c.b16 %v695, %v694
  %v886 = vpack.c.b16 %v697, %v696
  %v887 = vpack.c.b16 %v699, %v698
  %v888 = vpack.c.b16 %v701, %v700
  %v889 = vpack.c.b16 %v703, %v702
  %v890 = vpack.c.b16 %v705, %v704
  %v891 = vpack.c.b16 %v707, %v706
  %v892 = vpack.c.b16 %v709, %v708
  %v893 = vpack.c.b16 %v711, %v710
  %v894 = vpack.c.b16 %v713, %v712
  %v895 = vpack.c.b16 %v715, %v714
  %v896 = vpack.c.b16 %v717, %v716
  %v897 = vpack.c.b16 %v719, %v718
  %v898 = vpack.c.b16 %v721, %v720
  %v899 = vpack.c.b16 %v723, %v722
  %v900 = vpack.c.b16 %v725, %v724
  %v901 = vpack.c.b16 %v727, %v726
  %v902 = vpack.c.b16 %v729, %v728
  %v903 = vpack.c.b16 %v731, %v730
  %v904 = vpack.c.b16 %v733, %v732
  %v905 = vpack.c.b16 %v735, %v734
  %v906 = vpack.c.b16 %v737, %v736
  %v907 = vpack.c.b16 %v739, %v738
  %v908 = vpack.c.b16 %v741, %v740
  %v909 = vpack.c.b16 %v743, %v742
  %v910 = vpack.c.b16 %v745, %v744
  %v911 = vpack.c.b16 %v747, %v746
  %v912 = vpack.c.b16 %v749, %v748
  %v913 = vpack.c.b16 %v751, %v750
  %v914 = vpack.c.b16 %v753, %v752
  %v915 = vpack.c.b16 %v755, %v754
  %v916 = vpack.c.b16 %v757, %v756
  %v917 = vpack.c.b16 %v759, %v758
  %v918 = vpack.c.b16 %v761, %v760
  %v919 = vpack.c.b16 %v763, %v762
  %v920 = vpack.c.b16 %v765, %v764
  %v921 = vpack.c.b16 %v767, %v766
  %v922 = vpack.c.b16 %v769, %v768
  %v923 = vpack.c.b16 %v771, %v770
  %v924 = vpack.c.b16 %v773, %v772
  %v925 = vpack.c.b16 %v775, %v774
  %v926 = vpack.c.b16 %v777, %v776
  %v927 = vpack.c.b16 %v779, %v778
  %v928 = vpack.c.b16 %v781, %v780
  %v929 = vpack.c.b16 %v783, %v782
  %v930 = vpack.c.b16 %v785, %v784
  %v931 = vpack.c.b16 %v787, %v786
  %v932 = vpack.c.b16 %v789, %v788
  %v933 = vpack.c.b16 %v791, %v790
  %v934 = vpack.c.b16 %v793, %v792
  %v935 = vpack.c.b16 %v795, %v794
  %v936 = vpack.c.b16 %v797, %v796
  %v937 = vpack.c.b16 %v799, %v798
  %v938 = vpack.c.b16 %v801, %v800
  %v939 = vpack.c.b16 %v803, %v802
  %v940 = vpack.c.b16 %v805, %v804
  %v941 = vpack.c.b16 %v807, %v806
  %v942 = vpack.c.b16 %v809, %v808
  %v943 = vpack.c.b16 %v811, %v810
  %v944 = vpack.c.b16 %v813, %v812
  %v945 = vpack.c.b16 %v815, %v814
  %v946 = vpack.c.b16 %v817, %v816
  %v947 = vpack.c.b16 %v819, %v818
  %1076 = vmatpush.bf16.msra.mxu0 %v827
  %1077 = vmatpush.bf16.msra.mxu0 %v826
  %1078 = vmatpush.bf16.msra.mxu0 %v825
  %1079 = vmatpush.bf16.msra.mxu0 %v824
  %1080 = vmatpush.bf16.msra.mxu0 %v823
  %1081 = vmatpush.bf16.msra.mxu0 %v822
  %1082 = vmatpush.bf16.msra.mxu0 %v821
  %1083 = vmatpush.bf16.msra.mxu0 %v820
  %1084 = vmatmul.bf16.gmra.mxu0 %v274
  %v1085 = vpop.f32.mrf.mxu0
  %v1086 = vadd.f32 0.0, %v1085
  %v1087 = vpop.f32.mrf.mxu0
  %1088 = vdwg.mxu0
  %1089 = vmatpush.bf16.msra.mxu0 %v835
  %1090 = vmatpush.bf16.msra.mxu0 %v834
  %1091 = vmatpush.bf16.msra.mxu0 %v833
  %1092 = vmatpush.bf16.msra.mxu0 %v832
  %1093 = vmatpush.bf16.msra.mxu0 %v831
  %1094 = vmatpush.bf16.msra.mxu0 %v830
  %1095 = vmatpush.bf16.msra.mxu0 %v829
  %1096 = vmatpush.bf16.msra.mxu0 %v828
  %1097 = vmatmul.bf16.gmra.mxu0 %v275
  %v1098 = vpop.f32.mrf.mxu0
  %v1099 = vadd.f32 %v1086, %v1098
  %v1100 = vpop.f32.mrf.mxu0
  %1101 = vdwg.mxu0
  %1102 = vmatpush.bf16.msra.mxu0 %v843
  %1103 = vmatpush.bf16.msra.mxu0 %v842
  %1104 = vmatpush.bf16.msra.mxu0 %v841
  %1105 = vmatpush.bf16.msra.mxu0 %v840
  %1106 = vmatpush.bf16.msra.mxu0 %v839
  %1107 = vmatpush.bf16.msra.mxu0 %v838
  %1108 = vmatpush.bf16.msra.mxu0 %v837
  %1109 = vmatpush.bf16.msra.mxu0 %v836
  %1110 = vmatmul.bf16.gmra.mxu0 %v276
  %v1111 = vpop.f32.mrf.mxu0
  %v1112 = vadd.f32 %v1099, %v1111
  %v1113 = vpop.f32.mrf.mxu0
  %1114 = vdwg.mxu0
  %1115 = vmatpush.bf16.msra.mxu0 %v851
  %1116 = vmatpush.bf16.msra.mxu0 %v850
  %1117 = vmatpush.bf16.msra.mxu0 %v849
  %1118 = vmatpush.bf16.msra.mxu0 %v848
  %1119 = vmatpush.bf16.msra.mxu0 %v847
  %1120 = vmatpush.bf16.msra.mxu0 %v846
  %1121 = vmatpush.bf16.msra.mxu0 %v845
  %1122 = vmatpush.bf16.msra.mxu0 %v844
  %1123 = vmatmul.bf16.gmra.mxu0 %v277
  %v1124 = vpop.f32.mrf.mxu0
  %v1125 = vadd.f32 %v1112, %v1124
  %v1126 = vpop.f32.mrf.mxu0
  %1127 = vdwg.mxu0
  %1128 = vmatpush.bf16.msra.mxu0 %v859
  %1129 = vmatpush.bf16.msra.mxu0 %v858
  %1130 = vmatpush.bf16.msra.mxu0 %v857
  %1131 = vmatpush.bf16.msra.mxu0 %v856
  %1132 = vmatpush.bf16.msra.mxu0 %v855
  %1133 = vmatpush.bf16.msra.mxu0 %v854
  %1134 = vmatpush.bf16.msra.mxu0 %v853
  %1135 = vmatpush.bf16.msra.mxu0 %v852
  %1136 = vmatmul.bf16.gmra.mxu0 %v278
  %v1137 = vpop.f32.mrf.mxu0
  %v1138 = vadd.f32 %v1125, %v1137
  %v1139 = vpop.f32.mrf.mxu0
  %1140 = vdwg.mxu0
  %1141 = vmatpush.bf16.msra.mxu0 %v867
  %1142 = vmatpush.bf16.msra.mxu0 %v866
  %1143 = vmatpush.bf16.msra.mxu0 %v865
  %1144 = vmatpush.bf16.msra.mxu0 %v864
  %1145 = vmatpush.bf16.msra.mxu0 %v863
  %1146 = vmatpush.bf16.msra.mxu0 %v862
  %1147 = vmatpush.bf16.msra.mxu0 %v861
  %1148 = vmatpush.bf16.msra.mxu0 %v860
  %1149 = vmatmul.bf16.gmra.mxu0 %v279
  %v1150 = vpop.f32.mrf.mxu0
  %v1151 = vadd.f32 %v1138, %v1150
  %v1152 = vpop.f32.mrf.mxu0
  %1153 = vdwg.mxu0
  %1154 = vmatpush.bf16.msra.mxu0 %v875
  %1155 = vmatpush.bf16.msra.mxu0 %v874
  %1156 = vmatpush.bf16.msra.mxu0 %v873
  %1157 = vmatpush.bf16.msra.mxu0 %v872
  %1158 = vmatpush.bf16.msra.mxu0 %v871
  %1159 = vmatpush.bf16.msra.mxu0 %v870
  %1160 = vmatpush.bf16.msra.mxu0 %v869
  %1161 = vmatpush.bf16.msra.mxu0 %v868
  %1162 = vmatmul.bf16.gmra.mxu0 %v280
  %v1163 = vpop.f32.mrf.mxu0
  %v1164 = vadd.f32 %v1151, %v1163
  %v1165 = vpop.f32.mrf.mxu0
  %1166 = vdwg.mxu0
  %1167 = vmatpush.bf16.msra.mxu0 %v883
  %1168 = vmatpush.bf16.msra.mxu0 %v882
  %1169 = vmatpush.bf16.msra.mxu0 %v881
  %1170 = vmatpush.bf16.msra.mxu0 %v880
  %1171 = vmatpush.bf16.msra.mxu0 %v879
  %1172 = vmatpush.bf16.msra.mxu0 %v878
  %1173 = vmatpush.bf16.msra.mxu0 %v877
  %1174 = vmatpush.bf16.msra.mxu0 %v876
  %1175 = vmatmul.bf16.gmra.mxu0 %v281
  %v1176 = vpop.f32.mrf.mxu0
  %v1177 = vadd.f32 %v1164, %v1176
  %v1178 = vpop.f32.mrf.mxu0
  %1179 = vdwg.mxu0
  %1180 = vmatpush.bf16.msra.mxu0 %v891
  %1181 = vmatpush.bf16.msra.mxu0 %v890
  %1182 = vmatpush.bf16.msra.mxu0 %v889
  %1183 = vmatpush.bf16.msra.mxu0 %v888
  %1184 = vmatpush.bf16.msra.mxu0 %v887
  %1185 = vmatpush.bf16.msra.mxu0 %v886
  %1186 = vmatpush.bf16.msra.mxu0 %v885
  %1187 = vmatpush.bf16.msra.mxu0 %v884
  %1188 = vmatmul.bf16.gmra.mxu0 %v284
  %v1189 = vpop.f32.mrf.mxu0
  %v1190 = vadd.f32 %v1177, %v1189
  %v1191 = vpop.f32.mrf.mxu0
  %1192 = vdwg.mxu0
  %1193 = vmatpush.bf16.msra.mxu0 %v899
  %1194 = vmatpush.bf16.msra.mxu0 %v898
  %1195 = vmatpush.bf16.msra.mxu0 %v897
  %1196 = vmatpush.bf16.msra.mxu0 %v896
  %1197 = vmatpush.bf16.msra.mxu0 %v895
  %1198 = vmatpush.bf16.msra.mxu0 %v894
  %1199 = vmatpush.bf16.msra.mxu0 %v893
  %1200 = vmatpush.bf16.msra.mxu0 %v892
  %1201 = vmatmul.bf16.gmra.mxu0 %v285
  %v1202 = vpop.f32.mrf.mxu0
  %v1203 = vadd.f32 %v1190, %v1202
  %v1204 = vpop.f32.mrf.mxu0
  %1205 = vdwg.mxu0
  %1206 = vmatpush.bf16.msra.mxu0 %v907
  %1207 = vmatpush.bf16.msra.mxu0 %v906
  %1208 = vmatpush.bf16.msra.mxu0 %v905
  %1209 = vmatpush.bf16.msra.mxu0 %v904
  %1210 = vmatpush.bf16.msra.mxu0 %v903
  %1211 = vmatpush.bf16.msra.mxu0 %v902
  %1212 = vmatpush.bf16.msra.mxu0 %v901
  %1213 = vmatpush.bf16.msra.mxu0 %v900
  %1214 = vmatmul.bf16.gmra.mxu0 %v286
  %v1215 = vpop.f32.mrf.mxu0
  %v1216 = vadd.f32 %v1203, %v1215
  %v1217 = vpop.f32.mrf.mxu0
  %1218 = vdwg.mxu0
  %1219 = vmatpush.bf16.msra.mxu0 %v915
  %1220 = vmatpush.bf16.msra.mxu0 %v914
  %1221 = vmatpush.bf16.msra.mxu0 %v913
  %1222 = vmatpush.bf16.msra.mxu0 %v912
  %1223 = vmatpush.bf16.msra.mxu0 %v911
  %1224 = vmatpush.bf16.msra.mxu0 %v910
  %1225 = vmatpush.bf16.msra.mxu0 %v909
  %1226 = vmatpush.bf16.msra.mxu0 %v908
  %1227 = vmatmul.bf16.gmra.mxu0 %v287
  %v1228 = vpop.f32.mrf.mxu0
  %v1229 = vadd.f32 %v1216, %v1228
  %v1230 = vpop.f32.mrf.mxu0
  %1231 = vdwg.mxu0
  %1232 = vmatpush.bf16.msra.mxu0 %v923
  %1233 = vmatpush.bf16.msra.mxu0 %v922
  %1234 = vmatpush.bf16.msra.mxu0 %v921
  %1235 = vmatpush.bf16.msra.mxu0 %v920
  %1236 = vmatpush.bf16.msra.mxu0 %v919
  %1237 = vmatpush.bf16.msra.mxu0 %v918
  %1238 = vmatpush.bf16.msra.mxu0 %v917
  %1239 = vmatpush.bf16.msra.mxu0 %v916
  %1240 = vmatmul.bf16.gmra.mxu0 %v288
  %v1241 = vpop.f32.mrf.mxu0
  %v1242 = vadd.f32 %v1229, %v1241
  %v1243 = vpop.f32.mrf.mxu0
  %1244 = vdwg.mxu0
  %1245 = vmatpush.bf16.msra.mxu0 %v931
  %1246 = vmatpush.bf16.msra.mxu0 %v930
  %1247 = vmatpush.bf16.msra.mxu0 %v929
  %1248 = vmatpush.bf16.msra.mxu0 %v928
  %1249 = vmatpush.bf16.msra.mxu0 %v927
  %1250 = vmatpush.bf16.msra.mxu0 %v926
  %1251 = vmatpush.bf16.msra.mxu0 %v925
  %1252 = vmatpush.bf16.msra.mxu0 %v924
  %1253 = vmatmul.bf16.gmra.mxu0 %v289
  %v1254 = vpop.f32.mrf.mxu0
  %v1255 = vadd.f32 %v1242, %v1254
  %v1256 = vpop.f32.mrf.mxu0
  %1257 = vdwg.mxu0
  %1258 = vmatpush.bf16.msra.mxu0 %v939
  %1259 = vmatpush.bf16.msra.mxu0 %v938
  %1260 = vmatpush.bf16.msra.mxu0 %v937
  %1261 = vmatpush.bf16.msra.mxu0 %v936
  %1262 = vmatpush.bf16.msra.mxu0 %v935
  %1263 = vmatpush.bf16.msra.mxu0 %v934
  %1264 = vmatpush.bf16.msra.mxu0 %v933
  %1265 = vmatpush.bf16.msra.mxu0 %v932
  %1266 = vmatmul.bf16.gmra.mxu0 %v290
  %v1267 = vpop.f32.mrf.mxu0
  %v1268 = vadd.f32 %v1255, %v1267
  %v1269 = vpop.f32.mrf.mxu0
  %1270 = vdwg.mxu0
  %1271 = vmatpush.bf16.msra.mxu0 %v947
  %1272 = vmatpush.bf16.msra.mxu0 %v946
  %1273 = vmatpush.bf16.msra.mxu0 %v945
  %1274 = vmatpush.bf16.msra.mxu0 %v944
  %1275 = vmatpush.bf16.msra.mxu0 %v943
  %1276 = vmatpush.bf16.msra.mxu0 %v942
  %1277 = vmatpush.bf16.msra.mxu0 %v941
  %1278 = vmatpush.bf16.msra.mxu0 %v940
  %1279 = vmatmul.bf16.gmra.mxu0 %v291
  %v1280 = vpop.f32.mrf.mxu0
  %v1281 = vadd.f32 %v1268, %v1280
  %v1282 = vpop.f32.mrf.mxu0
  %1283 = vdwg.mxu0
  %vm1284 = vcmask 1041408
  %v1285 = vsel %vm1284, %v1281, 0.0
  %v1286 = vrot.slane %v1285, 4
  %v1287 = vadd.f32 %v1285, %v1286
  %v1288 = vrot.slane %v1287, 2
  %v1289 = vadd.f32 %v1287, %v1288
  %v1290 = vrot.slane %v1289, 1
  %v1291 = vadd.f32 %v1289, %v1290
  %v1292 = vrcp.pop 2.0
  %v1293 = vmul.f32 2.0, %v1292
  %v1294 = vsub.f32 1.0, %v1293
  %v1295 = vmul.f32 %v1292, %v1294
  %v1296 = vadd.f32 %v1292, %v1295
  %vm1297 = vweird.f32 %v1292
  %v1298 = vsel %vm1297, %v1292, %v1296
  %v1299 = vmul.f32 %v1291, %v1298
  %v1300 = vmul.f32 %v1281, %v1281
  %v1301 = vsel %vm1284, %v1300, 0.0
  %v1302 = vrot.slane %v1301, 4
  %v1303 = vadd.f32 %v1301, %v1302
  %v1304 = vrot.slane %v1303, 2
  %v1305 = vadd.f32 %v1303, %v1304
  %v1306 = vrot.slane %v1305, 1
  %v1307 = vadd.f32 %v1305, %v1306
  %v1308 = vmul.f32 %v1307, %v1298
  %v1309 = vmul.f32 %v1299, %v1299
  %v1310 = vsub.f32 %v1308, %v1309
  %v1311 = vmax.f32 %v1310, 0.0
  %v1312 = vadd.f32 %v1311, 1e-05
  %v1313 = vrsqrt.pop %v1312
  %v1314 = vmul.f32 %v1313, %v1312
  %v1315 = vmul.f32 %v1314, %v1313
  %v1316 = vmul.f32 0.5, %v1315
  %v1317 = vsub.f32 1.5, %v1316
  %v1318 = vmul.f32 %v1313, %v1317
  %vm1319 = vweird.f32 %v1312
  %vm1320 = vweird.f32 %v1313
  %vm1321 = vmor %vm1319, %vm1320
  %v1322 = vsel %vm1321, %v1313, %v1318
  %v1323 = vld [vmem:[%s2] sm:$0x1]
  %v1324 = vmul.f32 %v1322, %v1323
  %v1325 = vperm.slane %v1324, 0
  %v1326 = vmul.f32 %v1281, %v1325
  %v1327 = vld [vmem:[%s2 + $0x1] sm:$0x1]
  %v1328 = vmul.f32 %v1299, %v1324
  %v1329 = vsub.f32 %v1327, %v1328
  %v1330 = vperm.slane %v1329, 0
  %v1331 = vadd.f32 %v1326, %v1330
  %vm1332 = vcmp.ge.f32.partialorder %v1331, 0.0
  %v1333 = vmul.f32 %v1331, 0.01
  %v1334 = vsel %vm1332, %v1331, %v1333
  %v1335 = vlaneseq
  %v1336 = vand.u32 %v1335, 127
  %vm1337 = vcmp.ge.s32.totalorder %v1336, 32
  %vm1338 = vcmp.lt.s32.totalorder %v1336, 64
  %vm1339 = vmand %vm1337, %vm1338
  %v1340 = vmul.f32 %v1334, 0.5
  %v1341 = vmul.f32 %v1340, 1.442695
  %v1342 = vpow.pop %v1341
  %v1343 = vsel %vm1339, %v1342, %v1334
  %1344 = vst [vmem:[%s3] sm:$0x3] %v1343
  // Predicated region
  $region14: #{encoder_forward.17} parent=0 // pred_check
    _
  $region15: #{encoder_forward.17} parent=0 // pred_check_branch
    %1346 = sbr.rel (0) target = $region17
  $region16: #{encoder_forward.17} parent=0 // pred_region
    _
  $region17: #{encoder_forward.17} parent=0 // pred_fallthru
    _
  // Predicated region
  $region18: #{encoder_forward.17} parent=0 // pred_check
    _
  $region19: #{encoder_forward.17} parent=0 // pred_check_branch
    %1348 = sbr.rel (0) target = $region21
  $region20: #{encoder_forward.17} parent=0 // pred_region
    _
  $region21: #{encoder_forward.17} parent=0 // pred_fallthru
    _

// kernel: encoder_forward.15
$region0: #{encoder_forward.15}
  #allocation0 [shape = 'u32[]', space=smem, size = 0x4, offset = 0x4, fixed_abs, tag = 'smem constant byte address 0x4 - core index']
  #allocation1 [shape = 'u32[72,128]{1,0:T(1,128)}', space=vmem, size = 0x9000, scoped, tag = 'internal scratch']
  %s0 = inlined_call_operand.vmem [shape: bf16[8,2304], index: 0, kind: input, shape index: {}]
  %s1 = inlined_call_operand.vmem [shape: bf16[2304,512], index: 1, kind: input, shape index: {}]
  %s2 = inlined_call_operand.vmem [shape: bf16[8,512], index: 2, kind: output, shape index: {0}]
  %s3 = inlined_call_operand.vmem [shape: f32[1,2,512], index: 3, kind: output, shape index: {1}]
  %4 = xla_tuple %s2, %s3
  %s5 = sld [smem:[#allocation0]]
  $region26: #{encoder_forward.15} parent=0
    _
  %s7 = ssub.s32 1, %s5
  %s8 = scalar_select 0, %s7, %s5
  // Predicated region
  $region2: #{encoder_forward.15} parent=0 // pred_check
    _
  $region3: #{encoder_forward.15} parent=0 // pred_check_branch
    %10 = sbr.rel (0) target = $region5
  $region4: #{encoder_forward.15} parent=0 // pred_region
    _
  $region5: #{encoder_forward.15} parent=0 // pred_fallthru
    _
  // Predicated region
  $region6: #{encoder_forward.15} parent=0 // pred_check
    _
  $region7: #{encoder_forward.15} parent=0 // pred_check_branch
    %12 = sbr.rel (0) target = $region9
  $region8: #{encoder_forward.15} parent=0 // pred_region
    _
  $region9: #{encoder_forward.15} parent=0 // pred_fallthru
    _
  %v13 = vld [vmem:[%s0] sm:$0xff]
  %v14 = vld [vmem:[%s0 + $0x8] sm:$0xff]
  %v15 = vld [vmem:[%s0 + $0x10] sm:$0xff]
  %v16 = vld [vmem:[%s0 + $0x18] sm:$0xff]
  %v17 = vld [vmem:[%s0 + $0x20] sm:$0xff]
  %v18 = vld [vmem:[%s0 + $0x28] sm:$0xff]
  %v19 = vld [vmem:[%s0 + $0x30] sm:$0xff]
  %v20 = vld [vmem:[%s0 + $0x38] sm:$0xff]
  %v21 = vld [vmem:[%s0 + $0x40] sm:$0xff]
  %v22 = vld [vmem:[%s1] sm:$0xff]
  %v23 = vld [vmem:[%s1 + $0x8] sm:$0xff]
  %v24 = vld [vmem:[%s1 + $0x10] sm:$0xff]
  %v25 = vld [vmem:[%s1 + $0x18] sm:$0xff]
  %v26 = vld [vmem:[%s1 + $0x20] sm:$0xff]
  %v27 = vld [vmem:[%s1 + $0x28] sm:$0xff]
  %v28 = vld [vmem:[%s1 + $0x30] sm:$0xff]
  %v29 = vld [vmem:[%s1 + $0x38] sm:$0xff]
  %v30 = vld [vmem:[%s1 + $0x40] sm:$0xff]
  %v31 = vld [vmem:[%s1 + $0x48] sm:$0xff]
  %v32 = vld [vmem:[%s1 + $0x50] sm:$0xff]
  %v33 = vld [vmem:[%s1 + $0x58] sm:$0xff]
  %v34 = vld [vmem:[%s1 + $0x60] sm:$0xff]
  %v35 = vld [vmem:[%s1 + $0x68] sm:$0xff]
  %v36 = vld [vmem:[%s1 + $0x70] sm:$0xff]
  %v37 = vld [vmem:[%s1 + $0x78] sm:$0xff]
  %v38 = vld [vmem:[%s1 + $0x80] sm:$0xff]
  %v39 = vld [vmem:[%s1 + $0x88] sm:$0xff]
  %v40 = vld [vmem:[%s1 + $0x90] sm:$0xff]
  %v41 = vld [vmem:[%s1 + $0x98] sm:$0xff]
  %v42 = vld [vmem:[%s1 + $0xa0] sm:$0xff]
  %v43 = vld [vmem:[%s1 + $0xa8] sm:$0xff]
  %v44 = vld [vmem:[%s1 + $0xb0] sm:$0xff]
  %v45 = vld [vmem:[%s1 + $0xb8] sm:$0xff]
  %v46 = vld [vmem:[%s1 + $0xc0] sm:$0xff]
  %v47 = vld [vmem:[%s1 + $0xc8] sm:$0xff]
  %v48 = vld [vmem:[%s1 + $0xd0] sm:$0xff]
  %v49 = vld [vmem:[%s1 + $0xd8] sm:$0xff]
  %v50 = vld [vmem:[%s1 + $0xe0] sm:$0xff]
  %v51 = vld [vmem:[%s1 + $0xe8] sm:$0xff]
  %v52 = vld [vmem:[%s1 + $0xf0] sm:$0xff]
  %v53 = vld [vmem:[%s1 + $0xf8] sm:$0xff]
  %v54 = vld [vmem:[%s1 + $0x100] sm:$0xff]
  %v55 = vld [vmem:[%s1 + $0x108] sm:$0xff]
  %v56 = vld [vmem:[%s1 + $0x110] sm:$0xff]
  %v57 = vld [vmem:[%s1 + $0x118] sm:$0xff]
  %v58 = vld [vmem:[%s1 + $0x120] sm:$0xff]
  %v59 = vld [vmem:[%s1 + $0x128] sm:$0xff]
  %v60 = vld [vmem:[%s1 + $0x130] sm:$0xff]
  %v61 = vld [vmem:[%s1 + $0x138] sm:$0xff]
  %v62 = vld [vmem:[%s1 + $0x140] sm:$0xff]
  %v63 = vld [vmem:[%s1 + $0x148] sm:$0xff]
  %v64 = vld [vmem:[%s1 + $0x150] sm:$0xff]
  %v65 = vld [vmem:[%s1 + $0x158] sm:$0xff]
  %v66 = vld [vmem:[%s1 + $0x160] sm:$0xff]
  %v67 = vld [vmem:[%s1 + $0x168] sm:$0xff]
  %v68 = vld [vmem:[%s1 + $0x170] sm:$0xff]
  %v69 = vld [vmem:[%s1 + $0x178] sm:$0xff]
  %v70 = vld [vmem:[%s1 + $0x180] sm:$0xff]
  %v71 = vld [vmem:[%s1 + $0x188] sm:$0xff]
  %v72 = vld [vmem:[%s1 + $0x190] sm:$0xff]
  %v73 = vld [vmem:[%s1 + $0x198] sm:$0xff]
  %v74 = vld [vmem:[%s1 + $0x1a0] sm:$0xff]
  %v75 = vld [vmem:[%s1 + $0x1a8] sm:$0xff]
  %v76 = vld [vmem:[%s1 + $0x1b0] sm:$0xff]
  %v77 = vld [vmem:[%s1 + $0x1b8] sm:$0xff]
  %v78 = vld [vmem:[%s1 + $0x1c0] sm:$0xff]
  %v79 = vld [vmem:[%s1 + $0x1c8] sm:$0xff]
  %v80 = vld [vmem:[%s1 + $0x1d0] sm:$0xff]
  %v81 = vld [vmem:[%s1 + $0x1d8] sm:$0xff]
  %v82 = vld [vmem:[%s1 + $0x1e0] sm:$0xff]
  %v83 = vld [vmem:[%s1 + $0x1e8] sm:$0xff]
  %v84 = vld [vmem:[%s1 + $0x1f0] sm:$0xff]
  %v85 = vld [vmem:[%s1 + $0x1f8] sm:$0xff]
  %v86 = vld [vmem:[%s1 + $0x200] sm:$0xff]
  %v87 = vld [vmem:[%s1 + $0x208] sm:$0xff]
  %v88 = vld [vmem:[%s1 + $0x210] sm:$0xff]
  %v89 = vld [vmem:[%s1 + $0x218] sm:$0xff]
  %v90 = vld [vmem:[%s1 + $0x220] sm:$0xff]
  %v91 = vld [vmem:[%s1 + $0x228] sm:$0xff]
  %v92 = vld [vmem:[%s1 + $0x230] sm:$0xff]
  %v93 = vld [vmem:[%s1 + $0x238] sm:$0xff]
  %v94 = vld [vmem:[%s1 + $0x240] sm:$0xff]
  %v95 = vld [vmem:[%s1 + $0x248] sm:$0xff]
  %v96 = vld [vmem:[%s1 + $0x250] sm:$0xff]
  %v97 = vld [vmem:[%s1 + $0x258] sm:$0xff]
  %v98 = vld [vmem:[%s1 + $0x260] sm:$0xff]
  %v99 = vld [vmem:[%s1 + $0x268] sm:$0xff]
  %v100 = vld [vmem:[%s1 + $0x270] sm:$0xff]
  %v101 = vld [vmem:[%s1 + $0x278] sm:$0xff]
  %v102 = vld [vmem:[%s1 + $0x280] sm:$0xff]
  %v103 = vld [vmem:[%s1 + $0x288] sm:$0xff]
  %v104 = vld [vmem:[%s1 + $0x290] sm:$0xff]
  %v105 = vld [vmem:[%s1 + $0x298] sm:$0xff]
  %v106 = vld [vmem:[%s1 + $0x2a0] sm:$0xff]
  %v107 = vld [vmem:[%s1 + $0x2a8] sm:$0xff]
  %v108 = vld [vmem:[%s1 + $0x2b0] sm:$0xff]
  %v109 = vld [vmem:[%s1 + $0x2b8] sm:$0xff]
  %v110 = vld [vmem:[%s1 + $0x2c0] sm:$0xff]
  %v111 = vld [vmem:[%s1 + $0x2c8] sm:$0xff]
  %v112 = vld [vmem:[%s1 + $0x2d0] sm:$0xff]
  %v113 = vld [vmem:[%s1 + $0x2d8] sm:$0xff]
  %v114 = vld [vmem:[%s1 + $0x2e0] sm:$0xff]
  %v115 = vld [vmem:[%s1 + $0x2e8] sm:$0xff]
  %v116 = vld [vmem:[%s1 + $0x2f0] sm:$0xff]
  %v117 = vld [vmem:[%s1 + $0x2f8] sm:$0xff]
  %v118 = vld [vmem:[%s1 + $0x300] sm:$0xff]
  %v119 = vld [vmem:[%s1 + $0x308] sm:$0xff]
  %v120 = vld [vmem:[%s1 + $0x310] sm:$0xff]
  %v121 = vld [vmem:[%s1 + $0x318] sm:$0xff]
  %v122 = vld [vmem:[%s1 + $0x320] sm:$0xff]
  %v123 = vld [vmem:[%s1 + $0x328] sm:$0xff]
  %v124 = vld [vmem:[%s1 + $0x330] sm:$0xff]
  %v125 = vld [vmem:[%s1 + $0x338] sm:$0xff]
  %v126 = vld [vmem:[%s1 + $0x340] sm:$0xff]
  %v127 = vld [vmem:[%s1 + $0x348] sm:$0xff]
  %v128 = vld [vmem:[%s1 + $0x350] sm:$0xff]
  %v129 = vld [vmem:[%s1 + $0x358] sm:$0xff]
  %v130 = vld [vmem:[%s1 + $0x360] sm:$0xff]
  %v131 = vld [vmem:[%s1 + $0x368] sm:$0xff]
  %v132 = vld [vmem:[%s1 + $0x370] sm:$0xff]
  %v133 = vld [vmem:[%s1 + $0x378] sm:$0xff]
  %v134 = vld [vmem:[%s1 + $0x380] sm:$0xff]
  %v135 = vld [vmem:[%s1 + $0x388] sm:$0xff]
  %v136 = vld [vmem:[%s1 + $0x390] sm:$0xff]
  %v137 = vld [vmem:[%s1 + $0x398] sm:$0xff]
  %v138 = vld [vmem:[%s1 + $0x3a0] sm:$0xff]
  %v139 = vld [vmem:[%s1 + $0x3a8] sm:$0xff]
  %v140 = vld [vmem:[%s1 + $0x3b0] sm:$0xff]
  %v141 = vld [vmem:[%s1 + $0x3b8] sm:$0xff]
  %v142 = vld [vmem:[%s1 + $0x3c0] sm:$0xff]
  %v143 = vld [vmem:[%s1 + $0x3c8] sm:$0xff]
  %v144 = vld [vmem:[%s1 + $0x3d0] sm:$0xff]
  %v145 = vld [vmem:[%s1 + $0x3d8] sm:$0xff]
  %v146 = vld [vmem:[%s1 + $0x3e0] sm:$0xff]
  %v147 = vld [vmem:[%s1 + $0x3e8] sm:$0xff]
  %v148 = vld [vmem:[%s1 + $0x3f0] sm:$0xff]
  %v149 = vld [vmem:[%s1 + $0x3f8] sm:$0xff]
  %v150 = vld [vmem:[%s1 + $0x400] sm:$0xff]
  %v151 = vld [vmem:[%s1 + $0x408] sm:$0xff]
  %v152 = vld [vmem:[%s1 + $0x410] sm:$0xff]
  %v153 = vld [vmem:[%s1 + $0x418] sm:$0xff]
  %v154 = vld [vmem:[%s1 + $0x420] sm:$0xff]
  %v155 = vld [vmem:[%s1 + $0x428] sm:$0xff]
  %v156 = vld [vmem:[%s1 + $0x430] sm:$0xff]
  %v157 = vld [vmem:[%s1 + $0x438] sm:$0xff]
  %v158 = vld [vmem:[%s1 + $0x440] sm:$0xff]
  %v159 = vld [vmem:[%s1 + $0x448] sm:$0xff]
  %v160 = vld [vmem:[%s1 + $0x450] sm:$0xff]
  %v161 = vld [vmem:[%s1 + $0x458] sm:$0xff]
  %v162 = vld [vmem:[%s1 + $0x460] sm:$0xff]
  %v163 = vld [vmem:[%s1 + $0x468] sm:$0xff]
  %v164 = vld [vmem:[%s1 + $0x470] sm:$0xff]
  %v165 = vld [vmem:[%s1 + $0x478] sm:$0xff]
  %v166 = vld [vmem:[%s1 + $0x480] sm:$0xff]
  %v167 = vld [vmem:[%s1 + $0x488] sm:$0xff]
  %v168 = vld [vmem:[%s1 + $0x490] sm:$0xff]
  %v169 = vld [vmem:[%s1 + $0x498] sm:$0xff]
  %v170 = vld [vmem:[%s1 + $0x4a0] sm:$0xff]
  %v171 = vld [vmem:[%s1 + $0x4a8] sm:$0xff]
  %v172 = vld [vmem:[%s1 + $0x4b0] sm:$0xff]
  %v173 = vld [vmem:[%s1 + $0x4b8] sm:$0xff]
  %v174 = vld [vmem:[%s1 + $0x4c0] sm:$0xff]
  %v175 = vld [vmem:[%s1 + $0x4c8] sm:$0xff]
  %v176 = vld [vmem:[%s1 + $0x4d0] sm:$0xff]
  %v177 = vld [vmem:[%s1 + $0x4d8] sm:$0xff]
  %v178 = vld [vmem:[%s1 + $0x4e0] sm:$0xff]
  %v179 = vld [vmem:[%s1 + $0x4e8] sm:$0xff]
  %v180 = vld [vmem:[%s1 + $0x4f0] sm:$0xff]
  %v181 = vld [vmem:[%s1 + $0x4f8] sm:$0xff]
  %v182 = vld [vmem:[%s1 + $0x500] sm:$0xff]
  %v183 = vld [vmem:[%s1 + $0x508] sm:$0xff]
  %v184 = vld [vmem:[%s1 + $0x510] sm:$0xff]
  %v185 = vld [vmem:[%s1 + $0x518] sm:$0xff]
  %v186 = vld [vmem:[%s1 + $0x520] sm:$0xff]
  %v187 = vld [vmem:[%s1 + $0x528] sm:$0xff]
  %v188 = vld [vmem:[%s1 + $0x530] sm:$0xff]
  %v189 = vld [vmem:[%s1 + $0x538] sm:$0xff]
  %v190 = vld [vmem:[%s1 + $0x540] sm:$0xff]
  %v191 = vld [vmem:[%s1 + $0x548] sm:$0xff]
  %v192 = vld [vmem:[%s1 + $0x550] sm:$0xff]
  %v193 = vld [vmem:[%s1 + $0x558] sm:$0xff]
  %v194 = vld [vmem:[%s1 + $0x560] sm:$0xff]
  %v195 = vld [vmem:[%s1 + $0x568] sm:$0xff]
  %v196 = vld [vmem:[%s1 + $0x570] sm:$0xff]
  %v197 = vld [vmem:[%s1 + $0x578] sm:$0xff]
  %v198 = vld [vmem:[%s1 + $0x580] sm:$0xff]
  %v199 = vld [vmem:[%s1 + $0x588] sm:$0xff]
  %v200 = vld [vmem:[%s1 + $0x590] sm:$0xff]
  %v201 = vld [vmem:[%s1 + $0x598] sm:$0xff]
  %v202 = vld [vmem:[%s1 + $0x5a0] sm:$0xff]
  %v203 = vld [vmem:[%s1 + $0x5a8] sm:$0xff]
  %v204 = vld [vmem:[%s1 + $0x5b0] sm:$0xff]
  %v205 = vld [vmem:[%s1 + $0x5b8] sm:$0xff]
  %v206 = vld [vmem:[%s1 + $0x5c0] sm:$0xff]
  %v207 = vld [vmem:[%s1 + $0x5c8] sm:$0xff]
  %v208 = vld [vmem:[%s1 + $0x5d0] sm:$0xff]
  %v209 = vld [vmem:[%s1 + $0x5d8] sm:$0xff]
  %v210 = vld [vmem:[%s1 + $0x5e0] sm:$0xff]
  %v211 = vld [vmem:[%s1 + $0x5e8] sm:$0xff]
  %v212 = vld [vmem:[%s1 + $0x5f0] sm:$0xff]
  %v213 = vld [vmem:[%s1 + $0x5f8] sm:$0xff]
  %v214 = vld [vmem:[%s1 + $0x600] sm:$0xff]
  %v215 = vld [vmem:[%s1 + $0x608] sm:$0xff]
  %v216 = vld [vmem:[%s1 + $0x610] sm:$0xff]
  %v217 = vld [vmem:[%s1 + $0x618] sm:$0xff]
  %v218 = vld [vmem:[%s1 + $0x620] sm:$0xff]
  %v219 = vld [vmem:[%s1 + $0x628] sm:$0xff]
  %v220 = vld [vmem:[%s1 + $0x630] sm:$0xff]
  %v221 = vld [vmem:[%s1 + $0x638] sm:$0xff]
  %v222 = vld [vmem:[%s1 + $0x640] sm:$0xff]
  %v223 = vld [vmem:[%s1 + $0x648] sm:$0xff]
  %v224 = vld [vmem:[%s1 + $0x650] sm:$0xff]
  %v225 = vld [vmem:[%s1 + $0x658] sm:$0xff]
  %v226 = vld [vmem:[%s1 + $0x660] sm:$0xff]
  %v227 = vld [vmem:[%s1 + $0x668] sm:$0xff]
  %v228 = vld [vmem:[%s1 + $0x670] sm:$0xff]
  %v229 = vld [vmem:[%s1 + $0x678] sm:$0xff]
  %v230 = vld [vmem:[%s1 + $0x680] sm:$0xff]
  %v231 = vld [vmem:[%s1 + $0x688] sm:$0xff]
  %v232 = vld [vmem:[%s1 + $0x690] sm:$0xff]
  %v233 = vld [vmem:[%s1 + $0x698] sm:$0xff]
  %v234 = vld [vmem:[%s1 + $0x6a0] sm:$0xff]
  %v235 = vld [vmem:[%s1 + $0x6a8] sm:$0xff]
  %v236 = vld [vmem:[%s1 + $0x6b0] sm:$0xff]
  %v237 = vld [vmem:[%s1 + $0x6b8] sm:$0xff]
  %v238 = vld [vmem:[%s1 + $0x6c0] sm:$0xff]
  %v239 = vld [vmem:[%s1 + $0x6c8] sm:$0xff]
  %v240 = vld [vmem:[%s1 + $0x6d0] sm:$0xff]
  %v241 = vld [vmem:[%s1 + $0x6d8] sm:$0xff]
  %v242 = vld [vmem:[%s1 + $0x6e0] sm:$0xff]
  %v243 = vld [vmem:[%s1 + $0x6e8] sm:$0xff]
  %v244 = vld [vmem:[%s1 + $0x6f0] sm:$0xff]
  %v245 = vld [vmem:[%s1 + $0x6f8] sm:$0xff]
  %v246 = vld [vmem:[%s1 + $0x700] sm:$0xff]
  %v247 = vld [vmem:[%s1 + $0x708] sm:$0xff]
  %v248 = vld [vmem:[%s1 + $0x710] sm:$0xff]
  %v249 = vld [vmem:[%s1 + $0x718] sm:$0xff]
  %v250 = vld [vmem:[%s1 + $0x720] sm:$0xff]
  %v251 = vld [vmem:[%s1 + $0x728] sm:$0xff]
  %v252 = vld [vmem:[%s1 + $0x730] sm:$0xff]
  %v253 = vld [vmem:[%s1 + $0x738] sm:$0xff]
  %v254 = vld [vmem:[%s1 + $0x740] sm:$0xff]
  %v255 = vld [vmem:[%s1 + $0x748] sm:$0xff]
  %v256 = vld [vmem:[%s1 + $0x750] sm:$0xff]
  %v257 = vld [vmem:[%s1 + $0x758] sm:$0xff]
  %v258 = vld [vmem:[%s1 + $0x760] sm:$0xff]
  %v259 = vld [vmem:[%s1 + $0x768] sm:$0xff]
  %v260 = vld [vmem:[%s1 + $0x770] sm:$0xff]
  %v261 = vld [vmem:[%s1 + $0x778] sm:$0xff]
  %v262 = vld [vmem:[%s1 + $0x780] sm:$0xff]
  %v263 = vld [vmem:[%s1 + $0x788] sm:$0xff]
  %v264 = vld [vmem:[%s1 + $0x790] sm:$0xff]
  %v265 = vld [vmem:[%s1 + $0x798] sm:$0xff]
  %v266 = vld [vmem:[%s1 + $0x7a0] sm:$0xff]
  %v267 = vld [vmem:[%s1 + $0x7a8] sm:$0xff]
  %v268 = vld [vmem:[%s1 + $0x7b0] sm:$0xff]
  %v269 = vld [vmem:[%s1 + $0x7b8] sm:$0xff]
  %v270 = vld [vmem:[%s1 + $0x7c0] sm:$0xff]
  %v271 = vld [vmem:[%s1 + $0x7c8] sm:$0xff]
  %v272 = vld [vmem:[%s1 + $0x7d0] sm:$0xff]
  %v273 = vld [vmem:[%s1 + $0x7d8] sm:$0xff]
  %v274 = vld [vmem:[%s1 + $0x7e0] sm:$0xff]
  %v275 = vld [vmem:[%s1 + $0x7e8] sm:$0xff]
  %v276 = vld [vmem:[%s1 + $0x7f0] sm:$0xff]
  %v277 = vld [vmem:[%s1 + $0x7f8] sm:$0xff]
  %v278 = vld [vmem:[%s1 + $0x800] sm:$0xff]
  %v279 = vld [vmem:[%s1 + $0x808] sm:$0xff]
  %v280 = vld [vmem:[%s1 + $0x810] sm:$0xff]
  %v281 = vld [vmem:[%s1 + $0x818] sm:$0xff]
  %v282 = vld [vmem:[%s1 + $0x820] sm:$0xff]
  %v283 = vld [vmem:[%s1 + $0x828] sm:$0xff]
  %v284 = vld [vmem:[%s1 + $0x830] sm:$0xff]
  %v285 = vld [vmem:[%s1 + $0x838] sm:$0xff]
  %v286 = vld [vmem:[%s1 + $0x840] sm:$0xff]
  %v287 = vld [vmem:[%s1 + $0x848] sm:$0xff]
  %v288 = vld [vmem:[%s1 + $0x850] sm:$0xff]
  %v289 = vld [vmem:[%s1 + $0x858] sm:$0xff]
  %v290 = vld [vmem:[%s1 + $0x860] sm:$0xff]
  %v291 = vld [vmem:[%s1 + $0x868] sm:$0xff]
  %v292 = vld [vmem:[%s1 + $0x870] sm:$0xff]
  %v293 = vld [vmem:[%s1 + $0x878] sm:$0xff]
  %v294 = vld [vmem:[%s1 + $0x880] sm:$0xff]
  %v295 = vld [vmem:[%s1 + $0x888] sm:$0xff]
  %v296 = vld [vmem:[%s1 + $0x890] sm:$0xff]
  %v297 = vld [vmem:[%s1 + $0x898] sm:$0xff]
  %v298 = vld [vmem:[%s1 + $0x8a0] sm:$0xff]
  %v299 = vld [vmem:[%s1 + $0x8a8] sm:$0xff]
  %v300 = vld [vmem:[%s1 + $0x8b0] sm:$0xff]
  %v301 = vld [vmem:[%s1 + $0x8b8] sm:$0xff]
  %v302 = vld [vmem:[%s1 + $0x8c0] sm:$0xff]
  %v303 = vld [vmem:[%s1 + $0x8c8] sm:$0xff]
  %v304 = vld [vmem:[%s1 + $0x8d0] sm:$0xff]
  %v305 = vld [vmem:[%s1 + $0x8d8] sm:$0xff]
  %v306 = vld [vmem:[%s1 + $0x8e0] sm:$0xff]
  %v307 = vld [vmem:[%s1 + $0x8e8] sm:$0xff]
  %v308 = vld [vmem:[%s1 + $0x8f0] sm:$0xff]
  %v309 = vld [vmem:[%s1 + $0x8f8] sm:$0xff]
  %v310 = vld [vmem:[%s1 + $0x900] sm:$0xff]
  %v311 = vld [vmem:[%s1 + $0x908] sm:$0xff]
  %v312 = vld [vmem:[%s1 + $0x910] sm:$0xff]
  %v313 = vld [vmem:[%s1 + $0x918] sm:$0xff]
  %v314 = vld [vmem:[%s1 + $0x920] sm:$0xff]
  %v315 = vld [vmem:[%s1 + $0x928] sm:$0xff]
  %v316 = vld [vmem:[%s1 + $0x930] sm:$0xff]
  %v317 = vld [vmem:[%s1 + $0x938] sm:$0xff]
  %v318 = vld [vmem:[%s1 + $0x940] sm:$0xff]
  %v319 = vld [vmem:[%s1 + $0x948] sm:$0xff]
  %v320 = vld [vmem:[%s1 + $0x950] sm:$0xff]
  %v321 = vld [vmem:[%s1 + $0x958] sm:$0xff]
  %v322 = vld [vmem:[%s1 + $0x960] sm:$0xff]
  %v323 = vld [vmem:[%s1 + $0x968] sm:$0xff]
  %v324 = vld [vmem:[%s1 + $0x970] sm:$0xff]
  %v325 = vld [vmem:[%s1 + $0x978] sm:$0xff]
  %v326 = vld [vmem:[%s1 + $0x980] sm:$0xff]
  %v327 = vld [vmem:[%s1 + $0x988] sm:$0xff]
  %v328 = vld [vmem:[%s1 + $0x990] sm:$0xff]
  %v329 = vld [vmem:[%s1 + $0x998] sm:$0xff]
  %v330 = vld [vmem:[%s1 + $0x9a0] sm:$0xff]
  %v331 = vld [vmem:[%s1 + $0x9a8] sm:$0xff]
  %v332 = vld [vmem:[%s1 + $0x9b0] sm:$0xff]
  %v333 = vld [vmem:[%s1 + $0x9b8] sm:$0xff]
  %v334 = vld [vmem:[%s1 + $0x9c0] sm:$0xff]
  %v335 = vld [vmem:[%s1 + $0x9c8] sm:$0xff]
  %v336 = vld [vmem:[%s1 + $0x9d0] sm:$0xff]
  %v337 = vld [vmem:[%s1 + $0x9d8] sm:$0xff]
  %v338 = vld [vmem:[%s1 + $0x9e0] sm:$0xff]
  %v339 = vld [vmem:[%s1 + $0x9e8] sm:$0xff]
  %v340 = vld [vmem:[%s1 + $0x9f0] sm:$0xff]
  %v341 = vld [vmem:[%s1 + $0x9f8] sm:$0xff]
  %v342 = vld [vmem:[%s1 + $0xa00] sm:$0xff]
  %v343 = vld [vmem:[%s1 + $0xa08] sm:$0xff]
  %v344 = vld [vmem:[%s1 + $0xa10] sm:$0xff]
  %v345 = vld [vmem:[%s1 + $0xa18] sm:$0xff]
  %v346 = vld [vmem:[%s1 + $0xa20] sm:$0xff]
  %v347 = vld [vmem:[%s1 + $0xa28] sm:$0xff]
  %v348 = vld [vmem:[%s1 + $0xa30] sm:$0xff]
  %v349 = vld [vmem:[%s1 + $0xa38] sm:$0xff]
  %v350 = vld [vmem:[%s1 + $0xa40] sm:$0xff]
  %v351 = vld [vmem:[%s1 + $0xa48] sm:$0xff]
  %v352 = vld [vmem:[%s1 + $0xa50] sm:$0xff]
  %v353 = vld [vmem:[%s1 + $0xa58] sm:$0xff]
  %v354 = vld [vmem:[%s1 + $0xa60] sm:$0xff]
  %v355 = vld [vmem:[%s1 + $0xa68] sm:$0xff]
  %v356 = vld [vmem:[%s1 + $0xa70] sm:$0xff]
  %v357 = vld [vmem:[%s1 + $0xa78] sm:$0xff]
  %v358 = vld [vmem:[%s1 + $0xa80] sm:$0xff]
  %v359 = vld [vmem:[%s1 + $0xa88] sm:$0xff]
  %v360 = vld [vmem:[%s1 + $0xa90] sm:$0xff]
  %v361 = vld [vmem:[%s1 + $0xa98] sm:$0xff]
  %v362 = vld [vmem:[%s1 + $0xaa0] sm:$0xff]
  %v363 = vld [vmem:[%s1 + $0xaa8] sm:$0xff]
  %v364 = vld [vmem:[%s1 + $0xab0] sm:$0xff]
  %v365 = vld [vmem:[%s1 + $0xab8] sm:$0xff]
  %v366 = vld [vmem:[%s1 + $0xac0] sm:$0xff]
  %v367 = vld [vmem:[%s1 + $0xac8] sm:$0xff]
  %v368 = vld [vmem:[%s1 + $0xad0] sm:$0xff]
  %v369 = vld [vmem:[%s1 + $0xad8] sm:$0xff]
  %v370 = vld [vmem:[%s1 + $0xae0] sm:$0xff]
  %v371 = vld [vmem:[%s1 + $0xae8] sm:$0xff]
  %v372 = vld [vmem:[%s1 + $0xaf0] sm:$0xff]
  %v373 = vld [vmem:[%s1 + $0xaf8] sm:$0xff]
  %v374 = vld [vmem:[%s1 + $0xb00] sm:$0xff]
  %v375 = vld [vmem:[%s1 + $0xb08] sm:$0xff]
  %v376 = vld [vmem:[%s1 + $0xb10] sm:$0xff]
  %v377 = vld [vmem:[%s1 + $0xb18] sm:$0xff]
  %v378 = vld [vmem:[%s1 + $0xb20] sm:$0xff]
  %v379 = vld [vmem:[%s1 + $0xb28] sm:$0xff]
  %v380 = vld [vmem:[%s1 + $0xb30] sm:$0xff]
  %v381 = vld [vmem:[%s1 + $0xb38] sm:$0xff]
  %v382 = vld [vmem:[%s1 + $0xb40] sm:$0xff]
  %v383 = vld [vmem:[%s1 + $0xb48] sm:$0xff]
  %v384 = vld [vmem:[%s1 + $0xb50] sm:$0xff]
  %v385 = vld [vmem:[%s1 + $0xb58] sm:$0xff]
  %v386 = vld [vmem:[%s1 + $0xb60] sm:$0xff]
  %v387 = vld [vmem:[%s1 + $0xb68] sm:$0xff]
  %v388 = vld [vmem:[%s1 + $0xb70] sm:$0xff]
  %v389 = vld [vmem:[%s1 + $0xb78] sm:$0xff]
  %v390 = vld [vmem:[%s1 + $0xb80] sm:$0xff]
  %v391 = vld [vmem:[%s1 + $0xb88] sm:$0xff]
  %v392 = vld [vmem:[%s1 + $0xb90] sm:$0xff]
  %v393 = vld [vmem:[%s1 + $0xb98] sm:$0xff]
  %v394 = vld [vmem:[%s1 + $0xba0] sm:$0xff]
  %v395 = vld [vmem:[%s1 + $0xba8] sm:$0xff]
  %v396 = vld [vmem:[%s1 + $0xbb0] sm:$0xff]
  %v397 = vld [vmem:[%s1 + $0xbb8] sm:$0xff]
  %v398 = vld [vmem:[%s1 + $0xbc0] sm:$0xff]
  %v399 = vld [vmem:[%s1 + $0xbc8] sm:$0xff]
  %v400 = vld [vmem:[%s1 + $0xbd0] sm:$0xff]
  %v401 = vld [vmem:[%s1 + $0xbd8] sm:$0xff]
  %v402 = vld [vmem:[%s1 + $0xbe0] sm:$0xff]
  %v403 = vld [vmem:[%s1 + $0xbe8] sm:$0xff]
  %v404 = vld [vmem:[%s1 + $0xbf0] sm:$0xff]
  %v405 = vld [vmem:[%s1 + $0xbf8] sm:$0xff]
  %v406 = vld [vmem:[%s1 + $0xc00] sm:$0xff]
  %v407 = vld [vmem:[%s1 + $0xc08] sm:$0xff]
  %v408 = vld [vmem:[%s1 + $0xc10] sm:$0xff]
  %v409 = vld [vmem:[%s1 + $0xc18] sm:$0xff]
  %v410 = vld [vmem:[%s1 + $0xc20] sm:$0xff]
  %v411 = vld [vmem:[%s1 + $0xc28] sm:$0xff]
  %v412 = vld [vmem:[%s1 + $0xc30] sm:$0xff]
  %v413 = vld [vmem:[%s1 + $0xc38] sm:$0xff]
  %v414 = vld [vmem:[%s1 + $0xc40] sm:$0xff]
  %v415 = vld [vmem:[%s1 + $0xc48] sm:$0xff]
  %v416 = vld [vmem:[%s1 + $0xc50] sm:$0xff]
  %v417 = vld [vmem:[%s1 + $0xc58] sm:$0xff]
  %v418 = vld [vmem:[%s1 + $0xc60] sm:$0xff]
  %v419 = vld [vmem:[%s1 + $0xc68] sm:$0xff]
  %v420 = vld [vmem:[%s1 + $0xc70] sm:$0xff]
  %v421 = vld [vmem:[%s1 + $0xc78] sm:$0xff]
  %v422 = vld [vmem:[%s1 + $0xc80] sm:$0xff]
  %v423 = vld [vmem:[%s1 + $0xc88] sm:$0xff]
  %v424 = vld [vmem:[%s1 + $0xc90] sm:$0xff]
  %v425 = vld [vmem:[%s1 + $0xc98] sm:$0xff]
  %v426 = vld [vmem:[%s1 + $0xca0] sm:$0xff]
  %v427 = vld [vmem:[%s1 + $0xca8] sm:$0xff]
  %v428 = vld [vmem:[%s1 + $0xcb0] sm:$0xff]
  %v429 = vld [vmem:[%s1 + $0xcb8] sm:$0xff]
  %v430 = vld [vmem:[%s1 + $0xcc0] sm:$0xff]
  %v431 = vld [vmem:[%s1 + $0xcc8] sm:$0xff]
  %v432 = vld [vmem:[%s1 + $0xcd0] sm:$0xff]
  %v433 = vld [vmem:[%s1 + $0xcd8] sm:$0xff]
  %v434 = vld [vmem:[%s1 + $0xce0] sm:$0xff]
  %v435 = vld [vmem:[%s1 + $0xce8] sm:$0xff]
  %v436 = vld [vmem:[%s1 + $0xcf0] sm:$0xff]
  %v437 = vld [vmem:[%s1 + $0xcf8] sm:$0xff]
  %v438 = vld [vmem:[%s1 + $0xd00] sm:$0xff]
  %v439 = vld [vmem:[%s1 + $0xd08] sm:$0xff]
  %v440 = vld [vmem:[%s1 + $0xd10] sm:$0xff]
  %v441 = vld [vmem:[%s1 + $0xd18] sm:$0xff]
  %v442 = vld [vmem:[%s1 + $0xd20] sm:$0xff]
  %v443 = vld [vmem:[%s1 + $0xd28] sm:$0xff]
  %v444 = vld [vmem:[%s1 + $0xd30] sm:$0xff]
  %v445 = vld [vmem:[%s1 + $0xd38] sm:$0xff]
  %v446 = vld [vmem:[%s1 + $0xd40] sm:$0xff]
  %v447 = vld [vmem:[%s1 + $0xd48] sm:$0xff]
  %v448 = vld [vmem:[%s1 + $0xd50] sm:$0xff]
  %v449 = vld [vmem:[%s1 + $0xd58] sm:$0xff]
  %v450 = vld [vmem:[%s1 + $0xd60] sm:$0xff]
  %v451 = vld [vmem:[%s1 + $0xd68] sm:$0xff]
  %v452 = vld [vmem:[%s1 + $0xd70] sm:$0xff]
  %v453 = vld [vmem:[%s1 + $0xd78] sm:$0xff]
  %v454 = vld [vmem:[%s1 + $0xd80] sm:$0xff]
  %v455 = vld [vmem:[%s1 + $0xd88] sm:$0xff]
  %v456 = vld [vmem:[%s1 + $0xd90] sm:$0xff]
  %v457 = vld [vmem:[%s1 + $0xd98] sm:$0xff]
  %v458 = vld [vmem:[%s1 + $0xda0] sm:$0xff]
  %v459 = vld [vmem:[%s1 + $0xda8] sm:$0xff]
  %v460 = vld [vmem:[%s1 + $0xdb0] sm:$0xff]
  %v461 = vld [vmem:[%s1 + $0xdb8] sm:$0xff]
  %v462 = vld [vmem:[%s1 + $0xdc0] sm:$0xff]
  %v463 = vld [vmem:[%s1 + $0xdc8] sm:$0xff]
  %v464 = vld [vmem:[%s1 + $0xdd0] sm:$0xff]
  %v465 = vld [vmem:[%s1 + $0xdd8] sm:$0xff]
  %v466 = vld [vmem:[%s1 + $0xde0] sm:$0xff]
  %v467 = vld [vmem:[%s1 + $0xde8] sm:$0xff]
  %v468 = vld [vmem:[%s1 + $0xdf0] sm:$0xff]
  %v469 = vld [vmem:[%s1 + $0xdf8] sm:$0xff]
  %v470 = vld [vmem:[%s1 + $0xe00] sm:$0xff]
  %v471 = vld [vmem:[%s1 + $0xe08] sm:$0xff]
  %v472 = vld [vmem:[%s1 + $0xe10] sm:$0xff]
  %v473 = vld [vmem:[%s1 + $0xe18] sm:$0xff]
  %v474 = vld [vmem:[%s1 + $0xe20] sm:$0xff]
  %v475 = vld [vmem:[%s1 + $0xe28] sm:$0xff]
  %v476 = vld [vmem:[%s1 + $0xe30] sm:$0xff]
  %v477 = vld [vmem:[%s1 + $0xe38] sm:$0xff]
  %v478 = vld [vmem:[%s1 + $0xe40] sm:$0xff]
  %v479 = vld [vmem:[%s1 + $0xe48] sm:$0xff]
  %v480 = vld [vmem:[%s1 + $0xe50] sm:$0xff]
  %v481 = vld [vmem:[%s1 + $0xe58] sm:$0xff]
  %v482 = vld [vmem:[%s1 + $0xe60] sm:$0xff]
  %v483 = vld [vmem:[%s1 + $0xe68] sm:$0xff]
  %v484 = vld [vmem:[%s1 + $0xe70] sm:$0xff]
  %v485 = vld [vmem:[%s1 + $0xe78] sm:$0xff]
  %v486 = vld [vmem:[%s1 + $0xe80] sm:$0xff]
  %v487 = vld [vmem:[%s1 + $0xe88] sm:$0xff]
  %v488 = vld [vmem:[%s1 + $0xe90] sm:$0xff]
  %v489 = vld [vmem:[%s1 + $0xe98] sm:$0xff]
  %v490 = vld [vmem:[%s1 + $0xea0] sm:$0xff]
  %v491 = vld [vmem:[%s1 + $0xea8] sm:$0xff]
  %v492 = vld [vmem:[%s1 + $0xeb0] sm:$0xff]
  %v493 = vld [vmem:[%s1 + $0xeb8] sm:$0xff]
  %v494 = vld [vmem:[%s1 + $0xec0] sm:$0xff]
  %v495 = vld [vmem:[%s1 + $0xec8] sm:$0xff]
  %v496 = vld [vmem:[%s1 + $0xed0] sm:$0xff]
  %v497 = vld [vmem:[%s1 + $0xed8] sm:$0xff]
  %v498 = vld [vmem:[%s1 + $0xee0] sm:$0xff]
  %v499 = vld [vmem:[%s1 + $0xee8] sm:$0xff]
  %v500 = vld [vmem:[%s1 + $0xef0] sm:$0xff]
  %v501 = vld [vmem:[%s1 + $0xef8] sm:$0xff]
  %v502 = vld [vmem:[%s1 + $0xf00] sm:$0xff]
  %v503 = vld [vmem:[%s1 + $0xf08] sm:$0xff]
  %v504 = vld [vmem:[%s1 + $0xf10] sm:$0xff]
  %v505 = vld [vmem:[%s1 + $0xf18] sm:$0xff]
  %v506 = vld [vmem:[%s1 + $0xf20] sm:$0xff]
  %v507 = vld [vmem:[%s1 + $0xf28] sm:$0xff]
  %v508 = vld [vmem:[%s1 + $0xf30] sm:$0xff]
  %v509 = vld [vmem:[%s1 + $0xf38] sm:$0xff]
  %v510 = vld [vmem:[%s1 + $0xf40] sm:$0xff]
  %v511 = vld [vmem:[%s1 + $0xf48] sm:$0xff]
  %v512 = vld [vmem:[%s1 + $0xf50] sm:$0xff]
  %v513 = vld [vmem:[%s1 + $0xf58] sm:$0xff]
  %v514 = vld [vmem:[%s1 + $0xf60] sm:$0xff]
  %v515 = vld [vmem:[%s1 + $0xf68] sm:$0xff]
  %v516 = vld [vmem:[%s1 + $0xf70] sm:$0xff]
  %v517 = vld [vmem:[%s1 + $0xf78] sm:$0xff]
  %v518 = vld [vmem:[%s1 + $0xf80] sm:$0xff]
  %v519 = vld [vmem:[%s1 + $0xf88] sm:$0xff]
  %v520 = vld [vmem:[%s1 + $0xf90] sm:$0xff]
  %v521 = vld [vmem:[%s1 + $0xf98] sm:$0xff]
  %v522 = vld [vmem:[%s1 + $0xfa0] sm:$0xff]
  %v523 = vld [vmem:[%s1 + $0xfa8] sm:$0xff]
  %v524 = vld [vmem:[%s1 + $0xfb0] sm:$0xff]
  %v525 = vld [vmem:[%s1 + $0xfb8] sm:$0xff]
  %v526 = vld [vmem:[%s1 + $0xfc0] sm:$0xff]
  %v527 = vld [vmem:[%s1 + $0xfc8] sm:$0xff]
  %v528 = vld [vmem:[%s1 + $0xfd0] sm:$0xff]
  %v529 = vld [vmem:[%s1 + $0xfd8] sm:$0xff]
  %v530 = vld [vmem:[%s1 + $0xfe0] sm:$0xff]
  %v531 = vld [vmem:[%s1 + $0xfe8] sm:$0xff]
  %v532 = vld [vmem:[%s1 + $0xff0] sm:$0xff]
  %v533 = vld [vmem:[%s1 + $0xff8] sm:$0xff]
  %v534 = vld [vmem:[%s1 + $0x1000] sm:$0xff]
  %v535 = vld [vmem:[%s1 + $0x1008] sm:$0xff]
  %v536 = vld [vmem:[%s1 + $0x1010] sm:$0xff]
  %v537 = vld [vmem:[%s1 + $0x1018] sm:$0xff]
  %v538 = vld [vmem:[%s1 + $0x1020] sm:$0xff]
  %v539 = vld [vmem:[%s1 + $0x1028] sm:$0xff]
  %v540 = vld [vmem:[%s1 + $0x1030] sm:$0xff]
  %v541 = vld [vmem:[%s1 + $0x1038] sm:$0xff]
  %v542 = vld [vmem:[%s1 + $0x1040] sm:$0xff]
  %v543 = vld [vmem:[%s1 + $0x1048] sm:$0xff]
  %v544 = vld [vmem:[%s1 + $0x1050] sm:$0xff]
  %v545 = vld [vmem:[%s1 + $0x1058] sm:$0xff]
  %v546 = vld [vmem:[%s1 + $0x1060] sm:$0xff]
  %v547 = vld [vmem:[%s1 + $0x1068] sm:$0xff]
  %v548 = vld [vmem:[%s1 + $0x1070] sm:$0xff]
  %v549 = vld [vmem:[%s1 + $0x1078] sm:$0xff]
  %v550 = vld [vmem:[%s1 + $0x1080] sm:$0xff]
  %v551 = vld [vmem:[%s1 + $0x1088] sm:$0xff]
  %v552 = vld [vmem:[%s1 + $0x1090] sm:$0xff]
  %v553 = vld [vmem:[%s1 + $0x1098] sm:$0xff]
  %v554 = vld [vmem:[%s1 + $0x10a0] sm:$0xff]
  %v555 = vld [vmem:[%s1 + $0x10a8] sm:$0xff]
  %v556 = vld [vmem:[%s1 + $0x10b0] sm:$0xff]
  %v557 = vld [vmem:[%s1 + $0x10b8] sm:$0xff]
  %v558 = vld [vmem:[%s1 + $0x10c0] sm:$0xff]
  %v559 = vld [vmem:[%s1 + $0x10c8] sm:$0xff]
  %v560 = vld [vmem:[%s1 + $0x10d0] sm:$0xff]
  %v561 = vld [vmem:[%s1 + $0x10d8] sm:$0xff]
  %v562 = vld [vmem:[%s1 + $0x10e0] sm:$0xff]
  %v563 = vld [vmem:[%s1 + $0x10e8] sm:$0xff]
  %v564 = vld [vmem:[%s1 + $0x10f0] sm:$0xff]
  %v565 = vld [vmem:[%s1 + $0x10f8] sm:$0xff]
  %v566 = vld [vmem:[%s1 + $0x1100] sm:$0xff]
  %v567 = vld [vmem:[%s1 + $0x1108] sm:$0xff]
  %v568 = vld [vmem:[%s1 + $0x1110] sm:$0xff]
  %v569 = vld [vmem:[%s1 + $0x1118] sm:$0xff]
  %v570 = vld [vmem:[%s1 + $0x1120] sm:$0xff]
  %v571 = vld [vmem:[%s1 + $0x1128] sm:$0xff]
  %v572 = vld [vmem:[%s1 + $0x1130] sm:$0xff]
  %v573 = vld [vmem:[%s1 + $0x1138] sm:$0xff]
  %v574 = vld [vmem:[%s1 + $0x1140] sm:$0xff]
  %v575 = vld [vmem:[%s1 + $0x1148] sm:$0xff]
  %v576 = vld [vmem:[%s1 + $0x1150] sm:$0xff]
  %v577 = vld [vmem:[%s1 + $0x1158] sm:$0xff]
  %v578 = vld [vmem:[%s1 + $0x1160] sm:$0xff]
  %v579 = vld [vmem:[%s1 + $0x1168] sm:$0xff]
  %v580 = vld [vmem:[%s1 + $0x1170] sm:$0xff]
  %v581 = vld [vmem:[%s1 + $0x1178] sm:$0xff]
  %v582 = vld [vmem:[%s1 + $0x1180] sm:$0xff]
  %v583 = vld [vmem:[%s1 + $0x1188] sm:$0xff]
  %v584 = vld [vmem:[%s1 + $0x1190] sm:$0xff]
  %v585 = vld [vmem:[%s1 + $0x1198] sm:$0xff]
  %v586 = vld [vmem:[%s1 + $0x11a0] sm:$0xff]
  %v587 = vld [vmem:[%s1 + $0x11a8] sm:$0xff]
  %v588 = vld [vmem:[%s1 + $0x11b0] sm:$0xff]
  %v589 = vld [vmem:[%s1 + $0x11b8] sm:$0xff]
  %v590 = vld [vmem:[%s1 + $0x11c0] sm:$0xff]
  %v591 = vld [vmem:[%s1 + $0x11c8] sm:$0xff]
  %v592 = vld [vmem:[%s1 + $0x11d0] sm:$0xff]
  %v593 = vld [vmem:[%s1 + $0x11d8] sm:$0xff]
  %v594 = vld [vmem:[%s1 + $0x11e0] sm:$0xff]
  %v595 = vld [vmem:[%s1 + $0x11e8] sm:$0xff]
  %v596 = vld [vmem:[%s1 + $0x11f0] sm:$0xff]
  %v597 = vld [vmem:[%s1 + $0x11f8] sm:$0xff]
  %v607 = vunpack.c.l.b16 %v13
  %v608 = vunpack.c.h.b16 %v13
  %v609 = vunpack.c.l.b16 %v14
  %v610 = vunpack.c.h.b16 %v14
  %v611 = vunpack.c.l.b16 %v15
  %v612 = vunpack.c.h.b16 %v15
  %v613 = vunpack.c.l.b16 %v16
  %v614 = vunpack.c.h.b16 %v16
  %v615 = vunpack.c.l.b16 %v17
  %v616 = vunpack.c.h.b16 %v17
  %v617 = vunpack.c.l.b16 %v18
  %v618 = vunpack.c.h.b16 %v18
  %v619 = vunpack.c.l.b16 %v19
  %v620 = vunpack.c.h.b16 %v19
  %v621 = vunpack.c.l.b16 %v20
  %v622 = vunpack.c.h.b16 %v20
  %v623 = vunpack.c.l.b16 %v21
  %v624 = vunpack.c.h.b16 %v21
  %v625 = vpack.c.b16 %v607, %v607
  %v626 = vpack.c.b16 %v608, %v608
  %v627 = vpack.c.b16 %v609, %v609
  %v628 = vpack.c.b16 %v610, %v610
  %v629 = vpack.c.b16 %v611, %v611
  %v630 = vpack.c.b16 %v612, %v612
  %v631 = vpack.c.b16 %v613, %v613
  %v632 = vpack.c.b16 %v614, %v614
  %v633 = vpack.c.b16 %v615, %v615
  %v634 = vpack.c.b16 %v616, %v616
  %v635 = vpack.c.b16 %v617, %v617
  %v636 = vpack.c.b16 %v618, %v618
  %v637 = vpack.c.b16 %v619, %v619
  %v638 = vpack.c.b16 %v620, %v620
  %v639 = vpack.c.b16 %v621, %v621
  %v640 = vpack.c.b16 %v622, %v622
  %v641 = vpack.c.b16 %v623, %v623
  %v642 = vpack.c.b16 %v624, %v624
  %v1237 = vunpack.c.l.b16 %v22
  %v1238 = vunpack.c.h.b16 %v22
  %v1239 = vunpack.c.l.b16 %v23
  %v1240 = vunpack.c.h.b16 %v23
  %v1241 = vunpack.c.l.b16 %v24
  %v1242 = vunpack.c.h.b16 %v24
  %v1243 = vunpack.c.l.b16 %v25
  %v1244 = vunpack.c.h.b16 %v25
  %v1245 = vunpack.c.l.b16 %v26
  %v1246 = vunpack.c.h.b16 %v26
  %v1247 = vunpack.c.l.b16 %v27
  %v1248 = vunpack.c.h.b16 %v27
  %v1249 = vunpack.c.l.b16 %v28
  %v1250 = vunpack.c.h.b16 %v28
  %v1251 = vunpack.c.l.b16 %v29
  %v1252 = vunpack.c.h.b16 %v29
  %v1253 = vunpack.c.l.b16 %v30
  %v1254 = vunpack.c.h.b16 %v30
  %v1255 = vunpack.c.l.b16 %v31
  %v1256 = vunpack.c.h.b16 %v31
  %v1257 = vunpack.c.l.b16 %v32
  %v1258 = vunpack.c.h.b16 %v32
  %v1259 = vunpack.c.l.b16 %v33
  %v1260 = vunpack.c.h.b16 %v33
  %v1261 = vunpack.c.l.b16 %v34
  %v1262 = vunpack.c.h.b16 %v34
  %v1263 = vunpack.c.l.b16 %v35
  %v1264 = vunpack.c.h.b16 %v35
  %v1265 = vunpack.c.l.b16 %v36
  %v1266 = vunpack.c.h.b16 %v36
  %v1267 = vunpack.c.l.b16 %v37
  %v1268 = vunpack.c.h.b16 %v37
  %v1269 = vunpack.c.l.b16 %v38
  %v1270 = vunpack.c.h.b16 %v38
  %v1271 = vunpack.c.l.b16 %v39
  %v1272 = vunpack.c.h.b16 %v39
  %v1273 = vunpack.c.l.b16 %v40
  %v1274 = vunpack.c.h.b16 %v40
  %v1275 = vunpack.c.l.b16 %v41
  %v1276 = vunpack.c.h.b16 %v41
  %v1277 = vunpack.c.l.b16 %v42
  %v1278 = vunpack.c.h.b16 %v42
  %v1279 = vunpack.c.l.b16 %v43
  %v1280 = vunpack.c.h.b16 %v43
  %v1281 = vunpack.c.l.b16 %v44
  %v1282 = vunpack.c.h.b16 %v44
  %v1283 = vunpack.c.l.b16 %v45
  %v1284 = vunpack.c.h.b16 %v45
  %v1285 = vunpack.c.l.b16 %v46
  %v1286 = vunpack.c.h.b16 %v46
  %v1287 = vunpack.c.l.b16 %v47
  %v1288 = vunpack.c.h.b16 %v47
  %v1289 = vunpack.c.l.b16 %v48
  %v1290 = vunpack.c.h.b16 %v48
  %v1291 = vunpack.c.l.b16 %v49
  %v1292 = vunpack.c.h.b16 %v49
  %v1293 = vunpack.c.l.b16 %v50
  %v1294 = vunpack.c.h.b16 %v50
  %v1295 = vunpack.c.l.b16 %v51
  %v1296 = vunpack.c.h.b16 %v51
  %v1297 = vunpack.c.l.b16 %v52
  %v1298 = vunpack.c.h.b16 %v52
  %v1299 = vunpack.c.l.b16 %v53
  %v1300 = vunpack.c.h.b16 %v53
  %v1301 = vunpack.c.l.b16 %v54
  %v1302 = vunpack.c.h.b16 %v54
  %v1303 = vunpack.c.l.b16 %v55
  %v1304 = vunpack.c.h.b16 %v55
  %v1305 = vunpack.c.l.b16 %v56
  %v1306 = vunpack.c.h.b16 %v56
  %v1307 = vunpack.c.l.b16 %v57
  %v1308 = vunpack.c.h.b16 %v57
  %v1309 = vunpack.c.l.b16 %v58
  %v1310 = vunpack.c.h.b16 %v58
  %v1311 = vunpack.c.l.b16 %v59
  %v1312 = vunpack.c.h.b16 %v59
  %v1313 = vunpack.c.l.b16 %v60
  %v1314 = vunpack.c.h.b16 %v60
  %v1315 = vunpack.c.l.b16 %v61
  %v1316 = vunpack.c.h.b16 %v61
  %v1317 = vunpack.c.l.b16 %v62
  %v1318 = vunpack.c.h.b16 %v62
  %v1319 = vunpack.c.l.b16 %v63
  %v1320 = vunpack.c.h.b16 %v63
  %v1321 = vunpack.c.l.b16 %v64
  %v1322 = vunpack.c.h.b16 %v64
  %v1323 = vunpack.c.l.b16 %v65
  %v1324 = vunpack.c.h.b16 %v65
  %v1325 = vunpack.c.l.b16 %v66
  %v1326 = vunpack.c.h.b16 %v66
  %v1327 = vunpack.c.l.b16 %v67
  %v1328 = vunpack.c.h.b16 %v67
  %v1329 = vunpack.c.l.b16 %v68
  %v1330 = vunpack.c.h.b16 %v68
  %v1331 = vunpack.c.l.b16 %v69
  %v1332 = vunpack.c.h.b16 %v69
  %v1333 = vunpack.c.l.b16 %v70
  %v1334 = vunpack.c.h.b16 %v70
  %v1335 = vunpack.c.l.b16 %v71
  %v1336 = vunpack.c.h.b16 %v71
  %v1337 = vunpack.c.l.b16 %v72
  %v1338 = vunpack.c.h.b16 %v72
  %v1339 = vunpack.c.l.b16 %v73
  %v1340 = vunpack.c.h.b16 %v73
  %v1341 = vunpack.c.l.b16 %v74
  %v1342 = vunpack.c.h.b16 %v74
  %v1343 = vunpack.c.l.b16 %v75
  %v1344 = vunpack.c.h.b16 %v75
  %v1345 = vunpack.c.l.b16 %v76
  %v1346 = vunpack.c.h.b16 %v76
  %v1347 = vunpack.c.l.b16 %v77
  %v1348 = vunpack.c.h.b16 %v77
  %v1349 = vunpack.c.l.b16 %v78
  %v1350 = vunpack.c.h.b16 %v78
  %v1351 = vunpack.c.l.b16 %v79
  %v1352 = vunpack.c.h.b16 %v79
  %v1353 = vunpack.c.l.b16 %v80
  %v1354 = vunpack.c.h.b16 %v80
  %v1355 = vunpack.c.l.b16 %v81
  %v1356 = vunpack.c.h.b16 %v81
  %v1357 = vunpack.c.l.b16 %v82
  %v1358 = vunpack.c.h.b16 %v82
  %v1359 = vunpack.c.l.b16 %v83
  %v1360 = vunpack.c.h.b16 %v83
  %v1361 = vunpack.c.l.b16 %v84
  %v1362 = vunpack.c.h.b16 %v84
  %v1363 = vunpack.c.l.b16 %v85
  %v1364 = vunpack.c.h.b16 %v85
  %v1365 = vunpack.c.l.b16 %v86
  %v1366 = vunpack.c.h.b16 %v86
  %v1367 = vunpack.c.l.b16 %v87
  %v1368 = vunpack.c.h.b16 %v87
  %v1369 = vunpack.c.l.b16 %v88
  %v1370 = vunpack.c.h.b16 %v88
  %v1371 = vunpack.c.l.b16 %v89
  %v1372 = vunpack.c.h.b16 %v89
  %v1373 = vunpack.c.l.b16 %v90
  %v1374 = vunpack.c.h.b16 %v90
  %v1375 = vunpack.c.l.b16 %v91
  %v1376 = vunpack.c.h.b16 %v91
  %v1377 = vunpack.c.l.b16 %v92
  %v1378 = vunpack.c.h.b16 %v92
  %v1379 = vunpack.c.l.b16 %v93
  %v1380 = vunpack.c.h.b16 %v93
  %v1381 = vunpack.c.l.b16 %v94
  %v1382 = vunpack.c.h.b16 %v94
  %v1383 = vunpack.c.l.b16 %v95
  %v1384 = vunpack.c.h.b16 %v95
  %v1385 = vunpack.c.l.b16 %v96
  %v1386 = vunpack.c.h.b16 %v96
  %v1387 = vunpack.c.l.b16 %v97
  %v1388 = vunpack.c.h.b16 %v97
  %v1389 = vunpack.c.l.b16 %v98
  %v1390 = vunpack.c.h.b16 %v98
  %v1391 = vunpack.c.l.b16 %v99
  %v1392 = vunpack.c.h.b16 %v99
  %v1393 = vunpack.c.l.b16 %v100
  %v1394 = vunpack.c.h.b16 %v100
  %v1395 = vunpack.c.l.b16 %v101
  %v1396 = vunpack.c.h.b16 %v101
  %v1397 = vunpack.c.l.b16 %v102
  %v1398 = vunpack.c.h.b16 %v102
  %v1399 = vunpack.c.l.b16 %v103
  %v1400 = vunpack.c.h.b16 %v103
  %v1401 = vunpack.c.l.b16 %v104
  %v1402 = vunpack.c.h.b16 %v104
  %v1403 = vunpack.c.l.b16 %v105
  %v1404 = vunpack.c.h.b16 %v105
  %v1405 = vunpack.c.l.b16 %v106
  %v1406 = vunpack.c.h.b16 %v106
  %v1407 = vunpack.c.l.b16 %v107
  %v1408 = vunpack.c.h.b16 %v107
  %v1409 = vunpack.c.l.b16 %v108
  %v1410 = vunpack.c.h.b16 %v108
  %v1411 = vunpack.c.l.b16 %v109
  %v1412 = vunpack.c.h.b16 %v109
  %v1413 = vunpack.c.l.b16 %v110
  %v1414 = vunpack.c.h.b16 %v110
  %v1415 = vunpack.c.l.b16 %v111
  %v1416 = vunpack.c.h.b16 %v111
  %v1417 = vunpack.c.l.b16 %v112
  %v1418 = vunpack.c.h.b16 %v112
  %v1419 = vunpack.c.l.b16 %v113
  %v1420 = vunpack.c.h.b16 %v113
  %v1421 = vunpack.c.l.b16 %v114
  %v1422 = vunpack.c.h.b16 %v114
  %v1423 = vunpack.c.l.b16 %v115
  %v1424 = vunpack.c.h.b16 %v115
  %v1425 = vunpack.c.l.b16 %v116
  %v1426 = vunpack.c.h.b16 %v116
  %v1427 = vunpack.c.l.b16 %v117
  %v1428 = vunpack.c.h.b16 %v117
  %v1429 = vunpack.c.l.b16 %v118
  %v1430 = vunpack.c.h.b16 %v118
  %v1431 = vunpack.c.l.b16 %v119
  %v1432 = vunpack.c.h.b16 %v119
  %v1433 = vunpack.c.l.b16 %v120
  %v1434 = vunpack.c.h.b16 %v120
  %v1435 = vunpack.c.l.b16 %v121
  %v1436 = vunpack.c.h.b16 %v121
  %v1437 = vunpack.c.l.b16 %v122
  %v1438 = vunpack.c.h.b16 %v122
  %v1439 = vunpack.c.l.b16 %v123
  %v1440 = vunpack.c.h.b16 %v123
  %v1441 = vunpack.c.l.b16 %v124
  %v1442 = vunpack.c.h.b16 %v124
  %v1443 = vunpack.c.l.b16 %v125
  %v1444 = vunpack.c.h.b16 %v125
  %v1445 = vunpack.c.l.b16 %v126
  %v1446 = vunpack.c.h.b16 %v126
  %v1447 = vunpack.c.l.b16 %v127
  %v1448 = vunpack.c.h.b16 %v127
  %v1449 = vunpack.c.l.b16 %v128
  %v1450 = vunpack.c.h.b16 %v128
  %v1451 = vunpack.c.l.b16 %v129
  %v1452 = vunpack.c.h.b16 %v129
  %v1453 = vunpack.c.l.b16 %v130
  %v1454 = vunpack.c.h.b16 %v130
  %v1455 = vunpack.c.l.b16 %v131
  %v1456 = vunpack.c.h.b16 %v131
  %v1457 = vunpack.c.l.b16 %v132
  %v1458 = vunpack.c.h.b16 %v132
  %v1459 = vunpack.c.l.b16 %v133
  %v1460 = vunpack.c.h.b16 %v133
  %v1461 = vunpack.c.l.b16 %v134
  %v1462 = vunpack.c.h.b16 %v134
  %v1463 = vunpack.c.l.b16 %v135
  %v1464 = vunpack.c.h.b16 %v135
  %v1465 = vunpack.c.l.b16 %v136
  %v1466 = vunpack.c.h.b16 %v136
  %v1467 = vunpack.c.l.b16 %v137
  %v1468 = vunpack.c.h.b16 %v137
  %v1469 = vunpack.c.l.b16 %v138
  %v1470 = vunpack.c.h.b16 %v138
  %v1471 = vunpack.c.l.b16 %v139
  %v1472 = vunpack.c.h.b16 %v139
  %v1473 = vunpack.c.l.b16 %v140
  %v1474 = vunpack.c.h.b16 %v140
  %v1475 = vunpack.c.l.b16 %v141
  %v1476 = vunpack.c.h.b16 %v141
  %v1477 = vunpack.c.l.b16 %v142
  %v1478 = vunpack.c.h.b16 %v142
  %v1479 = vunpack.c.l.b16 %v143
  %v1480 = vunpack.c.h.b16 %v143
  %v1481 = vunpack.c.l.b16 %v144
  %v1482 = vunpack.c.h.b16 %v144
  %v1483 = vunpack.c.l.b16 %v145
  %v1484 = vunpack.c.h.b16 %v145
  %v1485 = vunpack.c.l.b16 %v146
  %v1486 = vunpack.c.h.b16 %v146
  %v1487 = vunpack.c.l.b16 %v147
  %v1488 = vunpack.c.h.b16 %v147
  %v1489 = vunpack.c.l.b16 %v148
  %v1490 = vunpack.c.h.b16 %v148
  %v1491 = vunpack.c.l.b16 %v149
  %v1492 = vunpack.c.h.b16 %v149
  %v1493 = vunpack.c.l.b16 %v150
  %v1494 = vunpack.c.h.b16 %v150
  %v1495 = vunpack.c.l.b16 %v151
  %v1496 = vunpack.c.h.b16 %v151
  %v1497 = vunpack.c.l.b16 %v152
  %v1498 = vunpack.c.h.b16 %v152
  %v1499 = vunpack.c.l.b16 %v153
  %v1500 = vunpack.c.h.b16 %v153
  %v1501 = vunpack.c.l.b16 %v154
  %v1502 = vunpack.c.h.b16 %v154
  %v1503 = vunpack.c.l.b16 %v155
  %v1504 = vunpack.c.h.b16 %v155
  %v1505 = vunpack.c.l.b16 %v156
  %v1506 = vunpack.c.h.b16 %v156
  %v1507 = vunpack.c.l.b16 %v157
  %v1508 = vunpack.c.h.b16 %v157
  %v1509 = vunpack.c.l.b16 %v158
  %v1510 = vunpack.c.h.b16 %v158
  %v1511 = vunpack.c.l.b16 %v159
  %v1512 = vunpack.c.h.b16 %v159
  %v1513 = vunpack.c.l.b16 %v160
  %v1514 = vunpack.c.h.b16 %v160
  %v1515 = vunpack.c.l.b16 %v161
  %v1516 = vunpack.c.h.b16 %v161
  %v1517 = vunpack.c.l.b16 %v162
  %v1518 = vunpack.c.h.b16 %v162
  %v1519 = vunpack.c.l.b16 %v163
  %v1520 = vunpack.c.h.b16 %v163
  %v1521 = vunpack.c.l.b16 %v164
  %v1522 = vunpack.c.h.b16 %v164
  %v1523 = vunpack.c.l.b16 %v165
  %v1524 = vunpack.c.h.b16 %v165
  %v1525 = vunpack.c.l.b16 %v166
  %v1526 = vunpack.c.h.b16 %v166
  %v1527 = vunpack.c.l.b16 %v167
  %v1528 = vunpack.c.h.b16 %v167
  %v1529 = vunpack.c.l.b16 %v168
  %v1530 = vunpack.c.h.b16 %v168
  %v1531 = vunpack.c.l.b16 %v169
  %v1532 = vunpack.c.h.b16 %v169
  %v1533 = vunpack.c.l.b16 %v170
  %v1534 = vunpack.c.h.b16 %v170
  %v1535 = vunpack.c.l.b16 %v171
  %v1536 = vunpack.c.h.b16 %v171
  %v1537 = vunpack.c.l.b16 %v172
  %v1538 = vunpack.c.h.b16 %v172
  %v1539 = vunpack.c.l.b16 %v173
  %v1540 = vunpack.c.h.b16 %v173
  %v1541 = vunpack.c.l.b16 %v174
  %v1542 = vunpack.c.h.b16 %v174
  %v1543 = vunpack.c.l.b16 %v175
  %v1544 = vunpack.c.h.b16 %v175
  %v1545 = vunpack.c.l.b16 %v176
  %v1546 = vunpack.c.h.b16 %v176
  %v1547 = vunpack.c.l.b16 %v177
  %v1548 = vunpack.c.h.b16 %v177
  %v1549 = vunpack.c.l.b16 %v178
  %v1550 = vunpack.c.h.b16 %v178
  %v1551 = vunpack.c.l.b16 %v179
  %v1552 = vunpack.c.h.b16 %v179
  %v1553 = vunpack.c.l.b16 %v180
  %v1554 = vunpack.c.h.b16 %v180
  %v1555 = vunpack.c.l.b16 %v181
  %v1556 = vunpack.c.h.b16 %v181
  %v1557 = vunpack.c.l.b16 %v182
  %v1558 = vunpack.c.h.b16 %v182
  %v1559 = vunpack.c.l.b16 %v183
  %v1560 = vunpack.c.h.b16 %v183
  %v1561 = vunpack.c.l.b16 %v184
  %v1562 = vunpack.c.h.b16 %v184
  %v1563 = vunpack.c.l.b16 %v185
  %v1564 = vunpack.c.h.b16 %v185
  %v1565 = vunpack.c.l.b16 %v186
  %v1566 = vunpack.c.h.b16 %v186
  %v1567 = vunpack.c.l.b16 %v187
  %v1568 = vunpack.c.h.b16 %v187
  %v1569 = vunpack.c.l.b16 %v188
  %v1570 = vunpack.c.h.b16 %v188
  %v1571 = vunpack.c.l.b16 %v189
  %v1572 = vunpack.c.h.b16 %v189
  %v1573 = vunpack.c.l.b16 %v190
  %v1574 = vunpack.c.h.b16 %v190
  %v1575 = vunpack.c.l.b16 %v191
  %v1576 = vunpack.c.h.b16 %v191
  %v1577 = vunpack.c.l.b16 %v192
  %v1578 = vunpack.c.h.b16 %v192
  %v1579 = vunpack.c.l.b16 %v193
  %v1580 = vunpack.c.h.b16 %v193
  %v1581 = vunpack.c.l.b16 %v194
  %v1582 = vunpack.c.h.b16 %v194
  %v1583 = vunpack.c.l.b16 %v195
  %v1584 = vunpack.c.h.b16 %v195
  %v1585 = vunpack.c.l.b16 %v196
  %v1586 = vunpack.c.h.b16 %v196
  %v1587 = vunpack.c.l.b16 %v197
  %v1588 = vunpack.c.h.b16 %v197
  %v1589 = vunpack.c.l.b16 %v198
  %v1590 = vunpack.c.h.b16 %v198
  %v1591 = vunpack.c.l.b16 %v199
  %v1592 = vunpack.c.h.b16 %v199
  %v1593 = vunpack.c.l.b16 %v200
  %v1594 = vunpack.c.h.b16 %v200
  %v1595 = vunpack.c.l.b16 %v201
  %v1596 = vunpack.c.h.b16 %v201
  %v1597 = vunpack.c.l.b16 %v202
  %v1598 = vunpack.c.h.b16 %v202
  %v1599 = vunpack.c.l.b16 %v203
  %v1600 = vunpack.c.h.b16 %v203
  %v1601 = vunpack.c.l.b16 %v204
  %v1602 = vunpack.c.h.b16 %v204
  %v1603 = vunpack.c.l.b16 %v205
  %v1604 = vunpack.c.h.b16 %v205
  %v1605 = vunpack.c.l.b16 %v206
  %v1606 = vunpack.c.h.b16 %v206
  %v1607 = vunpack.c.l.b16 %v207
  %v1608 = vunpack.c.h.b16 %v207
  %v1609 = vunpack.c.l.b16 %v208
  %v1610 = vunpack.c.h.b16 %v208
  %v1611 = vunpack.c.l.b16 %v209
  %v1612 = vunpack.c.h.b16 %v209
  %v1613 = vunpack.c.l.b16 %v210
  %v1614 = vunpack.c.h.b16 %v210
  %v1615 = vunpack.c.l.b16 %v211
  %v1616 = vunpack.c.h.b16 %v211
  %v1617 = vunpack.c.l.b16 %v212
  %v1618 = vunpack.c.h.b16 %v212
  %v1619 = vunpack.c.l.b16 %v213
  %v1620 = vunpack.c.h.b16 %v213
  %v1621 = vunpack.c.l.b16 %v214
  %v1622 = vunpack.c.h.b16 %v214
  %v1623 = vunpack.c.l.b16 %v215
  %v1624 = vunpack.c.h.b16 %v215
  %v1625 = vunpack.c.l.b16 %v216
  %v1626 = vunpack.c.h.b16 %v216
  %v1627 = vunpack.c.l.b16 %v217
  %v1628 = vunpack.c.h.b16 %v217
  %v1629 = vunpack.c.l.b16 %v218
  %v1630 = vunpack.c.h.b16 %v218
  %v1631 = vunpack.c.l.b16 %v219
  %v1632 = vunpack.c.h.b16 %v219
  %v1633 = vunpack.c.l.b16 %v220
  %v1634 = vunpack.c.h.b16 %v220
  %v1635 = vunpack.c.l.b16 %v221
  %v1636 = vunpack.c.h.b16 %v221
  %v1637 = vunpack.c.l.b16 %v222
  %v1638 = vunpack.c.h.b16 %v222
  %v1639 = vunpack.c.l.b16 %v223
  %v1640 = vunpack.c.h.b16 %v223
  %v1641 = vunpack.c.l.b16 %v224
  %v1642 = vunpack.c.h.b16 %v224
  %v1643 = vunpack.c.l.b16 %v225
  %v1644 = vunpack.c.h.b16 %v225
  %v1645 = vunpack.c.l.b16 %v226
  %v1646 = vunpack.c.h.b16 %v226
  %v1647 = vunpack.c.l.b16 %v227
  %v1648 = vunpack.c.h.b16 %v227
  %v1649 = vunpack.c.l.b16 %v228
  %v1650 = vunpack.c.h.b16 %v228
  %v1651 = vunpack.c.l.b16 %v229
  %v1652 = vunpack.c.h.b16 %v229
  %v1653 = vunpack.c.l.b16 %v230
  %v1654 = vunpack.c.h.b16 %v230
  %v1655 = vunpack.c.l.b16 %v231
  %v1656 = vunpack.c.h.b16 %v231
  %v1657 = vunpack.c.l.b16 %v232
  %v1658 = vunpack.c.h.b16 %v232
  %v1659 = vunpack.c.l.b16 %v233
  %v1660 = vunpack.c.h.b16 %v233
  %v1661 = vunpack.c.l.b16 %v234
  %v1662 = vunpack.c.h.b16 %v234
  %v1663 = vunpack.c.l.b16 %v235
  %v1664 = vunpack.c.h.b16 %v235
  %v1665 = vunpack.c.l.b16 %v236
  %v1666 = vunpack.c.h.b16 %v236
  %v1667 = vunpack.c.l.b16 %v237
  %v1668 = vunpack.c.h.b16 %v237
  %v1669 = vunpack.c.l.b16 %v238
  %v1670 = vunpack.c.h.b16 %v238
  %v1671 = vunpack.c.l.b16 %v239
  %v1672 = vunpack.c.h.b16 %v239
  %v1673 = vunpack.c.l.b16 %v240
  %v1674 = vunpack.c.h.b16 %v240
  %v1675 = vunpack.c.l.b16 %v241
  %v1676 = vunpack.c.h.b16 %v241
  %v1677 = vunpack.c.l.b16 %v242
  %v1678 = vunpack.c.h.b16 %v242
  %v1679 = vunpack.c.l.b16 %v243
  %v1680 = vunpack.c.h.b16 %v243
  %v1681 = vunpack.c.l.b16 %v244
  %v1682 = vunpack.c.h.b16 %v244
  %v1683 = vunpack.c.l.b16 %v245
  %v1684 = vunpack.c.h.b16 %v245
  %v1685 = vunpack.c.l.b16 %v246
  %v1686 = vunpack.c.h.b16 %v246
  %v1687 = vunpack.c.l.b16 %v247
  %v1688 = vunpack.c.h.b16 %v247
  %v1689 = vunpack.c.l.b16 %v248
  %v1690 = vunpack.c.h.b16 %v248
  %v1691 = vunpack.c.l.b16 %v249
  %v1692 = vunpack.c.h.b16 %v249
  %v1693 = vunpack.c.l.b16 %v250
  %v1694 = vunpack.c.h.b16 %v250
  %v1695 = vunpack.c.l.b16 %v251
  %v1696 = vunpack.c.h.b16 %v251
  %v1697 = vunpack.c.l.b16 %v252
  %v1698 = vunpack.c.h.b16 %v252
  %v1699 = vunpack.c.l.b16 %v253
  %v1700 = vunpack.c.h.b16 %v253
  %v1701 = vunpack.c.l.b16 %v254
  %v1702 = vunpack.c.h.b16 %v254
  %v1703 = vunpack.c.l.b16 %v255
  %v1704 = vunpack.c.h.b16 %v255
  %v1705 = vunpack.c.l.b16 %v256
  %v1706 = vunpack.c.h.b16 %v256
  %v1707 = vunpack.c.l.b16 %v257
  %v1708 = vunpack.c.h.b16 %v257
  %v1709 = vunpack.c.l.b16 %v258
  %v1710 = vunpack.c.h.b16 %v258
  %v1711 = vunpack.c.l.b16 %v259
  %v1712 = vunpack.c.h.b16 %v259
  %v1713 = vunpack.c.l.b16 %v260
  %v1714 = vunpack.c.h.b16 %v260
  %v1715 = vunpack.c.l.b16 %v261
  %v1716 = vunpack.c.h.b16 %v261
  %v1717 = vunpack.c.l.b16 %v262
  %v1718 = vunpack.c.h.b16 %v262
  %v1719 = vunpack.c.l.b16 %v263
  %v1720 = vunpack.c.h.b16 %v263
  %v1721 = vunpack.c.l.b16 %v264
  %v1722 = vunpack.c.h.b16 %v264
  %v1723 = vunpack.c.l.b16 %v265
  %v1724 = vunpack.c.h.b16 %v265
  %v1725 = vunpack.c.l.b16 %v266
  %v1726 = vunpack.c.h.b16 %v266
  %v1727 = vunpack.c.l.b16 %v267
  %v1728 = vunpack.c.h.b16 %v267
  %v1729 = vunpack.c.l.b16 %v268
  %v1730 = vunpack.c.h.b16 %v268
  %v1731 = vunpack.c.l.b16 %v269
  %v1732 = vunpack.c.h.b16 %v269
  %v1733 = vunpack.c.l.b16 %v270
  %v1734 = vunpack.c.h.b16 %v270
  %v1735 = vunpack.c.l.b16 %v271
  %v1736 = vunpack.c.h.b16 %v271
  %v1737 = vunpack.c.l.b16 %v272
  %v1738 = vunpack.c.h.b16 %v272
  %v1739 = vunpack.c.l.b16 %v273
  %v1740 = vunpack.c.h.b16 %v273
  %v1741 = vunpack.c.l.b16 %v274
  %v1742 = vunpack.c.h.b16 %v274
  %v1743 = vunpack.c.l.b16 %v275
  %v1744 = vunpack.c.h.b16 %v275
  %v1745 = vunpack.c.l.b16 %v276
  %v1746 = vunpack.c.h.b16 %v276
  %v1747 = vunpack.c.l.b16 %v277
  %v1748 = vunpack.c.h.b16 %v277
  %v1749 = vunpack.c.l.b16 %v278
  %v1750 = vunpack.c.h.b16 %v278
  %v1751 = vunpack.c.l.b16 %v279
  %v1752 = vunpack.c.h.b16 %v279
  %v1753 = vunpack.c.l.b16 %v280
  %v1754 = vunpack.c.h.b16 %v280
  %v1755 = vunpack.c.l.b16 %v281
  %v1756 = vunpack.c.h.b16 %v281
  %v1757 = vunpack.c.l.b16 %v282
  %v1758 = vunpack.c.h.b16 %v282
  %v1759 = vunpack.c.l.b16 %v283
  %v1760 = vunpack.c.h.b16 %v283
  %v1761 = vunpack.c.l.b16 %v284
  %v1762 = vunpack.c.h.b16 %v284
  %v1763 = vunpack.c.l.b16 %v285
  %v1764 = vunpack.c.h.b16 %v285
  %v1765 = vunpack.c.l.b16 %v286
  %v1766 = vunpack.c.h.b16 %v286
  %v1767 = vunpack.c.l.b16 %v287
  %v1768 = vunpack.c.h.b16 %v287
  %v1769 = vunpack.c.l.b16 %v288
  %v1770 = vunpack.c.h.b16 %v288
  %v1771 = vunpack.c.l.b16 %v289
  %v1772 = vunpack.c.h.b16 %v289
  %v1773 = vunpack.c.l.b16 %v290
  %v1774 = vunpack.c.h.b16 %v290
  %v1775 = vunpack.c.l.b16 %v291
  %v1776 = vunpack.c.h.b16 %v291
  %v1777 = vunpack.c.l.b16 %v292
  %v1778 = vunpack.c.h.b16 %v292
  %v1779 = vunpack.c.l.b16 %v293
  %v1780 = vunpack.c.h.b16 %v293
  %v1781 = vunpack.c.l.b16 %v294
  %v1782 = vunpack.c.h.b16 %v294
  %v1783 = vunpack.c.l.b16 %v295
  %v1784 = vunpack.c.h.b16 %v295
  %v1785 = vunpack.c.l.b16 %v296
  %v1786 = vunpack.c.h.b16 %v296
  %v1787 = vunpack.c.l.b16 %v297
  %v1788 = vunpack.c.h.b16 %v297
  %v1789 = vunpack.c.l.b16 %v298
  %v1790 = vunpack.c.h.b16 %v298
  %v1791 = vunpack.c.l.b16 %v299
  %v1792 = vunpack.c.h.b16 %v299
  %v1793 = vunpack.c.l.b16 %v300
  %v1794 = vunpack.c.h.b16 %v300
  %v1795 = vunpack.c.l.b16 %v301
  %v1796 = vunpack.c.h.b16 %v301
  %v1797 = vunpack.c.l.b16 %v302
  %v1798 = vunpack.c.h.b16 %v302
  %v1799 = vunpack.c.l.b16 %v303
  %v1800 = vunpack.c.h.b16 %v303
  %v1801 = vunpack.c.l.b16 %v304
  %v1802 = vunpack.c.h.b16 %v304
  %v1803 = vunpack.c.l.b16 %v305
  %v1804 = vunpack.c.h.b16 %v305
  %v1805 = vunpack.c.l.b16 %v306
  %v1806 = vunpack.c.h.b16 %v306
  %v1807 = vunpack.c.l.b16 %v307
  %v1808 = vunpack.c.h.b16 %v307
  %v1809 = vunpack.c.l.b16 %v308
  %v1810 = vunpack.c.h.b16 %v308
  %v1811 = vunpack.c.l.b16 %v309
  %v1812 = vunpack.c.h.b16 %v309
  %v1813 = vunpack.c.l.b16 %v310
  %v1814 = vunpack.c.h.b16 %v310
  %v1815 = vunpack.c.l.b16 %v311
  %v1816 = vunpack.c.h.b16 %v311
  %v1817 = vunpack.c.l.b16 %v312
  %v1818 = vunpack.c.h.b16 %v312
  %v1819 = vunpack.c.l.b16 %v313
  %v1820 = vunpack.c.h.b16 %v313
  %v1821 = vunpack.c.l.b16 %v314
  %v1822 = vunpack.c.h.b16 %v314
  %v1823 = vunpack.c.l.b16 %v315
  %v1824 = vunpack.c.h.b16 %v315
  %v1825 = vunpack.c.l.b16 %v316
  %v1826 = vunpack.c.h.b16 %v316
  %v1827 = vunpack.c.l.b16 %v317
  %v1828 = vunpack.c.h.b16 %v317
  %v1829 = vunpack.c.l.b16 %v318
  %v1830 = vunpack.c.h.b16 %v318
  %v1831 = vunpack.c.l.b16 %v319
  %v1832 = vunpack.c.h.b16 %v319
  %v1833 = vunpack.c.l.b16 %v320
  %v1834 = vunpack.c.h.b16 %v320
  %v1835 = vunpack.c.l.b16 %v321
  %v1836 = vunpack.c.h.b16 %v321
  %v1837 = vunpack.c.l.b16 %v322
  %v1838 = vunpack.c.h.b16 %v322
  %v1839 = vunpack.c.l.b16 %v323
  %v1840 = vunpack.c.h.b16 %v323
  %v1841 = vunpack.c.l.b16 %v324
  %v1842 = vunpack.c.h.b16 %v324
  %v1843 = vunpack.c.l.b16 %v325
  %v1844 = vunpack.c.h.b16 %v325
  %v1845 = vunpack.c.l.b16 %v326
  %v1846 = vunpack.c.h.b16 %v326
  %v1847 = vunpack.c.l.b16 %v327
  %v1848 = vunpack.c.h.b16 %v327
  %v1849 = vunpack.c.l.b16 %v328
  %v1850 = vunpack.c.h.b16 %v328
  %v1851 = vunpack.c.l.b16 %v329
  %v1852 = vunpack.c.h.b16 %v329
  %v1853 = vunpack.c.l.b16 %v330
  %v1854 = vunpack.c.h.b16 %v330
  %v1855 = vunpack.c.l.b16 %v331
  %v1856 = vunpack.c.h.b16 %v331
  %v1857 = vunpack.c.l.b16 %v332
  %v1858 = vunpack.c.h.b16 %v332
  %v1859 = vunpack.c.l.b16 %v333
  %v1860 = vunpack.c.h.b16 %v333
  %v1861 = vunpack.c.l.b16 %v334
  %v1862 = vunpack.c.h.b16 %v334
  %v1863 = vunpack.c.l.b16 %v335
  %v1864 = vunpack.c.h.b16 %v335
  %v1865 = vunpack.c.l.b16 %v336
  %v1866 = vunpack.c.h.b16 %v336
  %v1867 = vunpack.c.l.b16 %v337
  %v1868 = vunpack.c.h.b16 %v337
  %v1869 = vunpack.c.l.b16 %v338
  %v1870 = vunpack.c.h.b16 %v338
  %v1871 = vunpack.c.l.b16 %v339
  %v1872 = vunpack.c.h.b16 %v339
  %v1873 = vunpack.c.l.b16 %v340
  %v1874 = vunpack.c.h.b16 %v340
  %v1875 = vunpack.c.l.b16 %v341
  %v1876 = vunpack.c.h.b16 %v341
  %v1877 = vunpack.c.l.b16 %v342
  %v1878 = vunpack.c.h.b16 %v342
  %v1879 = vunpack.c.l.b16 %v343
  %v1880 = vunpack.c.h.b16 %v343
  %v1881 = vunpack.c.l.b16 %v344
  %v1882 = vunpack.c.h.b16 %v344
  %v1883 = vunpack.c.l.b16 %v345
  %v1884 = vunpack.c.h.b16 %v345
  %v1885 = vunpack.c.l.b16 %v346
  %v1886 = vunpack.c.h.b16 %v346
  %v1887 = vunpack.c.l.b16 %v347
  %v1888 = vunpack.c.h.b16 %v347
  %v1889 = vunpack.c.l.b16 %v348
  %v1890 = vunpack.c.h.b16 %v348
  %v1891 = vunpack.c.l.b16 %v349
  %v1892 = vunpack.c.h.b16 %v349
  %v1893 = vunpack.c.l.b16 %v350
  %v1894 = vunpack.c.h.b16 %v350
  %v1895 = vunpack.c.l.b16 %v351
  %v1896 = vunpack.c.h.b16 %v351
  %v1897 = vunpack.c.l.b16 %v352
  %v1898 = vunpack.c.h.b16 %v352
  %v1899 = vunpack.c.l.b16 %v353
  %v1900 = vunpack.c.h.b16 %v353
  %v1901 = vunpack.c.l.b16 %v354
  %v1902 = vunpack.c.h.b16 %v354
  %v1903 = vunpack.c.l.b16 %v355
  %v1904 = vunpack.c.h.b16 %v355
  %v1905 = vunpack.c.l.b16 %v356
  %v1906 = vunpack.c.h.b16 %v356
  %v1907 = vunpack.c.l.b16 %v357
  %v1908 = vunpack.c.h.b16 %v357
  %v1909 = vunpack.c.l.b16 %v358
  %v1910 = vunpack.c.h.b16 %v358
  %v1911 = vunpack.c.l.b16 %v359
  %v1912 = vunpack.c.h.b16 %v359
  %v1913 = vunpack.c.l.b16 %v360
  %v1914 = vunpack.c.h.b16 %v360
  %v1915 = vunpack.c.l.b16 %v361
  %v1916 = vunpack.c.h.b16 %v361
  %v1917 = vunpack.c.l.b16 %v362
  %v1918 = vunpack.c.h.b16 %v362
  %v1919 = vunpack.c.l.b16 %v363
  %v1920 = vunpack.c.h.b16 %v363
  %v1921 = vunpack.c.l.b16 %v364
  %v1922 = vunpack.c.h.b16 %v364
  %v1923 = vunpack.c.l.b16 %v365
  %v1924 = vunpack.c.h.b16 %v365
  %v1925 = vunpack.c.l.b16 %v366
  %v1926 = vunpack.c.h.b16 %v366
  %v1927 = vunpack.c.l.b16 %v367
  %v1928 = vunpack.c.h.b16 %v367
  %v1929 = vunpack.c.l.b16 %v368
  %v1930 = vunpack.c.h.b16 %v368
  %v1931 = vunpack.c.l.b16 %v369
  %v1932 = vunpack.c.h.b16 %v369
  %v1933 = vunpack.c.l.b16 %v370
  %v1934 = vunpack.c.h.b16 %v370
  %v1935 = vunpack.c.l.b16 %v371
  %v1936 = vunpack.c.h.b16 %v371
  %v1937 = vunpack.c.l.b16 %v372
  %v1938 = vunpack.c.h.b16 %v372
  %v1939 = vunpack.c.l.b16 %v373
  %v1940 = vunpack.c.h.b16 %v373
  %v1941 = vunpack.c.l.b16 %v374
  %v1942 = vunpack.c.h.b16 %v374
  %v1943 = vunpack.c.l.b16 %v375
  %v1944 = vunpack.c.h.b16 %v375
  %v1945 = vunpack.c.l.b16 %v376
  %v1946 = vunpack.c.h.b16 %v376
  %v1947 = vunpack.c.l.b16 %v377
  %v1948 = vunpack.c.h.b16 %v377
  %v1949 = vunpack.c.l.b16 %v378
  %v1950 = vunpack.c.h.b16 %v378
  %v1951 = vunpack.c.l.b16 %v379
  %v1952 = vunpack.c.h.b16 %v379
  %v1953 = vunpack.c.l.b16 %v380
  %v1954 = vunpack.c.h.b16 %v380
  %v1955 = vunpack.c.l.b16 %v381
  %v1956 = vunpack.c.h.b16 %v381
  %v1957 = vunpack.c.l.b16 %v382
  %v1958 = vunpack.c.h.b16 %v382
  %v1959 = vunpack.c.l.b16 %v383
  %v1960 = vunpack.c.h.b16 %v383
  %v1961 = vunpack.c.l.b16 %v384
  %v1962 = vunpack.c.h.b16 %v384
  %v1963 = vunpack.c.l.b16 %v385
  %v1964 = vunpack.c.h.b16 %v385
  %v1965 = vunpack.c.l.b16 %v386
  %v1966 = vunpack.c.h.b16 %v386
  %v1967 = vunpack.c.l.b16 %v387
  %v1968 = vunpack.c.h.b16 %v387
  %v1969 = vunpack.c.l.b16 %v388
  %v1970 = vunpack.c.h.b16 %v388
  %v1971 = vunpack.c.l.b16 %v389
  %v1972 = vunpack.c.h.b16 %v389
  %v1973 = vunpack.c.l.b16 %v390
  %v1974 = vunpack.c.h.b16 %v390
  %v1975 = vunpack.c.l.b16 %v391
  %v1976 = vunpack.c.h.b16 %v391
  %v1977 = vunpack.c.l.b16 %v392
  %v1978 = vunpack.c.h.b16 %v392
  %v1979 = vunpack.c.l.b16 %v393
  %v1980 = vunpack.c.h.b16 %v393
  %v1981 = vunpack.c.l.b16 %v394
  %v1982 = vunpack.c.h.b16 %v394
  %v1983 = vunpack.c.l.b16 %v395
  %v1984 = vunpack.c.h.b16 %v395
  %v1985 = vunpack.c.l.b16 %v396
  %v1986 = vunpack.c.h.b16 %v396
  %v1987 = vunpack.c.l.b16 %v397
  %v1988 = vunpack.c.h.b16 %v397
  %v1989 = vunpack.c.l.b16 %v398
  %v1990 = vunpack.c.h.b16 %v398
  %v1991 = vunpack.c.l.b16 %v399
  %v1992 = vunpack.c.h.b16 %v399
  %v1993 = vunpack.c.l.b16 %v400
  %v1994 = vunpack.c.h.b16 %v400
  %v1995 = vunpack.c.l.b16 %v401
  %v1996 = vunpack.c.h.b16 %v401
  %v1997 = vunpack.c.l.b16 %v402
  %v1998 = vunpack.c.h.b16 %v402
  %v1999 = vunpack.c.l.b16 %v403
  %v2000 = vunpack.c.h.b16 %v403
  %v2001 = vunpack.c.l.b16 %v404
  %v2002 = vunpack.c.h.b16 %v404
  %v2003 = vunpack.c.l.b16 %v405
  %v2004 = vunpack.c.h.b16 %v405
  %v2005 = vunpack.c.l.b16 %v406
  %v2006 = vunpack.c.h.b16 %v406
  %v2007 = vunpack.c.l.b16 %v407
  %v2008 = vunpack.c.h.b16 %v407
  %v2009 = vunpack.c.l.b16 %v408
  %v2010 = vunpack.c.h.b16 %v408
  %v2011 = vunpack.c.l.b16 %v409
  %v2012 = vunpack.c.h.b16 %v409
  %v2013 = vunpack.c.l.b16 %v410
  %v2014 = vunpack.c.h.b16 %v410
  %v2015 = vunpack.c.l.b16 %v411
  %v2016 = vunpack.c.h.b16 %v411
  %v2017 = vunpack.c.l.b16 %v412
  %v2018 = vunpack.c.h.b16 %v412
  %v2019 = vunpack.c.l.b16 %v413
  %v2020 = vunpack.c.h.b16 %v413
  %v2021 = vunpack.c.l.b16 %v414
  %v2022 = vunpack.c.h.b16 %v414
  %v2023 = vunpack.c.l.b16 %v415
  %v2024 = vunpack.c.h.b16 %v415
  %v2025 = vunpack.c.l.b16 %v416
  %v2026 = vunpack.c.h.b16 %v416
  %v2027 = vunpack.c.l.b16 %v417
  %v2028 = vunpack.c.h.b16 %v417
  %v2029 = vunpack.c.l.b16 %v418
  %v2030 = vunpack.c.h.b16 %v418
  %v2031 = vunpack.c.l.b16 %v419
  %v2032 = vunpack.c.h.b16 %v419
  %v2033 = vunpack.c.l.b16 %v420
  %v2034 = vunpack.c.h.b16 %v420
  %v2035 = vunpack.c.l.b16 %v421
  %v2036 = vunpack.c.h.b16 %v421
  %v2037 = vunpack.c.l.b16 %v422
  %v2038 = vunpack.c.h.b16 %v422
  %v2039 = vunpack.c.l.b16 %v423
  %v2040 = vunpack.c.h.b16 %v423
  %v2041 = vunpack.c.l.b16 %v424
  %v2042 = vunpack.c.h.b16 %v424
  %v2043 = vunpack.c.l.b16 %v425
  %v2044 = vunpack.c.h.b16 %v425
  %v2045 = vunpack.c.l.b16 %v426
  %v2046 = vunpack.c.h.b16 %v426
  %v2047 = vunpack.c.l.b16 %v427
  %v2048 = vunpack.c.h.b16 %v427
  %v2049 = vunpack.c.l.b16 %v428
  %v2050 = vunpack.c.h.b16 %v428
  %v2051 = vunpack.c.l.b16 %v429
  %v2052 = vunpack.c.h.b16 %v429
  %v2053 = vunpack.c.l.b16 %v430
  %v2054 = vunpack.c.h.b16 %v430
  %v2055 = vunpack.c.l.b16 %v431
  %v2056 = vunpack.c.h.b16 %v431
  %v2057 = vunpack.c.l.b16 %v432
  %v2058 = vunpack.c.h.b16 %v432
  %v2059 = vunpack.c.l.b16 %v433
  %v2060 = vunpack.c.h.b16 %v433
  %v2061 = vunpack.c.l.b16 %v434
  %v2062 = vunpack.c.h.b16 %v434
  %v2063 = vunpack.c.l.b16 %v435
  %v2064 = vunpack.c.h.b16 %v435
  %v2065 = vunpack.c.l.b16 %v436
  %v2066 = vunpack.c.h.b16 %v436
  %v2067 = vunpack.c.l.b16 %v437
  %v2068 = vunpack.c.h.b16 %v437
  %v2069 = vunpack.c.l.b16 %v438
  %v2070 = vunpack.c.h.b16 %v438
  %v2071 = vunpack.c.l.b16 %v439
  %v2072 = vunpack.c.h.b16 %v439
  %v2073 = vunpack.c.l.b16 %v440
  %v2074 = vunpack.c.h.b16 %v440
  %v2075 = vunpack.c.l.b16 %v441
  %v2076 = vunpack.c.h.b16 %v441
  %v2077 = vunpack.c.l.b16 %v442
  %v2078 = vunpack.c.h.b16 %v442
  %v2079 = vunpack.c.l.b16 %v443
  %v2080 = vunpack.c.h.b16 %v443
  %v2081 = vunpack.c.l.b16 %v444
  %v2082 = vunpack.c.h.b16 %v444
  %v2083 = vunpack.c.l.b16 %v445
  %v2084 = vunpack.c.h.b16 %v445
  %v2085 = vunpack.c.l.b16 %v446
  %v2086 = vunpack.c.h.b16 %v446
  %v2087 = vunpack.c.l.b16 %v447
  %v2088 = vunpack.c.h.b16 %v447
  %v2089 = vunpack.c.l.b16 %v448
  %v2090 = vunpack.c.h.b16 %v448
  %v2091 = vunpack.c.l.b16 %v449
  %v2092 = vunpack.c.h.b16 %v449
  %v2093 = vunpack.c.l.b16 %v450
  %v2094 = vunpack.c.h.b16 %v450
  %v2095 = vunpack.c.l.b16 %v451
  %v2096 = vunpack.c.h.b16 %v451
  %v2097 = vunpack.c.l.b16 %v452
  %v2098 = vunpack.c.h.b16 %v452
  %v2099 = vunpack.c.l.b16 %v453
  %v2100 = vunpack.c.h.b16 %v453
  %v2101 = vunpack.c.l.b16 %v454
  %v2102 = vunpack.c.h.b16 %v454
  %v2103 = vunpack.c.l.b16 %v455
  %v2104 = vunpack.c.h.b16 %v455
  %v2105 = vunpack.c.l.b16 %v456
  %v2106 = vunpack.c.h.b16 %v456
  %v2107 = vunpack.c.l.b16 %v457
  %v2108 = vunpack.c.h.b16 %v457
  %v2109 = vunpack.c.l.b16 %v458
  %v2110 = vunpack.c.h.b16 %v458
  %v2111 = vunpack.c.l.b16 %v459
  %v2112 = vunpack.c.h.b16 %v459
  %v2113 = vunpack.c.l.b16 %v460
  %v2114 = vunpack.c.h.b16 %v460
  %v2115 = vunpack.c.l.b16 %v461
  %v2116 = vunpack.c.h.b16 %v461
  %v2117 = vunpack.c.l.b16 %v462
  %v2118 = vunpack.c.h.b16 %v462
  %v2119 = vunpack.c.l.b16 %v463
  %v2120 = vunpack.c.h.b16 %v463
  %v2121 = vunpack.c.l.b16 %v464
  %v2122 = vunpack.c.h.b16 %v464
  %v2123 = vunpack.c.l.b16 %v465
  %v2124 = vunpack.c.h.b16 %v465
  %v2125 = vunpack.c.l.b16 %v466
  %v2126 = vunpack.c.h.b16 %v466
  %v2127 = vunpack.c.l.b16 %v467
  %v2128 = vunpack.c.h.b16 %v467
  %v2129 = vunpack.c.l.b16 %v468
  %v2130 = vunpack.c.h.b16 %v468
  %v2131 = vunpack.c.l.b16 %v469
  %v2132 = vunpack.c.h.b16 %v469
  %v2133 = vunpack.c.l.b16 %v470
  %v2134 = vunpack.c.h.b16 %v470
  %v2135 = vunpack.c.l.b16 %v471
  %v2136 = vunpack.c.h.b16 %v471
  %v2137 = vunpack.c.l.b16 %v472
  %v2138 = vunpack.c.h.b16 %v472
  %v2139 = vunpack.c.l.b16 %v473
  %v2140 = vunpack.c.h.b16 %v473
  %v2141 = vunpack.c.l.b16 %v474
  %v2142 = vunpack.c.h.b16 %v474
  %v2143 = vunpack.c.l.b16 %v475
  %v2144 = vunpack.c.h.b16 %v475
  %v2145 = vunpack.c.l.b16 %v476
  %v2146 = vunpack.c.h.b16 %v476
  %v2147 = vunpack.c.l.b16 %v477
  %v2148 = vunpack.c.h.b16 %v477
  %v2149 = vunpack.c.l.b16 %v478
  %v2150 = vunpack.c.h.b16 %v478
  %v2151 = vunpack.c.l.b16 %v479
  %v2152 = vunpack.c.h.b16 %v479
  %v2153 = vunpack.c.l.b16 %v480
  %v2154 = vunpack.c.h.b16 %v480
  %v2155 = vunpack.c.l.b16 %v481
  %v2156 = vunpack.c.h.b16 %v481
  %v2157 = vunpack.c.l.b16 %v482
  %v2158 = vunpack.c.h.b16 %v482
  %v2159 = vunpack.c.l.b16 %v483
  %v2160 = vunpack.c.h.b16 %v483
  %v2161 = vunpack.c.l.b16 %v484
  %v2162 = vunpack.c.h.b16 %v484
  %v2163 = vunpack.c.l.b16 %v485
  %v2164 = vunpack.c.h.b16 %v485
  %v2165 = vunpack.c.l.b16 %v486
  %v2166 = vunpack.c.h.b16 %v486
  %v2167 = vunpack.c.l.b16 %v487
  %v2168 = vunpack.c.h.b16 %v487
  %v2169 = vunpack.c.l.b16 %v488
  %v2170 = vunpack.c.h.b16 %v488
  %v2171 = vunpack.c.l.b16 %v489
  %v2172 = vunpack.c.h.b16 %v489
  %v2173 = vunpack.c.l.b16 %v490
  %v2174 = vunpack.c.h.b16 %v490
  %v2175 = vunpack.c.l.b16 %v491
  %v2176 = vunpack.c.h.b16 %v491
  %v2177 = vunpack.c.l.b16 %v492
  %v2178 = vunpack.c.h.b16 %v492
  %v2179 = vunpack.c.l.b16 %v493
  %v2180 = vunpack.c.h.b16 %v493
  %v2181 = vunpack.c.l.b16 %v494
  %v2182 = vunpack.c.h.b16 %v494
  %v2183 = vunpack.c.l.b16 %v495
  %v2184 = vunpack.c.h.b16 %v495
  %v2185 = vunpack.c.l.b16 %v496
  %v2186 = vunpack.c.h.b16 %v496
  %v2187 = vunpack.c.l.b16 %v497
  %v2188 = vunpack.c.h.b16 %v497
  %v2189 = vunpack.c.l.b16 %v498
  %v2190 = vunpack.c.h.b16 %v498
  %v2191 = vunpack.c.l.b16 %v499
  %v2192 = vunpack.c.h.b16 %v499
  %v2193 = vunpack.c.l.b16 %v500
  %v2194 = vunpack.c.h.b16 %v500
  %v2195 = vunpack.c.l.b16 %v501
  %v2196 = vunpack.c.h.b16 %v501
  %v2197 = vunpack.c.l.b16 %v502
  %v2198 = vunpack.c.h.b16 %v502
  %v2199 = vunpack.c.l.b16 %v503
  %v2200 = vunpack.c.h.b16 %v503
  %v2201 = vunpack.c.l.b16 %v504
  %v2202 = vunpack.c.h.b16 %v504
  %v2203 = vunpack.c.l.b16 %v505
  %v2204 = vunpack.c.h.b16 %v505
  %v2205 = vunpack.c.l.b16 %v506
  %v2206 = vunpack.c.h.b16 %v506
  %v2207 = vunpack.c.l.b16 %v507
  %v2208 = vunpack.c.h.b16 %v507
  %v2209 = vunpack.c.l.b16 %v508
  %v2210 = vunpack.c.h.b16 %v508
  %v2211 = vunpack.c.l.b16 %v509
  %v2212 = vunpack.c.h.b16 %v509
  %v2213 = vunpack.c.l.b16 %v510
  %v2214 = vunpack.c.h.b16 %v510
  %v2215 = vunpack.c.l.b16 %v511
  %v2216 = vunpack.c.h.b16 %v511
  %v2217 = vunpack.c.l.b16 %v512
  %v2218 = vunpack.c.h.b16 %v512
  %v2219 = vunpack.c.l.b16 %v513
  %v2220 = vunpack.c.h.b16 %v513
  %v2221 = vunpack.c.l.b16 %v514
  %v2222 = vunpack.c.h.b16 %v514
  %v2223 = vunpack.c.l.b16 %v515
  %v2224 = vunpack.c.h.b16 %v515
  %v2225 = vunpack.c.l.b16 %v516
  %v2226 = vunpack.c.h.b16 %v516
  %v2227 = vunpack.c.l.b16 %v517
  %v2228 = vunpack.c.h.b16 %v517
  %v2229 = vunpack.c.l.b16 %v518
  %v2230 = vunpack.c.h.b16 %v518
  %v2231 = vunpack.c.l.b16 %v519
  %v2232 = vunpack.c.h.b16 %v519
  %v2233 = vunpack.c.l.b16 %v520
  %v2234 = vunpack.c.h.b16 %v520
  %v2235 = vunpack.c.l.b16 %v521
  %v2236 = vunpack.c.h.b16 %v521
  %v2237 = vunpack.c.l.b16 %v522
  %v2238 = vunpack.c.h.b16 %v522
  %v2239 = vunpack.c.l.b16 %v523
  %v2240 = vunpack.c.h.b16 %v523
  %v2241 = vunpack.c.l.b16 %v524
  %v2242 = vunpack.c.h.b16 %v524
  %v2243 = vunpack.c.l.b16 %v525
  %v2244 = vunpack.c.h.b16 %v525
  %v2245 = vunpack.c.l.b16 %v526
  %v2246 = vunpack.c.h.b16 %v526
  %v2247 = vunpack.c.l.b16 %v527
  %v2248 = vunpack.c.h.b16 %v527
  %v2249 = vunpack.c.l.b16 %v528
  %v2250 = vunpack.c.h.b16 %v528
  %v2251 = vunpack.c.l.b16 %v529
  %v2252 = vunpack.c.h.b16 %v529
  %v2253 = vunpack.c.l.b16 %v530
  %v2254 = vunpack.c.h.b16 %v530
  %v2255 = vunpack.c.l.b16 %v531
  %v2256 = vunpack.c.h.b16 %v531
  %v2257 = vunpack.c.l.b16 %v532
  %v2258 = vunpack.c.h.b16 %v532
  %v2259 = vunpack.c.l.b16 %v533
  %v2260 = vunpack.c.h.b16 %v533
  %v2261 = vunpack.c.l.b16 %v534
  %v2262 = vunpack.c.h.b16 %v534
  %v2263 = vunpack.c.l.b16 %v535
  %v2264 = vunpack.c.h.b16 %v535
  %v2265 = vunpack.c.l.b16 %v536
  %v2266 = vunpack.c.h.b16 %v536
  %v2267 = vunpack.c.l.b16 %v537
  %v2268 = vunpack.c.h.b16 %v537
  %v2269 = vunpack.c.l.b16 %v538
  %v2270 = vunpack.c.h.b16 %v538
  %v2271 = vunpack.c.l.b16 %v539
  %v2272 = vunpack.c.h.b16 %v539
  %v2273 = vunpack.c.l.b16 %v540
  %v2274 = vunpack.c.h.b16 %v540
  %v2275 = vunpack.c.l.b16 %v541
  %v2276 = vunpack.c.h.b16 %v541
  %v2277 = vunpack.c.l.b16 %v542
  %v2278 = vunpack.c.h.b16 %v542
  %v2279 = vunpack.c.l.b16 %v543
  %v2280 = vunpack.c.h.b16 %v543
  %v2281 = vunpack.c.l.b16 %v544
  %v2282 = vunpack.c.h.b16 %v544
  %v2283 = vunpack.c.l.b16 %v545
  %v2284 = vunpack.c.h.b16 %v545
  %v2285 = vunpack.c.l.b16 %v546
  %v2286 = vunpack.c.h.b16 %v546
  %v2287 = vunpack.c.l.b16 %v547
  %v2288 = vunpack.c.h.b16 %v547
  %v2289 = vunpack.c.l.b16 %v548
  %v2290 = vunpack.c.h.b16 %v548
  %v2291 = vunpack.c.l.b16 %v549
  %v2292 = vunpack.c.h.b16 %v549
  %v2293 = vunpack.c.l.b16 %v550
  %v2294 = vunpack.c.h.b16 %v550
  %v2295 = vunpack.c.l.b16 %v551
  %v2296 = vunpack.c.h.b16 %v551
  %v2297 = vunpack.c.l.b16 %v552
  %v2298 = vunpack.c.h.b16 %v552
  %v2299 = vunpack.c.l.b16 %v553
  %v2300 = vunpack.c.h.b16 %v553
  %v2301 = vunpack.c.l.b16 %v554
  %v2302 = vunpack.c.h.b16 %v554
  %v2303 = vunpack.c.l.b16 %v555
  %v2304 = vunpack.c.h.b16 %v555
  %v2305 = vunpack.c.l.b16 %v556
  %v2306 = vunpack.c.h.b16 %v556
  %v2307 = vunpack.c.l.b16 %v557
  %v2308 = vunpack.c.h.b16 %v557
  %v2309 = vunpack.c.l.b16 %v558
  %v2310 = vunpack.c.h.b16 %v558
  %v2311 = vunpack.c.l.b16 %v559
  %v2312 = vunpack.c.h.b16 %v559
  %v2313 = vunpack.c.l.b16 %v560
  %v2314 = vunpack.c.h.b16 %v560
  %v2315 = vunpack.c.l.b16 %v561
  %v2316 = vunpack.c.h.b16 %v561
  %v2317 = vunpack.c.l.b16 %v562
  %v2318 = vunpack.c.h.b16 %v562
  %v2319 = vunpack.c.l.b16 %v563
  %v2320 = vunpack.c.h.b16 %v563
  %v2321 = vunpack.c.l.b16 %v564
  %v2322 = vunpack.c.h.b16 %v564
  %v2323 = vunpack.c.l.b16 %v565
  %v2324 = vunpack.c.h.b16 %v565
  %v2325 = vunpack.c.l.b16 %v566
  %v2326 = vunpack.c.h.b16 %v566
  %v2327 = vunpack.c.l.b16 %v567
  %v2328 = vunpack.c.h.b16 %v567
  %v2329 = vunpack.c.l.b16 %v568
  %v2330 = vunpack.c.h.b16 %v568
  %v2331 = vunpack.c.l.b16 %v569
  %v2332 = vunpack.c.h.b16 %v569
  %v2333 = vunpack.c.l.b16 %v570
  %v2334 = vunpack.c.h.b16 %v570
  %v2335 = vunpack.c.l.b16 %v571
  %v2336 = vunpack.c.h.b16 %v571
  %v2337 = vunpack.c.l.b16 %v572
  %v2338 = vunpack.c.h.b16 %v572
  %v2339 = vunpack.c.l.b16 %v573
  %v2340 = vunpack.c.h.b16 %v573
  %v2341 = vunpack.c.l.b16 %v574
  %v2342 = vunpack.c.h.b16 %v574
  %v2343 = vunpack.c.l.b16 %v575
  %v2344 = vunpack.c.h.b16 %v575
  %v2345 = vunpack.c.l.b16 %v576
  %v2346 = vunpack.c.h.b16 %v576
  %v2347 = vunpack.c.l.b16 %v577
  %v2348 = vunpack.c.h.b16 %v577
  %v2349 = vunpack.c.l.b16 %v578
  %v2350 = vunpack.c.h.b16 %v578
  %v2351 = vunpack.c.l.b16 %v579
  %v2352 = vunpack.c.h.b16 %v579
  %v2353 = vunpack.c.l.b16 %v580
  %v2354 = vunpack.c.h.b16 %v580
  %v2355 = vunpack.c.l.b16 %v581
  %v2356 = vunpack.c.h.b16 %v581
  %v2357 = vunpack.c.l.b16 %v582
  %v2358 = vunpack.c.h.b16 %v582
  %v2359 = vunpack.c.l.b16 %v583
  %v2360 = vunpack.c.h.b16 %v583
  %v2361 = vunpack.c.l.b16 %v584
  %v2362 = vunpack.c.h.b16 %v584
  %v2363 = vunpack.c.l.b16 %v585
  %v2364 = vunpack.c.h.b16 %v585
  %v2365 = vunpack.c.l.b16 %v586
  %v2366 = vunpack.c.h.b16 %v586
  %v2367 = vunpack.c.l.b16 %v587
  %v2368 = vunpack.c.h.b16 %v587
  %v2369 = vunpack.c.l.b16 %v588
  %v2370 = vunpack.c.h.b16 %v588
  %v2371 = vunpack.c.l.b16 %v589
  %v2372 = vunpack.c.h.b16 %v589
  %v2373 = vunpack.c.l.b16 %v590
  %v2374 = vunpack.c.h.b16 %v590
  %v2375 = vunpack.c.l.b16 %v591
  %v2376 = vunpack.c.h.b16 %v591
  %v2377 = vunpack.c.l.b16 %v592
  %v2378 = vunpack.c.h.b16 %v592
  %v2379 = vunpack.c.l.b16 %v593
  %v2380 = vunpack.c.h.b16 %v593
  %v2381 = vunpack.c.l.b16 %v594
  %v2382 = vunpack.c.h.b16 %v594
  %v2383 = vunpack.c.l.b16 %v595
  %v2384 = vunpack.c.h.b16 %v595
  %v2385 = vunpack.c.l.b16 %v596
  %v2386 = vunpack.c.h.b16 %v596
  %v2387 = vunpack.c.l.b16 %v597
  %v2388 = vunpack.c.h.b16 %v597
  %v2389 = vpack.c.b16 %v1241, %v1237
  %v2390 = vpack.c.b16 %v1242, %v1238
  %v2391 = vpack.c.b16 %v1243, %v1239
  %v2392 = vpack.c.b16 %v1244, %v1240
  %v2393 = vpack.c.b16 %v1249, %v1245
  %v2394 = vpack.c.b16 %v1250, %v1246
  %v2395 = vpack.c.b16 %v1251, %v1247
  %v2396 = vpack.c.b16 %v1252, %v1248
  %v2397 = vpack.c.b16 %v1257, %v1253
  %v2398 = vpack.c.b16 %v1258, %v1254
  %v2399 = vpack.c.b16 %v1259, %v1255
  %v2400 = vpack.c.b16 %v1260, %v1256
  %v2401 = vpack.c.b16 %v1265, %v1261
  %v2402 = vpack.c.b16 %v1266, %v1262
  %v2403 = vpack.c.b16 %v1267, %v1263
  %v2404 = vpack.c.b16 %v1268, %v1264
  %v2405 = vpack.c.b16 %v1273, %v1269
  %v2406 = vpack.c.b16 %v1274, %v1270
  %v2407 = vpack.c.b16 %v1275, %v1271
  %v2408 = vpack.c.b16 %v1276, %v1272
  %v2409 = vpack.c.b16 %v1281, %v1277
  %v2410 = vpack.c.b16 %v1282, %v1278
  %v2411 = vpack.c.b16 %v1283, %v1279
  %v2412 = vpack.c.b16 %v1284, %v1280
  %v2413 = vpack.c.b16 %v1289, %v1285
  %v2414 = vpack.c.b16 %v1290, %v1286
  %v2415 = vpack.c.b16 %v1291, %v1287
  %v2416 = vpack.c.b16 %v1292, %v1288
  %v2417 = vpack.c.b16 %v1297, %v1293
  %v2418 = vpack.c.b16 %v1298, %v1294
  %v2419 = vpack.c.b16 %v1299, %v1295
  %v2420 = vpack.c.b16 %v1300, %v1296
  %v2421 = vpack.c.b16 %v1305, %v1301
  %v2422 = vpack.c.b16 %v1306, %v1302
  %v2423 = vpack.c.b16 %v1307, %v1303
  %v2424 = vpack.c.b16 %v1308, %v1304
  %v2425 = vpack.c.b16 %v1313, %v1309
  %v2426 = vpack.c.b16 %v1314, %v1310
  %v2427 = vpack.c.b16 %v1315, %v1311
  %v2428 = vpack.c.b16 %v1316, %v1312
  %v2429 = vpack.c.b16 %v1321, %v1317
  %v2430 = vpack.c.b16 %v1322, %v1318
  %v2431 = vpack.c.b16 %v1323, %v1319
  %v2432 = vpack.c.b16 %v1324, %v1320
  %v2433 = vpack.c.b16 %v1329, %v1325
  %v2434 = vpack.c.b16 %v1330, %v1326
  %v2435 = vpack.c.b16 %v1331, %v1327
  %v2436 = vpack.c.b16 %v1332, %v1328
  %v2437 = vpack.c.b16 %v1337, %v1333
  %v2438 = vpack.c.b16 %v1338, %v1334
  %v2439 = vpack.c.b16 %v1339, %v1335
  %v2440 = vpack.c.b16 %v1340, %v1336
  %v2441 = vpack.c.b16 %v1345, %v1341
  %v2442 = vpack.c.b16 %v1346, %v1342
  %v2443 = vpack.c.b16 %v1347, %v1343
  %v2444 = vpack.c.b16 %v1348, %v1344
  %v2445 = vpack.c.b16 %v1353, %v1349
  %v2446 = vpack.c.b16 %v1354, %v1350
  %v2447 = vpack.c.b16 %v1355, %v1351
  %v2448 = vpack.c.b16 %v1356, %v1352
  %v2449 = vpack.c.b16 %v1361, %v1357
  %v2450 = vpack.c.b16 %v1362, %v1358
  %v2451 = vpack.c.b16 %v1363, %v1359
  %v2452 = vpack.c.b16 %v1364, %v1360
  %v2453 = vpack.c.b16 %v1369, %v1365
  %v2454 = vpack.c.b16 %v1370, %v1366
  %v2455 = vpack.c.b16 %v1371, %v1367
  %v2456 = vpack.c.b16 %v1372, %v1368
  %v2457 = vpack.c.b16 %v1377, %v1373
  %v2458 = vpack.c.b16 %v1378, %v1374
  %v2459 = vpack.c.b16 %v1379, %v1375
  %v2460 = vpack.c.b16 %v1380, %v1376
  %v2461 = vpack.c.b16 %v1385, %v1381
  %v2462 = vpack.c.b16 %v1386, %v1382
  %v2463 = vpack.c.b16 %v1387, %v1383
  %v2464 = vpack.c.b16 %v1388, %v1384
  %v2465 = vpack.c.b16 %v1393, %v1389
  %v2466 = vpack.c.b16 %v1394, %v1390
  %v2467 = vpack.c.b16 %v1395, %v1391
  %v2468 = vpack.c.b16 %v1396, %v1392
  %v2469 = vpack.c.b16 %v1401, %v1397
  %v2470 = vpack.c.b16 %v1402, %v1398
  %v2471 = vpack.c.b16 %v1403, %v1399
  %v2472 = vpack.c.b16 %v1404, %v1400
  %v2473 = vpack.c.b16 %v1409, %v1405
  %v2474 = vpack.c.b16 %v1410, %v1406
  %v2475 = vpack.c.b16 %v1411, %v1407
  %v2476 = vpack.c.b16 %v1412, %v1408
  %v2477 = vpack.c.b16 %v1417, %v1413
  %v2478 = vpack.c.b16 %v1418, %v1414
  %v2479 = vpack.c.b16 %v1419, %v1415
  %v2480 = vpack.c.b16 %v1420, %v1416
  %v2481 = vpack.c.b16 %v1425, %v1421
  %v2482 = vpack.c.b16 %v1426, %v1422
  %v2483 = vpack.c.b16 %v1427, %v1423
  %v2484 = vpack.c.b16 %v1428, %v1424
  %v2485 = vpack.c.b16 %v1433, %v1429
  %v2486 = vpack.c.b16 %v1434, %v1430
  %v2487 = vpack.c.b16 %v1435, %v1431
  %v2488 = vpack.c.b16 %v1436, %v1432
  %v2489 = vpack.c.b16 %v1441, %v1437
  %v2490 = vpack.c.b16 %v1442, %v1438
  %v2491 = vpack.c.b16 %v1443, %v1439
  %v2492 = vpack.c.b16 %v1444, %v1440
  %v2493 = vpack.c.b16 %v1449, %v1445
  %v2494 = vpack.c.b16 %v1450, %v1446
  %v2495 = vpack.c.b16 %v1451, %v1447
  %v2496 = vpack.c.b16 %v1452, %v1448
  %v2497 = vpack.c.b16 %v1457, %v1453
  %v2498 = vpack.c.b16 %v1458, %v1454
  %v2499 = vpack.c.b16 %v1459, %v1455
  %v2500 = vpack.c.b16 %v1460, %v1456
  %v2501 = vpack.c.b16 %v1465, %v1461
  %v2502 = vpack.c.b16 %v1466, %v1462
  %v2503 = vpack.c.b16 %v1467, %v1463
  %v2504 = vpack.c.b16 %v1468, %v1464
  %v2505 = vpack.c.b16 %v1473, %v1469
  %v2506 = vpack.c.b16 %v1474, %v1470
  %v2507 = vpack.c.b16 %v1475, %v1471
  %v2508 = vpack.c.b16 %v1476, %v1472
  %v2509 = vpack.c.b16 %v1481, %v1477
  %v2510 = vpack.c.b16 %v1482, %v1478
  %v2511 = vpack.c.b16 %v1483, %v1479
  %v2512 = vpack.c.b16 %v1484, %v1480
  %v2513 = vpack.c.b16 %v1489, %v1485
  %v2514 = vpack.c.b16 %v1490, %v1486
  %v2515 = vpack.c.b16 %v1491, %v1487
  %v2516 = vpack.c.b16 %v1492, %v1488
  %v2517 = vpack.c.b16 %v1497, %v1493
  %v2518 = vpack.c.b16 %v1498, %v1494
  %v2519 = vpack.c.b16 %v1499, %v1495
  %v2520 = vpack.c.b16 %v1500, %v1496
  %v2521 = vpack.c.b16 %v1505, %v1501
  %v2522 = vpack.c.b16 %v1506, %v1502
  %v2523 = vpack.c.b16 %v1507, %v1503
  %v2524 = vpack.c.b16 %v1508, %v1504
  %v2525 = vpack.c.b16 %v1513, %v1509
  %v2526 = vpack.c.b16 %v1514, %v1510
  %v2527 = vpack.c.b16 %v1515, %v1511
  %v2528 = vpack.c.b16 %v1516, %v1512
  %v2529 = vpack.c.b16 %v1521, %v1517
  %v2530 = vpack.c.b16 %v1522, %v1518
  %v2531 = vpack.c.b16 %v1523, %v1519
  %v2532 = vpack.c.b16 %v1524, %v1520
  %v2533 = vpack.c.b16 %v1529, %v1525
  %v2534 = vpack.c.b16 %v1530, %v1526
  %v2535 = vpack.c.b16 %v1531, %v1527
  %v2536 = vpack.c.b16 %v1532, %v1528
  %v2537 = vpack.c.b16 %v1537, %v1533
  %v2538 = vpack.c.b16 %v1538, %v1534
  %v2539 = vpack.c.b16 %v1539, %v1535
  %v2540 = vpack.c.b16 %v1540, %v1536
  %v2541 = vpack.c.b16 %v1545, %v1541
  %v2542 = vpack.c.b16 %v1546, %v1542
  %v2543 = vpack.c.b16 %v1547, %v1543
  %v2544 = vpack.c.b16 %v1548, %v1544
  %v2545 = vpack.c.b16 %v1553, %v1549
  %v2546 = vpack.c.b16 %v1554, %v1550
  %v2547 = vpack.c.b16 %v1555, %v1551
  %v2548 = vpack.c.b16 %v1556, %v1552
  %v2549 = vpack.c.b16 %v1561, %v1557
  %v2550 = vpack.c.b16 %v1562, %v1558
  %v2551 = vpack.c.b16 %v1563, %v1559
  %v2552 = vpack.c.b16 %v1564, %v1560
  %v2553 = vpack.c.b16 %v1569, %v1565
  %v2554 = vpack.c.b16 %v1570, %v1566
  %v2555 = vpack.c.b16 %v1571, %v1567
  %v2556 = vpack.c.b16 %v1572, %v1568
  %v2557 = vpack.c.b16 %v1577, %v1573
  %v2558 = vpack.c.b16 %v1578, %v1574
  %v2559 = vpack.c.b16 %v1579, %v1575
  %v2560 = vpack.c.b16 %v1580, %v1576
  %v2561 = vpack.c.b16 %v1585, %v1581
  %v2562 = vpack.c.b16 %v1586, %v1582
  %v2563 = vpack.c.b16 %v1587, %v1583
  %v2564 = vpack.c.b16 %v1588, %v1584
  %v2565 = vpack.c.b16 %v1593, %v1589
  %v2566 = vpack.c.b16 %v1594, %v1590
  %v2567 = vpack.c.b16 %v1595, %v1591
  %v2568 = vpack.c.b16 %v1596, %v1592
  %v2569 = vpack.c.b16 %v1601, %v1597
  %v2570 = vpack.c.b16 %v1602, %v1598
  %v2571 = vpack.c.b16 %v1603, %v1599
  %v2572 = vpack.c.b16 %v1604, %v1600
  %v2573 = vpack.c.b16 %v1609, %v1605
  %v2574 = vpack.c.b16 %v1610, %v1606
  %v2575 = vpack.c.b16 %v1611, %v1607
  %v2576 = vpack.c.b16 %v1612, %v1608
  %v2577 = vpack.c.b16 %v1617, %v1613
  %v2578 = vpack.c.b16 %v1618, %v1614
  %v2579 = vpack.c.b16 %v1619, %v1615
  %v2580 = vpack.c.b16 %v1620, %v1616
  %v2581 = vpack.c.b16 %v1625, %v1621
  %v2582 = vpack.c.b16 %v1626, %v1622
  %v2583 = vpack.c.b16 %v1627, %v1623
  %v2584 = vpack.c.b16 %v1628, %v1624
  %v2585 = vpack.c.b16 %v1633, %v1629
  %v2586 = vpack.c.b16 %v1634, %v1630
  %v2587 = vpack.c.b16 %v1635, %v1631
  %v2588 = vpack.c.b16 %v1636, %v1632
  %v2589 = vpack.c.b16 %v1641, %v1637
  %v2590 = vpack.c.b16 %v1642, %v1638
  %v2591 = vpack.c.b16 %v1643, %v1639
  %v2592 = vpack.c.b16 %v1644, %v1640
  %v2593 = vpack.c.b16 %v1649, %v1645
  %v2594 = vpack.c.b16 %v1650, %v1646
  %v2595 = vpack.c.b16 %v1651, %v1647
  %v2596 = vpack.c.b16 %v1652, %v1648
  %v2597 = vpack.c.b16 %v1657, %v1653
  %v2598 = vpack.c.b16 %v1658, %v1654
  %v2599 = vpack.c.b16 %v1659, %v1655
  %v2600 = vpack.c.b16 %v1660, %v1656
  %v2601 = vpack.c.b16 %v1665, %v1661
  %v2602 = vpack.c.b16 %v1666, %v1662
  %v2603 = vpack.c.b16 %v1667, %v1663
  %v2604 = vpack.c.b16 %v1668, %v1664
  %v2605 = vpack.c.b16 %v1673, %v1669
  %v2606 = vpack.c.b16 %v1674, %v1670
  %v2607 = vpack.c.b16 %v1675, %v1671
  %v2608 = vpack.c.b16 %v1676, %v1672
  %v2609 = vpack.c.b16 %v1681, %v1677
  %v2610 = vpack.c.b16 %v1682, %v1678
  %v2611 = vpack.c.b16 %v1683, %v1679
  %v2612 = vpack.c.b16 %v1684, %v1680
  %v2613 = vpack.c.b16 %v1689, %v1685
  %v2614 = vpack.c.b16 %v1690, %v1686
  %v2615 = vpack.c.b16 %v1691, %v1687
  %v2616 = vpack.c.b16 %v1692, %v1688
  %v2617 = vpack.c.b16 %v1697, %v1693
  %v2618 = vpack.c.b16 %v1698, %v1694
  %v2619 = vpack.c.b16 %v1699, %v1695
  %v2620 = vpack.c.b16 %v1700, %v1696
  %v2621 = vpack.c.b16 %v1705, %v1701
  %v2622 = vpack.c.b16 %v1706, %v1702
  %v2623 = vpack.c.b16 %v1707, %v1703
  %v2624 = vpack.c.b16 %v1708, %v1704
  %v2625 = vpack.c.b16 %v1713, %v1709
  %v2626 = vpack.c.b16 %v1714, %v1710
  %v2627 = vpack.c.b16 %v1715, %v1711
  %v2628 = vpack.c.b16 %v1716, %v1712
  %v2629 = vpack.c.b16 %v1721, %v1717
  %v2630 = vpack.c.b16 %v1722, %v1718
  %v2631 = vpack.c.b16 %v1723, %v1719
  %v2632 = vpack.c.b16 %v1724, %v1720
  %v2633 = vpack.c.b16 %v1729, %v1725
  %v2634 = vpack.c.b16 %v1730, %v1726
  %v2635 = vpack.c.b16 %v1731, %v1727
  %v2636 = vpack.c.b16 %v1732, %v1728
  %v2637 = vpack.c.b16 %v1737, %v1733
  %v2638 = vpack.c.b16 %v1738, %v1734
  %v2639 = vpack.c.b16 %v1739, %v1735
  %v2640 = vpack.c.b16 %v1740, %v1736
  %v2641 = vpack.c.b16 %v1745, %v1741
  %v2642 = vpack.c.b16 %v1746, %v1742
  %v2643 = vpack.c.b16 %v1747, %v1743
  %v2644 = vpack.c.b16 %v1748, %v1744
  %v2645 = vpack.c.b16 %v1753, %v1749
  %v2646 = vpack.c.b16 %v1754, %v1750
  %v2647 = vpack.c.b16 %v1755, %v1751
  %v2648 = vpack.c.b16 %v1756, %v1752
  %v2649 = vpack.c.b16 %v1761, %v1757
  %v2650 = vpack.c.b16 %v1762, %v1758
  %v2651 = vpack.c.b16 %v1763, %v1759
  %v2652 = vpack.c.b16 %v1764, %v1760
  %v2653 = vpack.c.b16 %v1769, %v1765
  %v2654 = vpack.c.b16 %v1770, %v1766
  %v2655 = vpack.c.b16 %v1771, %v1767
  %v2656 = vpack.c.b16 %v1772, %v1768
  %v2657 = vpack.c.b16 %v1777, %v1773
  %v2658 = vpack.c.b16 %v1778, %v1774
  %v2659 = vpack.c.b16 %v1779, %v1775
  %v2660 = vpack.c.b16 %v1780, %v1776
  %v2661 = vpack.c.b16 %v1785, %v1781
  %v2662 = vpack.c.b16 %v1786, %v1782
  %v2663 = vpack.c.b16 %v1787, %v1783
  %v2664 = vpack.c.b16 %v1788, %v1784
  %v2665 = vpack.c.b16 %v1793, %v1789
  %v2666 = vpack.c.b16 %v1794, %v1790
  %v2667 = vpack.c.b16 %v1795, %v1791
  %v2668 = vpack.c.b16 %v1796, %v1792
  %v2669 = vpack.c.b16 %v1801, %v1797
  %v2670 = vpack.c.b16 %v1802, %v1798
  %v2671 = vpack.c.b16 %v1803, %v1799
  %v2672 = vpack.c.b16 %v1804, %v1800
  %v2673 = vpack.c.b16 %v1809, %v1805
  %v2674 = vpack.c.b16 %v1810, %v1806
  %v2675 = vpack.c.b16 %v1811, %v1807
  %v2676 = vpack.c.b16 %v1812, %v1808
  %v2677 = vpack.c.b16 %v1817, %v1813
  %v2678 = vpack.c.b16 %v1818, %v1814
  %v2679 = vpack.c.b16 %v1819, %v1815
  %v2680 = vpack.c.b16 %v1820, %v1816
  %v2681 = vpack.c.b16 %v1825, %v1821
  %v2682 = vpack.c.b16 %v1826, %v1822
  %v2683 = vpack.c.b16 %v1827, %v1823
  %v2684 = vpack.c.b16 %v1828, %v1824
  %v2685 = vpack.c.b16 %v1833, %v1829
  %v2686 = vpack.c.b16 %v1834, %v1830
  %v2687 = vpack.c.b16 %v1835, %v1831
  %v2688 = vpack.c.b16 %v1836, %v1832
  %v2689 = vpack.c.b16 %v1841, %v1837
  %v2690 = vpack.c.b16 %v1842, %v1838
  %v2691 = vpack.c.b16 %v1843, %v1839
  %v2692 = vpack.c.b16 %v1844, %v1840
  %v2693 = vpack.c.b16 %v1849, %v1845
  %v2694 = vpack.c.b16 %v1850, %v1846
  %v2695 = vpack.c.b16 %v1851, %v1847
  %v2696 = vpack.c.b16 %v1852, %v1848
  %v2697 = vpack.c.b16 %v1857, %v1853
  %v2698 = vpack.c.b16 %v1858, %v1854
  %v2699 = vpack.c.b16 %v1859, %v1855
  %v2700 = vpack.c.b16 %v1860, %v1856
  %v2701 = vpack.c.b16 %v1865, %v1861
  %v2702 = vpack.c.b16 %v1866, %v1862
  %v2703 = vpack.c.b16 %v1867, %v1863
  %v2704 = vpack.c.b16 %v1868, %v1864
  %v2705 = vpack.c.b16 %v1873, %v1869
  %v2706 = vpack.c.b16 %v1874, %v1870
  %v2707 = vpack.c.b16 %v1875, %v1871
  %v2708 = vpack.c.b16 %v1876, %v1872
  %v2709 = vpack.c.b16 %v1881, %v1877
  %v2710 = vpack.c.b16 %v1882, %v1878
  %v2711 = vpack.c.b16 %v1883, %v1879
  %v2712 = vpack.c.b16 %v1884, %v1880
  %v2713 = vpack.c.b16 %v1889, %v1885
  %v2714 = vpack.c.b16 %v1890, %v1886
  %v2715 = vpack.c.b16 %v1891, %v1887
  %v2716 = vpack.c.b16 %v1892, %v1888
  %v2717 = vpack.c.b16 %v1897, %v1893
  %v2718 = vpack.c.b16 %v1898, %v1894
  %v2719 = vpack.c.b16 %v1899, %v1895
  %v2720 = vpack.c.b16 %v1900, %v1896
  %v2721 = vpack.c.b16 %v1905, %v1901
  %v2722 = vpack.c.b16 %v1906, %v1902
  %v2723 = vpack.c.b16 %v1907, %v1903
  %v2724 = vpack.c.b16 %v1908, %v1904
  %v2725 = vpack.c.b16 %v1913, %v1909
  %v2726 = vpack.c.b16 %v1914, %v1910
  %v2727 = vpack.c.b16 %v1915, %v1911
  %v2728 = vpack.c.b16 %v1916, %v1912
  %v2729 = vpack.c.b16 %v1921, %v1917
  %v2730 = vpack.c.b16 %v1922, %v1918
  %v2731 = vpack.c.b16 %v1923, %v1919
  %v2732 = vpack.c.b16 %v1924, %v1920
  %v2733 = vpack.c.b16 %v1929, %v1925
  %v2734 = vpack.c.b16 %v1930, %v1926
  %v2735 = vpack.c.b16 %v1931, %v1927
  %v2736 = vpack.c.b16 %v1932, %v1928
  %v2737 = vpack.c.b16 %v1937, %v1933
  %v2738 = vpack.c.b16 %v1938, %v1934
  %v2739 = vpack.c.b16 %v1939, %v1935
  %v2740 = vpack.c.b16 %v1940, %v1936
  %v2741 = vpack.c.b16 %v1945, %v1941
  %v2742 = vpack.c.b16 %v1946, %v1942
  %v2743 = vpack.c.b16 %v1947, %v1943
  %v2744 = vpack.c.b16 %v1948, %v1944
  %v2745 = vpack.c.b16 %v1953, %v1949
  %v2746 = vpack.c.b16 %v1954, %v1950
  %v2747 = vpack.c.b16 %v1955, %v1951
  %v2748 = vpack.c.b16 %v1956, %v1952
  %v2749 = vpack.c.b16 %v1961, %v1957
  %v2750 = vpack.c.b16 %v1962, %v1958
  %v2751 = vpack.c.b16 %v1963, %v1959
  %v2752 = vpack.c.b16 %v1964, %v1960
  %v2753 = vpack.c.b16 %v1969, %v1965
  %v2754 = vpack.c.b16 %v1970, %v1966
  %v2755 = vpack.c.b16 %v1971, %v1967
  %v2756 = vpack.c.b16 %v1972, %v1968
  %v2757 = vpack.c.b16 %v1977, %v1973
  %v2758 = vpack.c.b16 %v1978, %v1974
  %v2759 = vpack.c.b16 %v1979, %v1975
  %v2760 = vpack.c.b16 %v1980, %v1976
  %v2761 = vpack.c.b16 %v1985, %v1981
  %v2762 = vpack.c.b16 %v1986, %v1982
  %v2763 = vpack.c.b16 %v1987, %v1983
  %v2764 = vpack.c.b16 %v1988, %v1984
  %v2765 = vpack.c.b16 %v1993, %v1989
  %v2766 = vpack.c.b16 %v1994, %v1990
  %v2767 = vpack.c.b16 %v1995, %v1991
  %v2768 = vpack.c.b16 %v1996, %v1992
  %v2769 = vpack.c.b16 %v2001, %v1997
  %v2770 = vpack.c.b16 %v2002, %v1998
  %v2771 = vpack.c.b16 %v2003, %v1999
  %v2772 = vpack.c.b16 %v2004, %v2000
  %v2773 = vpack.c.b16 %v2009, %v2005
  %v2774 = vpack.c.b16 %v2010, %v2006
  %v2775 = vpack.c.b16 %v2011, %v2007
  %v2776 = vpack.c.b16 %v2012, %v2008
  %v2777 = vpack.c.b16 %v2017, %v2013
  %v2778 = vpack.c.b16 %v2018, %v2014
  %v2779 = vpack.c.b16 %v2019, %v2015
  %v2780 = vpack.c.b16 %v2020, %v2016
  %v2781 = vpack.c.b16 %v2025, %v2021
  %v2782 = vpack.c.b16 %v2026, %v2022
  %v2783 = vpack.c.b16 %v2027, %v2023
  %v2784 = vpack.c.b16 %v2028, %v2024
  %v2785 = vpack.c.b16 %v2033, %v2029
  %v2786 = vpack.c.b16 %v2034, %v2030
  %v2787 = vpack.c.b16 %v2035, %v2031
  %v2788 = vpack.c.b16 %v2036, %v2032
  %v2789 = vpack.c.b16 %v2041, %v2037
  %v2790 = vpack.c.b16 %v2042, %v2038
  %v2791 = vpack.c.b16 %v2043, %v2039
  %v2792 = vpack.c.b16 %v2044, %v2040
  %v2793 = vpack.c.b16 %v2049, %v2045
  %v2794 = vpack.c.b16 %v2050, %v2046
  %v2795 = vpack.c.b16 %v2051, %v2047
  %v2796 = vpack.c.b16 %v2052, %v2048
  %v2797 = vpack.c.b16 %v2057, %v2053
  %v2798 = vpack.c.b16 %v2058, %v2054
  %v2799 = vpack.c.b16 %v2059, %v2055
  %v2800 = vpack.c.b16 %v2060, %v2056
  %v2801 = vpack.c.b16 %v2065, %v2061
  %v2802 = vpack.c.b16 %v2066, %v2062
  %v2803 = vpack.c.b16 %v2067, %v2063
  %v2804 = vpack.c.b16 %v2068, %v2064
  %v2805 = vpack.c.b16 %v2073, %v2069
  %v2806 = vpack.c.b16 %v2074, %v2070
  %v2807 = vpack.c.b16 %v2075, %v2071
  %v2808 = vpack.c.b16 %v2076, %v2072
  %v2809 = vpack.c.b16 %v2081, %v2077
  %v2810 = vpack.c.b16 %v2082, %v2078
  %v2811 = vpack.c.b16 %v2083, %v2079
  %v2812 = vpack.c.b16 %v2084, %v2080
  %v2813 = vpack.c.b16 %v2089, %v2085
  %v2814 = vpack.c.b16 %v2090, %v2086
  %v2815 = vpack.c.b16 %v2091, %v2087
  %v2816 = vpack.c.b16 %v2092, %v2088
  %v2817 = vpack.c.b16 %v2097, %v2093
  %v2818 = vpack.c.b16 %v2098, %v2094
  %v2819 = vpack.c.b16 %v2099, %v2095
  %v2820 = vpack.c.b16 %v2100, %v2096
  %v2821 = vpack.c.b16 %v2105, %v2101
  %v2822 = vpack.c.b16 %v2106, %v2102
  %v2823 = vpack.c.b16 %v2107, %v2103
  %v2824 = vpack.c.b16 %v2108, %v2104
  %v2825 = vpack.c.b16 %v2113, %v2109
  %v2826 = vpack.c.b16 %v2114, %v2110
  %v2827 = vpack.c.b16 %v2115, %v2111
  %v2828 = vpack.c.b16 %v2116, %v2112
  %v2829 = vpack.c.b16 %v2121, %v2117
  %v2830 = vpack.c.b16 %v2122, %v2118
  %v2831 = vpack.c.b16 %v2123, %v2119
  %v2832 = vpack.c.b16 %v2124, %v2120
  %v2833 = vpack.c.b16 %v2129, %v2125
  %v2834 = vpack.c.b16 %v2130, %v2126
  %v2835 = vpack.c.b16 %v2131, %v2127
  %v2836 = vpack.c.b16 %v2132, %v2128
  %v2837 = vpack.c.b16 %v2137, %v2133
  %v2838 = vpack.c.b16 %v2138, %v2134
  %v2839 = vpack.c.b16 %v2139, %v2135
  %v2840 = vpack.c.b16 %v2140, %v2136
  %v2841 = vpack.c.b16 %v2145, %v2141
  %v2842 = vpack.c.b16 %v2146, %v2142
  %v2843 = vpack.c.b16 %v2147, %v2143
  %v2844 = vpack.c.b16 %v2148, %v2144
  %v2845 = vpack.c.b16 %v2153, %v2149
  %v2846 = vpack.c.b16 %v2154, %v2150
  %v2847 = vpack.c.b16 %v2155, %v2151
  %v2848 = vpack.c.b16 %v2156, %v2152
  %v2849 = vpack.c.b16 %v2161, %v2157
  %v2850 = vpack.c.b16 %v2162, %v2158
  %v2851 = vpack.c.b16 %v2163, %v2159
  %v2852 = vpack.c.b16 %v2164, %v2160
  %v2853 = vpack.c.b16 %v2169, %v2165
  %v2854 = vpack.c.b16 %v2170, %v2166
  %v2855 = vpack.c.b16 %v2171, %v2167
  %v2856 = vpack.c.b16 %v2172, %v2168
  %v2857 = vpack.c.b16 %v2177, %v2173
  %v2858 = vpack.c.b16 %v2178, %v2174
  %v2859 = vpack.c.b16 %v2179, %v2175
  %v2860 = vpack.c.b16 %v2180, %v2176
  %v2861 = vpack.c.b16 %v2185, %v2181
  %v2862 = vpack.c.b16 %v2186, %v2182
  %v2863 = vpack.c.b16 %v2187, %v2183
  %v2864 = vpack.c.b16 %v2188, %v2184
  %v2865 = vpack.c.b16 %v2193, %v2189
  %v2866 = vpack.c.b16 %v2194, %v2190
  %v2867 = vpack.c.b16 %v2195, %v2191
  %v2868 = vpack.c.b16 %v2196, %v2192
  %v2869 = vpack.c.b16 %v2201, %v2197
  %v2870 = vpack.c.b16 %v2202, %v2198
  %v2871 = vpack.c.b16 %v2203, %v2199
  %v2872 = vpack.c.b16 %v2204, %v2200
  %v2873 = vpack.c.b16 %v2209, %v2205
  %v2874 = vpack.c.b16 %v2210, %v2206
  %v2875 = vpack.c.b16 %v2211, %v2207
  %v2876 = vpack.c.b16 %v2212, %v2208
  %v2877 = vpack.c.b16 %v2217, %v2213
  %v2878 = vpack.c.b16 %v2218, %v2214
  %v2879 = vpack.c.b16 %v2219, %v2215
  %v2880 = vpack.c.b16 %v2220, %v2216
  %v2881 = vpack.c.b16 %v2225, %v2221
  %v2882 = vpack.c.b16 %v2226, %v2222
  %v2883 = vpack.c.b16 %v2227, %v2223
  %v2884 = vpack.c.b16 %v2228, %v2224
  %v2885 = vpack.c.b16 %v2233, %v2229
  %v2886 = vpack.c.b16 %v2234, %v2230
  %v2887 = vpack.c.b16 %v2235, %v2231
  %v2888 = vpack.c.b16 %v2236, %v2232
  %v2889 = vpack.c.b16 %v2241, %v2237
  %v2890 = vpack.c.b16 %v2242, %v2238
  %v2891 = vpack.c.b16 %v2243, %v2239
  %v2892 = vpack.c.b16 %v2244, %v2240
  %v2893 = vpack.c.b16 %v2249, %v2245
  %v2894 = vpack.c.b16 %v2250, %v2246
  %v2895 = vpack.c.b16 %v2251, %v2247
  %v2896 = vpack.c.b16 %v2252, %v2248
  %v2897 = vpack.c.b16 %v2257, %v2253
  %v2898 = vpack.c.b16 %v2258, %v2254
  %v2899 = vpack.c.b16 %v2259, %v2255
  %v2900 = vpack.c.b16 %v2260, %v2256
  %v2901 = vpack.c.b16 %v2265, %v2261
  %v2902 = vpack.c.b16 %v2266, %v2262
  %v2903 = vpack.c.b16 %v2267, %v2263
  %v2904 = vpack.c.b16 %v2268, %v2264
  %v2905 = vpack.c.b16 %v2273, %v2269
  %v2906 = vpack.c.b16 %v2274, %v2270
  %v2907 = vpack.c.b16 %v2275, %v2271
  %v2908 = vpack.c.b16 %v2276, %v2272
  %v2909 = vpack.c.b16 %v2281, %v2277
  %v2910 = vpack.c.b16 %v2282, %v2278
  %v2911 = vpack.c.b16 %v2283, %v2279
  %v2912 = vpack.c.b16 %v2284, %v2280
  %v2913 = vpack.c.b16 %v2289, %v2285
  %v2914 = vpack.c.b16 %v2290, %v2286
  %v2915 = vpack.c.b16 %v2291, %v2287
  %v2916 = vpack.c.b16 %v2292, %v2288
  %v2917 = vpack.c.b16 %v2297, %v2293
  %v2918 = vpack.c.b16 %v2298, %v2294
  %v2919 = vpack.c.b16 %v2299, %v2295
  %v2920 = vpack.c.b16 %v2300, %v2296
  %v2921 = vpack.c.b16 %v2305, %v2301
  %v2922 = vpack.c.b16 %v2306, %v2302
  %v2923 = vpack.c.b16 %v2307, %v2303
  %v2924 = vpack.c.b16 %v2308, %v2304
  %v2925 = vpack.c.b16 %v2313, %v2309
  %v2926 = vpack.c.b16 %v2314, %v2310
  %v2927 = vpack.c.b16 %v2315, %v2311
  %v2928 = vpack.c.b16 %v2316, %v2312
  %v2929 = vpack.c.b16 %v2321, %v2317
  %v2930 = vpack.c.b16 %v2322, %v2318
  %v2931 = vpack.c.b16 %v2323, %v2319
  %v2932 = vpack.c.b16 %v2324, %v2320
  %v2933 = vpack.c.b16 %v2329, %v2325
  %v2934 = vpack.c.b16 %v2330, %v2326
  %v2935 = vpack.c.b16 %v2331, %v2327
  %v2936 = vpack.c.b16 %v2332, %v2328
  %v2937 = vpack.c.b16 %v2337, %v2333
  %v2938 = vpack.c.b16 %v2338, %v2334
  %v2939 = vpack.c.b16 %v2339, %v2335
  %v2940 = vpack.c.b16 %v2340, %v2336
  %v2941 = vpack.c.b16 %v2345, %v2341
  %v2942 = vpack.c.b16 %v2346, %v2342
  %v2943 = vpack.c.b16 %v2347, %v2343
  %v2944 = vpack.c.b16 %v2348, %v2344
  %v2945 = vpack.c.b16 %v2353, %v2349
  %v2946 = vpack.c.b16 %v2354, %v2350
  %v2947 = vpack.c.b16 %v2355, %v2351
  %v2948 = vpack.c.b16 %v2356, %v2352
  %v2949 = vpack.c.b16 %v2361, %v2357
  %v2950 = vpack.c.b16 %v2362, %v2358
  %v2951 = vpack.c.b16 %v2363, %v2359
  %v2952 = vpack.c.b16 %v2364, %v2360
  %v2953 = vpack.c.b16 %v2369, %v2365
  %v2954 = vpack.c.b16 %v2370, %v2366
  %v2955 = vpack.c.b16 %v2371, %v2367
  %v2956 = vpack.c.b16 %v2372, %v2368
  %v2957 = vpack.c.b16 %v2377, %v2373
  %v2958 = vpack.c.b16 %v2378, %v2374
  %v2959 = vpack.c.b16 %v2379, %v2375
  %v2960 = vpack.c.b16 %v2380, %v2376
  %v2961 = vpack.c.b16 %v2385, %v2381
  %v2962 = vpack.c.b16 %v2386, %v2382
  %v2963 = vpack.c.b16 %v2387, %v2383
  %v2964 = vpack.c.b16 %v2388, %v2384
  %3541 = vmatpush.bf16.msra.mxu0 %v2417
  %3542 = vmatpush.bf16.msra.mxu0 %v2413
  %3543 = vmatpush.bf16.msra.mxu0 %v2409
  %3544 = vmatpush.bf16.msra.mxu0 %v2405
  %3545 = vmatpush.bf16.msra.mxu0 %v2401
  %3546 = vmatpush.bf16.msra.mxu0 %v2397
  %3547 = vmatpush.bf16.msra.mxu0 %v2393
  %3548 = vmatpush.bf16.msra.mxu0 %v2389
  %3549 = vmatmul.bf16.gmra.mxu0 %v625
  %v3550 = vpop.f32.mrf.mxu0
  %v3551 = vadd.f32 0.0, %v3550
  %v3552 = vpop.f32.mrf.mxu0
  %3553 = vdwg.mxu0
  %3554 = vmatpush.bf16.msra.mxu0 %v2449
  %3555 = vmatpush.bf16.msra.mxu0 %v2445
  %3556 = vmatpush.bf16.msra.mxu0 %v2441
  %3557 = vmatpush.bf16.msra.mxu0 %v2437
  %3558 = vmatpush.bf16.msra.mxu0 %v2433
  %3559 = vmatpush.bf16.msra.mxu0 %v2429
  %3560 = vmatpush.bf16.msra.mxu0 %v2425
  %3561 = vmatpush.bf16.msra.mxu0 %v2421
  %3562 = vmatmul.bf16.gmra.mxu0 %v626
  %v3563 = vpop.f32.mrf.mxu0
  %v3564 = vadd.f32 %v3551, %v3563
  %v3565 = vpop.f32.mrf.mxu0
  %3566 = vdwg.mxu0
  %3567 = vmatpush.bf16.msra.mxu0 %v2481
  %3568 = vmatpush.bf16.msra.mxu0 %v2477
  %3569 = vmatpush.bf16.msra.mxu0 %v2473
  %3570 = vmatpush.bf16.msra.mxu0 %v2469
  %3571 = vmatpush.bf16.msra.mxu0 %v2465
  %3572 = vmatpush.bf16.msra.mxu0 %v2461
  %3573 = vmatpush.bf16.msra.mxu0 %v2457
  %3574 = vmatpush.bf16.msra.mxu0 %v2453
  %3575 = vmatmul.bf16.gmra.mxu0 %v627
  %v3576 = vpop.f32.mrf.mxu0
  %v3577 = vadd.f32 %v3564, %v3576
  %v3578 = vpop.f32.mrf.mxu0
  %3579 = vdwg.mxu0
  %3580 = vmatpush.bf16.msra.mxu0 %v2513
  %3581 = vmatpush.bf16.msra.mxu0 %v2509
  %3582 = vmatpush.bf16.msra.mxu0 %v2505
  %3583 = vmatpush.bf16.msra.mxu0 %v2501
  %3584 = vmatpush.bf16.msra.mxu0 %v2497
  %3585 = vmatpush.bf16.msra.mxu0 %v2493
  %3586 = vmatpush.bf16.msra.mxu0 %v2489
  %3587 = vmatpush.bf16.msra.mxu0 %v2485
  %3588 = vmatmul.bf16.gmra.mxu0 %v628
  %v3589 = vpop.f32.mrf.mxu0
  %v3590 = vadd.f32 %v3577, %v3589
  %v3591 = vpop.f32.mrf.mxu0
  %3592 = vdwg.mxu0
  %3593 = vmatpush.bf16.msra.mxu0 %v2545
  %3594 = vmatpush.bf16.msra.mxu0 %v2541
  %3595 = vmatpush.bf16.msra.mxu0 %v2537
  %3596 = vmatpush.bf16.msra.mxu0 %v2533
  %3597 = vmatpush.bf16.msra.mxu0 %v2529
  %3598 = vmatpush.bf16.msra.mxu0 %v2525
  %3599 = vmatpush.bf16.msra.mxu0 %v2521
  %3600 = vmatpush.bf16.msra.mxu0 %v2517
  %3601 = vmatmul.bf16.gmra.mxu0 %v629
  %v3602 = vpop.f32.mrf.mxu0
  %v3603 = vadd.f32 %v3590, %v3602
  %v3604 = vpop.f32.mrf.mxu0
  %3605 = vdwg.mxu0
  %3606 = vmatpush.bf16.msra.mxu0 %v2577
  %3607 = vmatpush.bf16.msra.mxu0 %v2573
  %3608 = vmatpush.bf16.msra.mxu0 %v2569
  %3609 = vmatpush.bf16.msra.mxu0 %v2565
  %3610 = vmatpush.bf16.msra.mxu0 %v2561
  %3611 = vmatpush.bf16.msra.mxu0 %v2557
  %3612 = vmatpush.bf16.msra.mxu0 %v2553
  %3613 = vmatpush.bf16.msra.mxu0 %v2549
  %3614 = vmatmul.bf16.gmra.mxu0 %v630
  %v3615 = vpop.f32.mrf.mxu0
  %v3616 = vadd.f32 %v3603, %v3615
  %v3617 = vpop.f32.mrf.mxu0
  %3618 = vdwg.mxu0
  %3619 = vmatpush.bf16.msra.mxu0 %v2609
  %3620 = vmatpush.bf16.msra.mxu0 %v2605
  %3621 = vmatpush.bf16.msra.mxu0 %v2601
  %3622 = vmatpush.bf16.msra.mxu0 %v2597
  %3623 = vmatpush.bf16.msra.mxu0 %v2593
  %3624 = vmatpush.bf16.msra.mxu0 %v2589
  %3625 = vmatpush.bf16.msra.mxu0 %v2585
  %3626 = vmatpush.bf16.msra.mxu0 %v2581
  %3627 = vmatmul.bf16.gmra.mxu0 %v631
  %v3628 = vpop.f32.mrf.mxu0
  %v3629 = vadd.f32 %v3616, %v3628
  %v3630 = vpop.f32.mrf.mxu0
  %3631 = vdwg.mxu0
  %3632 = vmatpush.bf16.msra.mxu0 %v2641
  %3633 = vmatpush.bf16.msra.mxu0 %v2637
  %3634 = vmatpush.bf16.msra.mxu0 %v2633
  %3635 = vmatpush.bf16.msra.mxu0 %v2629
  %3636 = vmatpush.bf16.msra.mxu0 %v2625
  %3637 = vmatpush.bf16.msra.mxu0 %v2621
  %3638 = vmatpush.bf16.msra.mxu0 %v2617
  %3639 = vmatpush.bf16.msra.mxu0 %v2613
  %3640 = vmatmul.bf16.gmra.mxu0 %v632
  %v3641 = vpop.f32.mrf.mxu0
  %v3642 = vadd.f32 %v3629, %v3641
  %v3643 = vpop.f32.mrf.mxu0
  %3644 = vdwg.mxu0
  %3645 = vmatpush.bf16.msra.mxu0 %v2673
  %3646 = vmatpush.bf16.msra.mxu0 %v2669
  %3647 = vmatpush.bf16.msra.mxu0 %v2665
  %3648 = vmatpush.bf16.msra.mxu0 %v2661
  %3649 = vmatpush.bf16.msra.mxu0 %v2657
  %3650 = vmatpush.bf16.msra.mxu0 %v2653
  %3651 = vmatpush.bf16.msra.mxu0 %v2649
  %3652 = vmatpush.bf16.msra.mxu0 %v2645
  %3653 = vmatmul.bf16.gmra.mxu0 %v633
  %v3654 = vpop.f32.mrf.mxu0
  %v3655 = vadd.f32 %v3642, %v3654
  %v3656 = vpop.f32.mrf.mxu0
  %3657 = vdwg.mxu0
  %3658 = vmatpush.bf16.msra.mxu0 %v2705
  %3659 = vmatpush.bf16.msra.mxu0 %v2701
  %3660 = vmatpush.bf16.msra.mxu0 %v2697
  %3661 = vmatpush.bf16.msra.mxu0 %v2693
  %3662 = vmatpush.bf16.msra.mxu0 %v2689
  %3663 = vmatpush.bf16.msra.mxu0 %v2685
  %3664 = vmatpush.bf16.msra.mxu0 %v2681
  %3665 = vmatpush.bf16.msra.mxu0 %v2677
  %3666 = vmatmul.bf16.gmra.mxu0 %v634
  %v3667 = vpop.f32.mrf.mxu0
  %v3668 = vadd.f32 %v3655, %v3667
  %v3669 = vpop.f32.mrf.mxu0
  %3670 = vdwg.mxu0
  %3671 = vmatpush.bf16.msra.mxu0 %v2737
  %3672 = vmatpush.bf16.msra.mxu0 %v2733
  %3673 = vmatpush.bf16.msra.mxu0 %v2729
  %3674 = vmatpush.bf16.msra.mxu0 %v2725
  %3675 = vmatpush.bf16.msra.mxu0 %v2721
  %3676 = vmatpush.bf16.msra.mxu0 %v2717
  %3677 = vmatpush.bf16.msra.mxu0 %v2713
  %3678 = vmatpush.bf16.msra.mxu0 %v2709
  %3679 = vmatmul.bf16.gmra.mxu0 %v635
  %v3680 = vpop.f32.mrf.mxu0
  %v3681 = vadd.f32 %v3668, %v3680
  %v3682 = vpop.f32.mrf.mxu0
  %3683 = vdwg.mxu0
  %3684 = vmatpush.bf16.msra.mxu0 %v2769
  %3685 = vmatpush.bf16.msra.mxu0 %v2765
  %3686 = vmatpush.bf16.msra.mxu0 %v2761
  %3687 = vmatpush.bf16.msra.mxu0 %v2757
  %3688 = vmatpush.bf16.msra.mxu0 %v2753
  %3689 = vmatpush.bf16.msra.mxu0 %v2749
  %3690 = vmatpush.bf16.msra.mxu0 %v2745
  %3691 = vmatpush.bf16.msra.mxu0 %v2741
  %3692 = vmatmul.bf16.gmra.mxu0 %v636
  %v3693 = vpop.f32.mrf.mxu0
  %v3694 = vadd.f32 %v3681, %v3693
  %v3695 = vpop.f32.mrf.mxu0
  %3696 = vdwg.mxu0
  %3697 = vmatpush.bf16.msra.mxu0 %v2801
  %3698 = vmatpush.bf16.msra.mxu0 %v2797
  %3699 = vmatpush.bf16.msra.mxu0 %v2793
  %3700 = vmatpush.bf16.msra.mxu0 %v2789
  %3701 = vmatpush.bf16.msra.mxu0 %v2785
  %3702 = vmatpush.bf16.msra.mxu0 %v2781
  %3703 = vmatpush.bf16.msra.mxu0 %v2777
  %3704 = vmatpush.bf16.msra.mxu0 %v2773
  %3705 = vmatmul.bf16.gmra.mxu0 %v637
  %v3706 = vpop.f32.mrf.mxu0
  %v3707 = vadd.f32 %v3694, %v3706
  %v3708 = vpop.f32.mrf.mxu0
  %3709 = vdwg.mxu0
  %3710 = vmatpush.bf16.msra.mxu0 %v2833
  %3711 = vmatpush.bf16.msra.mxu0 %v2829
  %3712 = vmatpush.bf16.msra.mxu0 %v2825
  %3713 = vmatpush.bf16.msra.mxu0 %v2821
  %3714 = vmatpush.bf16.msra.mxu0 %v2817
  %3715 = vmatpush.bf16.msra.mxu0 %v2813
  %3716 = vmatpush.bf16.msra.mxu0 %v2809
  %3717 = vmatpush.bf16.msra.mxu0 %v2805
  %3718 = vmatmul.bf16.gmra.mxu0 %v638
  %v3719 = vpop.f32.mrf.mxu0
  %v3720 = vadd.f32 %v3707, %v3719
  %v3721 = vpop.f32.mrf.mxu0
  %3722 = vdwg.mxu0
  %3723 = vmatpush.bf16.msra.mxu0 %v2865
  %3724 = vmatpush.bf16.msra.mxu0 %v2861
  %3725 = vmatpush.bf16.msra.mxu0 %v2857
  %3726 = vmatpush.bf16.msra.mxu0 %v2853
  %3727 = vmatpush.bf16.msra.mxu0 %v2849
  %3728 = vmatpush.bf16.msra.mxu0 %v2845
  %3729 = vmatpush.bf16.msra.mxu0 %v2841
  %3730 = vmatpush.bf16.msra.mxu0 %v2837
  %3731 = vmatmul.bf16.gmra.mxu0 %v639
  %v3732 = vpop.f32.mrf.mxu0
  %v3733 = vadd.f32 %v3720, %v3732
  %v3734 = vpop.f32.mrf.mxu0
  %3735 = vdwg.mxu0
  %3736 = vmatpush.bf16.msra.mxu0 %v2897
  %3737 = vmatpush.bf16.msra.mxu0 %v2893
  %3738 = vmatpush.bf16.msra.mxu0 %v2889
  %3739 = vmatpush.bf16.msra.mxu0 %v2885
  %3740 = vmatpush.bf16.msra.mxu0 %v2881
  %3741 = vmatpush.bf16.msra.mxu0 %v2877
  %3742 = vmatpush.bf16.msra.mxu0 %v2873
  %3743 = vmatpush.bf16.msra.mxu0 %v2869
  %3744 = vmatmul.bf16.gmra.mxu0 %v640
  %v3745 = vpop.f32.mrf.mxu0
  %v3746 = vadd.f32 %v3733, %v3745
  %v3747 = vpop.f32.mrf.mxu0
  %3748 = vdwg.mxu0
  %3749 = vmatpush.bf16.msra.mxu0 %v2929
  %3750 = vmatpush.bf16.msra.mxu0 %v2925
  %3751 = vmatpush.bf16.msra.mxu0 %v2921
  %3752 = vmatpush.bf16.msra.mxu0 %v2917
  %3753 = vmatpush.bf16.msra.mxu0 %v2913
  %3754 = vmatpush.bf16.msra.mxu0 %v2909
  %3755 = vmatpush.bf16.msra.mxu0 %v2905
  %3756 = vmatpush.bf16.msra.mxu0 %v2901
  %3757 = vmatmul.bf16.gmra.mxu0 %v641
  %v3758 = vpop.f32.mrf.mxu0
  %v3759 = vadd.f32 %v3746, %v3758
  %v3760 = vpop.f32.mrf.mxu0
  %3761 = vdwg.mxu0
  %3762 = vmatpush.bf16.msra.mxu0 %v2961
  %3763 = vmatpush.bf16.msra.mxu0 %v2957
  %3764 = vmatpush.bf16.msra.mxu0 %v2953
  %3765 = vmatpush.bf16.msra.mxu0 %v2949
  %3766 = vmatpush.bf16.msra.mxu0 %v2945
  %3767 = vmatpush.bf16.msra.mxu0 %v2941
  %3768 = vmatpush.bf16.msra.mxu0 %v2937
  %3769 = vmatpush.bf16.msra.mxu0 %v2933
  %3770 = vmatmul.bf16.gmra.mxu0 %v642
  %v3771 = vpop.f32.mrf.mxu0
  %v3772 = vadd.f32 %v3759, %v3771
  %v3773 = vpop.f32.mrf.mxu0
  %3774 = vdwg.mxu0
  %3775 = vmatpush.bf16.msra.mxu0 %v2418
  %3776 = vmatpush.bf16.msra.mxu0 %v2414
  %3777 = vmatpush.bf16.msra.mxu0 %v2410
  %3778 = vmatpush.bf16.msra.mxu0 %v2406
  %3779 = vmatpush.bf16.msra.mxu0 %v2402
  %3780 = vmatpush.bf16.msra.mxu0 %v2398
  %3781 = vmatpush.bf16.msra.mxu0 %v2394
  %3782 = vmatpush.bf16.msra.mxu0 %v2390
  %3783 = vmatmul.bf16.gmra.mxu0 %v625
  %v3784 = vpop.f32.mrf.mxu0
  %v3785 = vadd.f32 0.0, %v3784
  %v3786 = vpop.f32.mrf.mxu0
  %3787 = vdwg.mxu0
  %3788 = vmatpush.bf16.msra.mxu0 %v2450
  %3789 = vmatpush.bf16.msra.mxu0 %v2446
  %3790 = vmatpush.bf16.msra.mxu0 %v2442
  %3791 = vmatpush.bf16.msra.mxu0 %v2438
  %3792 = vmatpush.bf16.msra.mxu0 %v2434
  %3793 = vmatpush.bf16.msra.mxu0 %v2430
  %3794 = vmatpush.bf16.msra.mxu0 %v2426
  %3795 = vmatpush.bf16.msra.mxu0 %v2422
  %3796 = vmatmul.bf16.gmra.mxu0 %v626
  %v3797 = vpop.f32.mrf.mxu0
  %v3798 = vadd.f32 %v3785, %v3797
  %v3799 = vpop.f32.mrf.mxu0
  %3800 = vdwg.mxu0
  %3801 = vmatpush.bf16.msra.mxu0 %v2482
  %3802 = vmatpush.bf16.msra.mxu0 %v2478
  %3803 = vmatpush.bf16.msra.mxu0 %v2474
  %3804 = vmatpush.bf16.msra.mxu0 %v2470
  %3805 = vmatpush.bf16.msra.mxu0 %v2466
  %3806 = vmatpush.bf16.msra.mxu0 %v2462
  %3807 = vmatpush.bf16.msra.mxu0 %v2458
  %3808 = vmatpush.bf16.msra.mxu0 %v2454
  %3809 = vmatmul.bf16.gmra.mxu0 %v627
  %v3810 = vpop.f32.mrf.mxu0
  %v3811 = vadd.f32 %v3798, %v3810
  %v3812 = vpop.f32.mrf.mxu0
  %3813 = vdwg.mxu0
  %3814 = vmatpush.bf16.msra.mxu0 %v2514
  %3815 = vmatpush.bf16.msra.mxu0 %v2510
  %3816 = vmatpush.bf16.msra.mxu0 %v2506
  %3817 = vmatpush.bf16.msra.mxu0 %v2502
  %3818 = vmatpush.bf16.msra.mxu0 %v2498
  %3819 = vmatpush.bf16.msra.mxu0 %v2494
  %3820 = vmatpush.bf16.msra.mxu0 %v2490
  %3821 = vmatpush.bf16.msra.mxu0 %v2486
  %3822 = vmatmul.bf16.gmra.mxu0 %v628
  %v3823 = vpop.f32.mrf.mxu0
  %v3824 = vadd.f32 %v3811, %v3823
  %v3825 = vpop.f32.mrf.mxu0
  %3826 = vdwg.mxu0
  %3827 = vmatpush.bf16.msra.mxu0 %v2546
  %3828 = vmatpush.bf16.msra.mxu0 %v2542
  %3829 = vmatpush.bf16.msra.mxu0 %v2538
  %3830 = vmatpush.bf16.msra.mxu0 %v2534
  %3831 = vmatpush.bf16.msra.mxu0 %v2530
  %3832 = vmatpush.bf16.msra.mxu0 %v2526
  %3833 = vmatpush.bf16.msra.mxu0 %v2522
  %3834 = vmatpush.bf16.msra.mxu0 %v2518
  %3835 = vmatmul.bf16.gmra.mxu0 %v629
  %v3836 = vpop.f32.mrf.mxu0
  %v3837 = vadd.f32 %v3824, %v3836
  %v3838 = vpop.f32.mrf.mxu0
  %3839 = vdwg.mxu0
  %3840 = vmatpush.bf16.msra.mxu0 %v2578
  %3841 = vmatpush.bf16.msra.mxu0 %v2574
  %3842 = vmatpush.bf16.msra.mxu0 %v2570
  %3843 = vmatpush.bf16.msra.mxu0 %v2566
  %3844 = vmatpush.bf16.msra.mxu0 %v2562
  %3845 = vmatpush.bf16.msra.mxu0 %v2558
  %3846 = vmatpush.bf16.msra.mxu0 %v2554
  %3847 = vmatpush.bf16.msra.mxu0 %v2550
  %3848 = vmatmul.bf16.gmra.mxu0 %v630
  %v3849 = vpop.f32.mrf.mxu0
  %v3850 = vadd.f32 %v3837, %v3849
  %v3851 = vpop.f32.mrf.mxu0
  %3852 = vdwg.mxu0
  %3853 = vmatpush.bf16.msra.mxu0 %v2610
  %3854 = vmatpush.bf16.msra.mxu0 %v2606
  %3855 = vmatpush.bf16.msra.mxu0 %v2602
  %3856 = vmatpush.bf16.msra.mxu0 %v2598
  %3857 = vmatpush.bf16.msra.mxu0 %v2594
  %3858 = vmatpush.bf16.msra.mxu0 %v2590
  %3859 = vmatpush.bf16.msra.mxu0 %v2586
  %3860 = vmatpush.bf16.msra.mxu0 %v2582
  %3861 = vmatmul.bf16.gmra.mxu0 %v631
  %v3862 = vpop.f32.mrf.mxu0
  %v3863 = vadd.f32 %v3850, %v3862
  %v3864 = vpop.f32.mrf.mxu0
  %3865 = vdwg.mxu0
  %3866 = vmatpush.bf16.msra.mxu0 %v2642
  %3867 = vmatpush.bf16.msra.mxu0 %v2638
  %3868 = vmatpush.bf16.msra.mxu0 %v2634
  %3869 = vmatpush.bf16.msra.mxu0 %v2630
  %3870 = vmatpush.bf16.msra.mxu0 %v2626
  %3871 = vmatpush.bf16.msra.mxu0 %v2622
  %3872 = vmatpush.bf16.msra.mxu0 %v2618
  %3873 = vmatpush.bf16.msra.mxu0 %v2614
  %3874 = vmatmul.bf16.gmra.mxu0 %v632
  %v3875 = vpop.f32.mrf.mxu0
  %v3876 = vadd.f32 %v3863, %v3875
  %v3877 = vpop.f32.mrf.mxu0
  %3878 = vdwg.mxu0
  %3879 = vmatpush.bf16.msra.mxu0 %v2674
  %3880 = vmatpush.bf16.msra.mxu0 %v2670
  %3881 = vmatpush.bf16.msra.mxu0 %v2666
  %3882 = vmatpush.bf16.msra.mxu0 %v2662
  %3883 = vmatpush.bf16.msra.mxu0 %v2658
  %3884 = vmatpush.bf16.msra.mxu0 %v2654
  %3885 = vmatpush.bf16.msra.mxu0 %v2650
  %3886 = vmatpush.bf16.msra.mxu0 %v2646
  %3887 = vmatmul.bf16.gmra.mxu0 %v633
  %v3888 = vpop.f32.mrf.mxu0
  %v3889 = vadd.f32 %v3876, %v3888
  %v3890 = vpop.f32.mrf.mxu0
  %3891 = vdwg.mxu0
  %3892 = vmatpush.bf16.msra.mxu0 %v2706
  %3893 = vmatpush.bf16.msra.mxu0 %v2702
  %3894 = vmatpush.bf16.msra.mxu0 %v2698
  %3895 = vmatpush.bf16.msra.mxu0 %v2694
  %3896 = vmatpush.bf16.msra.mxu0 %v2690
  %3897 = vmatpush.bf16.msra.mxu0 %v2686
  %3898 = vmatpush.bf16.msra.mxu0 %v2682
  %3899 = vmatpush.bf16.msra.mxu0 %v2678
  %3900 = vmatmul.bf16.gmra.mxu0 %v634
  %v3901 = vpop.f32.mrf.mxu0
  %v3902 = vadd.f32 %v3889, %v3901
  %v3903 = vpop.f32.mrf.mxu0
  %3904 = vdwg.mxu0
  %3905 = vmatpush.bf16.msra.mxu0 %v2738
  %3906 = vmatpush.bf16.msra.mxu0 %v2734
  %3907 = vmatpush.bf16.msra.mxu0 %v2730
  %3908 = vmatpush.bf16.msra.mxu0 %v2726
  %3909 = vmatpush.bf16.msra.mxu0 %v2722
  %3910 = vmatpush.bf16.msra.mxu0 %v2718
  %3911 = vmatpush.bf16.msra.mxu0 %v2714
  %3912 = vmatpush.bf16.msra.mxu0 %v2710
  %3913 = vmatmul.bf16.gmra.mxu0 %v635
  %v3914 = vpop.f32.mrf.mxu0
  %v3915 = vadd.f32 %v3902, %v3914
  %v3916 = vpop.f32.mrf.mxu0
  %3917 = vdwg.mxu0
  %3918 = vmatpush.bf16.msra.mxu0 %v2770
  %3919 = vmatpush.bf16.msra.mxu0 %v2766
  %3920 = vmatpush.bf16.msra.mxu0 %v2762
  %3921 = vmatpush.bf16.msra.mxu0 %v2758
  %3922 = vmatpush.bf16.msra.mxu0 %v2754
  %3923 = vmatpush.bf16.msra.mxu0 %v2750
  %3924 = vmatpush.bf16.msra.mxu0 %v2746
  %3925 = vmatpush.bf16.msra.mxu0 %v2742
  %3926 = vmatmul.bf16.gmra.mxu0 %v636
  %v3927 = vpop.f32.mrf.mxu0
  %v3928 = vadd.f32 %v3915, %v3927
  %v3929 = vpop.f32.mrf.mxu0
  %3930 = vdwg.mxu0
  %3931 = vmatpush.bf16.msra.mxu0 %v2802
  %3932 = vmatpush.bf16.msra.mxu0 %v2798
  %3933 = vmatpush.bf16.msra.mxu0 %v2794
  %3934 = vmatpush.bf16.msra.mxu0 %v2790
  %3935 = vmatpush.bf16.msra.mxu0 %v2786
  %3936 = vmatpush.bf16.msra.mxu0 %v2782
  %3937 = vmatpush.bf16.msra.mxu0 %v2778
  %3938 = vmatpush.bf16.msra.mxu0 %v2774
  %3939 = vmatmul.bf16.gmra.mxu0 %v637
  %v3940 = vpop.f32.mrf.mxu0
  %v3941 = vadd.f32 %v3928, %v3940
  %v3942 = vpop.f32.mrf.mxu0
  %3943 = vdwg.mxu0
  %3944 = vmatpush.bf16.msra.mxu0 %v2834
  %3945 = vmatpush.bf16.msra.mxu0 %v2830
  %3946 = vmatpush.bf16.msra.mxu0 %v2826
  %3947 = vmatpush.bf16.msra.mxu0 %v2822
  %3948 = vmatpush.bf16.msra.mxu0 %v2818
  %3949 = vmatpush.bf16.msra.mxu0 %v2814
  %3950 = vmatpush.bf16.msra.mxu0 %v2810
  %3951 = vmatpush.bf16.msra.mxu0 %v2806
  %3952 = vmatmul.bf16.gmra.mxu0 %v638
  %v3953 = vpop.f32.mrf.mxu0
  %v3954 = vadd.f32 %v3941, %v3953
  %v3955 = vpop.f32.mrf.mxu0
  %3956 = vdwg.mxu0
  %3957 = vmatpush.bf16.msra.mxu0 %v2866
  %3958 = vmatpush.bf16.msra.mxu0 %v2862
  %3959 = vmatpush.bf16.msra.mxu0 %v2858
  %3960 = vmatpush.bf16.msra.mxu0 %v2854
  %3961 = vmatpush.bf16.msra.mxu0 %v2850
  %3962 = vmatpush.bf16.msra.mxu0 %v2846
  %3963 = vmatpush.bf16.msra.mxu0 %v2842
  %3964 = vmatpush.bf16.msra.mxu0 %v2838
  %3965 = vmatmul.bf16.gmra.mxu0 %v639
  %v3966 = vpop.f32.mrf.mxu0
  %v3967 = vadd.f32 %v3954, %v3966
  %v3968 = vpop.f32.mrf.mxu0
  %3969 = vdwg.mxu0
  %3970 = vmatpush.bf16.msra.mxu0 %v2898
  %3971 = vmatpush.bf16.msra.mxu0 %v2894
  %3972 = vmatpush.bf16.msra.mxu0 %v2890
  %3973 = vmatpush.bf16.msra.mxu0 %v2886
  %3974 = vmatpush.bf16.msra.mxu0 %v2882
  %3975 = vmatpush.bf16.msra.mxu0 %v2878
  %3976 = vmatpush.bf16.msra.mxu0 %v2874
  %3977 = vmatpush.bf16.msra.mxu0 %v2870
  %3978 = vmatmul.bf16.gmra.mxu0 %v640
  %v3979 = vpop.f32.mrf.mxu0
  %v3980 = vadd.f32 %v3967, %v3979
  %v3981 = vpop.f32.mrf.mxu0
  %3982 = vdwg.mxu0
  %3983 = vmatpush.bf16.msra.mxu0 %v2930
  %3984 = vmatpush.bf16.msra.mxu0 %v2926
  %3985 = vmatpush.bf16.msra.mxu0 %v2922
  %3986 = vmatpush.bf16.msra.mxu0 %v2918
  %3987 = vmatpush.bf16.msra.mxu0 %v2914
  %3988 = vmatpush.bf16.msra.mxu0 %v2910
  %3989 = vmatpush.bf16.msra.mxu0 %v2906
  %3990 = vmatpush.bf16.msra.mxu0 %v2902
  %3991 = vmatmul.bf16.gmra.mxu0 %v641
  %v3992 = vpop.f32.mrf.mxu0
  %v3993 = vadd.f32 %v3980, %v3992
  %v3994 = vpop.f32.mrf.mxu0
  %3995 = vdwg.mxu0
  %3996 = vmatpush.bf16.msra.mxu0 %v2962
  %3997 = vmatpush.bf16.msra.mxu0 %v2958
  %3998 = vmatpush.bf16.msra.mxu0 %v2954
  %3999 = vmatpush.bf16.msra.mxu0 %v2950
  %4000 = vmatpush.bf16.msra.mxu0 %v2946
  %4001 = vmatpush.bf16.msra.mxu0 %v2942
  %4002 = vmatpush.bf16.msra.mxu0 %v2938
  %4003 = vmatpush.bf16.msra.mxu0 %v2934
  %4004 = vmatmul.bf16.gmra.mxu0 %v642
  %v4005 = vpop.f32.mrf.mxu0
  %v4006 = vadd.f32 %v3993, %v4005
  %v4007 = vpop.f32.mrf.mxu0
  %4008 = vdwg.mxu0
  %4009 = vmatpush.bf16.msra.mxu0 %v2419
  %4010 = vmatpush.bf16.msra.mxu0 %v2415
  %4011 = vmatpush.bf16.msra.mxu0 %v2411
  %4012 = vmatpush.bf16.msra.mxu0 %v2407
  %4013 = vmatpush.bf16.msra.mxu0 %v2403
  %4014 = vmatpush.bf16.msra.mxu0 %v2399
  %4015 = vmatpush.bf16.msra.mxu0 %v2395
  %4016 = vmatpush.bf16.msra.mxu0 %v2391
  %4017 = vmatmul.bf16.gmra.mxu0 %v625
  %v4018 = vpop.f32.mrf.mxu0
  %v4019 = vadd.f32 0.0, %v4018
  %v4020 = vpop.f32.mrf.mxu0
  %4021 = vdwg.mxu0
  %4022 = vmatpush.bf16.msra.mxu0 %v2451
  %4023 = vmatpush.bf16.msra.mxu0 %v2447
  %4024 = vmatpush.bf16.msra.mxu0 %v2443
  %4025 = vmatpush.bf16.msra.mxu0 %v2439
  %4026 = vmatpush.bf16.msra.mxu0 %v2435
  %4027 = vmatpush.bf16.msra.mxu0 %v2431
  %4028 = vmatpush.bf16.msra.mxu0 %v2427
  %4029 = vmatpush.bf16.msra.mxu0 %v2423
  %4030 = vmatmul.bf16.gmra.mxu0 %v626
  %v4031 = vpop.f32.mrf.mxu0
  %v4032 = vadd.f32 %v4019, %v4031
  %v4033 = vpop.f32.mrf.mxu0
  %4034 = vdwg.mxu0
  %4035 = vmatpush.bf16.msra.mxu0 %v2483
  %4036 = vmatpush.bf16.msra.mxu0 %v2479
  %4037 = vmatpush.bf16.msra.mxu0 %v2475
  %4038 = vmatpush.bf16.msra.mxu0 %v2471
  %4039 = vmatpush.bf16.msra.mxu0 %v2467
  %4040 = vmatpush.bf16.msra.mxu0 %v2463
  %4041 = vmatpush.bf16.msra.mxu0 %v2459
  %4042 = vmatpush.bf16.msra.mxu0 %v2455
  %4043 = vmatmul.bf16.gmra.mxu0 %v627
  %v4044 = vpop.f32.mrf.mxu0
  %v4045 = vadd.f32 %v4032, %v4044
  %v4046 = vpop.f32.mrf.mxu0
  %4047 = vdwg.mxu0
  %4048 = vmatpush.bf16.msra.mxu0 %v2515
  %4049 = vmatpush.bf16.msra.mxu0 %v2511
  %4050 = vmatpush.bf16.msra.mxu0 %v2507
  %4051 = vmatpush.bf16.msra.mxu0 %v2503
  %4052 = vmatpush.bf16.msra.mxu0 %v2499
  %4053 = vmatpush.bf16.msra.mxu0 %v2495
  %4054 = vmatpush.bf16.msra.mxu0 %v2491
  %4055 = vmatpush.bf16.msra.mxu0 %v2487
  %4056 = vmatmul.bf16.gmra.mxu0 %v628
  %v4057 = vpop.f32.mrf.mxu0
  %v4058 = vadd.f32 %v4045, %v4057
  %v4059 = vpop.f32.mrf.mxu0
  %4060 = vdwg.mxu0
  %4061 = vmatpush.bf16.msra.mxu0 %v2547
  %4062 = vmatpush.bf16.msra.mxu0 %v2543
  %4063 = vmatpush.bf16.msra.mxu0 %v2539
  %4064 = vmatpush.bf16.msra.mxu0 %v2535
  %4065 = vmatpush.bf16.msra.mxu0 %v2531
  %4066 = vmatpush.bf16.msra.mxu0 %v2527
  %4067 = vmatpush.bf16.msra.mxu0 %v2523
  %4068 = vmatpush.bf16.msra.mxu0 %v2519
  %4069 = vmatmul.bf16.gmra.mxu0 %v629
  %v4070 = vpop.f32.mrf.mxu0
  %v4071 = vadd.f32 %v4058, %v4070
  %v4072 = vpop.f32.mrf.mxu0
  %4073 = vdwg.mxu0
  %4074 = vmatpush.bf16.msra.mxu0 %v2579
  %4075 = vmatpush.bf16.msra.mxu0 %v2575
  %4076 = vmatpush.bf16.msra.mxu0 %v2571
  %4077 = vmatpush.bf16.msra.mxu0 %v2567
  %4078 = vmatpush.bf16.msra.mxu0 %v2563
  %4079 = vmatpush.bf16.msra.mxu0 %v2559
  %4080 = vmatpush.bf16.msra.mxu0 %v2555
  %4081 = vmatpush.bf16.msra.mxu0 %v2551
  %4082 = vmatmul.bf16.gmra.mxu0 %v630
  %v4083 = vpop.f32.mrf.mxu0
  %v4084 = vadd.f32 %v4071, %v4083
  %v4085 = vpop.f32.mrf.mxu0
  %4086 = vdwg.mxu0
  %4087 = vmatpush.bf16.msra.mxu0 %v2611
  %4088 = vmatpush.bf16.msra.mxu0 %v2607
  %4089 = vmatpush.bf16.msra.mxu0 %v2603
  %4090 = vmatpush.bf16.msra.mxu0 %v2599
  %4091 = vmatpush.bf16.msra.mxu0 %v2595
  %4092 = vmatpush.bf16.msra.mxu0 %v2591
  %4093 = vmatpush.bf16.msra.mxu0 %v2587
  %4094 = vmatpush.bf16.msra.mxu0 %v2583
  %4095 = vmatmul.bf16.gmra.mxu0 %v631
  %v4096 = vpop.f32.mrf.mxu0
  %v4097 = vadd.f32 %v4084, %v4096
  %v4098 = vpop.f32.mrf.mxu0
  %4099 = vdwg.mxu0
  %4100 = vmatpush.bf16.msra.mxu0 %v2643
  %4101 = vmatpush.bf16.msra.mxu0 %v2639
  %4102 = vmatpush.bf16.msra.mxu0 %v2635
  %4103 = vmatpush.bf16.msra.mxu0 %v2631
  %4104 = vmatpush.bf16.msra.mxu0 %v2627
  %4105 = vmatpush.bf16.msra.mxu0 %v2623
  %4106 = vmatpush.bf16.msra.mxu0 %v2619
  %4107 = vmatpush.bf16.msra.mxu0 %v2615
  %4108 = vmatmul.bf16.gmra.mxu0 %v632
  %v4109 = vpop.f32.mrf.mxu0
  %v4110 = vadd.f32 %v4097, %v4109
  %v4111 = vpop.f32.mrf.mxu0
  %4112 = vdwg.mxu0
  %4113 = vmatpush.bf16.msra.mxu0 %v2675
  %4114 = vmatpush.bf16.msra.mxu0 %v2671
  %4115 = vmatpush.bf16.msra.mxu0 %v2667
  %4116 = vmatpush.bf16.msra.mxu0 %v2663
  %4117 = vmatpush.bf16.msra.mxu0 %v2659
  %4118 = vmatpush.bf16.msra.mxu0 %v2655
  %4119 = vmatpush.bf16.msra.mxu0 %v2651
  %4120 = vmatpush.bf16.msra.mxu0 %v2647
  %4121 = vmatmul.bf16.gmra.mxu0 %v633
  %v4122 = vpop.f32.mrf.mxu0
  %v4123 = vadd.f32 %v4110, %v4122
  %v4124 = vpop.f32.mrf.mxu0
  %4125 = vdwg.mxu0
  %4126 = vmatpush.bf16.msra.mxu0 %v2707
  %4127 = vmatpush.bf16.msra.mxu0 %v2703
  %4128 = vmatpush.bf16.msra.mxu0 %v2699
  %4129 = vmatpush.bf16.msra.mxu0 %v2695
  %4130 = vmatpush.bf16.msra.mxu0 %v2691
  %4131 = vmatpush.bf16.msra.mxu0 %v2687
  %4132 = vmatpush.bf16.msra.mxu0 %v2683
  %4133 = vmatpush.bf16.msra.mxu0 %v2679
  %4134 = vmatmul.bf16.gmra.mxu0 %v634
  %v4135 = vpop.f32.mrf.mxu0
  %v4136 = vadd.f32 %v4123, %v4135
  %v4137 = vpop.f32.mrf.mxu0
  %4138 = vdwg.mxu0
  %4139 = vmatpush.bf16.msra.mxu0 %v2739
  %4140 = vmatpush.bf16.msra.mxu0 %v2735
  %4141 = vmatpush.bf16.msra.mxu0 %v2731
  %4142 = vmatpush.bf16.msra.mxu0 %v2727
  %4143 = vmatpush.bf16.msra.mxu0 %v2723
  %4144 = vmatpush.bf16.msra.mxu0 %v2719
  %4145 = vmatpush.bf16.msra.mxu0 %v2715
  %4146 = vmatpush.bf16.msra.mxu0 %v2711
  %4147 = vmatmul.bf16.gmra.mxu0 %v635
  %v4148 = vpop.f32.mrf.mxu0
  %v4149 = vadd.f32 %v4136, %v4148
  %v4150 = vpop.f32.mrf.mxu0
  %4151 = vdwg.mxu0
  %4152 = vmatpush.bf16.msra.mxu0 %v2771
  %4153 = vmatpush.bf16.msra.mxu0 %v2767
  %4154 = vmatpush.bf16.msra.mxu0 %v2763
  %4155 = vmatpush.bf16.msra.mxu0 %v2759
  %4156 = vmatpush.bf16.msra.mxu0 %v2755
  %4157 = vmatpush.bf16.msra.mxu0 %v2751
  %4158 = vmatpush.bf16.msra.mxu0 %v2747
  %4159 = vmatpush.bf16.msra.mxu0 %v2743
  %4160 = vmatmul.bf16.gmra.mxu0 %v636
  %v4161 = vpop.f32.mrf.mxu0
  %v4162 = vadd.f32 %v4149, %v4161
  %v4163 = vpop.f32.mrf.mxu0
  %4164 = vdwg.mxu0
  %4165 = vmatpush.bf16.msra.mxu0 %v2803
  %4166 = vmatpush.bf16.msra.mxu0 %v2799
  %4167 = vmatpush.bf16.msra.mxu0 %v2795
  %4168 = vmatpush.bf16.msra.mxu0 %v2791
  %4169 = vmatpush.bf16.msra.mxu0 %v2787
  %4170 = vmatpush.bf16.msra.mxu0 %v2783
  %4171 = vmatpush.bf16.msra.mxu0 %v2779
  %4172 = vmatpush.bf16.msra.mxu0 %v2775
  %4173 = vmatmul.bf16.gmra.mxu0 %v637
  %v4174 = vpop.f32.mrf.mxu0
  %v4175 = vadd.f32 %v4162, %v4174
  %v4176 = vpop.f32.mrf.mxu0
  %4177 = vdwg.mxu0
  %4178 = vmatpush.bf16.msra.mxu0 %v2835
  %4179 = vmatpush.bf16.msra.mxu0 %v2831
  %4180 = vmatpush.bf16.msra.mxu0 %v2827
  %4181 = vmatpush.bf16.msra.mxu0 %v2823
  %4182 = vmatpush.bf16.msra.mxu0 %v2819
  %4183 = vmatpush.bf16.msra.mxu0 %v2815
  %4184 = vmatpush.bf16.msra.mxu0 %v2811
  %4185 = vmatpush.bf16.msra.mxu0 %v2807
  %4186 = vmatmul.bf16.gmra.mxu0 %v638
  %v4187 = vpop.f32.mrf.mxu0
  %v4188 = vadd.f32 %v4175, %v4187
  %v4189 = vpop.f32.mrf.mxu0
  %4190 = vdwg.mxu0
  %4191 = vmatpush.bf16.msra.mxu0 %v2867
  %4192 = vmatpush.bf16.msra.mxu0 %v2863
  %4193 = vmatpush.bf16.msra.mxu0 %v2859
  %4194 = vmatpush.bf16.msra.mxu0 %v2855
  %4195 = vmatpush.bf16.msra.mxu0 %v2851
  %4196 = vmatpush.bf16.msra.mxu0 %v2847
  %4197 = vmatpush.bf16.msra.mxu0 %v2843
  %4198 = vmatpush.bf16.msra.mxu0 %v2839
  %4199 = vmatmul.bf16.gmra.mxu0 %v639
  %v4200 = vpop.f32.mrf.mxu0
  %v4201 = vadd.f32 %v4188, %v4200
  %v4202 = vpop.f32.mrf.mxu0
  %4203 = vdwg.mxu0
  %4204 = vmatpush.bf16.msra.mxu0 %v2899
  %4205 = vmatpush.bf16.msra.mxu0 %v2895
  %4206 = vmatpush.bf16.msra.mxu0 %v2891
  %4207 = vmatpush.bf16.msra.mxu0 %v2887
  %4208 = vmatpush.bf16.msra.mxu0 %v2883
  %4209 = vmatpush.bf16.msra.mxu0 %v2879
  %4210 = vmatpush.bf16.msra.mxu0 %v2875
  %4211 = vmatpush.bf16.msra.mxu0 %v2871
  %4212 = vmatmul.bf16.gmra.mxu0 %v640
  %v4213 = vpop.f32.mrf.mxu0
  %v4214 = vadd.f32 %v4201, %v4213
  %v4215 = vpop.f32.mrf.mxu0
  %4216 = vdwg.mxu0
  %4217 = vmatpush.bf16.msra.mxu0 %v2931
  %4218 = vmatpush.bf16.msra.mxu0 %v2927
  %4219 = vmatpush.bf16.msra.mxu0 %v2923
  %4220 = vmatpush.bf16.msra.mxu0 %v2919
  %4221 = vmatpush.bf16.msra.mxu0 %v2915
  %4222 = vmatpush.bf16.msra.mxu0 %v2911
  %4223 = vmatpush.bf16.msra.mxu0 %v2907
  %4224 = vmatpush.bf16.msra.mxu0 %v2903
  %4225 = vmatmul.bf16.gmra.mxu0 %v641
  %v4226 = vpop.f32.mrf.mxu0
  %v4227 = vadd.f32 %v4214, %v4226
  %v4228 = vpop.f32.mrf.mxu0
  %4229 = vdwg.mxu0
  %4230 = vmatpush.bf16.msra.mxu0 %v2963
  %4231 = vmatpush.bf16.msra.mxu0 %v2959
  %4232 = vmatpush.bf16.msra.mxu0 %v2955
  %4233 = vmatpush.bf16.msra.mxu0 %v2951
  %4234 = vmatpush.bf16.msra.mxu0 %v2947
  %4235 = vmatpush.bf16.msra.mxu0 %v2943
  %4236 = vmatpush.bf16.msra.mxu0 %v2939
  %4237 = vmatpush.bf16.msra.mxu0 %v2935
  %4238 = vmatmul.bf16.gmra.mxu0 %v642
  %v4239 = vpop.f32.mrf.mxu0
  %v4240 = vadd.f32 %v4227, %v4239
  %v4241 = vpop.f32.mrf.mxu0
  %4242 = vdwg.mxu0
  %4243 = vmatpush.bf16.msra.mxu0 %v2420
  %4244 = vmatpush.bf16.msra.mxu0 %v2416
  %4245 = vmatpush.bf16.msra.mxu0 %v2412
  %4246 = vmatpush.bf16.msra.mxu0 %v2408
  %4247 = vmatpush.bf16.msra.mxu0 %v2404
  %4248 = vmatpush.bf16.msra.mxu0 %v2400
  %4249 = vmatpush.bf16.msra.mxu0 %v2396
  %4250 = vmatpush.bf16.msra.mxu0 %v2392
  %4251 = vmatmul.bf16.gmra.mxu0 %v625
  %v4252 = vpop.f32.mrf.mxu0
  %v4253 = vadd.f32 0.0, %v4252
  %v4254 = vpop.f32.mrf.mxu0
  %4255 = vdwg.mxu0
  %4256 = vmatpush.bf16.msra.mxu0 %v2452
  %4257 = vmatpush.bf16.msra.mxu0 %v2448
  %4258 = vmatpush.bf16.msra.mxu0 %v2444
  %4259 = vmatpush.bf16.msra.mxu0 %v2440
  %4260 = vmatpush.bf16.msra.mxu0 %v2436
  %4261 = vmatpush.bf16.msra.mxu0 %v2432
  %4262 = vmatpush.bf16.msra.mxu0 %v2428
  %4263 = vmatpush.bf16.msra.mxu0 %v2424
  %4264 = vmatmul.bf16.gmra.mxu0 %v626
  %v4265 = vpop.f32.mrf.mxu0
  %v4266 = vadd.f32 %v4253, %v4265
  %v4267 = vpop.f32.mrf.mxu0
  %4268 = vdwg.mxu0
  %4269 = vmatpush.bf16.msra.mxu0 %v2484
  %4270 = vmatpush.bf16.msra.mxu0 %v2480
  %4271 = vmatpush.bf16.msra.mxu0 %v2476
  %4272 = vmatpush.bf16.msra.mxu0 %v2472
  %4273 = vmatpush.bf16.msra.mxu0 %v2468
  %4274 = vmatpush.bf16.msra.mxu0 %v2464
  %4275 = vmatpush.bf16.msra.mxu0 %v2460
  %4276 = vmatpush.bf16.msra.mxu0 %v2456
  %4277 = vmatmul.bf16.gmra.mxu0 %v627
  %v4278 = vpop.f32.mrf.mxu0
  %v4279 = vadd.f32 %v4266, %v4278
  %v4280 = vpop.f32.mrf.mxu0
  %4281 = vdwg.mxu0
  %4282 = vmatpush.bf16.msra.mxu0 %v2516
  %4283 = vmatpush.bf16.msra.mxu0 %v2512
  %4284 = vmatpush.bf16.msra.mxu0 %v2508
  %4285 = vmatpush.bf16.msra.mxu0 %v2504
  %4286 = vmatpush.bf16.msra.mxu0 %v2500
  %4287 = vmatpush.bf16.msra.mxu0 %v2496
  %4288 = vmatpush.bf16.msra.mxu0 %v2492
  %4289 = vmatpush.bf16.msra.mxu0 %v2488
  %4290 = vmatmul.bf16.gmra.mxu0 %v628
  %v4291 = vpop.f32.mrf.mxu0
  %v4292 = vadd.f32 %v4279, %v4291
  %v4293 = vpop.f32.mrf.mxu0
  %4294 = vdwg.mxu0
  %4295 = vmatpush.bf16.msra.mxu0 %v2548
  %4296 = vmatpush.bf16.msra.mxu0 %v2544
  %4297 = vmatpush.bf16.msra.mxu0 %v2540
  %4298 = vmatpush.bf16.msra.mxu0 %v2536
  %4299 = vmatpush.bf16.msra.mxu0 %v2532
  %4300 = vmatpush.bf16.msra.mxu0 %v2528
  %4301 = vmatpush.bf16.msra.mxu0 %v2524
  %4302 = vmatpush.bf16.msra.mxu0 %v2520
  %4303 = vmatmul.bf16.gmra.mxu0 %v629
  %v4304 = vpop.f32.mrf.mxu0
  %v4305 = vadd.f32 %v4292, %v4304
  %v4306 = vpop.f32.mrf.mxu0
  %4307 = vdwg.mxu0
  %4308 = vmatpush.bf16.msra.mxu0 %v2580
  %4309 = vmatpush.bf16.msra.mxu0 %v2576
  %4310 = vmatpush.bf16.msra.mxu0 %v2572
  %4311 = vmatpush.bf16.msra.mxu0 %v2568
  %4312 = vmatpush.bf16.msra.mxu0 %v2564
  %4313 = vmatpush.bf16.msra.mxu0 %v2560
  %4314 = vmatpush.bf16.msra.mxu0 %v2556
  %4315 = vmatpush.bf16.msra.mxu0 %v2552
  %4316 = vmatmul.bf16.gmra.mxu0 %v630
  %v4317 = vpop.f32.mrf.mxu0
  %v4318 = vadd.f32 %v4305, %v4317
  %v4319 = vpop.f32.mrf.mxu0
  %4320 = vdwg.mxu0
  %4321 = vmatpush.bf16.msra.mxu0 %v2612
  %4322 = vmatpush.bf16.msra.mxu0 %v2608
  %4323 = vmatpush.bf16.msra.mxu0 %v2604
  %4324 = vmatpush.bf16.msra.mxu0 %v2600
  %4325 = vmatpush.bf16.msra.mxu0 %v2596
  %4326 = vmatpush.bf16.msra.mxu0 %v2592
  %4327 = vmatpush.bf16.msra.mxu0 %v2588
  %4328 = vmatpush.bf16.msra.mxu0 %v2584
  %4329 = vmatmul.bf16.gmra.mxu0 %v631
  %v4330 = vpop.f32.mrf.mxu0
  %v4331 = vadd.f32 %v4318, %v4330
  %v4332 = vpop.f32.mrf.mxu0
  %4333 = vdwg.mxu0
  %4334 = vmatpush.bf16.msra.mxu0 %v2644
  %4335 = vmatpush.bf16.msra.mxu0 %v2640
  %4336 = vmatpush.bf16.msra.mxu0 %v2636
  %4337 = vmatpush.bf16.msra.mxu0 %v2632
  %4338 = vmatpush.bf16.msra.mxu0 %v2628
  %4339 = vmatpush.bf16.msra.mxu0 %v2624
  %4340 = vmatpush.bf16.msra.mxu0 %v2620
  %4341 = vmatpush.bf16.msra.mxu0 %v2616
  %4342 = vmatmul.bf16.gmra.mxu0 %v632
  %v4343 = vpop.f32.mrf.mxu0
  %v4344 = vadd.f32 %v4331, %v4343
  %v4345 = vpop.f32.mrf.mxu0
  %4346 = vdwg.mxu0
  %4347 = vmatpush.bf16.msra.mxu0 %v2676
  %4348 = vmatpush.bf16.msra.mxu0 %v2672
  %4349 = vmatpush.bf16.msra.mxu0 %v2668
  %4350 = vmatpush.bf16.msra.mxu0 %v2664
  %4351 = vmatpush.bf16.msra.mxu0 %v2660
  %4352 = vmatpush.bf16.msra.mxu0 %v2656
  %4353 = vmatpush.bf16.msra.mxu0 %v2652
  %4354 = vmatpush.bf16.msra.mxu0 %v2648
  %4355 = vmatmul.bf16.gmra.mxu0 %v633
  %v4356 = vpop.f32.mrf.mxu0
  %v4357 = vadd.f32 %v4344, %v4356
  %v4358 = vpop.f32.mrf.mxu0
  %4359 = vdwg.mxu0
  %4360 = vmatpush.bf16.msra.mxu0 %v2708
  %4361 = vmatpush.bf16.msra.mxu0 %v2704
  %4362 = vmatpush.bf16.msra.mxu0 %v2700
  %4363 = vmatpush.bf16.msra.mxu0 %v2696
  %4364 = vmatpush.bf16.msra.mxu0 %v2692
  %4365 = vmatpush.bf16.msra.mxu0 %v2688
  %4366 = vmatpush.bf16.msra.mxu0 %v2684
  %4367 = vmatpush.bf16.msra.mxu0 %v2680
  %4368 = vmatmul.bf16.gmra.mxu0 %v634
  %v4369 = vpop.f32.mrf.mxu0
  %v4370 = vadd.f32 %v4357, %v4369
  %v4371 = vpop.f32.mrf.mxu0
  %4372 = vdwg.mxu0
  %4373 = vmatpush.bf16.msra.mxu0 %v2740
  %4374 = vmatpush.bf16.msra.mxu0 %v2736
  %4375 = vmatpush.bf16.msra.mxu0 %v2732
  %4376 = vmatpush.bf16.msra.mxu0 %v2728
  %4377 = vmatpush.bf16.msra.mxu0 %v2724
  %4378 = vmatpush.bf16.msra.mxu0 %v2720
  %4379 = vmatpush.bf16.msra.mxu0 %v2716
  %4380 = vmatpush.bf16.msra.mxu0 %v2712
  %4381 = vmatmul.bf16.gmra.mxu0 %v635
  %v4382 = vpop.f32.mrf.mxu0
  %v4383 = vadd.f32 %v4370, %v4382
  %v4384 = vpop.f32.mrf.mxu0
  %4385 = vdwg.mxu0
  %4386 = vmatpush.bf16.msra.mxu0 %v2772
  %4387 = vmatpush.bf16.msra.mxu0 %v2768
  %4388 = vmatpush.bf16.msra.mxu0 %v2764
  %4389 = vmatpush.bf16.msra.mxu0 %v2760
  %4390 = vmatpush.bf16.msra.mxu0 %v2756
  %4391 = vmatpush.bf16.msra.mxu0 %v2752
  %4392 = vmatpush.bf16.msra.mxu0 %v2748
  %4393 = vmatpush.bf16.msra.mxu0 %v2744
  %4394 = vmatmul.bf16.gmra.mxu0 %v636
  %v4395 = vpop.f32.mrf.mxu0
  %v4396 = vadd.f32 %v4383, %v4395
  %v4397 = vpop.f32.mrf.mxu0
  %4398 = vdwg.mxu0
  %4399 = vmatpush.bf16.msra.mxu0 %v2804
  %4400 = vmatpush.bf16.msra.mxu0 %v2800
  %4401 = vmatpush.bf16.msra.mxu0 %v2796
  %4402 = vmatpush.bf16.msra.mxu0 %v2792
  %4403 = vmatpush.bf16.msra.mxu0 %v2788
  %4404 = vmatpush.bf16.msra.mxu0 %v2784
  %4405 = vmatpush.bf16.msra.mxu0 %v2780
  %4406 = vmatpush.bf16.msra.mxu0 %v2776
  %4407 = vmatmul.bf16.gmra.mxu0 %v637
  %v4408 = vpop.f32.mrf.mxu0
  %v4409 = vadd.f32 %v4396, %v4408
  %v4410 = vpop.f32.mrf.mxu0
  %4411 = vdwg.mxu0
  %4412 = vmatpush.bf16.msra.mxu0 %v2836
  %4413 = vmatpush.bf16.msra.mxu0 %v2832
  %4414 = vmatpush.bf16.msra.mxu0 %v2828
  %4415 = vmatpush.bf16.msra.mxu0 %v2824
  %4416 = vmatpush.bf16.msra.mxu0 %v2820
  %4417 = vmatpush.bf16.msra.mxu0 %v2816
  %4418 = vmatpush.bf16.msra.mxu0 %v2812
  %4419 = vmatpush.bf16.msra.mxu0 %v2808
  %4420 = vmatmul.bf16.gmra.mxu0 %v638
  %v4421 = vpop.f32.mrf.mxu0
  %v4422 = vadd.f32 %v4409, %v4421
  %v4423 = vpop.f32.mrf.mxu0
  %4424 = vdwg.mxu0
  %4425 = vmatpush.bf16.msra.mxu0 %v2868
  %4426 = vmatpush.bf16.msra.mxu0 %v2864
  %4427 = vmatpush.bf16.msra.mxu0 %v2860
  %4428 = vmatpush.bf16.msra.mxu0 %v2856
  %4429 = vmatpush.bf16.msra.mxu0 %v2852
  %4430 = vmatpush.bf16.msra.mxu0 %v2848
  %4431 = vmatpush.bf16.msra.mxu0 %v2844
  %4432 = vmatpush.bf16.msra.mxu0 %v2840
  %4433 = vmatmul.bf16.gmra.mxu0 %v639
  %v4434 = vpop.f32.mrf.mxu0
  %v4435 = vadd.f32 %v4422, %v4434
  %v4436 = vpop.f32.mrf.mxu0
  %4437 = vdwg.mxu0
  %4438 = vmatpush.bf16.msra.mxu0 %v2900
  %4439 = vmatpush.bf16.msra.mxu0 %v2896
  %4440 = vmatpush.bf16.msra.mxu0 %v2892
  %4441 = vmatpush.bf16.msra.mxu0 %v2888
  %4442 = vmatpush.bf16.msra.mxu0 %v2884
  %4443 = vmatpush.bf16.msra.mxu0 %v2880
  %4444 = vmatpush.bf16.msra.mxu0 %v2876
  %4445 = vmatpush.bf16.msra.mxu0 %v2872
  %4446 = vmatmul.bf16.gmra.mxu0 %v640
  %v4447 = vpop.f32.mrf.mxu0
  %v4448 = vadd.f32 %v4435, %v4447
  %v4449 = vpop.f32.mrf.mxu0
  %4450 = vdwg.mxu0
  %4451 = vmatpush.bf16.msra.mxu0 %v2932
  %4452 = vmatpush.bf16.msra.mxu0 %v2928
  %4453 = vmatpush.bf16.msra.mxu0 %v2924
  %4454 = vmatpush.bf16.msra.mxu0 %v2920
  %4455 = vmatpush.bf16.msra.mxu0 %v2916
  %4456 = vmatpush.bf16.msra.mxu0 %v2912
  %4457 = vmatpush.bf16.msra.mxu0 %v2908
  %4458 = vmatpush.bf16.msra.mxu0 %v2904
  %4459 = vmatmul.bf16.gmra.mxu0 %v641
  %v4460 = vpop.f32.mrf.mxu0
  %v4461 = vadd.f32 %v4448, %v4460
  %v4462 = vpop.f32.mrf.mxu0
  %4463 = vdwg.mxu0
  %4464 = vmatpush.bf16.msra.mxu0 %v2964
  %4465 = vmatpush.bf16.msra.mxu0 %v2960
  %4466 = vmatpush.bf16.msra.mxu0 %v2956
  %4467 = vmatpush.bf16.msra.mxu0 %v2952
  %4468 = vmatpush.bf16.msra.mxu0 %v2948
  %4469 = vmatpush.bf16.msra.mxu0 %v2944
  %4470 = vmatpush.bf16.msra.mxu0 %v2940
  %4471 = vmatpush.bf16.msra.mxu0 %v2936
  %4472 = vmatmul.bf16.gmra.mxu0 %v642
  %v4473 = vpop.f32.mrf.mxu0
  %v4474 = vadd.f32 %v4461, %v4473
  %v4475 = vpop.f32.mrf.mxu0
  %4476 = vdwg.mxu0
  %v4477 = vrot.slane %v3772, 4
  %v4478 = vadd.f32 %v3772, %v4477
  %v4479 = vrot.slane %v4478, 2
  %v4480 = vadd.f32 %v4478, %v4479
  %v4481 = vrot.slane %v4480, 1
  %v4482 = vadd.f32 %v4480, %v4481
  %v4483 = vrot.slane %v4006, 4
  %v4484 = vadd.f32 %v4006, %v4483
  %v4485 = vrot.slane %v4484, 2
  %v4486 = vadd.f32 %v4484, %v4485
  %v4487 = vrot.slane %v4486, 1
  %v4488 = vadd.f32 %v4486, %v4487
  %v4489 = vrot.slane %v4240, 4
  %v4490 = vadd.f32 %v4240, %v4489
  %v4491 = vrot.slane %v4490, 2
  %v4492 = vadd.f32 %v4490, %v4491
  %v4493 = vrot.slane %v4492, 1
  %v4494 = vadd.f32 %v4492, %v4493
  %v4495 = vrot.slane %v4474, 4
  %v4496 = vadd.f32 %v4474, %v4495
  %v4497 = vrot.slane %v4496, 2
  %v4498 = vadd.f32 %v4496, %v4497
  %v4499 = vrot.slane %v4498, 1
  %v4500 = vadd.f32 %v4498, %v4499
  %v4501 = vmul.f32 %v3772, %v3772
  %v4502 = vmul.f32 %v4006, %v4006
  %v4503 = vmul.f32 %v4240, %v4240
  %v4504 = vmul.f32 %v4474, %v4474
  %v4505 = vrot.slane %v4501, 4
  %v4506 = vadd.f32 %v4501, %v4505
  %v4507 = vrot.slane %v4506, 2
  %v4508 = vadd.f32 %v4506, %v4507
  %v4509 = vrot.slane %v4508, 1
  %v4510 = vadd.f32 %v4508, %v4509
  %v4511 = vrot.slane %v4502, 4
  %v4512 = vadd.f32 %v4502, %v4511
  %v4513 = vrot.slane %v4512, 2
  %v4514 = vadd.f32 %v4512, %v4513
  %v4515 = vrot.slane %v4514, 1
  %v4516 = vadd.f32 %v4514, %v4515
  %v4517 = vrot.slane %v4503, 4
  %v4518 = vadd.f32 %v4503, %v4517
  %v4519 = vrot.slane %v4518, 2
  %v4520 = vadd.f32 %v4518, %v4519
  %v4521 = vrot.slane %v4520, 1
  %v4522 = vadd.f32 %v4520, %v4521
  %v4523 = vrot.slane %v4504, 4
  %v4524 = vadd.f32 %v4504, %v4523
  %v4525 = vrot.slane %v4524, 2
  %v4526 = vadd.f32 %v4524, %v4525
  %v4527 = vrot.slane %v4526, 1
  %v4528 = vadd.f32 %v4526, %v4527
  %vm4529 = vcmask 1040384
  %v4530 = vsel %vm4529, %v4482, %v4510
  %v4531 = vsel %vm4529, %v4488, %v4516
  %v4532 = vsel %vm4529, %v4494, %v4522
  %v4533 = vsel %vm4529, %v4500, %v4528
  %v4538 = vrot.slane %v4531, 6
  %v4539 = vrot.slane %v4532, 4
  %v4540 = vrot.slane %v4533, 2
  %vm4541 = vcmask 1041408
  %v4542 = vsel %vm4541, %v4530, %v4538
  %vm4543 = vcmask 1045508
  %v4544 = vsel %vm4543, %v4539, %v4540
  %vm4545 = vcmask 1043456
  %v4546 = vsel %vm4545, %v4542, %v4544
  %4548 = vst [vmem:[%s3] sm:$0xff] %v4546
  %v4549 = vpack.c.bf16 %v4006, %v3772
  %v4550 = vpack.c.bf16 %v4474, %v4240
  %4551 = vst [vmem:[%s2] sm:$0xff] %v4549
  %4552 = vst [vmem:[%s2 + $0x8] sm:$0xff] %v4550
  // Predicated region
  $region10: #{encoder_forward.15} parent=0 // pred_check
    _
  $region11: #{encoder_forward.15} parent=0 // pred_check_branch
    %4554 = sbr.rel (0) target = $region13
  $region12: #{encoder_forward.15} parent=0 // pred_region
    _
  $region13: #{encoder_forward.15} parent=0 // pred_fallthru
    _
  // Predicated region
  $region14: #{encoder_forward.15} parent=0 // pred_check
    _
  $region15: #{encoder_forward.15} parent=0 // pred_check_branch
    %4556 = sbr.rel (0) target = $region17
  $region16: #{encoder_forward.15} parent=0 // pred_region
    _
  $region17: #{encoder_forward.15} parent=0 // pred_fallthru
    _
  // Predicated region
  $region18: #{encoder_forward.15} parent=0 // pred_check
    _
  $region19: #{encoder_forward.15} parent=0 // pred_check_branch
    %4558 = sbr.rel (0) target = $region21
  $region20: #{encoder_forward.15} parent=0 // pred_region
    _
  $region21: #{encoder_forward.15} parent=0 // pred_fallthru
    _
  // Predicated region
  $region22: #{encoder_forward.15} parent=0 // pred_check
    _
  $region23: #{encoder_forward.15} parent=0 // pred_check_branch
    %4560 = sbr.rel (0) target = $region25
  $region24: #{encoder_forward.15} parent=0 // pred_region
    _
  $region25: #{encoder_forward.15} parent=0 // pred_fallthru
    _

</llo_original>
